<compile_context>
chip_gen: v6e
topology: v6e:2x2x1
jax: 0.10.0
libtpu: 0.0.40
codegen_flags: <defaults>
</compile_context>

<pallas_src>
import numpy as np
import jax
import jax.numpy as jnp
from jax.experimental import pallas as pl
from jax.experimental.pallas import tpu as pltpu

# ---------------- model configuration (small, consistent with the module) -----------
B = 2                      # batch
T = 16                     # time steps (= num_patches)
IMU_IN, IMU_EMB = 24, 16   # imu:      (B, T, 4, 6)   -> flattened 24
E4_IN, E4_EMB = 12, 8      # e4acc:    (B, T, 4, 3)   -> 12
BBOX_IN, BBOX_EMB = 16, 8  # bbox:     (B, T, 4, 4)   -> 16
KP_IN, KP_EMB = 30, 16     # keypoint: (B, T, 3, 2, 5)-> 30
HT_EMB, PR_EMB = 8, 8      # ht / printer: nn.Embedding(2, 8)
D = IMU_EMB + E4_EMB + BBOX_EMB + KP_EMB + HT_EMB + PR_EMB   # 64 (= concat_dim = dim)
F_LIN = IMU_IN + E4_IN + BBOX_IN + KP_IN                      # 82
F_IN = F_LIN + 2           # + ht / printer flag columns -> 84

DEPTH = 2
HEADS = 4
DIM_HEAD = 16
INNER = HEADS * DIM_HEAD   # 64
MLP = 128
NUM_CLASSES = 11
SCALE = DIM_HEAD ** -0.5
EPS = 1e-5                 # PyTorch LayerNorm default


def _layer_norm(x, gamma, beta):
    mean = jnp.mean(x, axis=-1, keepdims=True)
    cen = x - mean
    var = jnp.mean(cen * cen, axis=-1, keepdims=True)
    return cen * jax.lax.rsqrt(var + EPS) * gamma + beta


def _gelu_tanh(x):
    # tanh-approx GELU (EUP tanh, no divide); |err| vs exact erf GELU < ~1e-3.
    c = 0.7978845608028654
    return 0.5 * x * (1.0 + jnp.tanh(c * (x + 0.044715 * x * x * x)))


def transformer_kernel(x_ref, wfull_ref, bfull_ref, pos_ref,
                       ag_ref, ab_ref, wq_ref, wk_ref, wv_ref, wout_ref,
                       fg_ref, fb_ref, w1_ref, b1_ref, w2_ref, b2_ref,
                       tng_ref, tnb_ref, lng_ref, lnb_ref, wh_ref, bh_ref,
                       logits_ref, feat_ref):
    NT = (((1,), (1,)), ((), ()))   # contract last dims: q @ k^T without a transpose

    # ---- Embedding (fused linears + embedding-table lookups) + positional emb ----
    x = x_ref[0]                                                       # (T, F_IN)
    h = jnp.dot(x, wfull_ref[...], preferred_element_type=jnp.float32)
    h = h + bfull_ref[...] + pos_ref[...]                              # (T, D)

    for l in range(DEPTH):                                             # static unroll
        # ---- pre-norm multi-head self-attention + residual ----
        xn = _layer_norm(h, ag_ref[l], ab_ref[l])
        attn_out = None
        for hh in range(HEADS):
            qh = jnp.dot(xn, wq_ref[l, hh], preferred_element_type=jnp.float32)
            kh = jnp.dot(xn, wk_ref[l, hh], preferred_element_type=jnp.float32)
            vh = jnp.dot(xn, wv_ref[l, hh], preferred_element_type=jnp.float32)
            s = jax.lax.dot_general(qh, kh, NT,
                                    preferred_element_type=jnp.float32) * SCALE
            s = s - jnp.max(s, axis=-1, keepdims=True)
            e = jnp.exp(s)
            p = e / jnp.sum(e, axis=-1, keepdims=True)
            oh = jnp.dot(p, vh, preferred_element_type=jnp.float32)    # (T, DIM_HEAD)
            contrib = jnp.dot(oh, wout_ref[l, hh],
                              preferred_element_type=jnp.float32)      # (T, D)
            attn_out = contrib if attn_out is None else attn_out + contrib
        h = h + attn_out

        # ---- pre-norm MLP (Linear -> GELU -> Linear) + residual ----
        xn = _layer_norm(h, fg_ref[l], fb_ref[l])
        u = jnp.dot(xn, w1_ref[l], preferred_element_type=jnp.float32) + b1_ref[l]
        u = _gelu_tanh(u)
        h = h + jnp.dot(u, w2_ref[l], preferred_element_type=jnp.float32) + b2_ref[l]

    h = _layer_norm(h, tng_ref[...], tnb_ref[...])      # Transformer final LayerNorm
    feat = _layer_norm(h, lng_ref[...], lnb_ref[...])   # self.ln
    feat_ref[0] = feat.astype(feat_ref.dtype)
    logits = jnp.dot(feat, wh_ref[...], preferred_element_type=jnp.float32) + bh_ref[...]
    logits_ref[0] = logits.astype(logits_ref.dtype)


def my_simple_transformer_pallas(x_feat, kp):
    args = (x_feat, kp["wfull"], kp["bfull"], kp["pos"],
            kp["ag"], kp["ab"], kp["wq"], kp["wk"], kp["wv"], kp["wout"],
            kp["fg"], kp["fb"], kp["w1"], kp["b1"], kp["w2"], kp["b2"],
            kp["tng"], kp["tnb"], kp["lng"], kp["lnb"], kp["wh"], kp["bh"])

    def full_spec(a):
        nd = a.ndim
        return pl.BlockSpec(a.shape, lambda b, _n=nd: (0,) * _n)

    in_specs = [pl.BlockSpec((1, T, F_IN), lambda b: (b, 0, 0))]
    in_specs += [full_spec(a) for a in args[1:]]

    out_shape = (jax.ShapeDtypeStruct((B, T, NUM_CLASSES), jnp.float32),
                 jax.ShapeDtypeStruct((B, T, D), jnp.float32))
    out_specs = (pl.BlockSpec((1, T, NUM_CLASSES), lambda b: (b, 0, 0)),
                 pl.BlockSpec((1, T, D), lambda b: (b, 0, 0)))

    return pl.pallas_call(
        transformer_kernel,
        out_shape=out_shape,
        grid=(B,),
        in_specs=in_specs,
        out_specs=out_specs,
        compiler_params=pltpu.CompilerParams(
            dimension_semantics=("parallel",)),       # 2 batch elems -> 2 TCs on v7x
    )(*args)


# ---------------------------------- parameters --------------------------------------
def init_params(key):
    ks = iter(jax.random.split(key, 32))
    n = lambda shape, s: s * jax.random.normal(next(ks), shape, jnp.float32)
    return dict(
        W_imu=n((IMU_IN, IMU_EMB), 1.0 / np.sqrt(IMU_IN)), b_imu=n((IMU_EMB,), 0.05),
        W_e4=n((E4_IN, E4_EMB), 1.0 / np.sqrt(E4_IN)), b_e4=n((E4_EMB,), 0.05),
        W_bbox=n((BBOX_IN, BBOX_EMB), 1.0 / np.sqrt(BBOX_IN)), b_bbox=n((BBOX_EMB,), 0.05),
        W_kp=n((KP_IN, KP_EMB), 1.0 / np.sqrt(KP_IN)), b_kp=n((KP_EMB,), 0.05),
        ht_table=n((2, HT_EMB), 0.5), pr_table=n((2, PR_EMB), 0.5),
        pos=n((1, T + 1, D), 0.3),
        a_ln_g=1.0 + n((DEPTH, D), 0.05), a_ln_b=n((DEPTH, D), 0.05),
        Wq=n((DEPTH, HEADS, D, DIM_HEAD), 1.0 / np.sqrt(D)),
        Wk=n((DEPTH, HEADS, D, DIM_HEAD), 1.0 / np.sqrt(D)),
        Wv=n((DEPTH, HEADS, D, DIM_HEAD), 1.0 / np.sqrt(D)),
        Wout=n((DEPTH, HEADS, DIM_HEAD, D), 1.0 / np.sqrt(INNER)),
        f_ln_g=1.0 + n((DEPTH, D), 0.05), f_ln_b=n((DEPTH, D), 0.05),
        W1=n((DEPTH, D, MLP), 1.0 / np.sqrt(D)), b1=n((DEPTH, MLP), 0.02),
        W2=n((DEPTH, MLP, D), 1.0 / np.sqrt(MLP)), b2=n((DEPTH, D), 0.02),
        tn_g=1.0 + n((D,), 0.05), tn_b=n((D,), 0.05),
        ln_g=1.0 + n((D,), 0.05), ln_b=n((D,), 0.05),
        W_head=n((D, NUM_CLASSES), 1.0 / np.sqrt(D)), b_head=n((NUM_CLASSES,), 0.02),
    )


def pack_params(p):
    # Block-diagonal fused embedding weight; columns follow the PyTorch concat order
    # (imu, e4acc, bbox, keypoint, ht, printer).  The ht/printer flag rows carry
    # (table[1] - table[0]); table[0] goes into the bias -> exact Embedding lookup.
    W_full = np.zeros((F_IN, D), np.float32)
    r, c = 0, 0
    for wk, cin, cout in (("W_imu", IMU_IN, IMU_EMB), ("W_e4", E4_IN, E4_EMB),
                          ("W_bbox", BBOX_IN, BBOX_EMB), ("W_kp", KP_IN, KP_EMB)):
        W_full[r:r + cin, c:c + cout] = np.asarray(p[wk])
        r += cin
        c += cout
    ht0, ht1 = np.asarray(p["ht_table"][0]), np.asarray(p["ht_table"][1])
    pr0, pr1 = np.asarray(p["pr_table"][0]), np.asarray(p["pr_table"][1])
    W_full[F_LIN, c:c + HT_EMB] = ht1 - ht0
    W_full[F_LIN + 1, c + HT_EMB:c + HT_EMB + PR_EMB] = pr1 - pr0
    b_full = np.concatenate([np.asarray(p["b_imu"]), np.asarray(p["b_e4"]),
                             np.asarray(p["b_bbox"]), np.asarray(p["b_kp"]),
                             ht0, pr0])[None, :]
    return dict(
        wfull=jnp.asarray(W_full), bfull=jnp.asarray(b_full),
        pos=p["pos"][0, :T],                                   # (T, D)
        ag=p["a_ln_g"][:, None, :], ab=p["a_ln_b"][:, None, :],
        wq=p["Wq"], wk=p["Wk"], wv=p["Wv"], wout=p["Wout"],
        fg=p["f_ln_g"][:, None, :], fb=p["f_ln_b"][:, None, :],
        w1=p["W1"], b1=p["b1"][:, None, :],
        w2=p["W2"], b2=p["b2"][:, None, :],
        tng=p["tn_g"][None, :], tnb=p["tn_b"][None, :],
        lng=p["ln_g"][None, :], lnb=p["ln_b"][None, :],
        wh=p["W_head"], bh=p["b_head"][None, :],
    )


def build_features(imu, keypoint, e4acc, bbox, ht, printer):
    """Rearranges + concat done in the JAX wrapper (free); ht/printer become flag cols."""
    Bq, Tq = imu.shape[:2]
    parts = [imu.reshape(Bq, Tq, -1), e4acc.reshape(Bq, Tq, -1),
             bbox.reshape(Bq, Tq, -1), keypoint.reshape(Bq, Tq, -1),
             ht.astype(jnp.float32)[..., None], printer.astype(jnp.float32)[..., None]]
    return jnp.concatenate(parts, axis=-1)                     # (B, T, F_IN)


# ------------------------------- pure-JAX reference ----------------------------------
def ref_forward(imu, keypoint, e4acc, bbox, ht, printer, p):
    Bq, Tq = imu.shape[:2]
    x_imu = imu.reshape(Bq, Tq, -1) @ p["W_imu"] + p["b_imu"]
    x_e4 = e4acc.reshape(Bq, Tq, -1) @ p["W_e4"] + p["b_e4"]
    x_bb = bbox.reshape(Bq, Tq, -1) @ p["W_bbox"] + p["b_bbox"]
    x_kp = keypoint.reshape(Bq, Tq, -1) @ p["W_kp"] + p["b_kp"]
    x_ht = p["ht_table"][ht]
    x_pr = p["pr_table"][printer]
    x = jnp.concatenate([x_imu, x_e4, x_bb, x_kp, x_ht, x_pr], axis=-1)
    x = x + p["pos"][:, :Tq]

    def ln(v, g, b):
        m = v.mean(-1, keepdims=True)
        var = ((v - m) ** 2).mean(-1, keepdims=True)
        return (v - m) / jnp.sqrt(var + EPS) * g + b

    for l in range(DEPTH):
        xn = ln(x, p["a_ln_g"][l], p["a_ln_b"][l])
        q = jnp.einsum("btd,hdk->bhtk", xn, p["Wq"][l])
        k = jnp.einsum("btd,hdk->bhtk", xn, p["Wk"][l])
        v = jnp.einsum("btd,hdk->bhtk", xn, p["Wv"][l])
        dots = jnp.einsum("bhqk,bhmk->bhqm", q, k) * SCALE
        attn = jax.nn.softmax(dots, axis=-1)
        out = jnp.einsum("bhqm,bhmk->bhqk", attn, v)
        x = x + jnp.einsum("bhtk,hkd->btd", out, p["Wout"][l])
        xn = ln(x, p["f_ln_g"][l], p["f_ln_b"][l])
        u = jax.nn.gelu(xn @ p["W1"][l] + p["b1"][l], approximate=False)
        x = x + u @ p["W2"][l] + p["b2"][l]

    x = ln(x, p["tn_g"], p["tn_b"])
    feat = ln(x, p["ln_g"], p["ln_b"])
    logits = feat @ p["W_head"] + p["b_head"]
    return logits, feat


if __name__ == "__main__":
    key = jax.random.PRNGKey(0)
    k_imu, k_kp, k_e4, k_bb, k_ht, k_pr, k_par = jax.random.split(key, 7)
    imu = jax.random.normal(k_imu, (B, T, 4, 6), jnp.float32)
    keypoint = jax.random.normal(k_kp, (B, T, 3, 2, 5), jnp.float32)
    e4acc = jax.random.normal(k_e4, (B, T, 4, 3), jnp.float32)
    bbox = jax.random.normal(k_bb, (B, T, 4, 4), jnp.float32)
    ht = jax.random.bernoulli(k_ht, 0.5, (B, T)).astype(jnp.int32)
    printer = jax.random.bernoulli(k_pr, 0.5, (B, T)).astype(jnp.int32)

    params = init_params(k_par)
    kparams = pack_params(params)
    x_feat = build_features(imu, keypoint, e4acc, bbox, ht, printer)

    logits, feat = my_simple_transformer_pallas(x_feat, kparams)
    jax.block_until_ready((logits, feat))
    assert logits.shape == (B, T, NUM_CLASSES) and feat.shape == (B, T, D)

    ref_logits, ref_feat = ref_forward(imu, keypoint, e4acc, bbox, ht, printer, params)
    err_l = float(jnp.max(jnp.abs(logits - ref_logits)))
    err_f = float(jnp.max(jnp.abs(feat - ref_feat)))
    # DEFAULT matmul precision (single-pass bf16 on the MXU) + tanh-GELU:
    # typical max error ~1e-3..1e-2 vs the f32 reference.
    assert err_l < 5e-2 and err_f < 5e-2, f"mismatch: logits {err_l}, feat {err_f}"
    print("KERNEL_OK")
</pallas_src>

<mosaic_0001>
module attributes {stable_mosaic.version = 11 : i64} {
  func.func @transformer_kernel(%arg0: i32, %arg1: memref<1x16x84xf32, #tpu.memory_space<vmem>>, %arg2: memref<84x64xf32, #tpu.memory_space<vmem>>, %arg3: memref<1x64xf32, #tpu.memory_space<vmem>>, %arg4: memref<16x64xf32, #tpu.memory_space<vmem>>, %arg5: memref<2x1x64xf32, #tpu.memory_space<vmem>>, %arg6: memref<2x1x64xf32, #tpu.memory_space<vmem>>, %arg7: memref<2x4x64x16xf32, #tpu.memory_space<vmem>>, %arg8: memref<2x4x64x16xf32, #tpu.memory_space<vmem>>, %arg9: memref<2x4x64x16xf32, #tpu.memory_space<vmem>>, %arg10: memref<2x4x16x64xf32, #tpu.memory_space<vmem>>, %arg11: memref<2x1x64xf32, #tpu.memory_space<vmem>>, %arg12: memref<2x1x64xf32, #tpu.memory_space<vmem>>, %arg13: memref<2x64x128xf32, #tpu.memory_space<vmem>>, %arg14: memref<2x1x128xf32, #tpu.memory_space<vmem>>, %arg15: memref<2x128x64xf32, #tpu.memory_space<vmem>>, %arg16: memref<2x1x64xf32, #tpu.memory_space<vmem>>, %arg17: memref<1x64xf32, #tpu.memory_space<vmem>>, %arg18: memref<1x64xf32, #tpu.memory_space<vmem>>, %arg19: memref<1x64xf32, #tpu.memory_space<vmem>>, %arg20: memref<1x64xf32, #tpu.memory_space<vmem>>, %arg21: memref<64x11xf32, #tpu.memory_space<vmem>>, %arg22: memref<1x11xf32, #tpu.memory_space<vmem>>, %arg23: memref<1x16x11xf32, #tpu.memory_space<vmem>>, %arg24: memref<1x16x64xf32, #tpu.memory_space<vmem>>) attributes {dimension_semantics = [#tpu.dimension_semantics<parallel>], iteration_bounds = array<i64: 2>, scalar_prefetch = 0 : i64, scratch_operands = 0 : i64, tpu.core_type = #tpu.core_type<tc>, window_params = [{transform_indices = @transform_0, window_bounds = array<i64: 1, 16, 84>}, {pipeline_mode = #tpu.pipeline_mode<synchronous>, transform_indices = @transform_1, window_bounds = array<i64: 84, 64>}, {pipeline_mode = #tpu.pipeline_mode<synchronous>, transform_indices = @transform_2, window_bounds = array<i64: 1, 64>}, {pipeline_mode = #tpu.pipeline_mode<synchronous>, transform_indices = @transform_3, window_bounds = array<i64: 16, 64>}, {pipeline_mode = #tpu.pipeline_mode<synchronous>, transform_indices = @transform_4, window_bounds = array<i64: 2, 1, 64>}, {pipeline_mode = #tpu.pipeline_mode<synchronous>, transform_indices = @transform_5, window_bounds = array<i64: 2, 1, 64>}, {pipeline_mode = #tpu.pipeline_mode<synchronous>, transform_indices = @transform_6, window_bounds = array<i64: 2, 4, 64, 16>}, {pipeline_mode = #tpu.pipeline_mode<synchronous>, transform_indices = @transform_7, window_bounds = array<i64: 2, 4, 64, 16>}, {pipeline_mode = #tpu.pipeline_mode<synchronous>, transform_indices = @transform_8, window_bounds = array<i64: 2, 4, 64, 16>}, {pipeline_mode = #tpu.pipeline_mode<synchronous>, transform_indices = @transform_9, window_bounds = array<i64: 2, 4, 16, 64>}, {pipeline_mode = #tpu.pipeline_mode<synchronous>, transform_indices = @transform_10, window_bounds = array<i64: 2, 1, 64>}, {pipeline_mode = #tpu.pipeline_mode<synchronous>, transform_indices = @transform_11, window_bounds = array<i64: 2, 1, 64>}, {pipeline_mode = #tpu.pipeline_mode<synchronous>, transform_indices = @transform_12, window_bounds = array<i64: 2, 64, 128>}, {pipeline_mode = #tpu.pipeline_mode<synchronous>, transform_indices = @transform_13, window_bounds = array<i64: 2, 1, 128>}, {pipeline_mode = #tpu.pipeline_mode<synchronous>, transform_indices = @transform_14, window_bounds = array<i64: 2, 128, 64>}, {pipeline_mode = #tpu.pipeline_mode<synchronous>, transform_indices = @transform_15, window_bounds = array<i64: 2, 1, 64>}, {pipeline_mode = #tpu.pipeline_mode<synchronous>, transform_indices = @transform_16, window_bounds = array<i64: 1, 64>}, {pipeline_mode = #tpu.pipeline_mode<synchronous>, transform_indices = @transform_17, window_bounds = array<i64: 1, 64>}, {pipeline_mode = #tpu.pipeline_mode<synchronous>, transform_indices = @transform_18, window_bounds = array<i64: 1, 64>}, {pipeline_mode = #tpu.pipeline_mode<synchronous>, transform_indices = @transform_19, window_bounds = array<i64: 1, 64>}, {pipeline_mode = #tpu.pipeline_mode<synchronous>, transform_indices = @transform_20, window_bounds = array<i64: 64, 11>}, {pipeline_mode = #tpu.pipeline_mode<synchronous>, transform_indices = @transform_21, window_bounds = array<i64: 1, 11>}, {transform_indices = @transform_22, window_bounds = array<i64: 1, 16, 11>}, {transform_indices = @transform_23, window_bounds = array<i64: 1, 16, 64>}]} {
    %c0 = arith.constant 0 : index
    %c0_0 = arith.constant 0 : index
    %c0_1 = arith.constant 0 : index
    %0 = vector.load %arg1[%c0, %c0_0, %c0_1] : memref<1x16x84xf32, #tpu.memory_space<vmem>>, vector<1x16x84xf32>
    %1 = vector.shape_cast %0 : vector<1x16x84xf32> to vector<16x84xf32>
    %c0_2 = arith.constant 0 : index
    %c0_3 = arith.constant 0 : index
    %2 = vector.load %arg2[%c0_2, %c0_3] : memref<84x64xf32, #tpu.memory_space<vmem>>, vector<84x64xf32>
    %cst = arith.constant dense<0.000000e+00> : vector<16x64xf32>
    %3 = tpu.matmul %1, %2, %cst {dimension_numbers = #tpu.dot_dimension_numbers<[1], [0], [0], [1], [0, 0, 1, 1], [], []>} : vector<16x84xf32>, vector<84x64xf32>, vector<16x64xf32> -> vector<16x64xf32>
    %c0_4 = arith.constant 0 : index
    %c0_5 = arith.constant 0 : index
    %4 = vector.load %arg3[%c0_4, %c0_5] : memref<1x64xf32, #tpu.memory_space<vmem>>, vector<1x64xf32>
    %5 = vector.broadcast %4 : vector<1x64xf32> to vector<16x64xf32>
    %6 = arith.addf %3, %5 : vector<16x64xf32>
    %c0_6 = arith.constant 0 : index
    %c0_7 = arith.constant 0 : index
    %7 = vector.load %arg4[%c0_6, %c0_7] : memref<16x64xf32, #tpu.memory_space<vmem>>, vector<16x64xf32>
    %8 = arith.addf %6, %7 : vector<16x64xf32>
    %c0_8 = arith.constant 0 : index
    %c0_9 = arith.constant 0 : index
    %c0_10 = arith.constant 0 : index
    %9 = vector.load %arg5[%c0_8, %c0_9, %c0_10] : memref<2x1x64xf32, #tpu.memory_space<vmem>>, vector<1x1x64xf32>
    %10 = vector.shape_cast %9 : vector<1x1x64xf32> to vector<1x64xf32>
    %c0_11 = arith.constant 0 : index
    %c0_12 = arith.constant 0 : index
    %c0_13 = arith.constant 0 : index
    %11 = vector.load %arg6[%c0_11, %c0_12, %c0_13] : memref<2x1x64xf32, #tpu.memory_space<vmem>>, vector<1x1x64xf32>
    %12 = vector.shape_cast %11 : vector<1x1x64xf32> to vector<1x64xf32>
    %cst_14 = arith.constant dense<0.000000e+00> : vector<16xf32>
    %13 = vector.multi_reduction <add>, %8, %cst_14 [1] : vector<16x64xf32> to vector<16xf32>
    %14 = vector.shape_cast %13 : vector<16xf32> to vector<16x1xf32>
    %cst_15 = arith.constant 6.400000e+01 : f32
    %15 = vector.broadcast %cst_15 : f32 to vector<16x1xf32>
    %16 = arith.divf %14, %15 : vector<16x1xf32>
    %17 = vector.broadcast %16 : vector<16x1xf32> to vector<16x64xf32>
    %18 = arith.subf %8, %17 : vector<16x64xf32>
    %19 = arith.mulf %18, %18 : vector<16x64xf32>
    %cst_16 = arith.constant dense<0.000000e+00> : vector<16xf32>
    %20 = vector.multi_reduction <add>, %19, %cst_16 [1] : vector<16x64xf32> to vector<16xf32>
    %21 = vector.shape_cast %20 : vector<16xf32> to vector<16x1xf32>
    %cst_17 = arith.constant 6.400000e+01 : f32
    %22 = vector.broadcast %cst_17 : f32 to vector<16x1xf32>
    %23 = arith.divf %21, %22 : vector<16x1xf32>
    %cst_18 = arith.constant 9.99999974E-6 : f32
    %24 = vector.broadcast %cst_18 : f32 to vector<16x1xf32>
    %25 = arith.addf %23, %24 : vector<16x1xf32>
    %26 = math.rsqrt %25 : vector<16x1xf32>
    %27 = vector.broadcast %26 : vector<16x1xf32> to vector<16x64xf32>
    %28 = arith.mulf %18, %27 : vector<16x64xf32>
    %29 = vector.broadcast %10 : vector<1x64xf32> to vector<16x64xf32>
    %30 = arith.mulf %28, %29 : vector<16x64xf32>
    %31 = vector.broadcast %12 : vector<1x64xf32> to vector<16x64xf32>
    %32 = arith.addf %30, %31 : vector<16x64xf32>
    %c0_19 = arith.constant 0 : index
    %c0_20 = arith.constant 0 : index
    %c0_21 = arith.constant 0 : index
    %c0_22 = arith.constant 0 : index
    %33 = vector.load %arg7[%c0_19, %c0_20, %c0_21, %c0_22] : memref<2x4x64x16xf32, #tpu.memory_space<vmem>>, vector<1x1x64x16xf32>
    %34 = vector.shape_cast %33 : vector<1x1x64x16xf32> to vector<64x16xf32>
    %cst_23 = arith.constant dense<0.000000e+00> : vector<16x16xf32>
    %35 = tpu.matmul %32, %34, %cst_23 {dimension_numbers = #tpu.dot_dimension_numbers<[1], [0], [0], [1], [0, 0, 1, 1], [], []>} : vector<16x64xf32>, vector<64x16xf32>, vector<16x16xf32> -> vector<16x16xf32>
    %c0_24 = arith.constant 0 : index
    %c0_25 = arith.constant 0 : index
    %c0_26 = arith.constant 0 : index
    %c0_27 = arith.constant 0 : index
    %36 = vector.load %arg8[%c0_24, %c0_25, %c0_26, %c0_27] : memref<2x4x64x16xf32, #tpu.memory_space<vmem>>, vector<1x1x64x16xf32>
    %37 = vector.shape_cast %36 : vector<1x1x64x16xf32> to vector<64x16xf32>
    %cst_28 = arith.constant dense<0.000000e+00> : vector<16x16xf32>
    %38 = tpu.matmul %32, %37, %cst_28 {dimension_numbers = #tpu.dot_dimension_numbers<[1], [0], [0], [1], [0, 0, 1, 1], [], []>} : vector<16x64xf32>, vector<64x16xf32>, vector<16x16xf32> -> vector<16x16xf32>
    %c0_29 = arith.constant 0 : index
    %c0_30 = arith.constant 0 : index
    %c0_31 = arith.constant 0 : index
    %c0_32 = arith.constant 0 : index
    %39 = vector.load %arg9[%c0_29, %c0_30, %c0_31, %c0_32] : memref<2x4x64x16xf32, #tpu.memory_space<vmem>>, vector<1x1x64x16xf32>
    %40 = vector.shape_cast %39 : vector<1x1x64x16xf32> to vector<64x16xf32>
    %cst_33 = arith.constant dense<0.000000e+00> : vector<16x16xf32>
    %41 = tpu.matmul %32, %40, %cst_33 {dimension_numbers = #tpu.dot_dimension_numbers<[1], [0], [0], [1], [0, 0, 1, 1], [], []>} : vector<16x64xf32>, vector<64x16xf32>, vector<16x16xf32> -> vector<16x16xf32>
    %cst_34 = arith.constant dense<0.000000e+00> : vector<16x16xf32>
    %42 = tpu.matmul %35, %38, %cst_34 {dimension_numbers = #tpu.dot_dimension_numbers<[1], [1], [0], [0], [0, 0, 1, 0], [], []>} : vector<16x16xf32>, vector<16x16xf32>, vector<16x16xf32> -> vector<16x16xf32>
    %cst_35 = arith.constant 2.500000e-01 : f32
    %43 = vector.broadcast %cst_35 : f32 to vector<16x16xf32>
    %44 = arith.mulf %42, %43 : vector<16x16xf32>
    %cst_36 = arith.constant dense<0xFF800000> : vector<16xf32>
    %45 = vector.multi_reduction <maximumf>, %44, %cst_36 [1] : vector<16x16xf32> to vector<16xf32>
    %46 = vector.shape_cast %45 : vector<16xf32> to vector<16x1xf32>
    %47 = vector.broadcast %46 : vector<16x1xf32> to vector<16x16xf32>
    %48 = arith.subf %44, %47 : vector<16x16xf32>
    %49 = math.exp %48 : vector<16x16xf32>
    %cst_37 = arith.constant dense<0.000000e+00> : vector<16xf32>
    %50 = vector.multi_reduction <add>, %49, %cst_37 [1] : vector<16x16xf32> to vector<16xf32>
    %51 = vector.shape_cast %50 : vector<16xf32> to vector<16x1xf32>
    %52 = vector.broadcast %51 : vector<16x1xf32> to vector<16x16xf32>
    %53 = arith.divf %49, %52 : vector<16x16xf32>
    %cst_38 = arith.constant dense<0.000000e+00> : vector<16x16xf32>
    %54 = tpu.matmul %53, %41, %cst_38 {dimension_numbers = #tpu.dot_dimension_numbers<[1], [0], [0], [1], [0, 0, 1, 1], [], []>} : vector<16x16xf32>, vector<16x16xf32>, vector<16x16xf32> -> vector<16x16xf32>
    %c0_39 = arith.constant 0 : index
    %c0_40 = arith.constant 0 : index
    %c0_41 = arith.constant 0 : index
    %c0_42 = arith.constant 0 : index
    %55 = vector.load %arg10[%c0_39, %c0_40, %c0_41, %c0_42] : memref<2x4x16x64xf32, #tpu.memory_space<vmem>>, vector<1x1x16x64xf32>
    %56 = vector.shape_cast %55 : vector<1x1x16x64xf32> to vector<16x64xf32>
    %cst_43 = arith.constant dense<0.000000e+00> : vector<16x64xf32>
    %57 = tpu.matmul %54, %56, %cst_43 {dimension_numbers = #tpu.dot_dimension_numbers<[1], [0], [0], [1], [0, 0, 1, 1], [], []>} : vector<16x16xf32>, vector<16x64xf32>, vector<16x64xf32> -> vector<16x64xf32>
    %c0_44 = arith.constant 0 : index
    %c1 = arith.constant 1 : index
    %c0_45 = arith.constant 0 : index
    %c0_46 = arith.constant 0 : index
    %58 = vector.load %arg7[%c0_44, %c1, %c0_45, %c0_46] : memref<2x4x64x16xf32, #tpu.memory_space<vmem>>, vector<1x1x64x16xf32>
    %59 = vector.shape_cast %58 : vector<1x1x64x16xf32> to vector<64x16xf32>
    %cst_47 = arith.constant dense<0.000000e+00> : vector<16x16xf32>
    %60 = tpu.matmul %32, %59, %cst_47 {dimension_numbers = #tpu.dot_dimension_numbers<[1], [0], [0], [1], [0, 0, 1, 1], [], []>} : vector<16x64xf32>, vector<64x16xf32>, vector<16x16xf32> -> vector<16x16xf32>
    %c0_48 = arith.constant 0 : index
    %c1_49 = arith.constant 1 : index
    %c0_50 = arith.constant 0 : index
    %c0_51 = arith.constant 0 : index
    %61 = vector.load %arg8[%c0_48, %c1_49, %c0_50, %c0_51] : memref<2x4x64x16xf32, #tpu.memory_space<vmem>>, vector<1x1x64x16xf32>
    %62 = vector.shape_cast %61 : vector<1x1x64x16xf32> to vector<64x16xf32>
    %cst_52 = arith.constant dense<0.000000e+00> : vector<16x16xf32>
    %63 = tpu.matmul %32, %62, %cst_52 {dimension_numbers = #tpu.dot_dimension_numbers<[1], [0], [0], [1], [0, 0, 1, 1], [], []>} : vector<16x64xf32>, vector<64x16xf32>, vector<16x16xf32> -> vector<16x16xf32>
    %c0_53 = arith.constant 0 : index
    %c1_54 = arith.constant 1 : index
    %c0_55 = arith.constant 0 : index
    %c0_56 = arith.constant 0 : index
    %64 = vector.load %arg9[%c0_53, %c1_54, %c0_55, %c0_56] : memref<2x4x64x16xf32, #tpu.memory_space<vmem>>, vector<1x1x64x16xf32>
    %65 = vector.shape_cast %64 : vector<1x1x64x16xf32> to vector<64x16xf32>
    %cst_57 = arith.constant dense<0.000000e+00> : vector<16x16xf32>
    %66 = tpu.matmul %32, %65, %cst_57 {dimension_numbers = #tpu.dot_dimension_numbers<[1], [0], [0], [1], [0, 0, 1, 1], [], []>} : vector<16x64xf32>, vector<64x16xf32>, vector<16x16xf32> -> vector<16x16xf32>
    %cst_58 = arith.constant dense<0.000000e+00> : vector<16x16xf32>
    %67 = tpu.matmul %60, %63, %cst_58 {dimension_numbers = #tpu.dot_dimension_numbers<[1], [1], [0], [0], [0, 0, 1, 0], [], []>} : vector<16x16xf32>, vector<16x16xf32>, vector<16x16xf32> -> vector<16x16xf32>
    %cst_59 = arith.constant 2.500000e-01 : f32
    %68 = vector.broadcast %cst_59 : f32 to vector<16x16xf32>
    %69 = arith.mulf %67, %68 : vector<16x16xf32>
    %cst_60 = arith.constant dense<0xFF800000> : vector<16xf32>
    %70 = vector.multi_reduction <maximumf>, %69, %cst_60 [1] : vector<16x16xf32> to vector<16xf32>
    %71 = vector.shape_cast %70 : vector<16xf32> to vector<16x1xf32>
    %72 = vector.broadcast %71 : vector<16x1xf32> to vector<16x16xf32>
    %73 = arith.subf %69, %72 : vector<16x16xf32>
    %74 = math.exp %73 : vector<16x16xf32>
    %cst_61 = arith.constant dense<0.000000e+00> : vector<16xf32>
    %75 = vector.multi_reduction <add>, %74, %cst_61 [1] : vector<16x16xf32> to vector<16xf32>
    %76 = vector.shape_cast %75 : vector<16xf32> to vector<16x1xf32>
    %77 = vector.broadcast %76 : vector<16x1xf32> to vector<16x16xf32>
    %78 = arith.divf %74, %77 : vector<16x16xf32>
    %cst_62 = arith.constant dense<0.000000e+00> : vector<16x16xf32>
    %79 = tpu.matmul %78, %66, %cst_62 {dimension_numbers = #tpu.dot_dimension_numbers<[1], [0], [0], [1], [0, 0, 1, 1], [], []>} : vector<16x16xf32>, vector<16x16xf32>, vector<16x16xf32> -> vector<16x16xf32>
    %c0_63 = arith.constant 0 : index
    %c1_64 = arith.constant 1 : index
    %c0_65 = arith.constant 0 : index
    %c0_66 = arith.constant 0 : index
    %80 = vector.load %arg10[%c0_63, %c1_64, %c0_65, %c0_66] : memref<2x4x16x64xf32, #tpu.memory_space<vmem>>, vector<1x1x16x64xf32>
    %81 = vector.shape_cast %80 : vector<1x1x16x64xf32> to vector<16x64xf32>
    %cst_67 = arith.constant dense<0.000000e+00> : vector<16x64xf32>
    %82 = tpu.matmul %79, %81, %cst_67 {dimension_numbers = #tpu.dot_dimension_numbers<[1], [0], [0], [1], [0, 0, 1, 1], [], []>} : vector<16x16xf32>, vector<16x64xf32>, vector<16x64xf32> -> vector<16x64xf32>
    %83 = arith.addf %57, %82 : vector<16x64xf32>
    %c0_68 = arith.constant 0 : index
    %c2 = arith.constant 2 : index
    %c0_69 = arith.constant 0 : index
    %c0_70 = arith.constant 0 : index
    %84 = vector.load %arg7[%c0_68, %c2, %c0_69, %c0_70] : memref<2x4x64x16xf32, #tpu.memory_space<vmem>>, vector<1x1x64x16xf32>
    %85 = vector.shape_cast %84 : vector<1x1x64x16xf32> to vector<64x16xf32>
    %cst_71 = arith.constant dense<0.000000e+00> : vector<16x16xf32>
    %86 = tpu.matmul %32, %85, %cst_71 {dimension_numbers = #tpu.dot_dimension_numbers<[1], [0], [0], [1], [0, 0, 1, 1], [], []>} : vector<16x64xf32>, vector<64x16xf32>, vector<16x16xf32> -> vector<16x16xf32>
    %c0_72 = arith.constant 0 : index
    %c2_73 = arith.constant 2 : index
    %c0_74 = arith.constant 0 : index
    %c0_75 = arith.constant 0 : index
    %87 = vector.load %arg8[%c0_72, %c2_73, %c0_74, %c0_75] : memref<2x4x64x16xf32, #tpu.memory_space<vmem>>, vector<1x1x64x16xf32>
    %88 = vector.shape_cast %87 : vector<1x1x64x16xf32> to vector<64x16xf32>
    %cst_76 = arith.constant dense<0.000000e+00> : vector<16x16xf32>
    %89 = tpu.matmul %32, %88, %cst_76 {dimension_numbers = #tpu.dot_dimension_numbers<[1], [0], [0], [1], [0, 0, 1, 1], [], []>} : vector<16x64xf32>, vector<64x16xf32>, vector<16x16xf32> -> vector<16x16xf32>
    %c0_77 = arith.constant 0 : index
    %c2_78 = arith.constant 2 : index
    %c0_79 = arith.constant 0 : index
    %c0_80 = arith.constant 0 : index
    %90 = vector.load %arg9[%c0_77, %c2_78, %c0_79, %c0_80] : memref<2x4x64x16xf32, #tpu.memory_space<vmem>>, vector<1x1x64x16xf32>
    %91 = vector.shape_cast %90 : vector<1x1x64x16xf32> to vector<64x16xf32>
    %cst_81 = arith.constant dense<0.000000e+00> : vector<16x16xf32>
    %92 = tpu.matmul %32, %91, %cst_81 {dimension_numbers = #tpu.dot_dimension_numbers<[1], [0], [0], [1], [0, 0, 1, 1], [], []>} : vector<16x64xf32>, vector<64x16xf32>, vector<16x16xf32> -> vector<16x16xf32>
    %cst_82 = arith.constant dense<0.000000e+00> : vector<16x16xf32>
    %93 = tpu.matmul %86, %89, %cst_82 {dimension_numbers = #tpu.dot_dimension_numbers<[1], [1], [0], [0], [0, 0, 1, 0], [], []>} : vector<16x16xf32>, vector<16x16xf32>, vector<16x16xf32> -> vector<16x16xf32>
    %cst_83 = arith.constant 2.500000e-01 : f32
    %94 = vector.broadcast %cst_83 : f32 to vector<16x16xf32>
    %95 = arith.mulf %93, %94 : vector<16x16xf32>
    %cst_84 = arith.constant dense<0xFF800000> : vector<16xf32>
    %96 = vector.multi_reduction <maximumf>, %95, %cst_84 [1] : vector<16x16xf32> to vector<16xf32>
    %97 = vector.shape_cast %96 : vector<16xf32> to vector<16x1xf32>
    %98 = vector.broadcast %97 : vector<16x1xf32> to vector<16x16xf32>
    %99 = arith.subf %95, %98 : vector<16x16xf32>
    %100 = math.exp %99 : vector<16x16xf32>
    %cst_85 = arith.constant dense<0.000000e+00> : vector<16xf32>
    %101 = vector.multi_reduction <add>, %100, %cst_85 [1] : vector<16x16xf32> to vector<16xf32>
    %102 = vector.shape_cast %101 : vector<16xf32> to vector<16x1xf32>
    %103 = vector.broadcast %102 : vector<16x1xf32> to vector<16x16xf32>
    %104 = arith.divf %100, %103 : vector<16x16xf32>
    %cst_86 = arith.constant dense<0.000000e+00> : vector<16x16xf32>
    %105 = tpu.matmul %104, %92, %cst_86 {dimension_numbers = #tpu.dot_dimension_numbers<[1], [0], [0], [1], [0, 0, 1, 1], [], []>} : vector<16x16xf32>, vector<16x16xf32>, vector<16x16xf32> -> vector<16x16xf32>
    %c0_87 = arith.constant 0 : index
    %c2_88 = arith.constant 2 : index
    %c0_89 = arith.constant 0 : index
    %c0_90 = arith.constant 0 : index
    %106 = vector.load %arg10[%c0_87, %c2_88, %c0_89, %c0_90] : memref<2x4x16x64xf32, #tpu.memory_space<vmem>>, vector<1x1x16x64xf32>
    %107 = vector.shape_cast %106 : vector<1x1x16x64xf32> to vector<16x64xf32>
    %cst_91 = arith.constant dense<0.000000e+00> : vector<16x64xf32>
    %108 = tpu.matmul %105, %107, %cst_91 {dimension_numbers = #tpu.dot_dimension_numbers<[1], [0], [0], [1], [0, 0, 1, 1], [], []>} : vector<16x16xf32>, vector<16x64xf32>, vector<16x64xf32> -> vector<16x64xf32>
    %109 = arith.addf %83, %108 : vector<16x64xf32>
    %c0_92 = arith.constant 0 : index
    %c3 = arith.constant 3 : index
    %c0_93 = arith.constant 0 : index
    %c0_94 = arith.constant 0 : index
    %110 = vector.load %arg7[%c0_92, %c3, %c0_93, %c0_94] : memref<2x4x64x16xf32, #tpu.memory_space<vmem>>, vector<1x1x64x16xf32>
    %111 = vector.shape_cast %110 : vector<1x1x64x16xf32> to vector<64x16xf32>
    %cst_95 = arith.constant dense<0.000000e+00> : vector<16x16xf32>
    %112 = tpu.matmul %32, %111, %cst_95 {dimension_numbers = #tpu.dot_dimension_numbers<[1], [0], [0], [1], [0, 0, 1, 1], [], []>} : vector<16x64xf32>, vector<64x16xf32>, vector<16x16xf32> -> vector<16x16xf32>
    %c0_96 = arith.constant 0 : index
    %c3_97 = arith.constant 3 : index
    %c0_98 = arith.constant 0 : index
    %c0_99 = arith.constant 0 : index
    %113 = vector.load %arg8[%c0_96, %c3_97, %c0_98, %c0_99] : memref<2x4x64x16xf32, #tpu.memory_space<vmem>>, vector<1x1x64x16xf32>
    %114 = vector.shape_cast %113 : vector<1x1x64x16xf32> to vector<64x16xf32>
    %cst_100 = arith.constant dense<0.000000e+00> : vector<16x16xf32>
    %115 = tpu.matmul %32, %114, %cst_100 {dimension_numbers = #tpu.dot_dimension_numbers<[1], [0], [0], [1], [0, 0, 1, 1], [], []>} : vector<16x64xf32>, vector<64x16xf32>, vector<16x16xf32> -> vector<16x16xf32>
    %c0_101 = arith.constant 0 : index
    %c3_102 = arith.constant 3 : index
    %c0_103 = arith.constant 0 : index
    %c0_104 = arith.constant 0 : index
    %116 = vector.load %arg9[%c0_101, %c3_102, %c0_103, %c0_104] : memref<2x4x64x16xf32, #tpu.memory_space<vmem>>, vector<1x1x64x16xf32>
    %117 = vector.shape_cast %116 : vector<1x1x64x16xf32> to vector<64x16xf32>
    %cst_105 = arith.constant dense<0.000000e+00> : vector<16x16xf32>
    %118 = tpu.matmul %32, %117, %cst_105 {dimension_numbers = #tpu.dot_dimension_numbers<[1], [0], [0], [1], [0, 0, 1, 1], [], []>} : vector<16x64xf32>, vector<64x16xf32>, vector<16x16xf32> -> vector<16x16xf32>
    %cst_106 = arith.constant dense<0.000000e+00> : vector<16x16xf32>
    %119 = tpu.matmul %112, %115, %cst_106 {dimension_numbers = #tpu.dot_dimension_numbers<[1], [1], [0], [0], [0, 0, 1, 0], [], []>} : vector<16x16xf32>, vector<16x16xf32>, vector<16x16xf32> -> vector<16x16xf32>
    %cst_107 = arith.constant 2.500000e-01 : f32
    %120 = vector.broadcast %cst_107 : f32 to vector<16x16xf32>
    %121 = arith.mulf %119, %120 : vector<16x16xf32>
    %cst_108 = arith.constant dense<0xFF800000> : vector<16xf32>
    %122 = vector.multi_reduction <maximumf>, %121, %cst_108 [1] : vector<16x16xf32> to vector<16xf32>
    %123 = vector.shape_cast %122 : vector<16xf32> to vector<16x1xf32>
    %124 = vector.broadcast %123 : vector<16x1xf32> to vector<16x16xf32>
    %125 = arith.subf %121, %124 : vector<16x16xf32>
    %126 = math.exp %125 : vector<16x16xf32>
    %cst_109 = arith.constant dense<0.000000e+00> : vector<16xf32>
    %127 = vector.multi_reduction <add>, %126, %cst_109 [1] : vector<16x16xf32> to vector<16xf32>
    %128 = vector.shape_cast %127 : vector<16xf32> to vector<16x1xf32>
    %129 = vector.broadcast %128 : vector<16x1xf32> to vector<16x16xf32>
    %130 = arith.divf %126, %129 : vector<16x16xf32>
    %cst_110 = arith.constant dense<0.000000e+00> : vector<16x16xf32>
    %131 = tpu.matmul %130, %118, %cst_110 {dimension_numbers = #tpu.dot_dimension_numbers<[1], [0], [0], [1], [0, 0, 1, 1], [], []>} : vector<16x16xf32>, vector<16x16xf32>, vector<16x16xf32> -> vector<16x16xf32>
    %c0_111 = arith.constant 0 : index
    %c3_112 = arith.constant 3 : index
    %c0_113 = arith.constant 0 : index
    %c0_114 = arith.constant 0 : index
    %132 = vector.load %arg10[%c0_111, %c3_112, %c0_113, %c0_114] : memref<2x4x16x64xf32, #tpu.memory_space<vmem>>, vector<1x1x16x64xf32>
    %133 = vector.shape_cast %132 : vector<1x1x16x64xf32> to vector<16x64xf32>
    %cst_115 = arith.constant dense<0.000000e+00> : vector<16x64xf32>
    %134 = tpu.matmul %131, %133, %cst_115 {dimension_numbers = #tpu.dot_dimension_numbers<[1], [0], [0], [1], [0, 0, 1, 1], [], []>} : vector<16x16xf32>, vector<16x64xf32>, vector<16x64xf32> -> vector<16x64xf32>
    %135 = arith.addf %109, %134 : vector<16x64xf32>
    %136 = arith.addf %8, %135 : vector<16x64xf32>
    %c0_116 = arith.constant 0 : index
    %c0_117 = arith.constant 0 : index
    %c0_118 = arith.constant 0 : index
    %137 = vector.load %arg11[%c0_116, %c0_117, %c0_118] : memref<2x1x64xf32, #tpu.memory_space<vmem>>, vector<1x1x64xf32>
    %138 = vector.shape_cast %137 : vector<1x1x64xf32> to vector<1x64xf32>
    %c0_119 = arith.constant 0 : index
    %c0_120 = arith.constant 0 : index
    %c0_121 = arith.constant 0 : index
    %139 = vector.load %arg12[%c0_119, %c0_120, %c0_121] : memref<2x1x64xf32, #tpu.memory_space<vmem>>, vector<1x1x64xf32>
    %140 = vector.shape_cast %139 : vector<1x1x64xf32> to vector<1x64xf32>
    %cst_122 = arith.constant dense<0.000000e+00> : vector<16xf32>
    %141 = vector.multi_reduction <add>, %136, %cst_122 [1] : vector<16x64xf32> to vector<16xf32>
    %142 = vector.shape_cast %141 : vector<16xf32> to vector<16x1xf32>
    %cst_123 = arith.constant 6.400000e+01 : f32
    %143 = vector.broadcast %cst_123 : f32 to vector<16x1xf32>
    %144 = arith.divf %142, %143 : vector<16x1xf32>
    %145 = vector.broadcast %144 : vector<16x1xf32> to vector<16x64xf32>
    %146 = arith.subf %136, %145 : vector<16x64xf32>
    %147 = arith.mulf %146, %146 : vector<16x64xf32>
    %cst_124 = arith.constant dense<0.000000e+00> : vector<16xf32>
    %148 = vector.multi_reduction <add>, %147, %cst_124 [1] : vector<16x64xf32> to vector<16xf32>
    %149 = vector.shape_cast %148 : vector<16xf32> to vector<16x1xf32>
    %cst_125 = arith.constant 6.400000e+01 : f32
    %150 = vector.broadcast %cst_125 : f32 to vector<16x1xf32>
    %151 = arith.divf %149, %150 : vector<16x1xf32>
    %cst_126 = arith.constant 9.99999974E-6 : f32
    %152 = vector.broadcast %cst_126 : f32 to vector<16x1xf32>
    %153 = arith.addf %151, %152 : vector<16x1xf32>
    %154 = math.rsqrt %153 : vector<16x1xf32>
    %155 = vector.broadcast %154 : vector<16x1xf32> to vector<16x64xf32>
    %156 = arith.mulf %146, %155 : vector<16x64xf32>
    %157 = vector.broadcast %138 : vector<1x64xf32> to vector<16x64xf32>
    %158 = arith.mulf %156, %157 : vector<16x64xf32>
    %159 = vector.broadcast %140 : vector<1x64xf32> to vector<16x64xf32>
    %160 = arith.addf %158, %159 : vector<16x64xf32>
    %c0_127 = arith.constant 0 : index
    %c0_128 = arith.constant 0 : index
    %c0_129 = arith.constant 0 : index
    %161 = vector.load %arg13[%c0_127, %c0_128, %c0_129] : memref<2x64x128xf32, #tpu.memory_space<vmem>>, vector<1x64x128xf32>
    %162 = vector.shape_cast %161 : vector<1x64x128xf32> to vector<64x128xf32>
    %cst_130 = arith.constant dense<0.000000e+00> : vector<16x128xf32>
    %163 = tpu.matmul %160, %162, %cst_130 {dimension_numbers = #tpu.dot_dimension_numbers<[1], [0], [0], [1], [0, 0, 1, 1], [], []>} : vector<16x64xf32>, vector<64x128xf32>, vector<16x128xf32> -> vector<16x128xf32>
    %c0_131 = arith.constant 0 : index
    %c0_132 = arith.constant 0 : index
    %c0_133 = arith.constant 0 : index
    %164 = vector.load %arg14[%c0_131, %c0_132, %c0_133] : memref<2x1x128xf32, #tpu.memory_space<vmem>>, vector<1x1x128xf32>
    %165 = vector.shape_cast %164 : vector<1x1x128xf32> to vector<1x128xf32>
    %166 = vector.broadcast %165 : vector<1x128xf32> to vector<16x128xf32>
    %167 = arith.addf %163, %166 : vector<16x128xf32>
    %cst_134 = arith.constant 5.000000e-01 : f32
    %168 = vector.broadcast %cst_134 : f32 to vector<16x128xf32>
    %169 = arith.mulf %168, %167 : vector<16x128xf32>
    %cst_135 = arith.constant 4.471500e-02 : f32
    %170 = vector.broadcast %cst_135 : f32 to vector<16x128xf32>
    %171 = arith.mulf %170, %167 : vector<16x128xf32>
    %172 = arith.mulf %171, %167 : vector<16x128xf32>
    %173 = arith.mulf %172, %167 : vector<16x128xf32>
    %174 = arith.addf %167, %173 : vector<16x128xf32>
    %cst_136 = arith.constant 0.797884583 : f32
    %175 = vector.broadcast %cst_136 : f32 to vector<16x128xf32>
    %176 = arith.mulf %175, %174 : vector<16x128xf32>
    %177 = math.tanh %176 : vector<16x128xf32>
    %cst_137 = arith.constant 1.000000e+00 : f32
    %178 = vector.broadcast %cst_137 : f32 to vector<16x128xf32>
    %179 = arith.addf %178, %177 : vector<16x128xf32>
    %180 = arith.mulf %169, %179 : vector<16x128xf32>
    %c0_138 = arith.constant 0 : index
    %c0_139 = arith.constant 0 : index
    %c0_140 = arith.constant 0 : index
    %181 = vector.load %arg15[%c0_138, %c0_139, %c0_140] : memref<2x128x64xf32, #tpu.memory_space<vmem>>, vector<1x128x64xf32>
    %182 = vector.shape_cast %181 : vector<1x128x64xf32> to vector<128x64xf32>
    %cst_141 = arith.constant dense<0.000000e+00> : vector<16x64xf32>
    %183 = tpu.matmul %180, %182, %cst_141 {dimension_numbers = #tpu.dot_dimension_numbers<[1], [0], [0], [1], [0, 0, 1, 1], [], []>} : vector<16x128xf32>, vector<128x64xf32>, vector<16x64xf32> -> vector<16x64xf32>
    %184 = arith.addf %136, %183 : vector<16x64xf32>
    %c0_142 = arith.constant 0 : index
    %c0_143 = arith.constant 0 : index
    %c0_144 = arith.constant 0 : index
    %185 = vector.load %arg16[%c0_142, %c0_143, %c0_144] : memref<2x1x64xf32, #tpu.memory_space<vmem>>, vector<1x1x64xf32>
    %186 = vector.shape_cast %185 : vector<1x1x64xf32> to vector<1x64xf32>
    %187 = vector.broadcast %186 : vector<1x64xf32> to vector<16x64xf32>
    %188 = arith.addf %184, %187 : vector<16x64xf32>
    %c1_145 = arith.constant 1 : index
    %c0_146 = arith.constant 0 : index
    %c0_147 = arith.constant 0 : index
    %189 = vector.load %arg5[%c1_145, %c0_146, %c0_147] : memref<2x1x64xf32, #tpu.memory_space<vmem>>, vector<1x1x64xf32>
    %190 = vector.shape_cast %189 : vector<1x1x64xf32> to vector<1x64xf32>
    %c1_148 = arith.constant 1 : index
    %c0_149 = arith.constant 0 : index
    %c0_150 = arith.constant 0 : index
    %191 = vector.load %arg6[%c1_148, %c0_149, %c0_150] : memref<2x1x64xf32, #tpu.memory_space<vmem>>, vector<1x1x64xf32>
    %192 = vector.shape_cast %191 : vector<1x1x64xf32> to vector<1x64xf32>
    %cst_151 = arith.constant dense<0.000000e+00> : vector<16xf32>
    %193 = vector.multi_reduction <add>, %188, %cst_151 [1] : vector<16x64xf32> to vector<16xf32>
    %194 = vector.shape_cast %193 : vector<16xf32> to vector<16x1xf32>
    %cst_152 = arith.constant 6.400000e+01 : f32
    %195 = vector.broadcast %cst_152 : f32 to vector<16x1xf32>
    %196 = arith.divf %194, %195 : vector<16x1xf32>
    %197 = vector.broadcast %196 : vector<16x1xf32> to vector<16x64xf32>
    %198 = arith.subf %188, %197 : vector<16x64xf32>
    %199 = arith.mulf %198, %198 : vector<16x64xf32>
    %cst_153 = arith.constant dense<0.000000e+00> : vector<16xf32>
    %200 = vector.multi_reduction <add>, %199, %cst_153 [1] : vector<16x64xf32> to vector<16xf32>
    %201 = vector.shape_cast %200 : vector<16xf32> to vector<16x1xf32>
    %cst_154 = arith.constant 6.400000e+01 : f32
    %202 = vector.broadcast %cst_154 : f32 to vector<16x1xf32>
    %203 = arith.divf %201, %202 : vector<16x1xf32>
    %cst_155 = arith.constant 9.99999974E-6 : f32
    %204 = vector.broadcast %cst_155 : f32 to vector<16x1xf32>
    %205 = arith.addf %203, %204 : vector<16x1xf32>
    %206 = math.rsqrt %205 : vector<16x1xf32>
    %207 = vector.broadcast %206 : vector<16x1xf32> to vector<16x64xf32>
    %208 = arith.mulf %198, %207 : vector<16x64xf32>
    %209 = vector.broadcast %190 : vector<1x64xf32> to vector<16x64xf32>
    %210 = arith.mulf %208, %209 : vector<16x64xf32>
    %211 = vector.broadcast %192 : vector<1x64xf32> to vector<16x64xf32>
    %212 = arith.addf %210, %211 : vector<16x64xf32>
    %c1_156 = arith.constant 1 : index
    %c0_157 = arith.constant 0 : index
    %c0_158 = arith.constant 0 : index
    %c0_159 = arith.constant 0 : index
    %213 = vector.load %arg7[%c1_156, %c0_157, %c0_158, %c0_159] : memref<2x4x64x16xf32, #tpu.memory_space<vmem>>, vector<1x1x64x16xf32>
    %214 = vector.shape_cast %213 : vector<1x1x64x16xf32> to vector<64x16xf32>
    %cst_160 = arith.constant dense<0.000000e+00> : vector<16x16xf32>
    %215 = tpu.matmul %212, %214, %cst_160 {dimension_numbers = #tpu.dot_dimension_numbers<[1], [0], [0], [1], [0, 0, 1, 1], [], []>} : vector<16x64xf32>, vector<64x16xf32>, vector<16x16xf32> -> vector<16x16xf32>
    %c1_161 = arith.constant 1 : index
    %c0_162 = arith.constant 0 : index
    %c0_163 = arith.constant 0 : index
    %c0_164 = arith.constant 0 : index
    %216 = vector.load %arg8[%c1_161, %c0_162, %c0_163, %c0_164] : memref<2x4x64x16xf32, #tpu.memory_space<vmem>>, vector<1x1x64x16xf32>
    %217 = vector.shape_cast %216 : vector<1x1x64x16xf32> to vector<64x16xf32>
    %cst_165 = arith.constant dense<0.000000e+00> : vector<16x16xf32>
    %218 = tpu.matmul %212, %217, %cst_165 {dimension_numbers = #tpu.dot_dimension_numbers<[1], [0], [0], [1], [0, 0, 1, 1], [], []>} : vector<16x64xf32>, vector<64x16xf32>, vector<16x16xf32> -> vector<16x16xf32>
    %c1_166 = arith.constant 1 : index
    %c0_167 = arith.constant 0 : index
    %c0_168 = arith.constant 0 : index
    %c0_169 = arith.constant 0 : index
    %219 = vector.load %arg9[%c1_166, %c0_167, %c0_168, %c0_169] : memref<2x4x64x16xf32, #tpu.memory_space<vmem>>, vector<1x1x64x16xf32>
    %220 = vector.shape_cast %219 : vector<1x1x64x16xf32> to vector<64x16xf32>
    %cst_170 = arith.constant dense<0.000000e+00> : vector<16x16xf32>
    %221 = tpu.matmul %212, %220, %cst_170 {dimension_numbers = #tpu.dot_dimension_numbers<[1], [0], [0], [1], [0, 0, 1, 1], [], []>} : vector<16x64xf32>, vector<64x16xf32>, vector<16x16xf32> -> vector<16x16xf32>
    %cst_171 = arith.constant dense<0.000000e+00> : vector<16x16xf32>
    %222 = tpu.matmul %215, %218, %cst_171 {dimension_numbers = #tpu.dot_dimension_numbers<[1], [1], [0], [0], [0, 0, 1, 0], [], []>} : vector<16x16xf32>, vector<16x16xf32>, vector<16x16xf32> -> vector<16x16xf32>
    %cst_172 = arith.constant 2.500000e-01 : f32
    %223 = vector.broadcast %cst_172 : f32 to vector<16x16xf32>
    %224 = arith.mulf %222, %223 : vector<16x16xf32>
    %cst_173 = arith.constant dense<0xFF800000> : vector<16xf32>
    %225 = vector.multi_reduction <maximumf>, %224, %cst_173 [1] : vector<16x16xf32> to vector<16xf32>
    %226 = vector.shape_cast %225 : vector<16xf32> to vector<16x1xf32>
    %227 = vector.broadcast %226 : vector<16x1xf32> to vector<16x16xf32>
    %228 = arith.subf %224, %227 : vector<16x16xf32>
    %229 = math.exp %228 : vector<16x16xf32>
    %cst_174 = arith.constant dense<0.000000e+00> : vector<16xf32>
    %230 = vector.multi_reduction <add>, %229, %cst_174 [1] : vector<16x16xf32> to vector<16xf32>
    %231 = vector.shape_cast %230 : vector<16xf32> to vector<16x1xf32>
    %232 = vector.broadcast %231 : vector<16x1xf32> to vector<16x16xf32>
    %233 = arith.divf %229, %232 : vector<16x16xf32>
    %cst_175 = arith.constant dense<0.000000e+00> : vector<16x16xf32>
    %234 = tpu.matmul %233, %221, %cst_175 {dimension_numbers = #tpu.dot_dimension_numbers<[1], [0], [0], [1], [0, 0, 1, 1], [], []>} : vector<16x16xf32>, vector<16x16xf32>, vector<16x16xf32> -> vector<16x16xf32>
    %c1_176 = arith.constant 1 : index
    %c0_177 = arith.constant 0 : index
    %c0_178 = arith.constant 0 : index
    %c0_179 = arith.constant 0 : index
    %235 = vector.load %arg10[%c1_176, %c0_177, %c0_178, %c0_179] : memref<2x4x16x64xf32, #tpu.memory_space<vmem>>, vector<1x1x16x64xf32>
    %236 = vector.shape_cast %235 : vector<1x1x16x64xf32> to vector<16x64xf32>
    %cst_180 = arith.constant dense<0.000000e+00> : vector<16x64xf32>
    %237 = tpu.matmul %234, %236, %cst_180 {dimension_numbers = #tpu.dot_dimension_numbers<[1], [0], [0], [1], [0, 0, 1, 1], [], []>} : vector<16x16xf32>, vector<16x64xf32>, vector<16x64xf32> -> vector<16x64xf32>
    %c1_181 = arith.constant 1 : index
    %c1_182 = arith.constant 1 : index
    %c0_183 = arith.constant 0 : index
    %c0_184 = arith.constant 0 : index
    %238 = vector.load %arg7[%c1_181, %c1_182, %c0_183, %c0_184] : memref<2x4x64x16xf32, #tpu.memory_space<vmem>>, vector<1x1x64x16xf32>
    %239 = vector.shape_cast %238 : vector<1x1x64x16xf32> to vector<64x16xf32>
    %cst_185 = arith.constant dense<0.000000e+00> : vector<16x16xf32>
    %240 = tpu.matmul %212, %239, %cst_185 {dimension_numbers = #tpu.dot_dimension_numbers<[1], [0], [0], [1], [0, 0, 1, 1], [], []>} : vector<16x64xf32>, vector<64x16xf32>, vector<16x16xf32> -> vector<16x16xf32>
    %c1_186 = arith.constant 1 : index
    %c1_187 = arith.constant 1 : index
    %c0_188 = arith.constant 0 : index
    %c0_189 = arith.constant 0 : index
    %241 = vector.load %arg8[%c1_186, %c1_187, %c0_188, %c0_189] : memref<2x4x64x16xf32, #tpu.memory_space<vmem>>, vector<1x1x64x16xf32>
    %242 = vector.shape_cast %241 : vector<1x1x64x16xf32> to vector<64x16xf32>
    %cst_190 = arith.constant dense<0.000000e+00> : vector<16x16xf32>
    %243 = tpu.matmul %212, %242, %cst_190 {dimension_numbers = #tpu.dot_dimension_numbers<[1], [0], [0], [1], [0, 0, 1, 1], [], []>} : vector<16x64xf32>, vector<64x16xf32>, vector<16x16xf32> -> vector<16x16xf32>
    %c1_191 = arith.constant 1 : index
    %c1_192 = arith.constant 1 : index
    %c0_193 = arith.constant 0 : index
    %c0_194 = arith.constant 0 : index
    %244 = vector.load %arg9[%c1_191, %c1_192, %c0_193, %c0_194] : memref<2x4x64x16xf32, #tpu.memory_space<vmem>>, vector<1x1x64x16xf32>
    %245 = vector.shape_cast %244 : vector<1x1x64x16xf32> to vector<64x16xf32>
    %cst_195 = arith.constant dense<0.000000e+00> : vector<16x16xf32>
    %246 = tpu.matmul %212, %245, %cst_195 {dimension_numbers = #tpu.dot_dimension_numbers<[1], [0], [0], [1], [0, 0, 1, 1], [], []>} : vector<16x64xf32>, vector<64x16xf32>, vector<16x16xf32> -> vector<16x16xf32>
    %cst_196 = arith.constant dense<0.000000e+00> : vector<16x16xf32>
    %247 = tpu.matmul %240, %243, %cst_196 {dimension_numbers = #tpu.dot_dimension_numbers<[1], [1], [0], [0], [0, 0, 1, 0], [], []>} : vector<16x16xf32>, vector<16x16xf32>, vector<16x16xf32> -> vector<16x16xf32>
    %cst_197 = arith.constant 2.500000e-01 : f32
    %248 = vector.broadcast %cst_197 : f32 to vector<16x16xf32>
    %249 = arith.mulf %247, %248 : vector<16x16xf32>
    %cst_198 = arith.constant dense<0xFF800000> : vector<16xf32>
    %250 = vector.multi_reduction <maximumf>, %249, %cst_198 [1] : vector<16x16xf32> to vector<16xf32>
    %251 = vector.shape_cast %250 : vector<16xf32> to vector<16x1xf32>
    %252 = vector.broadcast %251 : vector<16x1xf32> to vector<16x16xf32>
    %253 = arith.subf %249, %252 : vector<16x16xf32>
    %254 = math.exp %253 : vector<16x16xf32>
    %cst_199 = arith.constant dense<0.000000e+00> : vector<16xf32>
    %255 = vector.multi_reduction <add>, %254, %cst_199 [1] : vector<16x16xf32> to vector<16xf32>
    %256 = vector.shape_cast %255 : vector<16xf32> to vector<16x1xf32>
    %257 = vector.broadcast %256 : vector<16x1xf32> to vector<16x16xf32>
    %258 = arith.divf %254, %257 : vector<16x16xf32>
    %cst_200 = arith.constant dense<0.000000e+00> : vector<16x16xf32>
    %259 = tpu.matmul %258, %246, %cst_200 {dimension_numbers = #tpu.dot_dimension_numbers<[1], [0], [0], [1], [0, 0, 1, 1], [], []>} : vector<16x16xf32>, vector<16x16xf32>, vector<16x16xf32> -> vector<16x16xf32>
    %c1_201 = arith.constant 1 : index
    %c1_202 = arith.constant 1 : index
    %c0_203 = arith.constant 0 : index
    %c0_204 = arith.constant 0 : index
    %260 = vector.load %arg10[%c1_201, %c1_202, %c0_203, %c0_204] : memref<2x4x16x64xf32, #tpu.memory_space<vmem>>, vector<1x1x16x64xf32>
    %261 = vector.shape_cast %260 : vector<1x1x16x64xf32> to vector<16x64xf32>
    %cst_205 = arith.constant dense<0.000000e+00> : vector<16x64xf32>
    %262 = tpu.matmul %259, %261, %cst_205 {dimension_numbers = #tpu.dot_dimension_numbers<[1], [0], [0], [1], [0, 0, 1, 1], [], []>} : vector<16x16xf32>, vector<16x64xf32>, vector<16x64xf32> -> vector<16x64xf32>
    %263 = arith.addf %237, %262 : vector<16x64xf32>
    %c1_206 = arith.constant 1 : index
    %c2_207 = arith.constant 2 : index
    %c0_208 = arith.constant 0 : index
    %c0_209 = arith.constant 0 : index
    %264 = vector.load %arg7[%c1_206, %c2_207, %c0_208, %c0_209] : memref<2x4x64x16xf32, #tpu.memory_space<vmem>>, vector<1x1x64x16xf32>
    %265 = vector.shape_cast %264 : vector<1x1x64x16xf32> to vector<64x16xf32>
    %cst_210 = arith.constant dense<0.000000e+00> : vector<16x16xf32>
    %266 = tpu.matmul %212, %265, %cst_210 {dimension_numbers = #tpu.dot_dimension_numbers<[1], [0], [0], [1], [0, 0, 1, 1], [], []>} : vector<16x64xf32>, vector<64x16xf32>, vector<16x16xf32> -> vector<16x16xf32>
    %c1_211 = arith.constant 1 : index
    %c2_212 = arith.constant 2 : index
    %c0_213 = arith.constant 0 : index
    %c0_214 = arith.constant 0 : index
    %267 = vector.load %arg8[%c1_211, %c2_212, %c0_213, %c0_214] : memref<2x4x64x16xf32, #tpu.memory_space<vmem>>, vector<1x1x64x16xf32>
    %268 = vector.shape_cast %267 : vector<1x1x64x16xf32> to vector<64x16xf32>
    %cst_215 = arith.constant dense<0.000000e+00> : vector<16x16xf32>
    %269 = tpu.matmul %212, %268, %cst_215 {dimension_numbers = #tpu.dot_dimension_numbers<[1], [0], [0], [1], [0, 0, 1, 1], [], []>} : vector<16x64xf32>, vector<64x16xf32>, vector<16x16xf32> -> vector<16x16xf32>
    %c1_216 = arith.constant 1 : index
    %c2_217 = arith.constant 2 : index
    %c0_218 = arith.constant 0 : index
    %c0_219 = arith.constant 0 : index
    %270 = vector.load %arg9[%c1_216, %c2_217, %c0_218, %c0_219] : memref<2x4x64x16xf32, #tpu.memory_space<vmem>>, vector<1x1x64x16xf32>
    %271 = vector.shape_cast %270 : vector<1x1x64x16xf32> to vector<64x16xf32>
    %cst_220 = arith.constant dense<0.000000e+00> : vector<16x16xf32>
    %272 = tpu.matmul %212, %271, %cst_220 {dimension_numbers = #tpu.dot_dimension_numbers<[1], [0], [0], [1], [0, 0, 1, 1], [], []>} : vector<16x64xf32>, vector<64x16xf32>, vector<16x16xf32> -> vector<16x16xf32>
    %cst_221 = arith.constant dense<0.000000e+00> : vector<16x16xf32>
    %273 = tpu.matmul %266, %269, %cst_221 {dimension_numbers = #tpu.dot_dimension_numbers<[1], [1], [0], [0], [0, 0, 1, 0], [], []>} : vector<16x16xf32>, vector<16x16xf32>, vector<16x16xf32> -> vector<16x16xf32>
    %cst_222 = arith.constant 2.500000e-01 : f32
    %274 = vector.broadcast %cst_222 : f32 to vector<16x16xf32>
    %275 = arith.mulf %273, %274 : vector<16x16xf32>
    %cst_223 = arith.constant dense<0xFF800000> : vector<16xf32>
    %276 = vector.multi_reduction <maximumf>, %275, %cst_223 [1] : vector<16x16xf32> to vector<16xf32>
    %277 = vector.shape_cast %276 : vector<16xf32> to vector<16x1xf32>
    %278 = vector.broadcast %277 : vector<16x1xf32> to vector<16x16xf32>
    %279 = arith.subf %275, %278 : vector<16x16xf32>
    %280 = math.exp %279 : vector<16x16xf32>
    %cst_224 = arith.constant dense<0.000000e+00> : vector<16xf32>
    %281 = vector.multi_reduction <add>, %280, %cst_224 [1] : vector<16x16xf32> to vector<16xf32>
    %282 = vector.shape_cast %281 : vector<16xf32> to vector<16x1xf32>
    %283 = vector.broadcast %282 : vector<16x1xf32> to vector<16x16xf32>
    %284 = arith.divf %280, %283 : vector<16x16xf32>
    %cst_225 = arith.constant dense<0.000000e+00> : vector<16x16xf32>
    %285 = tpu.matmul %284, %272, %cst_225 {dimension_numbers = #tpu.dot_dimension_numbers<[1], [0], [0], [1], [0, 0, 1, 1], [], []>} : vector<16x16xf32>, vector<16x16xf32>, vector<16x16xf32> -> vector<16x16xf32>
    %c1_226 = arith.constant 1 : index
    %c2_227 = arith.constant 2 : index
    %c0_228 = arith.constant 0 : index
    %c0_229 = arith.constant 0 : index
    %286 = vector.load %arg10[%c1_226, %c2_227, %c0_228, %c0_229] : memref<2x4x16x64xf32, #tpu.memory_space<vmem>>, vector<1x1x16x64xf32>
    %287 = vector.shape_cast %286 : vector<1x1x16x64xf32> to vector<16x64xf32>
    %cst_230 = arith.constant dense<0.000000e+00> : vector<16x64xf32>
    %288 = tpu.matmul %285, %287, %cst_230 {dimension_numbers = #tpu.dot_dimension_numbers<[1], [0], [0], [1], [0, 0, 1, 1], [], []>} : vector<16x16xf32>, vector<16x64xf32>, vector<16x64xf32> -> vector<16x64xf32>
    %289 = arith.addf %263, %288 : vector<16x64xf32>
    %c1_231 = arith.constant 1 : index
    %c3_232 = arith.constant 3 : index
    %c0_233 = arith.constant 0 : index
    %c0_234 = arith.constant 0 : index
    %290 = vector.load %arg7[%c1_231, %c3_232, %c0_233, %c0_234] : memref<2x4x64x16xf32, #tpu.memory_space<vmem>>, vector<1x1x64x16xf32>
    %291 = vector.shape_cast %290 : vector<1x1x64x16xf32> to vector<64x16xf32>
    %cst_235 = arith.constant dense<0.000000e+00> : vector<16x16xf32>
    %292 = tpu.matmul %212, %291, %cst_235 {dimension_numbers = #tpu.dot_dimension_numbers<[1], [0], [0], [1], [0, 0, 1, 1], [], []>} : vector<16x64xf32>, vector<64x16xf32>, vector<16x16xf32> -> vector<16x16xf32>
    %c1_236 = arith.constant 1 : index
    %c3_237 = arith.constant 3 : index
    %c0_238 = arith.constant 0 : index
    %c0_239 = arith.constant 0 : index
    %293 = vector.load %arg8[%c1_236, %c3_237, %c0_238, %c0_239] : memref<2x4x64x16xf32, #tpu.memory_space<vmem>>, vector<1x1x64x16xf32>
    %294 = vector.shape_cast %293 : vector<1x1x64x16xf32> to vector<64x16xf32>
    %cst_240 = arith.constant dense<0.000000e+00> : vector<16x16xf32>
    %295 = tpu.matmul %212, %294, %cst_240 {dimension_numbers = #tpu.dot_dimension_numbers<[1], [0], [0], [1], [0, 0, 1, 1], [], []>} : vector<16x64xf32>, vector<64x16xf32>, vector<16x16xf32> -> vector<16x16xf32>
    %c1_241 = arith.constant 1 : index
    %c3_242 = arith.constant 3 : index
    %c0_243 = arith.constant 0 : index
    %c0_244 = arith.constant 0 : index
    %296 = vector.load %arg9[%c1_241, %c3_242, %c0_243, %c0_244] : memref<2x4x64x16xf32, #tpu.memory_space<vmem>>, vector<1x1x64x16xf32>
    %297 = vector.shape_cast %296 : vector<1x1x64x16xf32> to vector<64x16xf32>
    %cst_245 = arith.constant dense<0.000000e+00> : vector<16x16xf32>
    %298 = tpu.matmul %212, %297, %cst_245 {dimension_numbers = #tpu.dot_dimension_numbers<[1], [0], [0], [1], [0, 0, 1, 1], [], []>} : vector<16x64xf32>, vector<64x16xf32>, vector<16x16xf32> -> vector<16x16xf32>
    %cst_246 = arith.constant dense<0.000000e+00> : vector<16x16xf32>
    %299 = tpu.matmul %292, %295, %cst_246 {dimension_numbers = #tpu.dot_dimension_numbers<[1], [1], [0], [0], [0, 0, 1, 0], [], []>} : vector<16x16xf32>, vector<16x16xf32>, vector<16x16xf32> -> vector<16x16xf32>
    %cst_247 = arith.constant 2.500000e-01 : f32
    %300 = vector.broadcast %cst_247 : f32 to vector<16x16xf32>
    %301 = arith.mulf %299, %300 : vector<16x16xf32>
    %cst_248 = arith.constant dense<0xFF800000> : vector<16xf32>
    %302 = vector.multi_reduction <maximumf>, %301, %cst_248 [1] : vector<16x16xf32> to vector<16xf32>
    %303 = vector.shape_cast %302 : vector<16xf32> to vector<16x1xf32>
    %304 = vector.broadcast %303 : vector<16x1xf32> to vector<16x16xf32>
    %305 = arith.subf %301, %304 : vector<16x16xf32>
    %306 = math.exp %305 : vector<16x16xf32>
    %cst_249 = arith.constant dense<0.000000e+00> : vector<16xf32>
    %307 = vector.multi_reduction <add>, %306, %cst_249 [1] : vector<16x16xf32> to vector<16xf32>
    %308 = vector.shape_cast %307 : vector<16xf32> to vector<16x1xf32>
    %309 = vector.broadcast %308 : vector<16x1xf32> to vector<16x16xf32>
    %310 = arith.divf %306, %309 : vector<16x16xf32>
    %cst_250 = arith.constant dense<0.000000e+00> : vector<16x16xf32>
    %311 = tpu.matmul %310, %298, %cst_250 {dimension_numbers = #tpu.dot_dimension_numbers<[1], [0], [0], [1], [0, 0, 1, 1], [], []>} : vector<16x16xf32>, vector<16x16xf32>, vector<16x16xf32> -> vector<16x16xf32>
    %c1_251 = arith.constant 1 : index
    %c3_252 = arith.constant 3 : index
    %c0_253 = arith.constant 0 : index
    %c0_254 = arith.constant 0 : index
    %312 = vector.load %arg10[%c1_251, %c3_252, %c0_253, %c0_254] : memref<2x4x16x64xf32, #tpu.memory_space<vmem>>, vector<1x1x16x64xf32>
    %313 = vector.shape_cast %312 : vector<1x1x16x64xf32> to vector<16x64xf32>
    %cst_255 = arith.constant dense<0.000000e+00> : vector<16x64xf32>
    %314 = tpu.matmul %311, %313, %cst_255 {dimension_numbers = #tpu.dot_dimension_numbers<[1], [0], [0], [1], [0, 0, 1, 1], [], []>} : vector<16x16xf32>, vector<16x64xf32>, vector<16x64xf32> -> vector<16x64xf32>
    %315 = arith.addf %289, %314 : vector<16x64xf32>
    %316 = arith.addf %188, %315 : vector<16x64xf32>
    %c1_256 = arith.constant 1 : index
    %c0_257 = arith.constant 0 : index
    %c0_258 = arith.constant 0 : index
    %317 = vector.load %arg11[%c1_256, %c0_257, %c0_258] : memref<2x1x64xf32, #tpu.memory_space<vmem>>, vector<1x1x64xf32>
    %318 = vector.shape_cast %317 : vector<1x1x64xf32> to vector<1x64xf32>
    %c1_259 = arith.constant 1 : index
    %c0_260 = arith.constant 0 : index
    %c0_261 = arith.constant 0 : index
    %319 = vector.load %arg12[%c1_259, %c0_260, %c0_261] : memref<2x1x64xf32, #tpu.memory_space<vmem>>, vector<1x1x64xf32>
    %320 = vector.shape_cast %319 : vector<1x1x64xf32> to vector<1x64xf32>
    %cst_262 = arith.constant dense<0.000000e+00> : vector<16xf32>
    %321 = vector.multi_reduction <add>, %316, %cst_262 [1] : vector<16x64xf32> to vector<16xf32>
    %322 = vector.shape_cast %321 : vector<16xf32> to vector<16x1xf32>
    %cst_263 = arith.constant 6.400000e+01 : f32
    %323 = vector.broadcast %cst_263 : f32 to vector<16x1xf32>
    %324 = arith.divf %322, %323 : vector<16x1xf32>
    %325 = vector.broadcast %324 : vector<16x1xf32> to vector<16x64xf32>
    %326 = arith.subf %316, %325 : vector<16x64xf32>
    %327 = arith.mulf %326, %326 : vector<16x64xf32>
    %cst_264 = arith.constant dense<0.000000e+00> : vector<16xf32>
    %328 = vector.multi_reduction <add>, %327, %cst_264 [1] : vector<16x64xf32> to vector<16xf32>
    %329 = vector.shape_cast %328 : vector<16xf32> to vector<16x1xf32>
    %cst_265 = arith.constant 6.400000e+01 : f32
    %330 = vector.broadcast %cst_265 : f32 to vector<16x1xf32>
    %331 = arith.divf %329, %330 : vector<16x1xf32>
    %cst_266 = arith.constant 9.99999974E-6 : f32
    %332 = vector.broadcast %cst_266 : f32 to vector<16x1xf32>
    %333 = arith.addf %331, %332 : vector<16x1xf32>
    %334 = math.rsqrt %333 : vector<16x1xf32>
    %335 = vector.broadcast %334 : vector<16x1xf32> to vector<16x64xf32>
    %336 = arith.mulf %326, %335 : vector<16x64xf32>
    %337 = vector.broadcast %318 : vector<1x64xf32> to vector<16x64xf32>
    %338 = arith.mulf %336, %337 : vector<16x64xf32>
    %339 = vector.broadcast %320 : vector<1x64xf32> to vector<16x64xf32>
    %340 = arith.addf %338, %339 : vector<16x64xf32>
    %c1_267 = arith.constant 1 : index
    %c0_268 = arith.constant 0 : index
    %c0_269 = arith.constant 0 : index
    %341 = vector.load %arg13[%c1_267, %c0_268, %c0_269] : memref<2x64x128xf32, #tpu.memory_space<vmem>>, vector<1x64x128xf32>
    %342 = vector.shape_cast %341 : vector<1x64x128xf32> to vector<64x128xf32>
    %cst_270 = arith.constant dense<0.000000e+00> : vector<16x128xf32>
    %343 = tpu.matmul %340, %342, %cst_270 {dimension_numbers = #tpu.dot_dimension_numbers<[1], [0], [0], [1], [0, 0, 1, 1], [], []>} : vector<16x64xf32>, vector<64x128xf32>, vector<16x128xf32> -> vector<16x128xf32>
    %c1_271 = arith.constant 1 : index
    %c0_272 = arith.constant 0 : index
    %c0_273 = arith.constant 0 : index
    %344 = vector.load %arg14[%c1_271, %c0_272, %c0_273] : memref<2x1x128xf32, #tpu.memory_space<vmem>>, vector<1x1x128xf32>
    %345 = vector.shape_cast %344 : vector<1x1x128xf32> to vector<1x128xf32>
    %346 = vector.broadcast %345 : vector<1x128xf32> to vector<16x128xf32>
    %347 = arith.addf %343, %346 : vector<16x128xf32>
    %cst_274 = arith.constant 5.000000e-01 : f32
    %348 = vector.broadcast %cst_274 : f32 to vector<16x128xf32>
    %349 = arith.mulf %348, %347 : vector<16x128xf32>
    %cst_275 = arith.constant 4.471500e-02 : f32
    %350 = vector.broadcast %cst_275 : f32 to vector<16x128xf32>
    %351 = arith.mulf %350, %347 : vector<16x128xf32>
    %352 = arith.mulf %351, %347 : vector<16x128xf32>
    %353 = arith.mulf %352, %347 : vector<16x128xf32>
    %354 = arith.addf %347, %353 : vector<16x128xf32>
    %cst_276 = arith.constant 0.797884583 : f32
    %355 = vector.broadcast %cst_276 : f32 to vector<16x128xf32>
    %356 = arith.mulf %355, %354 : vector<16x128xf32>
    %357 = math.tanh %356 : vector<16x128xf32>
    %cst_277 = arith.constant 1.000000e+00 : f32
    %358 = vector.broadcast %cst_277 : f32 to vector<16x128xf32>
    %359 = arith.addf %358, %357 : vector<16x128xf32>
    %360 = arith.mulf %349, %359 : vector<16x128xf32>
    %c1_278 = arith.constant 1 : index
    %c0_279 = arith.constant 0 : index
    %c0_280 = arith.constant 0 : index
    %361 = vector.load %arg15[%c1_278, %c0_279, %c0_280] : memref<2x128x64xf32, #tpu.memory_space<vmem>>, vector<1x128x64xf32>
    %362 = vector.shape_cast %361 : vector<1x128x64xf32> to vector<128x64xf32>
    %cst_281 = arith.constant dense<0.000000e+00> : vector<16x64xf32>
    %363 = tpu.matmul %360, %362, %cst_281 {dimension_numbers = #tpu.dot_dimension_numbers<[1], [0], [0], [1], [0, 0, 1, 1], [], []>} : vector<16x128xf32>, vector<128x64xf32>, vector<16x64xf32> -> vector<16x64xf32>
    %364 = arith.addf %316, %363 : vector<16x64xf32>
    %c1_282 = arith.constant 1 : index
    %c0_283 = arith.constant 0 : index
    %c0_284 = arith.constant 0 : index
    %365 = vector.load %arg16[%c1_282, %c0_283, %c0_284] : memref<2x1x64xf32, #tpu.memory_space<vmem>>, vector<1x1x64xf32>
    %366 = vector.shape_cast %365 : vector<1x1x64xf32> to vector<1x64xf32>
    %367 = vector.broadcast %366 : vector<1x64xf32> to vector<16x64xf32>
    %368 = arith.addf %364, %367 : vector<16x64xf32>
    %c0_285 = arith.constant 0 : index
    %c0_286 = arith.constant 0 : index
    %369 = vector.load %arg17[%c0_285, %c0_286] : memref<1x64xf32, #tpu.memory_space<vmem>>, vector<1x64xf32>
    %c0_287 = arith.constant 0 : index
    %c0_288 = arith.constant 0 : index
    %370 = vector.load %arg18[%c0_287, %c0_288] : memref<1x64xf32, #tpu.memory_space<vmem>>, vector<1x64xf32>
    %cst_289 = arith.constant dense<0.000000e+00> : vector<16xf32>
    %371 = vector.multi_reduction <add>, %368, %cst_289 [1] : vector<16x64xf32> to vector<16xf32>
    %372 = vector.shape_cast %371 : vector<16xf32> to vector<16x1xf32>
    %cst_290 = arith.constant 6.400000e+01 : f32
    %373 = vector.broadcast %cst_290 : f32 to vector<16x1xf32>
    %374 = arith.divf %372, %373 : vector<16x1xf32>
    %375 = vector.broadcast %374 : vector<16x1xf32> to vector<16x64xf32>
    %376 = arith.subf %368, %375 : vector<16x64xf32>
    %377 = arith.mulf %376, %376 : vector<16x64xf32>
    %cst_291 = arith.constant dense<0.000000e+00> : vector<16xf32>
    %378 = vector.multi_reduction <add>, %377, %cst_291 [1] : vector<16x64xf32> to vector<16xf32>
    %379 = vector.shape_cast %378 : vector<16xf32> to vector<16x1xf32>
    %cst_292 = arith.constant 6.400000e+01 : f32
    %380 = vector.broadcast %cst_292 : f32 to vector<16x1xf32>
    %381 = arith.divf %379, %380 : vector<16x1xf32>
    %cst_293 = arith.constant 9.99999974E-6 : f32
    %382 = vector.broadcast %cst_293 : f32 to vector<16x1xf32>
    %383 = arith.addf %381, %382 : vector<16x1xf32>
    %384 = math.rsqrt %383 : vector<16x1xf32>
    %385 = vector.broadcast %384 : vector<16x1xf32> to vector<16x64xf32>
    %386 = arith.mulf %376, %385 : vector<16x64xf32>
    %387 = vector.broadcast %369 : vector<1x64xf32> to vector<16x64xf32>
    %388 = arith.mulf %386, %387 : vector<16x64xf32>
    %389 = vector.broadcast %370 : vector<1x64xf32> to vector<16x64xf32>
    %390 = arith.addf %388, %389 : vector<16x64xf32>
    %c0_294 = arith.constant 0 : index
    %c0_295 = arith.constant 0 : index
    %391 = vector.load %arg19[%c0_294, %c0_295] : memref<1x64xf32, #tpu.memory_space<vmem>>, vector<1x64xf32>
    %c0_296 = arith.constant 0 : index
    %c0_297 = arith.constant 0 : index
    %392 = vector.load %arg20[%c0_296, %c0_297] : memref<1x64xf32, #tpu.memory_space<vmem>>, vector<1x64xf32>
    %cst_298 = arith.constant dense<0.000000e+00> : vector<16xf32>
    %393 = vector.multi_reduction <add>, %390, %cst_298 [1] : vector<16x64xf32> to vector<16xf32>
    %394 = vector.shape_cast %393 : vector<16xf32> to vector<16x1xf32>
    %cst_299 = arith.constant 6.400000e+01 : f32
    %395 = vector.broadcast %cst_299 : f32 to vector<16x1xf32>
    %396 = arith.divf %394, %395 : vector<16x1xf32>
    %397 = vector.broadcast %396 : vector<16x1xf32> to vector<16x64xf32>
    %398 = arith.subf %390, %397 : vector<16x64xf32>
    %399 = arith.mulf %398, %398 : vector<16x64xf32>
    %cst_300 = arith.constant dense<0.000000e+00> : vector<16xf32>
    %400 = vector.multi_reduction <add>, %399, %cst_300 [1] : vector<16x64xf32> to vector<16xf32>
    %401 = vector.shape_cast %400 : vector<16xf32> to vector<16x1xf32>
    %cst_301 = arith.constant 6.400000e+01 : f32
    %402 = vector.broadcast %cst_301 : f32 to vector<16x1xf32>
    %403 = arith.divf %401, %402 : vector<16x1xf32>
    %cst_302 = arith.constant 9.99999974E-6 : f32
    %404 = vector.broadcast %cst_302 : f32 to vector<16x1xf32>
    %405 = arith.addf %403, %404 : vector<16x1xf32>
    %406 = math.rsqrt %405 : vector<16x1xf32>
    %407 = vector.broadcast %406 : vector<16x1xf32> to vector<16x64xf32>
    %408 = arith.mulf %398, %407 : vector<16x64xf32>
    %409 = vector.broadcast %391 : vector<1x64xf32> to vector<16x64xf32>
    %410 = arith.mulf %408, %409 : vector<16x64xf32>
    %411 = vector.broadcast %392 : vector<1x64xf32> to vector<16x64xf32>
    %412 = arith.addf %410, %411 : vector<16x64xf32>
    %c0_303 = arith.constant 0 : index
    %c0_304 = arith.constant 0 : index
    %c0_305 = arith.constant 0 : index
    %413 = vector.load %arg24[%c0_303, %c0_304, %c0_305] : memref<1x16x64xf32, #tpu.memory_space<vmem>>, vector<1x16x64xf32>
    %414 = vector.shape_cast %413 : vector<1x16x64xf32> to vector<16x64xf32>
    %415 = vector.shape_cast %412 : vector<16x64xf32> to vector<1x16x64xf32>
    tpu.vector_store %arg24[%c0_303, %c0_304, %c0_305], %415 {strides = array<i32>} : memref<1x16x64xf32, #tpu.memory_space<vmem>>, vector<1x16x64xf32>,
    %c0_306 = arith.constant 0 : index
    %c0_307 = arith.constant 0 : index
    %416 = vector.load %arg21[%c0_306, %c0_307] : memref<64x11xf32, #tpu.memory_space<vmem>>, vector<64x11xf32>
    %cst_308 = arith.constant dense<0.000000e+00> : vector<16x11xf32>
    %417 = tpu.matmul %412, %416, %cst_308 {dimension_numbers = #tpu.dot_dimension_numbers<[1], [0], [0], [1], [0, 0, 1, 1], [], []>} : vector<16x64xf32>, vector<64x11xf32>, vector<16x11xf32> -> vector<16x11xf32>
    %c0_309 = arith.constant 0 : index
    %c0_310 = arith.constant 0 : index
    %418 = vector.load %arg22[%c0_309, %c0_310] : memref<1x11xf32, #tpu.memory_space<vmem>>, vector<1x11xf32>
    %419 = vector.broadcast %418 : vector<1x11xf32> to vector<16x11xf32>
    %420 = arith.addf %417, %419 : vector<16x11xf32>
    %c0_311 = arith.constant 0 : index
    %c0_312 = arith.constant 0 : index
    %c0_313 = arith.constant 0 : index
    %421 = vector.load %arg23[%c0_311, %c0_312, %c0_313] : memref<1x16x11xf32, #tpu.memory_space<vmem>>, vector<1x16x11xf32>
    %422 = vector.shape_cast %421 : vector<1x16x11xf32> to vector<16x11xf32>
    %423 = vector.shape_cast %420 : vector<16x11xf32> to vector<1x16x11xf32>
    tpu.vector_store %arg23[%c0_311, %c0_312, %c0_313], %423 {strides = array<i32>} : memref<1x16x11xf32, #tpu.memory_space<vmem>>, vector<1x16x11xf32>,
    return
  }
  func.func @transform_0(%arg0: i32) -> (i32, i32, i32) {
    %c0_i32 = arith.constant 0 : i32
    %c0_i32_0 = arith.constant 0 : i32
    %c0_i32_1 = arith.constant 0 : i32
    return %arg0, %c0_i32, %c0_i32_0 : i32, i32, i32
  }
  func.func @transform_1(%arg0: i32) -> (i32, i32) {
    %c0_i32 = arith.constant 0 : i32
    %c0_i32_0 = arith.constant 0 : i32
    %c0_i32_1 = arith.constant 0 : i32
    return %c0_i32, %c0_i32_0 : i32, i32
  }
  func.func @transform_2(%arg0: i32) -> (i32, i32) {
    %c0_i32 = arith.constant 0 : i32
    %c0_i32_0 = arith.constant 0 : i32
    %c0_i32_1 = arith.constant 0 : i32
    return %c0_i32, %c0_i32_0 : i32, i32
  }
  func.func @transform_3(%arg0: i32) -> (i32, i32) {
    %c0_i32 = arith.constant 0 : i32
    %c0_i32_0 = arith.constant 0 : i32
    %c0_i32_1 = arith.constant 0 : i32
    return %c0_i32, %c0_i32_0 : i32, i32
  }
  func.func @transform_4(%arg0: i32) -> (i32, i32, i32) {
    %c0_i32 = arith.constant 0 : i32
    %c0_i32_0 = arith.constant 0 : i32
    %c0_i32_1 = arith.constant 0 : i32
    %c0_i32_2 = arith.constant 0 : i32
    return %c0_i32, %c0_i32_0, %c0_i32_1 : i32, i32, i32
  }
  func.func @transform_5(%arg0: i32) -> (i32, i32, i32) {
    %c0_i32 = arith.constant 0 : i32
    %c0_i32_0 = arith.constant 0 : i32
    %c0_i32_1 = arith.constant 0 : i32
    %c0_i32_2 = arith.constant 0 : i32
    return %c0_i32, %c0_i32_0, %c0_i32_1 : i32, i32, i32
  }
  func.func @transform_6(%arg0: i32) -> (i32, i32, i32, i32) {
    %c0_i32 = arith.constant 0 : i32
    %c0_i32_0 = arith.constant 0 : i32
    %c0_i32_1 = arith.constant 0 : i32
    %c0_i32_2 = arith.constant 0 : i32
    %c0_i32_3 = arith.constant 0 : i32
    return %c0_i32, %c0_i32_0, %c0_i32_1, %c0_i32_2 : i32, i32, i32, i32
  }
  func.func @transform_7(%arg0: i32) -> (i32, i32, i32, i32) {
    %c0_i32 = arith.constant 0 : i32
    %c0_i32_0 = arith.constant 0 : i32
    %c0_i32_1 = arith.constant 0 : i32
    %c0_i32_2 = arith.constant 0 : i32
    %c0_i32_3 = arith.constant 0 : i32
    return %c0_i32, %c0_i32_0, %c0_i32_1, %c0_i32_2 : i32, i32, i32, i32
  }
  func.func @transform_8(%arg0: i32) -> (i32, i32, i32, i32) {
    %c0_i32 = arith.constant 0 : i32
    %c0_i32_0 = arith.constant 0 : i32
    %c0_i32_1 = arith.constant 0 : i32
    %c0_i32_2 = arith.constant 0 : i32
    %c0_i32_3 = arith.constant 0 : i32
    return %c0_i32, %c0_i32_0, %c0_i32_1, %c0_i32_2 : i32, i32, i32, i32
  }
  func.func @transform_9(%arg0: i32) -> (i32, i32, i32, i32) {
    %c0_i32 = arith.constant 0 : i32
    %c0_i32_0 = arith.constant 0 : i32
    %c0_i32_1 = arith.constant 0 : i32
    %c0_i32_2 = arith.constant 0 : i32
    %c0_i32_3 = arith.constant 0 : i32
    return %c0_i32, %c0_i32_0, %c0_i32_1, %c0_i32_2 : i32, i32, i32, i32
  }
  func.func @transform_10(%arg0: i32) -> (i32, i32, i32) {
    %c0_i32 = arith.constant 0 : i32
    %c0_i32_0 = arith.constant 0 : i32
    %c0_i32_1 = arith.constant 0 : i32
    %c0_i32_2 = arith.constant 0 : i32
    return %c0_i32, %c0_i32_0, %c0_i32_1 : i32, i32, i32
  }
  func.func @transform_11(%arg0: i32) -> (i32, i32, i32) {
    %c0_i32 = arith.constant 0 : i32
    %c0_i32_0 = arith.constant 0 : i32
    %c0_i32_1 = arith.constant 0 : i32
    %c0_i32_2 = arith.constant 0 : i32
    return %c0_i32, %c0_i32_0, %c0_i32_1 : i32, i32, i32
  }
  func.func @transform_12(%arg0: i32) -> (i32, i32, i32) {
    %c0_i32 = arith.constant 0 : i32
    %c0_i32_0 = arith.constant 0 : i32
    %c0_i32_1 = arith.constant 0 : i32
    %c0_i32_2 = arith.constant 0 : i32
    return %c0_i32, %c0_i32_0, %c0_i32_1 : i32, i32, i32
  }
  func.func @transform_13(%arg0: i32) -> (i32, i32, i32) {
    %c0_i32 = arith.constant 0 : i32
    %c0_i32_0 = arith.constant 0 : i32
    %c0_i32_1 = arith.constant 0 : i32
    %c0_i32_2 = arith.constant 0 : i32
    return %c0_i32, %c0_i32_0, %c0_i32_1 : i32, i32, i32
  }
  func.func @transform_14(%arg0: i32) -> (i32, i32, i32) {
    %c0_i32 = arith.constant 0 : i32
    %c0_i32_0 = arith.constant 0 : i32
    %c0_i32_1 = arith.constant 0 : i32
    %c0_i32_2 = arith.constant 0 : i32
    return %c0_i32, %c0_i32_0, %c0_i32_1 : i32, i32, i32
  }
  func.func @transform_15(%arg0: i32) -> (i32, i32, i32) {
    %c0_i32 = arith.constant 0 : i32
    %c0_i32_0 = arith.constant 0 : i32
    %c0_i32_1 = arith.constant 0 : i32
    %c0_i32_2 = arith.constant 0 : i32
    return %c0_i32, %c0_i32_0, %c0_i32_1 : i32, i32, i32
  }
  func.func @transform_16(%arg0: i32) -> (i32, i32) {
    %c0_i32 = arith.constant 0 : i32
    %c0_i32_0 = arith.constant 0 : i32
    %c0_i32_1 = arith.constant 0 : i32
    return %c0_i32, %c0_i32_0 : i32, i32
  }
  func.func @transform_17(%arg0: i32) -> (i32, i32) {
    %c0_i32 = arith.constant 0 : i32
    %c0_i32_0 = arith.constant 0 : i32
    %c0_i32_1 = arith.constant 0 : i32
    return %c0_i32, %c0_i32_0 : i32, i32
  }
  func.func @transform_18(%arg0: i32) -> (i32, i32) {
    %c0_i32 = arith.constant 0 : i32
    %c0_i32_0 = arith.constant 0 : i32
    %c0_i32_1 = arith.constant 0 : i32
    return %c0_i32, %c0_i32_0 : i32, i32
  }
  func.func @transform_19(%arg0: i32) -> (i32, i32) {
    %c0_i32 = arith.constant 0 : i32
    %c0_i32_0 = arith.constant 0 : i32
    %c0_i32_1 = arith.constant 0 : i32
    return %c0_i32, %c0_i32_0 : i32, i32
  }
  func.func @transform_20(%arg0: i32) -> (i32, i32) {
    %c0_i32 = arith.constant 0 : i32
    %c0_i32_0 = arith.constant 0 : i32
    %c0_i32_1 = arith.constant 0 : i32
    return %c0_i32, %c0_i32_0 : i32, i32
  }
  func.func @transform_21(%arg0: i32) -> (i32, i32) {
    %c0_i32 = arith.constant 0 : i32
    %c0_i32_0 = arith.constant 0 : i32
    %c0_i32_1 = arith.constant 0 : i32
    return %c0_i32, %c0_i32_0 : i32, i32
  }
  func.func @transform_22(%arg0: i32) -> (i32, i32, i32) {
    %c0_i32 = arith.constant 0 : i32
    %c0_i32_0 = arith.constant 0 : i32
    %c0_i32_1 = arith.constant 0 : i32
    return %arg0, %c0_i32, %c0_i32_0 : i32, i32, i32
  }
  func.func @transform_23(%arg0: i32) -> (i32, i32, i32) {
    %c0_i32 = arith.constant 0 : i32
    %c0_i32_0 = arith.constant 0 : i32
    %c0_i32_1 = arith.constant 0 : i32
    return %arg0, %c0_i32, %c0_i32_0 : i32, i32, i32
  }
}

</mosaic_0001>

<llo_original>
// kernel: tpu_custom_call.1
$region0: #{tpu_custom_call.1}
  #allocation0 [shape = 'u32[]', space=smem, size = 0x4, offset = 0x4, fixed_abs, tag = 'smem constant byte address 0x4 - core index']
  #allocation1 [shape = 'u32[144,128]{1,0:T(1,128)}', space=vmem, size = 0x12000, scoped, tag = 'internal scratch']
  %s0 = inlined_call_operand.vmem [shape: f32[2,16,84], index: 0, kind: input, shape index: {}]
  %s1 = inlined_call_operand.vmem [shape: f32[84,64], index: 1, kind: input, shape index: {}]
  %s2 = inlined_call_operand.vmem [shape: f32[1,64], index: 2, kind: input, shape index: {}]
  %s3 = inlined_call_operand.vmem [shape: f32[16,64], index: 3, kind: input, shape index: {}]
  %s4 = inlined_call_operand.vmem [shape: f32[2,1,64], index: 4, kind: input, shape index: {}]
  %s5 = inlined_call_operand.vmem [shape: f32[2,1,64], index: 5, kind: input, shape index: {}]
  %s6 = inlined_call_operand.vmem [shape: f32[2,4,64,16], index: 6, kind: input, shape index: {}]
  %s7 = inlined_call_operand.vmem [shape: f32[2,4,64,16], index: 7, kind: input, shape index: {}]
  %s8 = inlined_call_operand.vmem [shape: f32[2,4,64,16], index: 8, kind: input, shape index: {}]
  %s9 = inlined_call_operand.vmem [shape: f32[2,4,16,64], index: 9, kind: input, shape index: {}]
  %s10 = inlined_call_operand.vmem [shape: f32[2,1,64], index: 10, kind: input, shape index: {}]
  %s11 = inlined_call_operand.vmem [shape: f32[2,1,64], index: 11, kind: input, shape index: {}]
  %s12 = inlined_call_operand.vmem [shape: f32[2,64,128], index: 12, kind: input, shape index: {}]
  %s13 = inlined_call_operand.vmem [shape: f32[2,1,128], index: 13, kind: input, shape index: {}]
  %s14 = inlined_call_operand.vmem [shape: f32[2,128,64], index: 14, kind: input, shape index: {}]
  %s15 = inlined_call_operand.vmem [shape: f32[2,1,64], index: 15, kind: input, shape index: {}]
  %s16 = inlined_call_operand.vmem [shape: f32[1,64], index: 16, kind: input, shape index: {}]
  %s17 = inlined_call_operand.vmem [shape: f32[1,64], index: 17, kind: input, shape index: {}]
  %s18 = inlined_call_operand.vmem [shape: f32[1,64], index: 18, kind: input, shape index: {}]
  %s19 = inlined_call_operand.vmem [shape: f32[1,64], index: 19, kind: input, shape index: {}]
  %s20 = inlined_call_operand.vmem [shape: f32[64,11], index: 20, kind: input, shape index: {}]
  %s21 = inlined_call_operand.vmem [shape: f32[1,11], index: 21, kind: input, shape index: {}]
  %s22 = inlined_call_operand.vmem [shape: f32[2,16,11], index: 22, kind: output, shape index: {0}]
  %s23 = inlined_call_operand.hbm [shape: f32[2,16,64], index: 23, kind: output, shape index: {1}]
  %24 = xla_tuple %s22, %s23
  %s25 = sld [smem:[#allocation0]]
  $region129: #{tpu_custom_call.1} parent=0
    _
  %s27 = ssub.s32 1, %s25
  %s28 = scalar_select 0, %s27, %s25
  $region1: #{tpu_custom_call.1} parent=0
    #allocation2 [shape = 'u8[16384]{0}', space=vmem, size = 0x4000, scoped, tag = 'output window, operand 1']
    #allocation3 [shape = 's32[2]{0}', space=sflag, size = 0x8, scoped, tag = 'scoped memory for tpu_custom_call.1']
    %29 = vsyncpa [#allocation3], 0
    %s30 = scalar_lea.sflag [#allocation3], 1
    %31 = vsyncpa %s30, 0
    loop: start=0, step=1, limit=4
    $region2: #{tpu_custom_call.1} parent=1 // loop_pre_header
      _
    $region3: #{tpu_custom_call.1} parent=1 // loop_header
      %s33 = sphi 0, %s37
      %p34 = scmp.ge.s32.totalorder %s33, 4
      %s43 = sphi 0, %s45
      %s46 = sphi 0, %s43
      %s47 = sphi 0, %s46
      %s63 = sphi 0, %s47
      %s67 = sphi 0, %s67
      %s69 = sphi 0, %s67
      %s70 = sphi 0, %s69
      %s84 = sphi 0, %s70
      %s88 = sphi 0, %s88
      %s90 = sphi 0, %s88
      %s91 = sphi 0, %s90
      %s105 = sphi 0, %s91
      %s109 = sphi 0, %s109
      %s111 = sphi 0, %s109
      %s112 = sphi 0, %s111
      %s126 = sphi 0, %s112
      %s130 = sphi 0, %s130
      %s132 = sphi 0, %s130
      %s133 = sphi 0, %s132
      %s147 = sphi 0, %s133
      %s151 = sphi 0, %s151
      %s153 = sphi 0, %s151
      %s154 = sphi 0, %s153
      %s168 = sphi 0, %s154
      %s172 = sphi 0, %s172
      %s174 = sphi 0, %s172
      %s175 = sphi 0, %s174
      %s189 = sphi 0, %s175
      %s193 = sphi 0, %s193
      %s195 = sphi 0, %s193
      %s196 = sphi 0, %s195
      %s210 = sphi 0, %s196
      %s214 = sphi 0, %s214
      %s216 = sphi 0, %s214
      %s217 = sphi 0, %s216
      %s231 = sphi 0, %s217
      %s235 = sphi 0, %s235
      %s237 = sphi 0, %s235
      %s238 = sphi 0, %s237
      %s252 = sphi 0, %s238
      %s256 = sphi 0, %s256
      %s258 = sphi 0, %s256
      %s259 = sphi 0, %s258
      %s273 = sphi 0, %s259
      %s277 = sphi 0, %s277
      %s279 = sphi 0, %s277
      %s280 = sphi 0, %s279
      %s294 = sphi 0, %s280
      %s298 = sphi 0, %s298
      %s300 = sphi 0, %s298
      %s301 = sphi 0, %s300
      %s315 = sphi 0, %s301
      %s319 = sphi 0, %s319
      %s321 = sphi 0, %s319
      %s322 = sphi 0, %s321
      %s336 = sphi 0, %s322
      %s340 = sphi 0, %s340
      %s342 = sphi 0, %s340
      %s343 = sphi 0, %s342
      %s357 = sphi 0, %s343
      %s361 = sphi 0, %s361
      %s363 = sphi 0, %s361
      %s364 = sphi 0, %s363
      %s378 = sphi 0, %s364
      %s382 = sphi 0, %s382
      %s384 = sphi 0, %s382
      %s385 = sphi 0, %s384
      %s399 = sphi 0, %s385
      %s403 = sphi 0, %s403
      %s405 = sphi 0, %s403
      %s406 = sphi 0, %s405
      %s420 = sphi 0, %s406
      %s424 = sphi 0, %s424
      %s426 = sphi 0, %s424
      %s427 = sphi 0, %s426
      %s441 = sphi 0, %s427
      %s445 = sphi 0, %s445
      %s447 = sphi 0, %s445
      %s448 = sphi 0, %s447
      %s462 = sphi 0, %s448
      %s466 = sphi 0, %s466
      %s468 = sphi 0, %s466
      %s469 = sphi 0, %s468
      %s483 = sphi 0, %s469
      %s487 = sphi 0, %s487
      %s489 = sphi 0, %s487
      %s490 = sphi 0, %s489
      %s504 = sphi 0, %s490
      %s510 = sphi 0, %s512
      %s513 = sphi 0, %s510
      %s514 = sphi 0, %s513
      %s530 = sphi 0, %s514
      %s536 = sphi 0, %s538
      %s539 = sphi 0, %s536
      %s540 = sphi 0, %s539
      %s556 = sphi 0, %s540
    $region4: #{tpu_custom_call.1} parent=1 // loop_header_branch
      %36 = sbr.rel (%p34) target = $region8
    $region5: #{tpu_custom_call.1} parent=1 // loop_body
      %s38 = ssub.s32 %s33, 1
      %s39 = ssub.s32 %s33, 2
      %s40 = sadd.s32 %s33, 1
      %s41 = ssub.s32 %s33, %s40
      %p42 = scmp.eq.s32.totalorder %s41, 0
      %s44 = sadd.s32 %s43, 1
      %s45 = scalar_select %p42, %s43, %s44
      %p48 = pneg %p42
      %p49 = scmp.eq.s32.totalorder %s33, 1
      %p50 = por %p48, %p49
      %p51 = scmp.ne.s32.totalorder %s43, %s46
      %p52 = scmp.eq.s32.totalorder %s33, 0
      %p53 = por %p51, %p52
      %p54 = scmp.ne.s32.totalorder %s43, %s46
      %p55 = scmp.eq.s32.totalorder %s38, 1
      %p56 = por %p54, %p55
      %p57 = scmp.ne.s32.totalorder %s46, %s47
      %p58 = scmp.eq.s32.totalorder %s38, 0
      %p59 = por %p57, %p58
      %p60 = scmp.ne.s32.totalorder %s46, %s47
      %p61 = scmp.eq.s32.totalorder %s39, 1
      %p62 = por %p60, %p61
      %p64 = scmp.ne.s32.totalorder %s47, %s63
      %p65 = scmp.eq.s32.totalorder %s39, 0
      %p66 = por %p64, %p65
      %s68 = sadd.s32 %s67, 1
      %p71 = scmp.eq.s32.totalorder %s33, 1
      %p72 = scmp.ne.s32.totalorder %s67, %s69
      %p73 = scmp.eq.s32.totalorder %s33, 0
      %p74 = por %p72, %p73
      %p75 = scmp.ne.s32.totalorder %s67, %s69
      %p76 = scmp.eq.s32.totalorder %s38, 1
      %p77 = por %p75, %p76
      %p78 = scmp.ne.s32.totalorder %s69, %s70
      %p79 = scmp.eq.s32.totalorder %s38, 0
      %p80 = por %p78, %p79
      %p81 = scmp.ne.s32.totalorder %s69, %s70
      %p82 = scmp.eq.s32.totalorder %s39, 1
      %p83 = por %p81, %p82
      %p85 = scmp.ne.s32.totalorder %s70, %s84
      %p86 = scmp.eq.s32.totalorder %s39, 0
      %p87 = por %p85, %p86
      %s89 = sadd.s32 %s88, 1
      %p92 = scmp.eq.s32.totalorder %s33, 1
      %p93 = scmp.ne.s32.totalorder %s88, %s90
      %p94 = scmp.eq.s32.totalorder %s33, 0
      %p95 = por %p93, %p94
      %p96 = scmp.ne.s32.totalorder %s88, %s90
      %p97 = scmp.eq.s32.totalorder %s38, 1
      %p98 = por %p96, %p97
      %p99 = scmp.ne.s32.totalorder %s90, %s91
      %p100 = scmp.eq.s32.totalorder %s38, 0
      %p101 = por %p99, %p100
      %p102 = scmp.ne.s32.totalorder %s90, %s91
      %p103 = scmp.eq.s32.totalorder %s39, 1
      %p104 = por %p102, %p103
      %p106 = scmp.ne.s32.totalorder %s91, %s105
      %p107 = scmp.eq.s32.totalorder %s39, 0
      %p108 = por %p106, %p107
      %s110 = sadd.s32 %s109, 1
      %p113 = scmp.eq.s32.totalorder %s33, 1
      %p114 = scmp.ne.s32.totalorder %s109, %s111
      %p115 = scmp.eq.s32.totalorder %s33, 0
      %p116 = por %p114, %p115
      %p117 = scmp.ne.s32.totalorder %s109, %s111
      %p118 = scmp.eq.s32.totalorder %s38, 1
      %p119 = por %p117, %p118
      %p120 = scmp.ne.s32.totalorder %s111, %s112
      %p121 = scmp.eq.s32.totalorder %s38, 0
      %p122 = por %p120, %p121
      %p123 = scmp.ne.s32.totalorder %s111, %s112
      %p124 = scmp.eq.s32.totalorder %s39, 1
      %p125 = por %p123, %p124
      %p127 = scmp.ne.s32.totalorder %s112, %s126
      %p128 = scmp.eq.s32.totalorder %s39, 0
      %p129 = por %p127, %p128
      %s131 = sadd.s32 %s130, 1
      %p134 = scmp.eq.s32.totalorder %s33, 1
      %p135 = scmp.ne.s32.totalorder %s130, %s132
      %p136 = scmp.eq.s32.totalorder %s33, 0
      %p137 = por %p135, %p136
      %p138 = scmp.ne.s32.totalorder %s130, %s132
      %p139 = scmp.eq.s32.totalorder %s38, 1
      %p140 = por %p138, %p139
      %p141 = scmp.ne.s32.totalorder %s132, %s133
      %p142 = scmp.eq.s32.totalorder %s38, 0
      %p143 = por %p141, %p142
      %p144 = scmp.ne.s32.totalorder %s132, %s133
      %p145 = scmp.eq.s32.totalorder %s39, 1
      %p146 = por %p144, %p145
      %p148 = scmp.ne.s32.totalorder %s133, %s147
      %p149 = scmp.eq.s32.totalorder %s39, 0
      %p150 = por %p148, %p149
      %s152 = sadd.s32 %s151, 1
      %p155 = scmp.eq.s32.totalorder %s33, 1
      %p156 = scmp.ne.s32.totalorder %s151, %s153
      %p157 = scmp.eq.s32.totalorder %s33, 0
      %p158 = por %p156, %p157
      %p159 = scmp.ne.s32.totalorder %s151, %s153
      %p160 = scmp.eq.s32.totalorder %s38, 1
      %p161 = por %p159, %p160
      %p162 = scmp.ne.s32.totalorder %s153, %s154
      %p163 = scmp.eq.s32.totalorder %s38, 0
      %p164 = por %p162, %p163
      %p165 = scmp.ne.s32.totalorder %s153, %s154
      %p166 = scmp.eq.s32.totalorder %s39, 1
      %p167 = por %p165, %p166
      %p169 = scmp.ne.s32.totalorder %s154, %s168
      %p170 = scmp.eq.s32.totalorder %s39, 0
      %p171 = por %p169, %p170
      %s173 = sadd.s32 %s172, 1
      %p176 = scmp.eq.s32.totalorder %s33, 1
      %p177 = scmp.ne.s32.totalorder %s172, %s174
      %p178 = scmp.eq.s32.totalorder %s33, 0
      %p179 = por %p177, %p178
      %p180 = scmp.ne.s32.totalorder %s172, %s174
      %p181 = scmp.eq.s32.totalorder %s38, 1
      %p182 = por %p180, %p181
      %p183 = scmp.ne.s32.totalorder %s174, %s175
      %p184 = scmp.eq.s32.totalorder %s38, 0
      %p185 = por %p183, %p184
      %p186 = scmp.ne.s32.totalorder %s174, %s175
      %p187 = scmp.eq.s32.totalorder %s39, 1
      %p188 = por %p186, %p187
      %p190 = scmp.ne.s32.totalorder %s175, %s189
      %p191 = scmp.eq.s32.totalorder %s39, 0
      %p192 = por %p190, %p191
      %s194 = sadd.s32 %s193, 1
      %p197 = scmp.eq.s32.totalorder %s33, 1
      %p198 = scmp.ne.s32.totalorder %s193, %s195
      %p199 = scmp.eq.s32.totalorder %s33, 0
      %p200 = por %p198, %p199
      %p201 = scmp.ne.s32.totalorder %s193, %s195
      %p202 = scmp.eq.s32.totalorder %s38, 1
      %p203 = por %p201, %p202
      %p204 = scmp.ne.s32.totalorder %s195, %s196
      %p205 = scmp.eq.s32.totalorder %s38, 0
      %p206 = por %p204, %p205
      %p207 = scmp.ne.s32.totalorder %s195, %s196
      %p208 = scmp.eq.s32.totalorder %s39, 1
      %p209 = por %p207, %p208
      %p211 = scmp.ne.s32.totalorder %s196, %s210
      %p212 = scmp.eq.s32.totalorder %s39, 0
      %p213 = por %p211, %p212
      %s215 = sadd.s32 %s214, 1
      %p218 = scmp.eq.s32.totalorder %s33, 1
      %p219 = scmp.ne.s32.totalorder %s214, %s216
      %p220 = scmp.eq.s32.totalorder %s33, 0
      %p221 = por %p219, %p220
      %p222 = scmp.ne.s32.totalorder %s214, %s216
      %p223 = scmp.eq.s32.totalorder %s38, 1
      %p224 = por %p222, %p223
      %p225 = scmp.ne.s32.totalorder %s216, %s217
      %p226 = scmp.eq.s32.totalorder %s38, 0
      %p227 = por %p225, %p226
      %p228 = scmp.ne.s32.totalorder %s216, %s217
      %p229 = scmp.eq.s32.totalorder %s39, 1
      %p230 = por %p228, %p229
      %p232 = scmp.ne.s32.totalorder %s217, %s231
      %p233 = scmp.eq.s32.totalorder %s39, 0
      %p234 = por %p232, %p233
      %s236 = sadd.s32 %s235, 1
      %p239 = scmp.eq.s32.totalorder %s33, 1
      %p240 = scmp.ne.s32.totalorder %s235, %s237
      %p241 = scmp.eq.s32.totalorder %s33, 0
      %p242 = por %p240, %p241
      %p243 = scmp.ne.s32.totalorder %s235, %s237
      %p244 = scmp.eq.s32.totalorder %s38, 1
      %p245 = por %p243, %p244
      %p246 = scmp.ne.s32.totalorder %s237, %s238
      %p247 = scmp.eq.s32.totalorder %s38, 0
      %p248 = por %p246, %p247
      %p249 = scmp.ne.s32.totalorder %s237, %s238
      %p250 = scmp.eq.s32.totalorder %s39, 1
      %p251 = por %p249, %p250
      %p253 = scmp.ne.s32.totalorder %s238, %s252
      %p254 = scmp.eq.s32.totalorder %s39, 0
      %p255 = por %p253, %p254
      %s257 = sadd.s32 %s256, 1
      %p260 = scmp.eq.s32.totalorder %s33, 1
      %p261 = scmp.ne.s32.totalorder %s256, %s258
      %p262 = scmp.eq.s32.totalorder %s33, 0
      %p263 = por %p261, %p262
      %p264 = scmp.ne.s32.totalorder %s256, %s258
      %p265 = scmp.eq.s32.totalorder %s38, 1
      %p266 = por %p264, %p265
      %p267 = scmp.ne.s32.totalorder %s258, %s259
      %p268 = scmp.eq.s32.totalorder %s38, 0
      %p269 = por %p267, %p268
      %p270 = scmp.ne.s32.totalorder %s258, %s259
      %p271 = scmp.eq.s32.totalorder %s39, 1
      %p272 = por %p270, %p271
      %p274 = scmp.ne.s32.totalorder %s259, %s273
      %p275 = scmp.eq.s32.totalorder %s39, 0
      %p276 = por %p274, %p275
      %s278 = sadd.s32 %s277, 1
      %p281 = scmp.eq.s32.totalorder %s33, 1
      %p282 = scmp.ne.s32.totalorder %s277, %s279
      %p283 = scmp.eq.s32.totalorder %s33, 0
      %p284 = por %p282, %p283
      %p285 = scmp.ne.s32.totalorder %s277, %s279
      %p286 = scmp.eq.s32.totalorder %s38, 1
      %p287 = por %p285, %p286
      %p288 = scmp.ne.s32.totalorder %s279, %s280
      %p289 = scmp.eq.s32.totalorder %s38, 0
      %p290 = por %p288, %p289
      %p291 = scmp.ne.s32.totalorder %s279, %s280
      %p292 = scmp.eq.s32.totalorder %s39, 1
      %p293 = por %p291, %p292
      %p295 = scmp.ne.s32.totalorder %s280, %s294
      %p296 = scmp.eq.s32.totalorder %s39, 0
      %p297 = por %p295, %p296
      %s299 = sadd.s32 %s298, 1
      %p302 = scmp.eq.s32.totalorder %s33, 1
      %p303 = scmp.ne.s32.totalorder %s298, %s300
      %p304 = scmp.eq.s32.totalorder %s33, 0
      %p305 = por %p303, %p304
      %p306 = scmp.ne.s32.totalorder %s298, %s300
      %p307 = scmp.eq.s32.totalorder %s38, 1
      %p308 = por %p306, %p307
      %p309 = scmp.ne.s32.totalorder %s300, %s301
      %p310 = scmp.eq.s32.totalorder %s38, 0
      %p311 = por %p309, %p310
      %p312 = scmp.ne.s32.totalorder %s300, %s301
      %p313 = scmp.eq.s32.totalorder %s39, 1
      %p314 = por %p312, %p313
      %p316 = scmp.ne.s32.totalorder %s301, %s315
      %p317 = scmp.eq.s32.totalorder %s39, 0
      %p318 = por %p316, %p317
      %s320 = sadd.s32 %s319, 1
      %p323 = scmp.eq.s32.totalorder %s33, 1
      %p324 = scmp.ne.s32.totalorder %s319, %s321
      %p325 = scmp.eq.s32.totalorder %s33, 0
      %p326 = por %p324, %p325
      %p327 = scmp.ne.s32.totalorder %s319, %s321
      %p328 = scmp.eq.s32.totalorder %s38, 1
      %p329 = por %p327, %p328
      %p330 = scmp.ne.s32.totalorder %s321, %s322
      %p331 = scmp.eq.s32.totalorder %s38, 0
      %p332 = por %p330, %p331
      %p333 = scmp.ne.s32.totalorder %s321, %s322
      %p334 = scmp.eq.s32.totalorder %s39, 1
      %p335 = por %p333, %p334
      %p337 = scmp.ne.s32.totalorder %s322, %s336
      %p338 = scmp.eq.s32.totalorder %s39, 0
      %p339 = por %p337, %p338
      %s341 = sadd.s32 %s340, 1
      %p344 = scmp.eq.s32.totalorder %s33, 1
      %p345 = scmp.ne.s32.totalorder %s340, %s342
      %p346 = scmp.eq.s32.totalorder %s33, 0
      %p347 = por %p345, %p346
      %p348 = scmp.ne.s32.totalorder %s340, %s342
      %p349 = scmp.eq.s32.totalorder %s38, 1
      %p350 = por %p348, %p349
      %p351 = scmp.ne.s32.totalorder %s342, %s343
      %p352 = scmp.eq.s32.totalorder %s38, 0
      %p353 = por %p351, %p352
      %p354 = scmp.ne.s32.totalorder %s342, %s343
      %p355 = scmp.eq.s32.totalorder %s39, 1
      %p356 = por %p354, %p355
      %p358 = scmp.ne.s32.totalorder %s343, %s357
      %p359 = scmp.eq.s32.totalorder %s39, 0
      %p360 = por %p358, %p359
      %s362 = sadd.s32 %s361, 1
      %p365 = scmp.eq.s32.totalorder %s33, 1
      %p366 = scmp.ne.s32.totalorder %s361, %s363
      %p367 = scmp.eq.s32.totalorder %s33, 0
      %p368 = por %p366, %p367
      %p369 = scmp.ne.s32.totalorder %s361, %s363
      %p370 = scmp.eq.s32.totalorder %s38, 1
      %p371 = por %p369, %p370
      %p372 = scmp.ne.s32.totalorder %s363, %s364
      %p373 = scmp.eq.s32.totalorder %s38, 0
      %p374 = por %p372, %p373
      %p375 = scmp.ne.s32.totalorder %s363, %s364
      %p376 = scmp.eq.s32.totalorder %s39, 1
      %p377 = por %p375, %p376
      %p379 = scmp.ne.s32.totalorder %s364, %s378
      %p380 = scmp.eq.s32.totalorder %s39, 0
      %p381 = por %p379, %p380
      %s383 = sadd.s32 %s382, 1
      %p386 = scmp.eq.s32.totalorder %s33, 1
      %p387 = scmp.ne.s32.totalorder %s382, %s384
      %p388 = scmp.eq.s32.totalorder %s33, 0
      %p389 = por %p387, %p388
      %p390 = scmp.ne.s32.totalorder %s382, %s384
      %p391 = scmp.eq.s32.totalorder %s38, 1
      %p392 = por %p390, %p391
      %p393 = scmp.ne.s32.totalorder %s384, %s385
      %p394 = scmp.eq.s32.totalorder %s38, 0
      %p395 = por %p393, %p394
      %p396 = scmp.ne.s32.totalorder %s384, %s385
      %p397 = scmp.eq.s32.totalorder %s39, 1
      %p398 = por %p396, %p397
      %p400 = scmp.ne.s32.totalorder %s385, %s399
      %p401 = scmp.eq.s32.totalorder %s39, 0
      %p402 = por %p400, %p401
      %s404 = sadd.s32 %s403, 1
      %p407 = scmp.eq.s32.totalorder %s33, 1
      %p408 = scmp.ne.s32.totalorder %s403, %s405
      %p409 = scmp.eq.s32.totalorder %s33, 0
      %p410 = por %p408, %p409
      %p411 = scmp.ne.s32.totalorder %s403, %s405
      %p412 = scmp.eq.s32.totalorder %s38, 1
      %p413 = por %p411, %p412
      %p414 = scmp.ne.s32.totalorder %s405, %s406
      %p415 = scmp.eq.s32.totalorder %s38, 0
      %p416 = por %p414, %p415
      %p417 = scmp.ne.s32.totalorder %s405, %s406
      %p418 = scmp.eq.s32.totalorder %s39, 1
      %p419 = por %p417, %p418
      %p421 = scmp.ne.s32.totalorder %s406, %s420
      %p422 = scmp.eq.s32.totalorder %s39, 0
      %p423 = por %p421, %p422
      %s425 = sadd.s32 %s424, 1
      %p428 = scmp.eq.s32.totalorder %s33, 1
      %p429 = scmp.ne.s32.totalorder %s424, %s426
      %p430 = scmp.eq.s32.totalorder %s33, 0
      %p431 = por %p429, %p430
      %p432 = scmp.ne.s32.totalorder %s424, %s426
      %p433 = scmp.eq.s32.totalorder %s38, 1
      %p434 = por %p432, %p433
      %p435 = scmp.ne.s32.totalorder %s426, %s427
      %p436 = scmp.eq.s32.totalorder %s38, 0
      %p437 = por %p435, %p436
      %p438 = scmp.ne.s32.totalorder %s426, %s427
      %p439 = scmp.eq.s32.totalorder %s39, 1
      %p440 = por %p438, %p439
      %p442 = scmp.ne.s32.totalorder %s427, %s441
      %p443 = scmp.eq.s32.totalorder %s39, 0
      %p444 = por %p442, %p443
      %s446 = sadd.s32 %s445, 1
      %p449 = scmp.eq.s32.totalorder %s33, 1
      %p450 = scmp.ne.s32.totalorder %s445, %s447
      %p451 = scmp.eq.s32.totalorder %s33, 0
      %p452 = por %p450, %p451
      %p453 = scmp.ne.s32.totalorder %s445, %s447
      %p454 = scmp.eq.s32.totalorder %s38, 1
      %p455 = por %p453, %p454
      %p456 = scmp.ne.s32.totalorder %s447, %s448
      %p457 = scmp.eq.s32.totalorder %s38, 0
      %p458 = por %p456, %p457
      %p459 = scmp.ne.s32.totalorder %s447, %s448
      %p460 = scmp.eq.s32.totalorder %s39, 1
      %p461 = por %p459, %p460
      %p463 = scmp.ne.s32.totalorder %s448, %s462
      %p464 = scmp.eq.s32.totalorder %s39, 0
      %p465 = por %p463, %p464
      %s467 = sadd.s32 %s466, 1
      %p470 = scmp.eq.s32.totalorder %s33, 1
      %p471 = scmp.ne.s32.totalorder %s466, %s468
      %p472 = scmp.eq.s32.totalorder %s33, 0
      %p473 = por %p471, %p472
      %p474 = scmp.ne.s32.totalorder %s466, %s468
      %p475 = scmp.eq.s32.totalorder %s38, 1
      %p476 = por %p474, %p475
      %p477 = scmp.ne.s32.totalorder %s468, %s469
      %p478 = scmp.eq.s32.totalorder %s38, 0
      %p479 = por %p477, %p478
      %p480 = scmp.ne.s32.totalorder %s468, %s469
      %p481 = scmp.eq.s32.totalorder %s39, 1
      %p482 = por %p480, %p481
      %p484 = scmp.ne.s32.totalorder %s469, %s483
      %p485 = scmp.eq.s32.totalorder %s39, 0
      %p486 = por %p484, %p485
      %s488 = sadd.s32 %s487, 1
      %p491 = scmp.eq.s32.totalorder %s33, 1
      %p492 = scmp.ne.s32.totalorder %s487, %s489
      %p493 = scmp.eq.s32.totalorder %s33, 0
      %p494 = por %p492, %p493
      %p495 = scmp.ne.s32.totalorder %s487, %s489
      %p496 = scmp.eq.s32.totalorder %s38, 1
      %p497 = por %p495, %p496
      %p498 = scmp.ne.s32.totalorder %s489, %s490
      %p499 = scmp.eq.s32.totalorder %s38, 0
      %p500 = por %p498, %p499
      %p501 = scmp.ne.s32.totalorder %s489, %s490
      %p502 = scmp.eq.s32.totalorder %s39, 1
      %p503 = por %p501, %p502
      %p505 = scmp.ne.s32.totalorder %s490, %s504
      %p506 = scmp.eq.s32.totalorder %s39, 0
      %p507 = por %p505, %p506
      %s508 = ssub.s32 %s33, %s40
      %p509 = scmp.eq.s32.totalorder %s508, 0
      %s511 = sadd.s32 %s510, 1
      %s512 = scalar_select %p509, %s510, %s511
      %p515 = pneg %p509
      %p516 = scmp.eq.s32.totalorder %s33, 1
      %p517 = por %p515, %p516
      %p518 = scmp.ne.s32.totalorder %s510, %s513
      %p519 = scmp.eq.s32.totalorder %s33, 0
      %p520 = por %p518, %p519
      %p521 = scmp.ne.s32.totalorder %s510, %s513
      %p522 = scmp.eq.s32.totalorder %s38, 1
      %p523 = por %p521, %p522
      %p524 = scmp.ne.s32.totalorder %s513, %s514
      %p525 = scmp.eq.s32.totalorder %s38, 0
      %p526 = por %p524, %p525
      %p527 = scmp.ne.s32.totalorder %s513, %s514
      %p528 = scmp.eq.s32.totalorder %s39, 1
      %p529 = por %p527, %p528
      %p531 = scmp.ne.s32.totalorder %s514, %s530
      %p532 = scmp.eq.s32.totalorder %s39, 0
      %p533 = por %p531, %p532
      %s534 = ssub.s32 %s33, %s40
      %p535 = scmp.eq.s32.totalorder %s534, 0
      %s537 = sadd.s32 %s536, 1
      %s538 = scalar_select %p535, %s536, %s537
      %p541 = pneg %p535
      %p542 = scmp.eq.s32.totalorder %s33, 1
      %p543 = por %p541, %p542
      %p544 = scmp.ne.s32.totalorder %s536, %s539
      %p545 = scmp.eq.s32.totalorder %s33, 0
      %p546 = por %p544, %p545
      %p547 = scmp.ne.s32.totalorder %s536, %s539
      %p548 = scmp.eq.s32.totalorder %s38, 1
      %p549 = por %p547, %p548
      %p550 = scmp.ne.s32.totalorder %s539, %s540
      %p551 = scmp.eq.s32.totalorder %s38, 0
      %p552 = por %p550, %p551
      %p553 = scmp.ne.s32.totalorder %s539, %s540
      %p554 = scmp.eq.s32.totalorder %s39, 1
      %p555 = por %p553, %p554
      %p557 = scmp.ne.s32.totalorder %s540, %s556
      %p558 = scmp.eq.s32.totalorder %s39, 0
      %p559 = por %p557, %p558
      %p560 = scmp.le.s32.totalorder 1, %s33
      %p561 = scmp.lt.s32.totalorder %s33, 3
      %p562 = pnand %p560, %p561
      %p563 = pneg %p562
      // Predicated region
      $region9: #{tpu_custom_call.1} parent=5 // pred_check
        _
      $region10: #{tpu_custom_call.1} parent=5 // pred_check_branch
        %565 = sbr.rel (%p562) target = $region12
      $region11: #{tpu_custom_call.1} parent=5 // pred_region
        %s566 = ssub.s32 %s33, 1
        // Predicated region
        $region13: #{tpu_custom_call.1} parent=11 // pred_check
          %p567 = pneg %p80
        $region14: #{tpu_custom_call.1} parent=11 // pred_check_branch
          %569 = sbr.rel (%p567) target = $region16
        $region15: #{tpu_custom_call.1} parent=11 // pred_region
          _
        $region16: #{tpu_custom_call.1} parent=11 // pred_fallthru
          _
        // Predicated region
        $region17: #{tpu_custom_call.1} parent=11 // pred_check
          %p570 = pneg %p101
        $region18: #{tpu_custom_call.1} parent=11 // pred_check_branch
          %572 = sbr.rel (%p570) target = $region20
        $region19: #{tpu_custom_call.1} parent=11 // pred_region
          _
        $region20: #{tpu_custom_call.1} parent=11 // pred_fallthru
          _
        // Predicated region
        $region21: #{tpu_custom_call.1} parent=11 // pred_check
          %p573 = pneg %p122
        $region22: #{tpu_custom_call.1} parent=11 // pred_check_branch
          %575 = sbr.rel (%p573) target = $region24
        $region23: #{tpu_custom_call.1} parent=11 // pred_region
          _
        $region24: #{tpu_custom_call.1} parent=11 // pred_fallthru
          _
        // Predicated region
        $region25: #{tpu_custom_call.1} parent=11 // pred_check
          %p576 = pneg %p143
        $region26: #{tpu_custom_call.1} parent=11 // pred_check_branch
          %578 = sbr.rel (%p576) target = $region28
        $region27: #{tpu_custom_call.1} parent=11 // pred_region
          _
        $region28: #{tpu_custom_call.1} parent=11 // pred_fallthru
          _
        // Predicated region
        $region29: #{tpu_custom_call.1} parent=11 // pred_check
          %p579 = pneg %p164
        $region30: #{tpu_custom_call.1} parent=11 // pred_check_branch
          %581 = sbr.rel (%p579) target = $region32
        $region31: #{tpu_custom_call.1} parent=11 // pred_region
          _
        $region32: #{tpu_custom_call.1} parent=11 // pred_fallthru
          _
        // Predicated region
        $region33: #{tpu_custom_call.1} parent=11 // pred_check
          %p582 = pneg %p185
        $region34: #{tpu_custom_call.1} parent=11 // pred_check_branch
          %584 = sbr.rel (%p582) target = $region36
        $region35: #{tpu_custom_call.1} parent=11 // pred_region
          _
        $region36: #{tpu_custom_call.1} parent=11 // pred_fallthru
          _
        // Predicated region
        $region37: #{tpu_custom_call.1} parent=11 // pred_check
          %p585 = pneg %p206
        $region38: #{tpu_custom_call.1} parent=11 // pred_check_branch
          %587 = sbr.rel (%p585) target = $region40
        $region39: #{tpu_custom_call.1} parent=11 // pred_region
          _
        $region40: #{tpu_custom_call.1} parent=11 // pred_fallthru
          _
        // Predicated region
        $region41: #{tpu_custom_call.1} parent=11 // pred_check
          %p588 = pneg %p227
        $region42: #{tpu_custom_call.1} parent=11 // pred_check_branch
          %590 = sbr.rel (%p588) target = $region44
        $region43: #{tpu_custom_call.1} parent=11 // pred_region
          _
        $region44: #{tpu_custom_call.1} parent=11 // pred_fallthru
          _
        // Predicated region
        $region45: #{tpu_custom_call.1} parent=11 // pred_check
          %p591 = pneg %p248
        $region46: #{tpu_custom_call.1} parent=11 // pred_check_branch
          %593 = sbr.rel (%p591) target = $region48
        $region47: #{tpu_custom_call.1} parent=11 // pred_region
          _
        $region48: #{tpu_custom_call.1} parent=11 // pred_fallthru
          _
        // Predicated region
        $region49: #{tpu_custom_call.1} parent=11 // pred_check
          %p594 = pneg %p269
        $region50: #{tpu_custom_call.1} parent=11 // pred_check_branch
          %596 = sbr.rel (%p594) target = $region52
        $region51: #{tpu_custom_call.1} parent=11 // pred_region
          _
        $region52: #{tpu_custom_call.1} parent=11 // pred_fallthru
          _
        // Predicated region
        $region53: #{tpu_custom_call.1} parent=11 // pred_check
          %p597 = pneg %p290
        $region54: #{tpu_custom_call.1} parent=11 // pred_check_branch
          %599 = sbr.rel (%p597) target = $region56
        $region55: #{tpu_custom_call.1} parent=11 // pred_region
          _
        $region56: #{tpu_custom_call.1} parent=11 // pred_fallthru
          _
        // Predicated region
        $region57: #{tpu_custom_call.1} parent=11 // pred_check
          %p600 = pneg %p311
        $region58: #{tpu_custom_call.1} parent=11 // pred_check_branch
          %602 = sbr.rel (%p600) target = $region60
        $region59: #{tpu_custom_call.1} parent=11 // pred_region
          _
        $region60: #{tpu_custom_call.1} parent=11 // pred_fallthru
          _
        // Predicated region
        $region61: #{tpu_custom_call.1} parent=11 // pred_check
          %p603 = pneg %p332
        $region62: #{tpu_custom_call.1} parent=11 // pred_check_branch
          %605 = sbr.rel (%p603) target = $region64
        $region63: #{tpu_custom_call.1} parent=11 // pred_region
          _
        $region64: #{tpu_custom_call.1} parent=11 // pred_fallthru
          _
        // Predicated region
        $region65: #{tpu_custom_call.1} parent=11 // pred_check
          %p606 = pneg %p353
        $region66: #{tpu_custom_call.1} parent=11 // pred_check_branch
          %608 = sbr.rel (%p606) target = $region68
        $region67: #{tpu_custom_call.1} parent=11 // pred_region
          _
        $region68: #{tpu_custom_call.1} parent=11 // pred_fallthru
          _
        // Predicated region
        $region69: #{tpu_custom_call.1} parent=11 // pred_check
          %p609 = pneg %p374
        $region70: #{tpu_custom_call.1} parent=11 // pred_check_branch
          %611 = sbr.rel (%p609) target = $region72
        $region71: #{tpu_custom_call.1} parent=11 // pred_region
          _
        $region72: #{tpu_custom_call.1} parent=11 // pred_fallthru
          _
        // Predicated region
        $region73: #{tpu_custom_call.1} parent=11 // pred_check
          %p612 = pneg %p395
        $region74: #{tpu_custom_call.1} parent=11 // pred_check_branch
          %614 = sbr.rel (%p612) target = $region76
        $region75: #{tpu_custom_call.1} parent=11 // pred_region
          _
        $region76: #{tpu_custom_call.1} parent=11 // pred_fallthru
          _
        // Predicated region
        $region77: #{tpu_custom_call.1} parent=11 // pred_check
          %p615 = pneg %p416
        $region78: #{tpu_custom_call.1} parent=11 // pred_check_branch
          %617 = sbr.rel (%p615) target = $region80
        $region79: #{tpu_custom_call.1} parent=11 // pred_region
          _
        $region80: #{tpu_custom_call.1} parent=11 // pred_fallthru
          _
        // Predicated region
        $region81: #{tpu_custom_call.1} parent=11 // pred_check
          %p618 = pneg %p437
        $region82: #{tpu_custom_call.1} parent=11 // pred_check_branch
          %620 = sbr.rel (%p618) target = $region84
        $region83: #{tpu_custom_call.1} parent=11 // pred_region
          _
        $region84: #{tpu_custom_call.1} parent=11 // pred_fallthru
          _
        // Predicated region
        $region85: #{tpu_custom_call.1} parent=11 // pred_check
          %p621 = pneg %p458
        $region86: #{tpu_custom_call.1} parent=11 // pred_check_branch
          %623 = sbr.rel (%p621) target = $region88
        $region87: #{tpu_custom_call.1} parent=11 // pred_region
          _
        $region88: #{tpu_custom_call.1} parent=11 // pred_fallthru
          _
        // Predicated region
        $region89: #{tpu_custom_call.1} parent=11 // pred_check
          %p624 = pneg %p479
        $region90: #{tpu_custom_call.1} parent=11 // pred_check_branch
          %626 = sbr.rel (%p624) target = $region92
        $region91: #{tpu_custom_call.1} parent=11 // pred_region
          _
        $region92: #{tpu_custom_call.1} parent=11 // pred_fallthru
          _
        // Predicated region
        $region93: #{tpu_custom_call.1} parent=11 // pred_check
          %p627 = pneg %p500
        $region94: #{tpu_custom_call.1} parent=11 // pred_check_branch
          %629 = sbr.rel (%p627) target = $region96
        $region95: #{tpu_custom_call.1} parent=11 // pred_region
          _
        $region96: #{tpu_custom_call.1} parent=11 // pred_fallthru
          _
      $region12: #{tpu_custom_call.1} parent=5 // pred_fallthru
        _
      %p630 = scmp.lt.s32.totalorder %s33, 2
      // Predicated region
      $region97: #{tpu_custom_call.1} parent=5 // pred_check
        %p631 = pneg %p630
      $region98: #{tpu_custom_call.1} parent=5 // pred_check_branch
        %633 = sbr.rel (%p631) target = $region100
      $region99: #{tpu_custom_call.1} parent=5 // pred_region
        // Predicated region
        $region101: #{tpu_custom_call.1} parent=99 // pred_check
          %p634 = pneg %p53
        $region102: #{tpu_custom_call.1} parent=99 // pred_check_branch
          %636 = sbr.rel (%p634) target = $region104
        $region103: #{tpu_custom_call.1} parent=99 // pred_region
          %p637 = scmp.lt.s32.totalorder %s33, 1
          %s638 = scalar_select %p637, %s33, 1
          %s639 = smul.addr %s638, 2
          %s640 = smul.addr %s639, 8
          %s641 = scalar_lea.vmem %s0, %s640
        $region104: #{tpu_custom_call.1} parent=99 // pred_fallthru
          _
      $region100: #{tpu_custom_call.1} parent=5 // pred_fallthru
        _
      %p642 = scmp.le.s32.totalorder 1, %s33
      %p643 = scmp.lt.s32.totalorder %s33, 3
      %p644 = pnand %p642, %p643
      %p645 = pneg %p644
      // Predicated region
      $region105: #{tpu_custom_call.1} parent=5 // pred_check
        _
      $region106: #{tpu_custom_call.1} parent=5 // pred_check_branch
        %647 = sbr.rel (%p644) target = $region108
      $region107: #{tpu_custom_call.1} parent=5 // pred_region
        %s648 = ssub.s32 %s33, 1
        %p649 = scmp.lt.s32.totalorder %s38, 1
        %s650 = scalar_select %p649, %s38, 1
        %s651 = smul.addr %s650, 2
        %s652 = smul.addr %s651, 8
        %s653 = scalar_lea.vmem %s0, %s652
        %p654 = pneg %p59
        %p655 = pneg %p56
        %p656 = pneg %p80
        %p657 = pneg %p77
        %p658 = pneg %p101
        %p659 = pneg %p98
        %p660 = pneg %p122
        %p661 = pneg %p119
        %p662 = pneg %p143
        %p663 = pneg %p140
        %p664 = pneg %p164
        %p665 = pneg %p161
        %p666 = pneg %p185
        %p667 = pneg %p182
        %p668 = pneg %p206
        %p669 = pneg %p203
        %p670 = pneg %p227
        %p671 = pneg %p224
        %p672 = pneg %p248
        %p673 = pneg %p245
        %p674 = pneg %p269
        %p675 = pneg %p266
        %p676 = pneg %p290
        %p677 = pneg %p287
        %p678 = pneg %p311
        %p679 = pneg %p308
        %p680 = pneg %p332
        %p681 = pneg %p329
        %p682 = pneg %p353
        %p683 = pneg %p350
        %p684 = pneg %p374
        %p685 = pneg %p371
        %p686 = pneg %p395
        %p687 = pneg %p392
        %p688 = pneg %p416
        %p689 = pneg %p413
        %p690 = pneg %p437
        %p691 = pneg %p434
        %p692 = pneg %p458
        %p693 = pneg %p455
        %p694 = pneg %p479
        %p695 = pneg %p476
        %p696 = pneg %p500
        %p697 = pneg %p497
        %p698 = pneg %p526
        %p699 = pneg %p523
        %p700 = scmp.lt.s32.totalorder %s38, 1
        %s701 = scalar_select %p700, %s38, 1
        %s702 = smul.addr %s701, 2
        %s703 = smul.addr %s702, 8
        %s704 = scalar_lea.vmem %s22, %s703
        %p705 = pneg %p552
        %p706 = pneg %p549
        %s707 = sand.u32 %s539, 1
        %s708 = scalar_lea.sflag [#allocation3], %s707
        %s709 = sand.u32 %s539, 1
        %s710 = smul.addr %s709, 16
        %s711 = scalar_lea.vmem [#allocation2], %s710
        %p712 = scmp.lt.s32.totalorder %s38, 1
        %s713 = scalar_select %p712, %s38, 1
        %s714 = smul.addr %s713, 2
        %s715 = smul.addr %s714, 8
        %s716 = scalar_lea.vmem %s0, %s715
        %p717 = scmp.lt.s32.totalorder %s38, 1
        %s718 = scalar_select %p717, %s38, 1
        %s719 = smul.addr %s718, 2
        %s720 = smul.addr %s719, 8
        %s721 = scalar_lea.vmem %s22, %s720
        %v722 = vld [vmem:[%s716] sm:$0xff]
        %v723 = vld [vmem:[%s716 + $0x8] sm:$0xff]
        %v724 = vld [vmem:[%s1] sm:$0xff]
        %v725 = vld [vmem:[%s1 + $0x8] sm:$0xff]
        %v726 = vld [vmem:[%s1 + $0x10] sm:$0xff]
        %v727 = vld [vmem:[%s1 + $0x18] sm:$0xff]
        %v728 = vld [vmem:[%s1 + $0x20] sm:$0xff]
        %v729 = vld [vmem:[%s1 + $0x28] sm:$0xff]
        %v730 = vld [vmem:[%s1 + $0x30] sm:$0xff]
        %v731 = vld [vmem:[%s1 + $0x38] sm:$0xff]
        %v732 = vld [vmem:[%s1 + $0x40] sm:$0xff]
        %v733 = vld [vmem:[%s1 + $0x48] sm:$0xff]
        %v734 = vld [vmem:[%s1 + $0x50] sm:$0xf]
        %v735 = vld [vmem:[%s2] sm:$0x1]
        %v737 = vlaneseq
        %v738 = vshrl.u32 %v737, 7
        %v739 = vsub.s32 0, %v738
        %v740 = vrot.slane %v735, %v739
        %vm742 = vcmask 687104
        %v744 = vsel %vm742, %v722, 0
        %v747 = vsel %vm742, %v723, 0
        %vm749 = vcmask 1043456
        %v751 = vsel %vm749, %v734, 0
        %753 = vmatprep.subr.mxu0 0.0
        %754 = vmatpush1.msra.mxu0 0.0
        %755 = vmatprep.subr.mxu0 0.0
        %756 = vmatpush1.msra.mxu0 0.0
        %757 = vmatprep.subr.mxu0 0.0
        %758 = vmatpush1.msra.mxu0 0.0
        %759 = vmatprep.subr.mxu0 0.0
        %760 = vmatpush1.msra.mxu0 0.0
        %761 = vmatprep.subr.mxu0 0.0
        %762 = vmatpush1.msra.mxu0 0.0
        %763 = vmatprep.subr.mxu0 0.0
        %764 = vmatpush1.msra.mxu0 %v751
        %765 = vmatprep.subr.mxu0 0.0
        %766 = vmatpush1.msra.mxu0 %v733
        %767 = vmatprep.subr.mxu0 0.0
        %768 = vmatpush1.msra.mxu0 %v732
        %769 = vmatprep.subr.mxu0 0.0
        %770 = vmatpush1.msra.mxu0 %v731
        %771 = vmatprep.subr.mxu0 0.0
        %772 = vmatpush1.msra.mxu0 %v730
        %773 = vmatprep.subr.mxu0 0.0
        %774 = vmatpush1.msra.mxu0 %v729
        %775 = vmatprep.subr.mxu0 0.0
        %776 = vmatpush1.msra.mxu0 %v728
        %777 = vmatprep.subr.mxu0 0.0
        %778 = vmatpush1.msra.mxu0 %v727
        %779 = vmatprep.subr.mxu0 0.0
        %780 = vmatpush1.msra.mxu0 %v726
        %781 = vmatprep.subr.mxu0 0.0
        %782 = vmatpush1.msra.mxu0 %v725
        %783 = vmatprep.subr.mxu0 0.0
        %784 = vmatpush1.msra.mxu0 %v724
        %785 = vmatprep.subr.mxu0 0.0
        %786 = vmatpush2.msra.mxu0 0.0
        %787 = vmatprep.subr.mxu0 0.0
        %788 = vmatpush2.msra.mxu0 0.0
        %789 = vmatprep.subr.mxu0 0.0
        %790 = vmatpush2.msra.mxu0 0.0
        %791 = vmatprep.subr.mxu0 0.0
        %792 = vmatpush2.msra.mxu0 0.0
        %793 = vmatprep.subr.mxu0 0.0
        %794 = vmatpush2.msra.mxu0 0.0
        %795 = vmatprep.subr.mxu0 0.0
        %796 = vmatpush2.msra.mxu0 0.0
        %797 = vmatprep.subr.mxu0 0.0
        %798 = vmatpush2.msra.mxu0 0.0
        %799 = vmatprep.subr.mxu0 0.0
        %800 = vmatpush2.msra.mxu0 0.0
        %801 = vmatprep.subr.mxu0 0.0
        %802 = vmatpush2.msra.mxu0 0.0
        %803 = vmatprep.subr.mxu0 0.0
        %804 = vmatpush2.msra.mxu0 0.0
        %805 = vmatprep.subr.mxu0 0.0
        %806 = vmatpush2.msra.mxu0 0.0
        %807 = vmatprep.subr.mxu0 0.0
        %808 = vmatpush2.msra.mxu0 0.0
        %809 = vmatprep.subr.mxu0 0.0
        %810 = vmatpush2.msra.mxu0 0.0
        %811 = vmatprep.subr.mxu0 0.0
        %812 = vmatpush2.msra.mxu0 0.0
        %813 = vmatprep.subr.mxu0 0.0
        %814 = vmatpush2.msra.mxu0 0.0
        %815 = vmatprep.subr.mxu0 0.0
        %816 = vmatpush2.msra.mxu0 0.0
        %817 = vmatprep.mubr.f32.mxu0 0.0
        %818 = vmatmul.mubr.f32.gmra.mxu0 %v744
        %v819 = vpop.f32.mrf.mxu0
        %v820 = vadd.f32 %v740, %v819
        %v821 = vpop.f32.mrf.mxu0
        %822 = vmatprep.mubr.f32.mxu0 0.0
        %823 = vmatmul.mubr.f32.gmra.mxu0 %v747
        %v824 = vpop.f32.mrf.mxu0
        %v825 = vadd.f32 %v740, %v824
        %v826 = vpop.f32.mrf.mxu0
        %827 = vdwg.mxu0
        %v828 = vld [vmem:[%s3] sm:$0xff]
        %v829 = vld [vmem:[%s3 + $0x8] sm:$0xff]
        %v830 = vadd.f32 %v820, %v828
        %v831 = vadd.f32 %v825, %v829
        %v832 = vld [vmem:[%s4] sm:$0x1]
        %v833 = vld [vmem:[%s5] sm:$0x1]
        %vm834 = vcmask 523264
        %v835 = vsel %vm834, %v830, 0.0
        %836 = vadd.xlane.f32.xlu0 %v835
        %v837 = vpop.xlane.xlu0 %836
        %v838 = vsel %vm834, %v831, 0.0
        %839 = vadd.xlane.f32.xlu0 %v838
        %v840 = vpop.xlane.xlu0 %839
        %v841 = vrcp.pop 64.0
        %v842 = vmul.f32 %v837, %v841
        %v843 = vmul.f32 %v840, %v841
        %v844 = vsub.f32 %v830, %v842
        %v845 = vsub.f32 %v831, %v843
        %v846 = vmul.f32 %v844, %v844
        %v847 = vmul.f32 %v845, %v845
        %v848 = vsel %vm834, %v846, 0.0
        %849 = vadd.xlane.f32.xlu0 %v848
        %v850 = vpop.xlane.xlu0 %849
        %v851 = vsel %vm834, %v847, 0.0
        %852 = vadd.xlane.f32.xlu0 %v851
        %v853 = vpop.xlane.xlu0 %852
        %v854 = vmul.f32 %v850, %v841
        %v855 = vmul.f32 %v853, %v841
        %v856 = vadd.f32 %v854, 1e-05
        %v857 = vadd.f32 %v855, 1e-05
        %v858 = vrsqrt.pop %v856
        %v859 = vrsqrt.pop %v857
        %v860 = vmul.f32 %v844, %v858
        %v861 = vmul.f32 %v845, %v859
        %v863 = vlaneseq
        %v864 = vshrl.u32 %v863, 7
        %v865 = vsub.s32 0, %v864
        %v866 = vrot.slane %v832, %v865
        %v868 = vmul.f32 %v860, %v866
        %v869 = vmul.f32 %v861, %v866
        %v871 = vlaneseq
        %v872 = vshrl.u32 %v871, 7
        %v873 = vsub.s32 0, %v872
        %v874 = vrot.slane %v833, %v873
        %v876 = vadd.f32 %v868, %v874
        %v877 = vadd.f32 %v869, %v874
        %v878 = vld [vmem:[%s6] sm:$0xff]
        %v879 = vld [vmem:[%s6 + $0x8] sm:$0xff]
        %v880 = vld [vmem:[%s6 + $0x10] sm:$0xff]
        %v881 = vld [vmem:[%s6 + $0x18] sm:$0xff]
        %v882 = vld [vmem:[%s6 + $0x20] sm:$0xff]
        %v883 = vld [vmem:[%s6 + $0x28] sm:$0xff]
        %v884 = vld [vmem:[%s6 + $0x30] sm:$0xff]
        %v885 = vld [vmem:[%s6 + $0x38] sm:$0xff]
        %v887 = vsel %vm834, %v876, 0
        %v890 = vsel %vm834, %v877, 0
        %892 = vmatprep.subr.mxu0 0.0
        %893 = vmatpush1.msra.mxu0 0.0
        %894 = vmatprep.subr.mxu0 0.0
        %895 = vmatpush1.msra.mxu0 0.0
        %896 = vmatprep.subr.mxu0 0.0
        %897 = vmatpush1.msra.mxu0 0.0
        %898 = vmatprep.subr.mxu0 0.0
        %899 = vmatpush1.msra.mxu0 0.0
        %900 = vmatprep.subr.mxu0 0.0
        %901 = vmatpush1.msra.mxu0 0.0
        %902 = vmatprep.subr.mxu0 0.0
        %903 = vmatpush1.msra.mxu0 0.0
        %904 = vmatprep.subr.mxu0 0.0
        %905 = vmatpush1.msra.mxu0 0.0
        %906 = vmatprep.subr.mxu0 0.0
        %907 = vmatpush1.msra.mxu0 0.0
        %908 = vmatprep.subr.mxu0 0.0
        %909 = vmatpush1.msra.mxu0 %v885
        %910 = vmatprep.subr.mxu0 0.0
        %911 = vmatpush1.msra.mxu0 %v884
        %912 = vmatprep.subr.mxu0 0.0
        %913 = vmatpush1.msra.mxu0 %v883
        %914 = vmatprep.subr.mxu0 0.0
        %915 = vmatpush1.msra.mxu0 %v882
        %916 = vmatprep.subr.mxu0 0.0
        %917 = vmatpush1.msra.mxu0 %v881
        %918 = vmatprep.subr.mxu0 0.0
        %919 = vmatpush1.msra.mxu0 %v880
        %920 = vmatprep.subr.mxu0 0.0
        %921 = vmatpush1.msra.mxu0 %v879
        %922 = vmatprep.subr.mxu0 0.0
        %923 = vmatpush1.msra.mxu0 %v878
        %924 = vmatprep.subr.mxu0 0.0
        %925 = vmatpush2.msra.mxu0 0.0
        %926 = vmatprep.subr.mxu0 0.0
        %927 = vmatpush2.msra.mxu0 0.0
        %928 = vmatprep.subr.mxu0 0.0
        %929 = vmatpush2.msra.mxu0 0.0
        %930 = vmatprep.subr.mxu0 0.0
        %931 = vmatpush2.msra.mxu0 0.0
        %932 = vmatprep.subr.mxu0 0.0
        %933 = vmatpush2.msra.mxu0 0.0
        %934 = vmatprep.subr.mxu0 0.0
        %935 = vmatpush2.msra.mxu0 0.0
        %936 = vmatprep.subr.mxu0 0.0
        %937 = vmatpush2.msra.mxu0 0.0
        %938 = vmatprep.subr.mxu0 0.0
        %939 = vmatpush2.msra.mxu0 0.0
        %940 = vmatprep.subr.mxu0 0.0
        %941 = vmatpush2.msra.mxu0 0.0
        %942 = vmatprep.subr.mxu0 0.0
        %943 = vmatpush2.msra.mxu0 0.0
        %944 = vmatprep.subr.mxu0 0.0
        %945 = vmatpush2.msra.mxu0 0.0
        %946 = vmatprep.subr.mxu0 0.0
        %947 = vmatpush2.msra.mxu0 0.0
        %948 = vmatprep.subr.mxu0 0.0
        %949 = vmatpush2.msra.mxu0 0.0
        %950 = vmatprep.subr.mxu0 0.0
        %951 = vmatpush2.msra.mxu0 0.0
        %952 = vmatprep.subr.mxu0 0.0
        %953 = vmatpush2.msra.mxu0 0.0
        %954 = vmatprep.subr.mxu0 0.0
        %955 = vmatpush2.msra.mxu0 0.0
        %956 = vmatprep.mubr.f32.mxu0 0.0
        %957 = vmatmul.mubr.f32.gmra.mxu0 %v887
        %v958 = vpop.f32.mrf.mxu0
        %v959 = vadd.f32 0.0, %v958
        %v960 = vpop.f32.mrf.mxu0
        %961 = vmatprep.mubr.f32.mxu0 0.0
        %962 = vmatmul.mubr.f32.gmra.mxu0 %v890
        %v963 = vpop.f32.mrf.mxu0
        %v964 = vadd.f32 0.0, %v963
        %v965 = vpop.f32.mrf.mxu0
        %966 = vdwg.mxu0
        %v967 = vld [vmem:[%s7] sm:$0xff]
        %v968 = vld [vmem:[%s7 + $0x8] sm:$0xff]
        %v969 = vld [vmem:[%s7 + $0x10] sm:$0xff]
        %v970 = vld [vmem:[%s7 + $0x18] sm:$0xff]
        %v971 = vld [vmem:[%s7 + $0x20] sm:$0xff]
        %v972 = vld [vmem:[%s7 + $0x28] sm:$0xff]
        %v973 = vld [vmem:[%s7 + $0x30] sm:$0xff]
        %v974 = vld [vmem:[%s7 + $0x38] sm:$0xff]
        %975 = vmatprep.subr.mxu0 0.0
        %976 = vmatpush1.msra.mxu0 0.0
        %977 = vmatprep.subr.mxu0 0.0
        %978 = vmatpush1.msra.mxu0 0.0
        %979 = vmatprep.subr.mxu0 0.0
        %980 = vmatpush1.msra.mxu0 0.0
        %981 = vmatprep.subr.mxu0 0.0
        %982 = vmatpush1.msra.mxu0 0.0
        %983 = vmatprep.subr.mxu0 0.0
        %984 = vmatpush1.msra.mxu0 0.0
        %985 = vmatprep.subr.mxu0 0.0
        %986 = vmatpush1.msra.mxu0 0.0
        %987 = vmatprep.subr.mxu0 0.0
        %988 = vmatpush1.msra.mxu0 0.0
        %989 = vmatprep.subr.mxu0 0.0
        %990 = vmatpush1.msra.mxu0 0.0
        %991 = vmatprep.subr.mxu0 0.0
        %992 = vmatpush1.msra.mxu0 %v974
        %993 = vmatprep.subr.mxu0 0.0
        %994 = vmatpush1.msra.mxu0 %v973
        %995 = vmatprep.subr.mxu0 0.0
        %996 = vmatpush1.msra.mxu0 %v972
        %997 = vmatprep.subr.mxu0 0.0
        %998 = vmatpush1.msra.mxu0 %v971
        %999 = vmatprep.subr.mxu0 0.0
        %1000 = vmatpush1.msra.mxu0 %v970
        %1001 = vmatprep.subr.mxu0 0.0
        %1002 = vmatpush1.msra.mxu0 %v969
        %1003 = vmatprep.subr.mxu0 0.0
        %1004 = vmatpush1.msra.mxu0 %v968
        %1005 = vmatprep.subr.mxu0 0.0
        %1006 = vmatpush1.msra.mxu0 %v967
        %1007 = vmatprep.subr.mxu0 0.0
        %1008 = vmatpush2.msra.mxu0 0.0
        %1009 = vmatprep.subr.mxu0 0.0
        %1010 = vmatpush2.msra.mxu0 0.0
        %1011 = vmatprep.subr.mxu0 0.0
        %1012 = vmatpush2.msra.mxu0 0.0
        %1013 = vmatprep.subr.mxu0 0.0
        %1014 = vmatpush2.msra.mxu0 0.0
        %1015 = vmatprep.subr.mxu0 0.0
        %1016 = vmatpush2.msra.mxu0 0.0
        %1017 = vmatprep.subr.mxu0 0.0
        %1018 = vmatpush2.msra.mxu0 0.0
        %1019 = vmatprep.subr.mxu0 0.0
        %1020 = vmatpush2.msra.mxu0 0.0
        %1021 = vmatprep.subr.mxu0 0.0
        %1022 = vmatpush2.msra.mxu0 0.0
        %1023 = vmatprep.subr.mxu0 0.0
        %1024 = vmatpush2.msra.mxu0 0.0
        %1025 = vmatprep.subr.mxu0 0.0
        %1026 = vmatpush2.msra.mxu0 0.0
        %1027 = vmatprep.subr.mxu0 0.0
        %1028 = vmatpush2.msra.mxu0 0.0
        %1029 = vmatprep.subr.mxu0 0.0
        %1030 = vmatpush2.msra.mxu0 0.0
        %1031 = vmatprep.subr.mxu0 0.0
        %1032 = vmatpush2.msra.mxu0 0.0
        %1033 = vmatprep.subr.mxu0 0.0
        %1034 = vmatpush2.msra.mxu0 0.0
        %1035 = vmatprep.subr.mxu0 0.0
        %1036 = vmatpush2.msra.mxu0 0.0
        %1037 = vmatprep.subr.mxu0 0.0
        %1038 = vmatpush2.msra.mxu0 0.0
        %1039 = vmatprep.mubr.f32.mxu0 0.0
        %1040 = vmatmul.mubr.f32.gmra.mxu0 %v887
        %v1041 = vpop.f32.mrf.mxu0
        %v1042 = vadd.f32 0.0, %v1041
        %v1043 = vpop.f32.mrf.mxu0
        %1044 = vmatprep.mubr.f32.mxu0 0.0
        %1045 = vmatmul.mubr.f32.gmra.mxu0 %v890
        %v1046 = vpop.f32.mrf.mxu0
        %v1047 = vadd.f32 0.0, %v1046
        %v1048 = vpop.f32.mrf.mxu0
        %1049 = vdwg.mxu0
        %v1050 = vld [vmem:[%s8] sm:$0xff]
        %v1051 = vld [vmem:[%s8 + $0x8] sm:$0xff]
        %v1052 = vld [vmem:[%s8 + $0x10] sm:$0xff]
        %v1053 = vld [vmem:[%s8 + $0x18] sm:$0xff]
        %v1054 = vld [vmem:[%s8 + $0x20] sm:$0xff]
        %v1055 = vld [vmem:[%s8 + $0x28] sm:$0xff]
        %v1056 = vld [vmem:[%s8 + $0x30] sm:$0xff]
        %v1057 = vld [vmem:[%s8 + $0x38] sm:$0xff]
        %1058 = vmatprep.subr.mxu0 0.0
        %1059 = vmatpush1.msra.mxu0 0.0
        %1060 = vmatprep.subr.mxu0 0.0
        %1061 = vmatpush1.msra.mxu0 0.0
        %1062 = vmatprep.subr.mxu0 0.0
        %1063 = vmatpush1.msra.mxu0 0.0
        %1064 = vmatprep.subr.mxu0 0.0
        %1065 = vmatpush1.msra.mxu0 0.0
        %1066 = vmatprep.subr.mxu0 0.0
        %1067 = vmatpush1.msra.mxu0 0.0
        %1068 = vmatprep.subr.mxu0 0.0
        %1069 = vmatpush1.msra.mxu0 0.0
        %1070 = vmatprep.subr.mxu0 0.0
        %1071 = vmatpush1.msra.mxu0 0.0
        %1072 = vmatprep.subr.mxu0 0.0
        %1073 = vmatpush1.msra.mxu0 0.0
        %1074 = vmatprep.subr.mxu0 0.0
        %1075 = vmatpush1.msra.mxu0 %v1057
        %1076 = vmatprep.subr.mxu0 0.0
        %1077 = vmatpush1.msra.mxu0 %v1056
        %1078 = vmatprep.subr.mxu0 0.0
        %1079 = vmatpush1.msra.mxu0 %v1055
        %1080 = vmatprep.subr.mxu0 0.0
        %1081 = vmatpush1.msra.mxu0 %v1054
        %1082 = vmatprep.subr.mxu0 0.0
        %1083 = vmatpush1.msra.mxu0 %v1053
        %1084 = vmatprep.subr.mxu0 0.0
        %1085 = vmatpush1.msra.mxu0 %v1052
        %1086 = vmatprep.subr.mxu0 0.0
        %1087 = vmatpush1.msra.mxu0 %v1051
        %1088 = vmatprep.subr.mxu0 0.0
        %1089 = vmatpush1.msra.mxu0 %v1050
        %1090 = vmatprep.subr.mxu0 0.0
        %1091 = vmatpush2.msra.mxu0 0.0
        %1092 = vmatprep.subr.mxu0 0.0
        %1093 = vmatpush2.msra.mxu0 0.0
        %1094 = vmatprep.subr.mxu0 0.0
        %1095 = vmatpush2.msra.mxu0 0.0
        %1096 = vmatprep.subr.mxu0 0.0
        %1097 = vmatpush2.msra.mxu0 0.0
        %1098 = vmatprep.subr.mxu0 0.0
        %1099 = vmatpush2.msra.mxu0 0.0
        %1100 = vmatprep.subr.mxu0 0.0
        %1101 = vmatpush2.msra.mxu0 0.0
        %1102 = vmatprep.subr.mxu0 0.0
        %1103 = vmatpush2.msra.mxu0 0.0
        %1104 = vmatprep.subr.mxu0 0.0
        %1105 = vmatpush2.msra.mxu0 0.0
        %1106 = vmatprep.subr.mxu0 0.0
        %1107 = vmatpush2.msra.mxu0 0.0
        %1108 = vmatprep.subr.mxu0 0.0
        %1109 = vmatpush2.msra.mxu0 0.0
        %1110 = vmatprep.subr.mxu0 0.0
        %1111 = vmatpush2.msra.mxu0 0.0
        %1112 = vmatprep.subr.mxu0 0.0
        %1113 = vmatpush2.msra.mxu0 0.0
        %1114 = vmatprep.subr.mxu0 0.0
        %1115 = vmatpush2.msra.mxu0 0.0
        %1116 = vmatprep.subr.mxu0 0.0
        %1117 = vmatpush2.msra.mxu0 0.0
        %1118 = vmatprep.subr.mxu0 0.0
        %1119 = vmatpush2.msra.mxu0 0.0
        %1120 = vmatprep.subr.mxu0 0.0
        %1121 = vmatpush2.msra.mxu0 0.0
        %1122 = vmatprep.mubr.f32.mxu0 0.0
        %1123 = vmatmul.mubr.f32.gmra.mxu0 %v887
        %v1124 = vpop.f32.mrf.mxu0
        %v1125 = vadd.f32 0.0, %v1124
        %v1126 = vpop.f32.mrf.mxu0
        %1127 = vmatprep.mubr.f32.mxu0 0.0
        %1128 = vmatmul.mubr.f32.gmra.mxu0 %v890
        %v1129 = vpop.f32.mrf.mxu0
        %v1130 = vadd.f32 0.0, %v1129
        %v1131 = vpop.f32.mrf.mxu0
        %1132 = vdwg.mxu0
        %vm1133 = vcmask 130048
        %v1135 = vsel %vm1133, %v959, 0
        %v1138 = vsel %vm1133, %v964, 0
        %v1141 = vsel %vm1133, %v1042, 0
        %v1144 = vsel %vm1133, %v1047, 0
        %1146 = vmatprep.subr.mxu0 0.0
        %1147 = vmatpush1.xpose.msra.mxu0 0.0
        %1148 = vmatprep.subr.mxu0 0.0
        %1149 = vmatpush1.xpose.msra.mxu0 0.0
        %1150 = vmatprep.subr.mxu0 0.0
        %1151 = vmatpush1.xpose.msra.mxu0 0.0
        %1152 = vmatprep.subr.mxu0 0.0
        %1153 = vmatpush1.xpose.msra.mxu0 0.0
        %1154 = vmatprep.subr.mxu0 0.0
        %1155 = vmatpush1.xpose.msra.mxu0 0.0
        %1156 = vmatprep.subr.mxu0 0.0
        %1157 = vmatpush1.xpose.msra.mxu0 0.0
        %1158 = vmatprep.subr.mxu0 0.0
        %1159 = vmatpush1.xpose.msra.mxu0 0.0
        %1160 = vmatprep.subr.mxu0 0.0
        %1161 = vmatpush1.xpose.msra.mxu0 0.0
        %1162 = vmatprep.subr.mxu0 0.0
        %1163 = vmatpush1.xpose.msra.mxu0 0.0
        %1164 = vmatprep.subr.mxu0 0.0
        %1165 = vmatpush1.xpose.msra.mxu0 0.0
        %1166 = vmatprep.subr.mxu0 0.0
        %1167 = vmatpush1.xpose.msra.mxu0 0.0
        %1168 = vmatprep.subr.mxu0 0.0
        %1169 = vmatpush1.xpose.msra.mxu0 0.0
        %1170 = vmatprep.subr.mxu0 0.0
        %1171 = vmatpush1.xpose.msra.mxu0 0.0
        %1172 = vmatprep.subr.mxu0 0.0
        %1173 = vmatpush1.xpose.msra.mxu0 0.0
        %1174 = vmatprep.subr.mxu0 0.0
        %1175 = vmatpush1.xpose.msra.mxu0 %v1144
        %1176 = vmatprep.subr.mxu0 0.0
        %1177 = vmatpush1.xpose.msra.mxu0 %v1141
        %1178 = vmatprep.subr.mxu0 0.0
        %1179 = vmatpush2.xpose.msra.mxu0 0.0
        %1180 = vmatprep.subr.mxu0 0.0
        %1181 = vmatpush2.xpose.msra.mxu0 0.0
        %1182 = vmatprep.subr.mxu0 0.0
        %1183 = vmatpush2.xpose.msra.mxu0 0.0
        %1184 = vmatprep.subr.mxu0 0.0
        %1185 = vmatpush2.xpose.msra.mxu0 0.0
        %1186 = vmatprep.subr.mxu0 0.0
        %1187 = vmatpush2.xpose.msra.mxu0 0.0
        %1188 = vmatprep.subr.mxu0 0.0
        %1189 = vmatpush2.xpose.msra.mxu0 0.0
        %1190 = vmatprep.subr.mxu0 0.0
        %1191 = vmatpush2.xpose.msra.mxu0 0.0
        %1192 = vmatprep.subr.mxu0 0.0
        %1193 = vmatpush2.xpose.msra.mxu0 0.0
        %1194 = vmatprep.subr.mxu0 0.0
        %1195 = vmatpush2.xpose.msra.mxu0 0.0
        %1196 = vmatprep.subr.mxu0 0.0
        %1197 = vmatpush2.xpose.msra.mxu0 0.0
        %1198 = vmatprep.subr.mxu0 0.0
        %1199 = vmatpush2.xpose.msra.mxu0 0.0
        %1200 = vmatprep.subr.mxu0 0.0
        %1201 = vmatpush2.xpose.msra.mxu0 0.0
        %1202 = vmatprep.subr.mxu0 0.0
        %1203 = vmatpush2.xpose.msra.mxu0 0.0
        %1204 = vmatprep.subr.mxu0 0.0
        %1205 = vmatpush2.xpose.msra.mxu0 0.0
        %1206 = vmatprep.subr.mxu0 0.0
        %1207 = vmatpush2.xpose.msra.mxu0 0.0
        %1208 = vmatprep.subr.mxu0 0.0
        %1209 = vmatpush2.xpose.msra.mxu0 0.0
        %1210 = vmatprep.mubr.f32.mxu0 0.0
        %1211 = vmatmul.mubr.f32.gmra.mxu0 %v1135
        %v1212 = vpop.f32.mrf.mxu0
        %v1213 = vadd.f32 0.0, %v1212
        %v1214 = vpop.f32.mrf.mxu0
        %1215 = vmatprep.mubr.f32.mxu0 0.0
        %1216 = vmatmul.mubr.f32.gmra.mxu0 %v1138
        %v1217 = vpop.f32.mrf.mxu0
        %v1218 = vadd.f32 0.0, %v1217
        %v1219 = vpop.f32.mrf.mxu0
        %1220 = vdwg.mxu0
        %v1221 = vmul.f32 %v1213, 0.25
        %v1222 = vmul.f32 %v1218, 0.25
        %v1223 = vsel %vm1133, %v1221, -inf
        %1224 = vmax.xlane.f32.xlu0 %v1223
        %v1225 = vpop.xlane.xlu0 %1224
        %v1226 = vsel %vm1133, %v1222, -inf
        %1227 = vmax.xlane.f32.xlu0 %v1226
        %v1228 = vpop.xlane.xlu0 %1227
        %v1229 = vsub.f32 %v1221, %v1225
        %v1230 = vsub.f32 %v1222, %v1228
        %v1231 = vmul.f32 %v1229, 1.442695
        %v1232 = vpow.pop %v1231
        %v1233 = vmul.f32 %v1230, 1.442695
        %v1234 = vpow.pop %v1233
        %v1235 = vsel %vm1133, %v1232, 0.0
        %1236 = vadd.xlane.f32.xlu0 %v1235
        %v1237 = vpop.xlane.xlu0 %1236
        %v1238 = vsel %vm1133, %v1234, 0.0
        %1239 = vadd.xlane.f32.xlu0 %v1238
        %v1240 = vpop.xlane.xlu0 %1239
        %v1241 = vrcp.pop %v1237
        %v1242 = vmul.f32 %v1232, %v1241
        %v1243 = vrcp.pop %v1240
        %v1244 = vmul.f32 %v1234, %v1243
        %v1246 = vsel %vm1133, %v1242, 0
        %v1249 = vsel %vm1133, %v1244, 0
        %1251 = vmatprep.subr.mxu0 0.0
        %1252 = vmatpush1.msra.mxu0 0.0
        %1253 = vmatprep.subr.mxu0 0.0
        %1254 = vmatpush1.msra.mxu0 0.0
        %1255 = vmatprep.subr.mxu0 0.0
        %1256 = vmatpush1.msra.mxu0 0.0
        %1257 = vmatprep.subr.mxu0 0.0
        %1258 = vmatpush1.msra.mxu0 0.0
        %1259 = vmatprep.subr.mxu0 0.0
        %1260 = vmatpush1.msra.mxu0 0.0
        %1261 = vmatprep.subr.mxu0 0.0
        %1262 = vmatpush1.msra.mxu0 0.0
        %1263 = vmatprep.subr.mxu0 0.0
        %1264 = vmatpush1.msra.mxu0 0.0
        %1265 = vmatprep.subr.mxu0 0.0
        %1266 = vmatpush1.msra.mxu0 0.0
        %1267 = vmatprep.subr.mxu0 0.0
        %1268 = vmatpush1.msra.mxu0 0.0
        %1269 = vmatprep.subr.mxu0 0.0
        %1270 = vmatpush1.msra.mxu0 0.0
        %1271 = vmatprep.subr.mxu0 0.0
        %1272 = vmatpush1.msra.mxu0 0.0
        %1273 = vmatprep.subr.mxu0 0.0
        %1274 = vmatpush1.msra.mxu0 0.0
        %1275 = vmatprep.subr.mxu0 0.0
        %1276 = vmatpush1.msra.mxu0 0.0
        %1277 = vmatprep.subr.mxu0 0.0
        %1278 = vmatpush1.msra.mxu0 0.0
        %1279 = vmatprep.subr.mxu0 0.0
        %1280 = vmatpush1.msra.mxu0 %v1130
        %1281 = vmatprep.subr.mxu0 0.0
        %1282 = vmatpush1.msra.mxu0 %v1125
        %1283 = vmatprep.subr.mxu0 0.0
        %1284 = vmatpush2.msra.mxu0 0.0
        %1285 = vmatprep.subr.mxu0 0.0
        %1286 = vmatpush2.msra.mxu0 0.0
        %1287 = vmatprep.subr.mxu0 0.0
        %1288 = vmatpush2.msra.mxu0 0.0
        %1289 = vmatprep.subr.mxu0 0.0
        %1290 = vmatpush2.msra.mxu0 0.0
        %1291 = vmatprep.subr.mxu0 0.0
        %1292 = vmatpush2.msra.mxu0 0.0
        %1293 = vmatprep.subr.mxu0 0.0
        %1294 = vmatpush2.msra.mxu0 0.0
        %1295 = vmatprep.subr.mxu0 0.0
        %1296 = vmatpush2.msra.mxu0 0.0
        %1297 = vmatprep.subr.mxu0 0.0
        %1298 = vmatpush2.msra.mxu0 0.0
        %1299 = vmatprep.subr.mxu0 0.0
        %1300 = vmatpush2.msra.mxu0 0.0
        %1301 = vmatprep.subr.mxu0 0.0
        %1302 = vmatpush2.msra.mxu0 0.0
        %1303 = vmatprep.subr.mxu0 0.0
        %1304 = vmatpush2.msra.mxu0 0.0
        %1305 = vmatprep.subr.mxu0 0.0
        %1306 = vmatpush2.msra.mxu0 0.0
        %1307 = vmatprep.subr.mxu0 0.0
        %1308 = vmatpush2.msra.mxu0 0.0
        %1309 = vmatprep.subr.mxu0 0.0
        %1310 = vmatpush2.msra.mxu0 0.0
        %1311 = vmatprep.subr.mxu0 0.0
        %1312 = vmatpush2.msra.mxu0 0.0
        %1313 = vmatprep.subr.mxu0 0.0
        %1314 = vmatpush2.msra.mxu0 0.0
        %1315 = vmatprep.mubr.f32.mxu0 0.0
        %1316 = vmatmul.mubr.f32.gmra.mxu0 %v1246
        %v1317 = vpop.f32.mrf.mxu0
        %v1318 = vadd.f32 0.0, %v1317
        %v1319 = vpop.f32.mrf.mxu0
        %1320 = vmatprep.mubr.f32.mxu0 0.0
        %1321 = vmatmul.mubr.f32.gmra.mxu0 %v1249
        %v1322 = vpop.f32.mrf.mxu0
        %v1323 = vadd.f32 0.0, %v1322
        %v1324 = vpop.f32.mrf.mxu0
        %1325 = vdwg.mxu0
        %v1326 = vld [vmem:[%s9] sm:$0xff]
        %v1327 = vld [vmem:[%s9 + $0x8] sm:$0xff]
        %s1328 = scalar_lea.vmem %s6, 64
        %v1329 = vld [vmem:[%s1328] sm:$0xff]
        %v1330 = vld [vmem:[%s1328 + $0x8] sm:$0xff]
        %v1331 = vld [vmem:[%s1328 + $0x10] sm:$0xff]
        %v1332 = vld [vmem:[%s1328 + $0x18] sm:$0xff]
        %v1333 = vld [vmem:[%s1328 + $0x20] sm:$0xff]
        %v1334 = vld [vmem:[%s1328 + $0x28] sm:$0xff]
        %v1335 = vld [vmem:[%s1328 + $0x30] sm:$0xff]
        %v1336 = vld [vmem:[%s1328 + $0x38] sm:$0xff]
        %1337 = vmatprep.subr.mxu0 0.0
        %1338 = vmatpush1.msra.mxu0 0.0
        %1339 = vmatprep.subr.mxu0 0.0
        %1340 = vmatpush1.msra.mxu0 0.0
        %1341 = vmatprep.subr.mxu0 0.0
        %1342 = vmatpush1.msra.mxu0 0.0
        %1343 = vmatprep.subr.mxu0 0.0
        %1344 = vmatpush1.msra.mxu0 0.0
        %1345 = vmatprep.subr.mxu0 0.0
        %1346 = vmatpush1.msra.mxu0 0.0
        %1347 = vmatprep.subr.mxu0 0.0
        %1348 = vmatpush1.msra.mxu0 0.0
        %1349 = vmatprep.subr.mxu0 0.0
        %1350 = vmatpush1.msra.mxu0 0.0
        %1351 = vmatprep.subr.mxu0 0.0
        %1352 = vmatpush1.msra.mxu0 0.0
        %1353 = vmatprep.subr.mxu0 0.0
        %1354 = vmatpush1.msra.mxu0 %v1336
        %1355 = vmatprep.subr.mxu0 0.0
        %1356 = vmatpush1.msra.mxu0 %v1335
        %1357 = vmatprep.subr.mxu0 0.0
        %1358 = vmatpush1.msra.mxu0 %v1334
        %1359 = vmatprep.subr.mxu0 0.0
        %1360 = vmatpush1.msra.mxu0 %v1333
        %1361 = vmatprep.subr.mxu0 0.0
        %1362 = vmatpush1.msra.mxu0 %v1332
        %1363 = vmatprep.subr.mxu0 0.0
        %1364 = vmatpush1.msra.mxu0 %v1331
        %1365 = vmatprep.subr.mxu0 0.0
        %1366 = vmatpush1.msra.mxu0 %v1330
        %1367 = vmatprep.subr.mxu0 0.0
        %1368 = vmatpush1.msra.mxu0 %v1329
        %1369 = vmatprep.subr.mxu0 0.0
        %1370 = vmatpush2.msra.mxu0 0.0
        %1371 = vmatprep.subr.mxu0 0.0
        %1372 = vmatpush2.msra.mxu0 0.0
        %1373 = vmatprep.subr.mxu0 0.0
        %1374 = vmatpush2.msra.mxu0 0.0
        %1375 = vmatprep.subr.mxu0 0.0
        %1376 = vmatpush2.msra.mxu0 0.0
        %1377 = vmatprep.subr.mxu0 0.0
        %1378 = vmatpush2.msra.mxu0 0.0
        %1379 = vmatprep.subr.mxu0 0.0
        %1380 = vmatpush2.msra.mxu0 0.0
        %1381 = vmatprep.subr.mxu0 0.0
        %1382 = vmatpush2.msra.mxu0 0.0
        %1383 = vmatprep.subr.mxu0 0.0
        %1384 = vmatpush2.msra.mxu0 0.0
        %1385 = vmatprep.subr.mxu0 0.0
        %1386 = vmatpush2.msra.mxu0 0.0
        %1387 = vmatprep.subr.mxu0 0.0
        %1388 = vmatpush2.msra.mxu0 0.0
        %1389 = vmatprep.subr.mxu0 0.0
        %1390 = vmatpush2.msra.mxu0 0.0
        %1391 = vmatprep.subr.mxu0 0.0
        %1392 = vmatpush2.msra.mxu0 0.0
        %1393 = vmatprep.subr.mxu0 0.0
        %1394 = vmatpush2.msra.mxu0 0.0
        %1395 = vmatprep.subr.mxu0 0.0
        %1396 = vmatpush2.msra.mxu0 0.0
        %1397 = vmatprep.subr.mxu0 0.0
        %1398 = vmatpush2.msra.mxu0 0.0
        %1399 = vmatprep.subr.mxu0 0.0
        %1400 = vmatpush2.msra.mxu0 0.0
        %1401 = vmatprep.mubr.f32.mxu0 0.0
        %1402 = vmatmul.mubr.f32.gmra.mxu0 %v887
        %v1403 = vpop.f32.mrf.mxu0
        %v1404 = vadd.f32 0.0, %v1403
        %v1405 = vpop.f32.mrf.mxu0
        %1406 = vmatprep.mubr.f32.mxu0 0.0
        %1407 = vmatmul.mubr.f32.gmra.mxu0 %v890
        %v1408 = vpop.f32.mrf.mxu0
        %v1409 = vadd.f32 0.0, %v1408
        %v1410 = vpop.f32.mrf.mxu0
        %1411 = vdwg.mxu0
        %s1412 = scalar_lea.vmem %s7, 64
        %v1413 = vld [vmem:[%s1412] sm:$0xff]
        %v1414 = vld [vmem:[%s1412 + $0x8] sm:$0xff]
        %v1415 = vld [vmem:[%s1412 + $0x10] sm:$0xff]
        %v1416 = vld [vmem:[%s1412 + $0x18] sm:$0xff]
        %v1417 = vld [vmem:[%s1412 + $0x20] sm:$0xff]
        %v1418 = vld [vmem:[%s1412 + $0x28] sm:$0xff]
        %v1419 = vld [vmem:[%s1412 + $0x30] sm:$0xff]
        %v1420 = vld [vmem:[%s1412 + $0x38] sm:$0xff]
        %1421 = vmatprep.subr.mxu0 0.0
        %1422 = vmatpush1.msra.mxu0 0.0
        %1423 = vmatprep.subr.mxu0 0.0
        %1424 = vmatpush1.msra.mxu0 0.0
        %1425 = vmatprep.subr.mxu0 0.0
        %1426 = vmatpush1.msra.mxu0 0.0
        %1427 = vmatprep.subr.mxu0 0.0
        %1428 = vmatpush1.msra.mxu0 0.0
        %1429 = vmatprep.subr.mxu0 0.0
        %1430 = vmatpush1.msra.mxu0 0.0
        %1431 = vmatprep.subr.mxu0 0.0
        %1432 = vmatpush1.msra.mxu0 0.0
        %1433 = vmatprep.subr.mxu0 0.0
        %1434 = vmatpush1.msra.mxu0 0.0
        %1435 = vmatprep.subr.mxu0 0.0
        %1436 = vmatpush1.msra.mxu0 0.0
        %1437 = vmatprep.subr.mxu0 0.0
        %1438 = vmatpush1.msra.mxu0 %v1420
        %1439 = vmatprep.subr.mxu0 0.0
        %1440 = vmatpush1.msra.mxu0 %v1419
        %1441 = vmatprep.subr.mxu0 0.0
        %1442 = vmatpush1.msra.mxu0 %v1418
        %1443 = vmatprep.subr.mxu0 0.0
        %1444 = vmatpush1.msra.mxu0 %v1417
        %1445 = vmatprep.subr.mxu0 0.0
        %1446 = vmatpush1.msra.mxu0 %v1416
        %1447 = vmatprep.subr.mxu0 0.0
        %1448 = vmatpush1.msra.mxu0 %v1415
        %1449 = vmatprep.subr.mxu0 0.0
        %1450 = vmatpush1.msra.mxu0 %v1414
        %1451 = vmatprep.subr.mxu0 0.0
        %1452 = vmatpush1.msra.mxu0 %v1413
        %1453 = vmatprep.subr.mxu0 0.0
        %1454 = vmatpush2.msra.mxu0 0.0
        %1455 = vmatprep.subr.mxu0 0.0
        %1456 = vmatpush2.msra.mxu0 0.0
        %1457 = vmatprep.subr.mxu0 0.0
        %1458 = vmatpush2.msra.mxu0 0.0
        %1459 = vmatprep.subr.mxu0 0.0
        %1460 = vmatpush2.msra.mxu0 0.0
        %1461 = vmatprep.subr.mxu0 0.0
        %1462 = vmatpush2.msra.mxu0 0.0
        %1463 = vmatprep.subr.mxu0 0.0
        %1464 = vmatpush2.msra.mxu0 0.0
        %1465 = vmatprep.subr.mxu0 0.0
        %1466 = vmatpush2.msra.mxu0 0.0
        %1467 = vmatprep.subr.mxu0 0.0
        %1468 = vmatpush2.msra.mxu0 0.0
        %1469 = vmatprep.subr.mxu0 0.0
        %1470 = vmatpush2.msra.mxu0 0.0
        %1471 = vmatprep.subr.mxu0 0.0
        %1472 = vmatpush2.msra.mxu0 0.0
        %1473 = vmatprep.subr.mxu0 0.0
        %1474 = vmatpush2.msra.mxu0 0.0
        %1475 = vmatprep.subr.mxu0 0.0
        %1476 = vmatpush2.msra.mxu0 0.0
        %1477 = vmatprep.subr.mxu0 0.0
        %1478 = vmatpush2.msra.mxu0 0.0
        %1479 = vmatprep.subr.mxu0 0.0
        %1480 = vmatpush2.msra.mxu0 0.0
        %1481 = vmatprep.subr.mxu0 0.0
        %1482 = vmatpush2.msra.mxu0 0.0
        %1483 = vmatprep.subr.mxu0 0.0
        %1484 = vmatpush2.msra.mxu0 0.0
        %1485 = vmatprep.mubr.f32.mxu0 0.0
        %1486 = vmatmul.mubr.f32.gmra.mxu0 %v887
        %v1487 = vpop.f32.mrf.mxu0
        %v1488 = vadd.f32 0.0, %v1487
        %v1489 = vpop.f32.mrf.mxu0
        %1490 = vmatprep.mubr.f32.mxu0 0.0
        %1491 = vmatmul.mubr.f32.gmra.mxu0 %v890
        %v1492 = vpop.f32.mrf.mxu0
        %v1493 = vadd.f32 0.0, %v1492
        %v1494 = vpop.f32.mrf.mxu0
        %1495 = vdwg.mxu0
        %s1496 = scalar_lea.vmem %s8, 64
        %v1497 = vld [vmem:[%s1496] sm:$0xff]
        %v1498 = vld [vmem:[%s1496 + $0x8] sm:$0xff]
        %v1499 = vld [vmem:[%s1496 + $0x10] sm:$0xff]
        %v1500 = vld [vmem:[%s1496 + $0x18] sm:$0xff]
        %v1501 = vld [vmem:[%s1496 + $0x20] sm:$0xff]
        %v1502 = vld [vmem:[%s1496 + $0x28] sm:$0xff]
        %v1503 = vld [vmem:[%s1496 + $0x30] sm:$0xff]
        %v1504 = vld [vmem:[%s1496 + $0x38] sm:$0xff]
        %1505 = vmatprep.subr.mxu0 0.0
        %1506 = vmatpush1.msra.mxu0 0.0
        %1507 = vmatprep.subr.mxu0 0.0
        %1508 = vmatpush1.msra.mxu0 0.0
        %1509 = vmatprep.subr.mxu0 0.0
        %1510 = vmatpush1.msra.mxu0 0.0
        %1511 = vmatprep.subr.mxu0 0.0
        %1512 = vmatpush1.msra.mxu0 0.0
        %1513 = vmatprep.subr.mxu0 0.0
        %1514 = vmatpush1.msra.mxu0 0.0
        %1515 = vmatprep.subr.mxu0 0.0
        %1516 = vmatpush1.msra.mxu0 0.0
        %1517 = vmatprep.subr.mxu0 0.0
        %1518 = vmatpush1.msra.mxu0 0.0
        %1519 = vmatprep.subr.mxu0 0.0
        %1520 = vmatpush1.msra.mxu0 0.0
        %1521 = vmatprep.subr.mxu0 0.0
        %1522 = vmatpush1.msra.mxu0 %v1504
        %1523 = vmatprep.subr.mxu0 0.0
        %1524 = vmatpush1.msra.mxu0 %v1503
        %1525 = vmatprep.subr.mxu0 0.0
        %1526 = vmatpush1.msra.mxu0 %v1502
        %1527 = vmatprep.subr.mxu0 0.0
        %1528 = vmatpush1.msra.mxu0 %v1501
        %1529 = vmatprep.subr.mxu0 0.0
        %1530 = vmatpush1.msra.mxu0 %v1500
        %1531 = vmatprep.subr.mxu0 0.0
        %1532 = vmatpush1.msra.mxu0 %v1499
        %1533 = vmatprep.subr.mxu0 0.0
        %1534 = vmatpush1.msra.mxu0 %v1498
        %1535 = vmatprep.subr.mxu0 0.0
        %1536 = vmatpush1.msra.mxu0 %v1497
        %1537 = vmatprep.subr.mxu0 0.0
        %1538 = vmatpush2.msra.mxu0 0.0
        %1539 = vmatprep.subr.mxu0 0.0
        %1540 = vmatpush2.msra.mxu0 0.0
        %1541 = vmatprep.subr.mxu0 0.0
        %1542 = vmatpush2.msra.mxu0 0.0
        %1543 = vmatprep.subr.mxu0 0.0
        %1544 = vmatpush2.msra.mxu0 0.0
        %1545 = vmatprep.subr.mxu0 0.0
        %1546 = vmatpush2.msra.mxu0 0.0
        %1547 = vmatprep.subr.mxu0 0.0
        %1548 = vmatpush2.msra.mxu0 0.0
        %1549 = vmatprep.subr.mxu0 0.0
        %1550 = vmatpush2.msra.mxu0 0.0
        %1551 = vmatprep.subr.mxu0 0.0
        %1552 = vmatpush2.msra.mxu0 0.0
        %1553 = vmatprep.subr.mxu0 0.0
        %1554 = vmatpush2.msra.mxu0 0.0
        %1555 = vmatprep.subr.mxu0 0.0
        %1556 = vmatpush2.msra.mxu0 0.0
        %1557 = vmatprep.subr.mxu0 0.0
        %1558 = vmatpush2.msra.mxu0 0.0
        %1559 = vmatprep.subr.mxu0 0.0
        %1560 = vmatpush2.msra.mxu0 0.0
        %1561 = vmatprep.subr.mxu0 0.0
        %1562 = vmatpush2.msra.mxu0 0.0
        %1563 = vmatprep.subr.mxu0 0.0
        %1564 = vmatpush2.msra.mxu0 0.0
        %1565 = vmatprep.subr.mxu0 0.0
        %1566 = vmatpush2.msra.mxu0 0.0
        %1567 = vmatprep.subr.mxu0 0.0
        %1568 = vmatpush2.msra.mxu0 0.0
        %1569 = vmatprep.mubr.f32.mxu0 0.0
        %1570 = vmatmul.mubr.f32.gmra.mxu0 %v887
        %v1571 = vpop.f32.mrf.mxu0
        %v1572 = vadd.f32 0.0, %v1571
        %v1573 = vpop.f32.mrf.mxu0
        %1574 = vmatprep.mubr.f32.mxu0 0.0
        %1575 = vmatmul.mubr.f32.gmra.mxu0 %v890
        %v1576 = vpop.f32.mrf.mxu0
        %v1577 = vadd.f32 0.0, %v1576
        %v1578 = vpop.f32.mrf.mxu0
        %1579 = vdwg.mxu0
        %v1581 = vsel %vm1133, %v1404, 0
        %v1584 = vsel %vm1133, %v1409, 0
        %v1587 = vsel %vm1133, %v1488, 0
        %v1590 = vsel %vm1133, %v1493, 0
        %1592 = vmatprep.subr.mxu0 0.0
        %1593 = vmatpush1.xpose.msra.mxu0 0.0
        %1594 = vmatprep.subr.mxu0 0.0
        %1595 = vmatpush1.xpose.msra.mxu0 0.0
        %1596 = vmatprep.subr.mxu0 0.0
        %1597 = vmatpush1.xpose.msra.mxu0 0.0
        %1598 = vmatprep.subr.mxu0 0.0
        %1599 = vmatpush1.xpose.msra.mxu0 0.0
        %1600 = vmatprep.subr.mxu0 0.0
        %1601 = vmatpush1.xpose.msra.mxu0 0.0
        %1602 = vmatprep.subr.mxu0 0.0
        %1603 = vmatpush1.xpose.msra.mxu0 0.0
        %1604 = vmatprep.subr.mxu0 0.0
        %1605 = vmatpush1.xpose.msra.mxu0 0.0
        %1606 = vmatprep.subr.mxu0 0.0
        %1607 = vmatpush1.xpose.msra.mxu0 0.0
        %1608 = vmatprep.subr.mxu0 0.0
        %1609 = vmatpush1.xpose.msra.mxu0 0.0
        %1610 = vmatprep.subr.mxu0 0.0
        %1611 = vmatpush1.xpose.msra.mxu0 0.0
        %1612 = vmatprep.subr.mxu0 0.0
        %1613 = vmatpush1.xpose.msra.mxu0 0.0
        %1614 = vmatprep.subr.mxu0 0.0
        %1615 = vmatpush1.xpose.msra.mxu0 0.0
        %1616 = vmatprep.subr.mxu0 0.0
        %1617 = vmatpush1.xpose.msra.mxu0 0.0
        %1618 = vmatprep.subr.mxu0 0.0
        %1619 = vmatpush1.xpose.msra.mxu0 0.0
        %1620 = vmatprep.subr.mxu0 0.0
        %1621 = vmatpush1.xpose.msra.mxu0 %v1590
        %1622 = vmatprep.subr.mxu0 0.0
        %1623 = vmatpush1.xpose.msra.mxu0 %v1587
        %1624 = vmatprep.subr.mxu0 0.0
        %1625 = vmatpush2.xpose.msra.mxu0 0.0
        %1626 = vmatprep.subr.mxu0 0.0
        %1627 = vmatpush2.xpose.msra.mxu0 0.0
        %1628 = vmatprep.subr.mxu0 0.0
        %1629 = vmatpush2.xpose.msra.mxu0 0.0
        %1630 = vmatprep.subr.mxu0 0.0
        %1631 = vmatpush2.xpose.msra.mxu0 0.0
        %1632 = vmatprep.subr.mxu0 0.0
        %1633 = vmatpush2.xpose.msra.mxu0 0.0
        %1634 = vmatprep.subr.mxu0 0.0
        %1635 = vmatpush2.xpose.msra.mxu0 0.0
        %1636 = vmatprep.subr.mxu0 0.0
        %1637 = vmatpush2.xpose.msra.mxu0 0.0
        %1638 = vmatprep.subr.mxu0 0.0
        %1639 = vmatpush2.xpose.msra.mxu0 0.0
        %1640 = vmatprep.subr.mxu0 0.0
        %1641 = vmatpush2.xpose.msra.mxu0 0.0
        %1642 = vmatprep.subr.mxu0 0.0
        %1643 = vmatpush2.xpose.msra.mxu0 0.0
        %1644 = vmatprep.subr.mxu0 0.0
        %1645 = vmatpush2.xpose.msra.mxu0 0.0
        %1646 = vmatprep.subr.mxu0 0.0
        %1647 = vmatpush2.xpose.msra.mxu0 0.0
        %1648 = vmatprep.subr.mxu0 0.0
        %1649 = vmatpush2.xpose.msra.mxu0 0.0
        %1650 = vmatprep.subr.mxu0 0.0
        %1651 = vmatpush2.xpose.msra.mxu0 0.0
        %1652 = vmatprep.subr.mxu0 0.0
        %1653 = vmatpush2.xpose.msra.mxu0 0.0
        %1654 = vmatprep.subr.mxu0 0.0
        %1655 = vmatpush2.xpose.msra.mxu0 0.0
        %1656 = vmatprep.mubr.f32.mxu0 0.0
        %1657 = vmatmul.mubr.f32.gmra.mxu0 %v1581
        %v1658 = vpop.f32.mrf.mxu0
        %v1659 = vadd.f32 0.0, %v1658
        %v1660 = vpop.f32.mrf.mxu0
        %1661 = vmatprep.mubr.f32.mxu0 0.0
        %1662 = vmatmul.mubr.f32.gmra.mxu0 %v1584
        %v1663 = vpop.f32.mrf.mxu0
        %v1664 = vadd.f32 0.0, %v1663
        %v1665 = vpop.f32.mrf.mxu0
        %1666 = vdwg.mxu0
        %v1667 = vmul.f32 %v1659, 0.25
        %v1668 = vmul.f32 %v1664, 0.25
        %v1669 = vsel %vm1133, %v1667, -inf
        %1670 = vmax.xlane.f32.xlu0 %v1669
        %v1671 = vpop.xlane.xlu0 %1670
        %v1672 = vsel %vm1133, %v1668, -inf
        %1673 = vmax.xlane.f32.xlu0 %v1672
        %v1674 = vpop.xlane.xlu0 %1673
        %v1675 = vsub.f32 %v1667, %v1671
        %v1676 = vsub.f32 %v1668, %v1674
        %v1677 = vmul.f32 %v1675, 1.442695
        %v1678 = vpow.pop %v1677
        %v1679 = vmul.f32 %v1676, 1.442695
        %v1680 = vpow.pop %v1679
        %v1681 = vsel %vm1133, %v1678, 0.0
        %1682 = vadd.xlane.f32.xlu0 %v1681
        %v1683 = vpop.xlane.xlu0 %1682
        %v1684 = vsel %vm1133, %v1680, 0.0
        %1685 = vadd.xlane.f32.xlu0 %v1684
        %v1686 = vpop.xlane.xlu0 %1685
        %v1687 = vrcp.pop %v1683
        %v1688 = vmul.f32 %v1678, %v1687
        %v1689 = vrcp.pop %v1686
        %v1690 = vmul.f32 %v1680, %v1689
        %v1692 = vsel %vm1133, %v1688, 0
        %v1695 = vsel %vm1133, %v1690, 0
        %1697 = vmatprep.subr.mxu0 0.0
        %1698 = vmatpush1.msra.mxu0 0.0
        %1699 = vmatprep.subr.mxu0 0.0
        %1700 = vmatpush1.msra.mxu0 0.0
        %1701 = vmatprep.subr.mxu0 0.0
        %1702 = vmatpush1.msra.mxu0 0.0
        %1703 = vmatprep.subr.mxu0 0.0
        %1704 = vmatpush1.msra.mxu0 0.0
        %1705 = vmatprep.subr.mxu0 0.0
        %1706 = vmatpush1.msra.mxu0 0.0
        %1707 = vmatprep.subr.mxu0 0.0
        %1708 = vmatpush1.msra.mxu0 0.0
        %1709 = vmatprep.subr.mxu0 0.0
        %1710 = vmatpush1.msra.mxu0 0.0
        %1711 = vmatprep.subr.mxu0 0.0
        %1712 = vmatpush1.msra.mxu0 0.0
        %1713 = vmatprep.subr.mxu0 0.0
        %1714 = vmatpush1.msra.mxu0 0.0
        %1715 = vmatprep.subr.mxu0 0.0
        %1716 = vmatpush1.msra.mxu0 0.0
        %1717 = vmatprep.subr.mxu0 0.0
        %1718 = vmatpush1.msra.mxu0 0.0
        %1719 = vmatprep.subr.mxu0 0.0
        %1720 = vmatpush1.msra.mxu0 0.0
        %1721 = vmatprep.subr.mxu0 0.0
        %1722 = vmatpush1.msra.mxu0 0.0
        %1723 = vmatprep.subr.mxu0 0.0
        %1724 = vmatpush1.msra.mxu0 0.0
        %1725 = vmatprep.subr.mxu0 0.0
        %1726 = vmatpush1.msra.mxu0 %v1577
        %1727 = vmatprep.subr.mxu0 0.0
        %1728 = vmatpush1.msra.mxu0 %v1572
        %1729 = vmatprep.subr.mxu0 0.0
        %1730 = vmatpush2.msra.mxu0 0.0
        %1731 = vmatprep.subr.mxu0 0.0
        %1732 = vmatpush2.msra.mxu0 0.0
        %1733 = vmatprep.subr.mxu0 0.0
        %1734 = vmatpush2.msra.mxu0 0.0
        %1735 = vmatprep.subr.mxu0 0.0
        %1736 = vmatpush2.msra.mxu0 0.0
        %1737 = vmatprep.subr.mxu0 0.0
        %1738 = vmatpush2.msra.mxu0 0.0
        %1739 = vmatprep.subr.mxu0 0.0
        %1740 = vmatpush2.msra.mxu0 0.0
        %1741 = vmatprep.subr.mxu0 0.0
        %1742 = vmatpush2.msra.mxu0 0.0
        %1743 = vmatprep.subr.mxu0 0.0
        %1744 = vmatpush2.msra.mxu0 0.0
        %1745 = vmatprep.subr.mxu0 0.0
        %1746 = vmatpush2.msra.mxu0 0.0
        %1747 = vmatprep.subr.mxu0 0.0
        %1748 = vmatpush2.msra.mxu0 0.0
        %1749 = vmatprep.subr.mxu0 0.0
        %1750 = vmatpush2.msra.mxu0 0.0
        %1751 = vmatprep.subr.mxu0 0.0
        %1752 = vmatpush2.msra.mxu0 0.0
        %1753 = vmatprep.subr.mxu0 0.0
        %1754 = vmatpush2.msra.mxu0 0.0
        %1755 = vmatprep.subr.mxu0 0.0
        %1756 = vmatpush2.msra.mxu0 0.0
        %1757 = vmatprep.subr.mxu0 0.0
        %1758 = vmatpush2.msra.mxu0 0.0
        %1759 = vmatprep.subr.mxu0 0.0
        %1760 = vmatpush2.msra.mxu0 0.0
        %1761 = vmatprep.mubr.f32.mxu0 0.0
        %1762 = vmatmul.mubr.f32.gmra.mxu0 %v1692
        %v1763 = vpop.f32.mrf.mxu0
        %v1764 = vadd.f32 0.0, %v1763
        %v1765 = vpop.f32.mrf.mxu0
        %1766 = vmatprep.mubr.f32.mxu0 0.0
        %1767 = vmatmul.mubr.f32.gmra.mxu0 %v1695
        %v1768 = vpop.f32.mrf.mxu0
        %v1769 = vadd.f32 0.0, %v1768
        %v1770 = vpop.f32.mrf.mxu0
        %1771 = vdwg.mxu0
        %s1772 = scalar_lea.vmem %s9, 16
        %v1773 = vld [vmem:[%s1772] sm:$0xff]
        %v1774 = vld [vmem:[%s1772 + $0x8] sm:$0xff]
        %v1776 = vsel %vm1133, %v1764, 0
        %v1779 = vsel %vm1133, %v1769, 0
        %1781 = vmatprep.subr.mxu0 0.0
        %1782 = vmatpush1.msra.mxu0 0.0
        %1783 = vmatprep.subr.mxu0 0.0
        %1784 = vmatpush1.msra.mxu0 0.0
        %1785 = vmatprep.subr.mxu0 0.0
        %1786 = vmatpush1.msra.mxu0 0.0
        %1787 = vmatprep.subr.mxu0 0.0
        %1788 = vmatpush1.msra.mxu0 0.0
        %1789 = vmatprep.subr.mxu0 0.0
        %1790 = vmatpush1.msra.mxu0 0.0
        %1791 = vmatprep.subr.mxu0 0.0
        %1792 = vmatpush1.msra.mxu0 0.0
        %1793 = vmatprep.subr.mxu0 0.0
        %1794 = vmatpush1.msra.mxu0 0.0
        %1795 = vmatprep.subr.mxu0 0.0
        %1796 = vmatpush1.msra.mxu0 0.0
        %1797 = vmatprep.subr.mxu0 0.0
        %1798 = vmatpush1.msra.mxu0 0.0
        %1799 = vmatprep.subr.mxu0 0.0
        %1800 = vmatpush1.msra.mxu0 0.0
        %1801 = vmatprep.subr.mxu0 0.0
        %1802 = vmatpush1.msra.mxu0 0.0
        %1803 = vmatprep.subr.mxu0 0.0
        %1804 = vmatpush1.msra.mxu0 0.0
        %1805 = vmatprep.subr.mxu0 0.0
        %1806 = vmatpush1.msra.mxu0 0.0
        %1807 = vmatprep.subr.mxu0 0.0
        %1808 = vmatpush1.msra.mxu0 0.0
        %1809 = vmatprep.subr.mxu0 0.0
        %1810 = vmatpush1.msra.mxu0 %v1774
        %1811 = vmatprep.subr.mxu0 0.0
        %1812 = vmatpush1.msra.mxu0 %v1773
        %1813 = vmatprep.subr.mxu0 0.0
        %1814 = vmatpush2.msra.mxu0 0.0
        %1815 = vmatprep.subr.mxu0 0.0
        %1816 = vmatpush2.msra.mxu0 0.0
        %1817 = vmatprep.subr.mxu0 0.0
        %1818 = vmatpush2.msra.mxu0 0.0
        %1819 = vmatprep.subr.mxu0 0.0
        %1820 = vmatpush2.msra.mxu0 0.0
        %1821 = vmatprep.subr.mxu0 0.0
        %1822 = vmatpush2.msra.mxu0 0.0
        %1823 = vmatprep.subr.mxu0 0.0
        %1824 = vmatpush2.msra.mxu0 0.0
        %1825 = vmatprep.subr.mxu0 0.0
        %1826 = vmatpush2.msra.mxu0 0.0
        %1827 = vmatprep.subr.mxu0 0.0
        %1828 = vmatpush2.msra.mxu0 0.0
        %1829 = vmatprep.subr.mxu0 0.0
        %1830 = vmatpush2.msra.mxu0 0.0
        %1831 = vmatprep.subr.mxu0 0.0
        %1832 = vmatpush2.msra.mxu0 0.0
        %1833 = vmatprep.subr.mxu0 0.0
        %1834 = vmatpush2.msra.mxu0 0.0
        %1835 = vmatprep.subr.mxu0 0.0
        %1836 = vmatpush2.msra.mxu0 0.0
        %1837 = vmatprep.subr.mxu0 0.0
        %1838 = vmatpush2.msra.mxu0 0.0
        %1839 = vmatprep.subr.mxu0 0.0
        %1840 = vmatpush2.msra.mxu0 0.0
        %1841 = vmatprep.subr.mxu0 0.0
        %1842 = vmatpush2.msra.mxu0 0.0
        %1843 = vmatprep.subr.mxu0 0.0
        %1844 = vmatpush2.msra.mxu0 0.0
        %1845 = vmatprep.mubr.f32.mxu0 0.0
        %1846 = vmatmul.mubr.f32.gmra.mxu0 %v1776
        %v1847 = vpop.f32.mrf.mxu0
        %v1848 = vadd.f32 0.0, %v1847
        %v1849 = vpop.f32.mrf.mxu0
        %1850 = vmatprep.mubr.f32.mxu0 0.0
        %1851 = vmatmul.mubr.f32.gmra.mxu0 %v1779
        %v1852 = vpop.f32.mrf.mxu0
        %v1853 = vadd.f32 0.0, %v1852
        %v1854 = vpop.f32.mrf.mxu0
        %1855 = vdwg.mxu0
        %v1857 = vsel %vm1133, %v1318, 0
        %v1860 = vsel %vm1133, %v1323, 0
        %1862 = vmatprep.subr.mxu0 0.0
        %1863 = vmatpush1.msra.mxu0 0.0
        %1864 = vmatprep.subr.mxu0 0.0
        %1865 = vmatpush1.msra.mxu0 0.0
        %1866 = vmatprep.subr.mxu0 0.0
        %1867 = vmatpush1.msra.mxu0 0.0
        %1868 = vmatprep.subr.mxu0 0.0
        %1869 = vmatpush1.msra.mxu0 0.0
        %1870 = vmatprep.subr.mxu0 0.0
        %1871 = vmatpush1.msra.mxu0 0.0
        %1872 = vmatprep.subr.mxu0 0.0
        %1873 = vmatpush1.msra.mxu0 0.0
        %1874 = vmatprep.subr.mxu0 0.0
        %1875 = vmatpush1.msra.mxu0 0.0
        %1876 = vmatprep.subr.mxu0 0.0
        %1877 = vmatpush1.msra.mxu0 0.0
        %1878 = vmatprep.subr.mxu0 0.0
        %1879 = vmatpush1.msra.mxu0 0.0
        %1880 = vmatprep.subr.mxu0 0.0
        %1881 = vmatpush1.msra.mxu0 0.0
        %1882 = vmatprep.subr.mxu0 0.0
        %1883 = vmatpush1.msra.mxu0 0.0
        %1884 = vmatprep.subr.mxu0 0.0
        %1885 = vmatpush1.msra.mxu0 0.0
        %1886 = vmatprep.subr.mxu0 0.0
        %1887 = vmatpush1.msra.mxu0 0.0
        %1888 = vmatprep.subr.mxu0 0.0
        %1889 = vmatpush1.msra.mxu0 0.0
        %1890 = vmatprep.subr.mxu0 0.0
        %1891 = vmatpush1.msra.mxu0 %v1327
        %1892 = vmatprep.subr.mxu0 0.0
        %1893 = vmatpush1.msra.mxu0 %v1326
        %1894 = vmatprep.subr.mxu0 0.0
        %1895 = vmatpush2.msra.mxu0 0.0
        %1896 = vmatprep.subr.mxu0 0.0
        %1897 = vmatpush2.msra.mxu0 0.0
        %1898 = vmatprep.subr.mxu0 0.0
        %1899 = vmatpush2.msra.mxu0 0.0
        %1900 = vmatprep.subr.mxu0 0.0
        %1901 = vmatpush2.msra.mxu0 0.0
        %1902 = vmatprep.subr.mxu0 0.0
        %1903 = vmatpush2.msra.mxu0 0.0
        %1904 = vmatprep.subr.mxu0 0.0
        %1905 = vmatpush2.msra.mxu0 0.0
        %1906 = vmatprep.subr.mxu0 0.0
        %1907 = vmatpush2.msra.mxu0 0.0
        %1908 = vmatprep.subr.mxu0 0.0
        %1909 = vmatpush2.msra.mxu0 0.0
        %1910 = vmatprep.subr.mxu0 0.0
        %1911 = vmatpush2.msra.mxu0 0.0
        %1912 = vmatprep.subr.mxu0 0.0
        %1913 = vmatpush2.msra.mxu0 0.0
        %1914 = vmatprep.subr.mxu0 0.0
        %1915 = vmatpush2.msra.mxu0 0.0
        %1916 = vmatprep.subr.mxu0 0.0
        %1917 = vmatpush2.msra.mxu0 0.0
        %1918 = vmatprep.subr.mxu0 0.0
        %1919 = vmatpush2.msra.mxu0 0.0
        %1920 = vmatprep.subr.mxu0 0.0
        %1921 = vmatpush2.msra.mxu0 0.0
        %1922 = vmatprep.subr.mxu0 0.0
        %1923 = vmatpush2.msra.mxu0 0.0
        %1924 = vmatprep.subr.mxu0 0.0
        %1925 = vmatpush2.msra.mxu0 0.0
        %1926 = vmatprep.mubr.f32.mxu0 0.0
        %1927 = vmatmul.mubr.f32.gmra.mxu0 %v1857
        %v1928 = vpop.f32.mrf.mxu0
        %v1929 = vadd.f32 %v1848, %v1928
        %v1930 = vpop.f32.mrf.mxu0
        %1931 = vmatprep.mubr.f32.mxu0 0.0
        %1932 = vmatmul.mubr.f32.gmra.mxu0 %v1860
        %v1933 = vpop.f32.mrf.mxu0
        %v1934 = vadd.f32 %v1853, %v1933
        %v1935 = vpop.f32.mrf.mxu0
        %1936 = vdwg.mxu0
        %s1937 = scalar_lea.vmem %s6, 128
        %v1938 = vld [vmem:[%s1937] sm:$0xff]
        %v1939 = vld [vmem:[%s1937 + $0x8] sm:$0xff]
        %v1940 = vld [vmem:[%s1937 + $0x10] sm:$0xff]
        %v1941 = vld [vmem:[%s1937 + $0x18] sm:$0xff]
        %v1942 = vld [vmem:[%s1937 + $0x20] sm:$0xff]
        %v1943 = vld [vmem:[%s1937 + $0x28] sm:$0xff]
        %v1944 = vld [vmem:[%s1937 + $0x30] sm:$0xff]
        %v1945 = vld [vmem:[%s1937 + $0x38] sm:$0xff]
        %1946 = vmatprep.subr.mxu0 0.0
        %1947 = vmatpush1.msra.mxu0 0.0
        %1948 = vmatprep.subr.mxu0 0.0
        %1949 = vmatpush1.msra.mxu0 0.0
        %1950 = vmatprep.subr.mxu0 0.0
        %1951 = vmatpush1.msra.mxu0 0.0
        %1952 = vmatprep.subr.mxu0 0.0
        %1953 = vmatpush1.msra.mxu0 0.0
        %1954 = vmatprep.subr.mxu0 0.0
        %1955 = vmatpush1.msra.mxu0 0.0
        %1956 = vmatprep.subr.mxu0 0.0
        %1957 = vmatpush1.msra.mxu0 0.0
        %1958 = vmatprep.subr.mxu0 0.0
        %1959 = vmatpush1.msra.mxu0 0.0
        %1960 = vmatprep.subr.mxu0 0.0
        %1961 = vmatpush1.msra.mxu0 0.0
        %1962 = vmatprep.subr.mxu0 0.0
        %1963 = vmatpush1.msra.mxu0 %v1945
        %1964 = vmatprep.subr.mxu0 0.0
        %1965 = vmatpush1.msra.mxu0 %v1944
        %1966 = vmatprep.subr.mxu0 0.0
        %1967 = vmatpush1.msra.mxu0 %v1943
        %1968 = vmatprep.subr.mxu0 0.0
        %1969 = vmatpush1.msra.mxu0 %v1942
        %1970 = vmatprep.subr.mxu0 0.0
        %1971 = vmatpush1.msra.mxu0 %v1941
        %1972 = vmatprep.subr.mxu0 0.0
        %1973 = vmatpush1.msra.mxu0 %v1940
        %1974 = vmatprep.subr.mxu0 0.0
        %1975 = vmatpush1.msra.mxu0 %v1939
        %1976 = vmatprep.subr.mxu0 0.0
        %1977 = vmatpush1.msra.mxu0 %v1938
        %1978 = vmatprep.subr.mxu0 0.0
        %1979 = vmatpush2.msra.mxu0 0.0
        %1980 = vmatprep.subr.mxu0 0.0
        %1981 = vmatpush2.msra.mxu0 0.0
        %1982 = vmatprep.subr.mxu0 0.0
        %1983 = vmatpush2.msra.mxu0 0.0
        %1984 = vmatprep.subr.mxu0 0.0
        %1985 = vmatpush2.msra.mxu0 0.0
        %1986 = vmatprep.subr.mxu0 0.0
        %1987 = vmatpush2.msra.mxu0 0.0
        %1988 = vmatprep.subr.mxu0 0.0
        %1989 = vmatpush2.msra.mxu0 0.0
        %1990 = vmatprep.subr.mxu0 0.0
        %1991 = vmatpush2.msra.mxu0 0.0
        %1992 = vmatprep.subr.mxu0 0.0
        %1993 = vmatpush2.msra.mxu0 0.0
        %1994 = vmatprep.subr.mxu0 0.0
        %1995 = vmatpush2.msra.mxu0 0.0
        %1996 = vmatprep.subr.mxu0 0.0
        %1997 = vmatpush2.msra.mxu0 0.0
        %1998 = vmatprep.subr.mxu0 0.0
        %1999 = vmatpush2.msra.mxu0 0.0
        %2000 = vmatprep.subr.mxu0 0.0
        %2001 = vmatpush2.msra.mxu0 0.0
        %2002 = vmatprep.subr.mxu0 0.0
        %2003 = vmatpush2.msra.mxu0 0.0
        %2004 = vmatprep.subr.mxu0 0.0
        %2005 = vmatpush2.msra.mxu0 0.0
        %2006 = vmatprep.subr.mxu0 0.0
        %2007 = vmatpush2.msra.mxu0 0.0
        %2008 = vmatprep.subr.mxu0 0.0
        %2009 = vmatpush2.msra.mxu0 0.0
        %2010 = vmatprep.mubr.f32.mxu0 0.0
        %2011 = vmatmul.mubr.f32.gmra.mxu0 %v887
        %v2012 = vpop.f32.mrf.mxu0
        %v2013 = vadd.f32 0.0, %v2012
        %v2014 = vpop.f32.mrf.mxu0
        %2015 = vmatprep.mubr.f32.mxu0 0.0
        %2016 = vmatmul.mubr.f32.gmra.mxu0 %v890
        %v2017 = vpop.f32.mrf.mxu0
        %v2018 = vadd.f32 0.0, %v2017
        %v2019 = vpop.f32.mrf.mxu0
        %2020 = vdwg.mxu0
        %s2021 = scalar_lea.vmem %s7, 128
        %v2022 = vld [vmem:[%s2021] sm:$0xff]
        %v2023 = vld [vmem:[%s2021 + $0x8] sm:$0xff]
        %v2024 = vld [vmem:[%s2021 + $0x10] sm:$0xff]
        %v2025 = vld [vmem:[%s2021 + $0x18] sm:$0xff]
        %v2026 = vld [vmem:[%s2021 + $0x20] sm:$0xff]
        %v2027 = vld [vmem:[%s2021 + $0x28] sm:$0xff]
        %v2028 = vld [vmem:[%s2021 + $0x30] sm:$0xff]
        %v2029 = vld [vmem:[%s2021 + $0x38] sm:$0xff]
        %2030 = vmatprep.subr.mxu0 0.0
        %2031 = vmatpush1.msra.mxu0 0.0
        %2032 = vmatprep.subr.mxu0 0.0
        %2033 = vmatpush1.msra.mxu0 0.0
        %2034 = vmatprep.subr.mxu0 0.0
        %2035 = vmatpush1.msra.mxu0 0.0
        %2036 = vmatprep.subr.mxu0 0.0
        %2037 = vmatpush1.msra.mxu0 0.0
        %2038 = vmatprep.subr.mxu0 0.0
        %2039 = vmatpush1.msra.mxu0 0.0
        %2040 = vmatprep.subr.mxu0 0.0
        %2041 = vmatpush1.msra.mxu0 0.0
        %2042 = vmatprep.subr.mxu0 0.0
        %2043 = vmatpush1.msra.mxu0 0.0
        %2044 = vmatprep.subr.mxu0 0.0
        %2045 = vmatpush1.msra.mxu0 0.0
        %2046 = vmatprep.subr.mxu0 0.0
        %2047 = vmatpush1.msra.mxu0 %v2029
        %2048 = vmatprep.subr.mxu0 0.0
        %2049 = vmatpush1.msra.mxu0 %v2028
        %2050 = vmatprep.subr.mxu0 0.0
        %2051 = vmatpush1.msra.mxu0 %v2027
        %2052 = vmatprep.subr.mxu0 0.0
        %2053 = vmatpush1.msra.mxu0 %v2026
        %2054 = vmatprep.subr.mxu0 0.0
        %2055 = vmatpush1.msra.mxu0 %v2025
        %2056 = vmatprep.subr.mxu0 0.0
        %2057 = vmatpush1.msra.mxu0 %v2024
        %2058 = vmatprep.subr.mxu0 0.0
        %2059 = vmatpush1.msra.mxu0 %v2023
        %2060 = vmatprep.subr.mxu0 0.0
        %2061 = vmatpush1.msra.mxu0 %v2022
        %2062 = vmatprep.subr.mxu0 0.0
        %2063 = vmatpush2.msra.mxu0 0.0
        %2064 = vmatprep.subr.mxu0 0.0
        %2065 = vmatpush2.msra.mxu0 0.0
        %2066 = vmatprep.subr.mxu0 0.0
        %2067 = vmatpush2.msra.mxu0 0.0
        %2068 = vmatprep.subr.mxu0 0.0
        %2069 = vmatpush2.msra.mxu0 0.0
        %2070 = vmatprep.subr.mxu0 0.0
        %2071 = vmatpush2.msra.mxu0 0.0
        %2072 = vmatprep.subr.mxu0 0.0
        %2073 = vmatpush2.msra.mxu0 0.0
        %2074 = vmatprep.subr.mxu0 0.0
        %2075 = vmatpush2.msra.mxu0 0.0
        %2076 = vmatprep.subr.mxu0 0.0
        %2077 = vmatpush2.msra.mxu0 0.0
        %2078 = vmatprep.subr.mxu0 0.0
        %2079 = vmatpush2.msra.mxu0 0.0
        %2080 = vmatprep.subr.mxu0 0.0
        %2081 = vmatpush2.msra.mxu0 0.0
        %2082 = vmatprep.subr.mxu0 0.0
        %2083 = vmatpush2.msra.mxu0 0.0
        %2084 = vmatprep.subr.mxu0 0.0
        %2085 = vmatpush2.msra.mxu0 0.0
        %2086 = vmatprep.subr.mxu0 0.0
        %2087 = vmatpush2.msra.mxu0 0.0
        %2088 = vmatprep.subr.mxu0 0.0
        %2089 = vmatpush2.msra.mxu0 0.0
        %2090 = vmatprep.subr.mxu0 0.0
        %2091 = vmatpush2.msra.mxu0 0.0
        %2092 = vmatprep.subr.mxu0 0.0
        %2093 = vmatpush2.msra.mxu0 0.0
        %2094 = vmatprep.mubr.f32.mxu0 0.0
        %2095 = vmatmul.mubr.f32.gmra.mxu0 %v887
        %v2096 = vpop.f32.mrf.mxu0
        %v2097 = vadd.f32 0.0, %v2096
        %v2098 = vpop.f32.mrf.mxu0
        %2099 = vmatprep.mubr.f32.mxu0 0.0
        %2100 = vmatmul.mubr.f32.gmra.mxu0 %v890
        %v2101 = vpop.f32.mrf.mxu0
        %v2102 = vadd.f32 0.0, %v2101
        %v2103 = vpop.f32.mrf.mxu0
        %2104 = vdwg.mxu0
        %s2105 = scalar_lea.vmem %s8, 128
        %v2106 = vld [vmem:[%s2105] sm:$0xff]
        %v2107 = vld [vmem:[%s2105 + $0x8] sm:$0xff]
        %v2108 = vld [vmem:[%s2105 + $0x10] sm:$0xff]
        %v2109 = vld [vmem:[%s2105 + $0x18] sm:$0xff]
        %v2110 = vld [vmem:[%s2105 + $0x20] sm:$0xff]
        %v2111 = vld [vmem:[%s2105 + $0x28] sm:$0xff]
        %v2112 = vld [vmem:[%s2105 + $0x30] sm:$0xff]
        %v2113 = vld [vmem:[%s2105 + $0x38] sm:$0xff]
        %2114 = vmatprep.subr.mxu0 0.0
        %2115 = vmatpush1.msra.mxu0 0.0
        %2116 = vmatprep.subr.mxu0 0.0
        %2117 = vmatpush1.msra.mxu0 0.0
        %2118 = vmatprep.subr.mxu0 0.0
        %2119 = vmatpush1.msra.mxu0 0.0
        %2120 = vmatprep.subr.mxu0 0.0
        %2121 = vmatpush1.msra.mxu0 0.0
        %2122 = vmatprep.subr.mxu0 0.0
        %2123 = vmatpush1.msra.mxu0 0.0
        %2124 = vmatprep.subr.mxu0 0.0
        %2125 = vmatpush1.msra.mxu0 0.0
        %2126 = vmatprep.subr.mxu0 0.0
        %2127 = vmatpush1.msra.mxu0 0.0
        %2128 = vmatprep.subr.mxu0 0.0
        %2129 = vmatpush1.msra.mxu0 0.0
        %2130 = vmatprep.subr.mxu0 0.0
        %2131 = vmatpush1.msra.mxu0 %v2113
        %2132 = vmatprep.subr.mxu0 0.0
        %2133 = vmatpush1.msra.mxu0 %v2112
        %2134 = vmatprep.subr.mxu0 0.0
        %2135 = vmatpush1.msra.mxu0 %v2111
        %2136 = vmatprep.subr.mxu0 0.0
        %2137 = vmatpush1.msra.mxu0 %v2110
        %2138 = vmatprep.subr.mxu0 0.0
        %2139 = vmatpush1.msra.mxu0 %v2109
        %2140 = vmatprep.subr.mxu0 0.0
        %2141 = vmatpush1.msra.mxu0 %v2108
        %2142 = vmatprep.subr.mxu0 0.0
        %2143 = vmatpush1.msra.mxu0 %v2107
        %2144 = vmatprep.subr.mxu0 0.0
        %2145 = vmatpush1.msra.mxu0 %v2106
        %2146 = vmatprep.subr.mxu0 0.0
        %2147 = vmatpush2.msra.mxu0 0.0
        %2148 = vmatprep.subr.mxu0 0.0
        %2149 = vmatpush2.msra.mxu0 0.0
        %2150 = vmatprep.subr.mxu0 0.0
        %2151 = vmatpush2.msra.mxu0 0.0
        %2152 = vmatprep.subr.mxu0 0.0
        %2153 = vmatpush2.msra.mxu0 0.0
        %2154 = vmatprep.subr.mxu0 0.0
        %2155 = vmatpush2.msra.mxu0 0.0
        %2156 = vmatprep.subr.mxu0 0.0
        %2157 = vmatpush2.msra.mxu0 0.0
        %2158 = vmatprep.subr.mxu0 0.0
        %2159 = vmatpush2.msra.mxu0 0.0
        %2160 = vmatprep.subr.mxu0 0.0
        %2161 = vmatpush2.msra.mxu0 0.0
        %2162 = vmatprep.subr.mxu0 0.0
        %2163 = vmatpush2.msra.mxu0 0.0
        %2164 = vmatprep.subr.mxu0 0.0
        %2165 = vmatpush2.msra.mxu0 0.0
        %2166 = vmatprep.subr.mxu0 0.0
        %2167 = vmatpush2.msra.mxu0 0.0
        %2168 = vmatprep.subr.mxu0 0.0
        %2169 = vmatpush2.msra.mxu0 0.0
        %2170 = vmatprep.subr.mxu0 0.0
        %2171 = vmatpush2.msra.mxu0 0.0
        %2172 = vmatprep.subr.mxu0 0.0
        %2173 = vmatpush2.msra.mxu0 0.0
        %2174 = vmatprep.subr.mxu0 0.0
        %2175 = vmatpush2.msra.mxu0 0.0
        %2176 = vmatprep.subr.mxu0 0.0
        %2177 = vmatpush2.msra.mxu0 0.0
        %2178 = vmatprep.mubr.f32.mxu0 0.0
        %2179 = vmatmul.mubr.f32.gmra.mxu0 %v887
        %v2180 = vpop.f32.mrf.mxu0
        %v2181 = vadd.f32 0.0, %v2180
        %v2182 = vpop.f32.mrf.mxu0
        %2183 = vmatprep.mubr.f32.mxu0 0.0
        %2184 = vmatmul.mubr.f32.gmra.mxu0 %v890
        %v2185 = vpop.f32.mrf.mxu0
        %v2186 = vadd.f32 0.0, %v2185
        %v2187 = vpop.f32.mrf.mxu0
        %2188 = vdwg.mxu0
        %v2190 = vsel %vm1133, %v2013, 0
        %v2193 = vsel %vm1133, %v2018, 0
        %v2196 = vsel %vm1133, %v2097, 0
        %v2199 = vsel %vm1133, %v2102, 0
        %2201 = vmatprep.subr.mxu0 0.0
        %2202 = vmatpush1.xpose.msra.mxu0 0.0
        %2203 = vmatprep.subr.mxu0 0.0
        %2204 = vmatpush1.xpose.msra.mxu0 0.0
        %2205 = vmatprep.subr.mxu0 0.0
        %2206 = vmatpush1.xpose.msra.mxu0 0.0
        %2207 = vmatprep.subr.mxu0 0.0
        %2208 = vmatpush1.xpose.msra.mxu0 0.0
        %2209 = vmatprep.subr.mxu0 0.0
        %2210 = vmatpush1.xpose.msra.mxu0 0.0
        %2211 = vmatprep.subr.mxu0 0.0
        %2212 = vmatpush1.xpose.msra.mxu0 0.0
        %2213 = vmatprep.subr.mxu0 0.0
        %2214 = vmatpush1.xpose.msra.mxu0 0.0
        %2215 = vmatprep.subr.mxu0 0.0
        %2216 = vmatpush1.xpose.msra.mxu0 0.0
        %2217 = vmatprep.subr.mxu0 0.0
        %2218 = vmatpush1.xpose.msra.mxu0 0.0
        %2219 = vmatprep.subr.mxu0 0.0
        %2220 = vmatpush1.xpose.msra.mxu0 0.0
        %2221 = vmatprep.subr.mxu0 0.0
        %2222 = vmatpush1.xpose.msra.mxu0 0.0
        %2223 = vmatprep.subr.mxu0 0.0
        %2224 = vmatpush1.xpose.msra.mxu0 0.0
        %2225 = vmatprep.subr.mxu0 0.0
        %2226 = vmatpush1.xpose.msra.mxu0 0.0
        %2227 = vmatprep.subr.mxu0 0.0
        %2228 = vmatpush1.xpose.msra.mxu0 0.0
        %2229 = vmatprep.subr.mxu0 0.0
        %2230 = vmatpush1.xpose.msra.mxu0 %v2199
        %2231 = vmatprep.subr.mxu0 0.0
        %2232 = vmatpush1.xpose.msra.mxu0 %v2196
        %2233 = vmatprep.subr.mxu0 0.0
        %2234 = vmatpush2.xpose.msra.mxu0 0.0
        %2235 = vmatprep.subr.mxu0 0.0
        %2236 = vmatpush2.xpose.msra.mxu0 0.0
        %2237 = vmatprep.subr.mxu0 0.0
        %2238 = vmatpush2.xpose.msra.mxu0 0.0
        %2239 = vmatprep.subr.mxu0 0.0
        %2240 = vmatpush2.xpose.msra.mxu0 0.0
        %2241 = vmatprep.subr.mxu0 0.0
        %2242 = vmatpush2.xpose.msra.mxu0 0.0
        %2243 = vmatprep.subr.mxu0 0.0
        %2244 = vmatpush2.xpose.msra.mxu0 0.0
        %2245 = vmatprep.subr.mxu0 0.0
        %2246 = vmatpush2.xpose.msra.mxu0 0.0
        %2247 = vmatprep.subr.mxu0 0.0
        %2248 = vmatpush2.xpose.msra.mxu0 0.0
        %2249 = vmatprep.subr.mxu0 0.0
        %2250 = vmatpush2.xpose.msra.mxu0 0.0
        %2251 = vmatprep.subr.mxu0 0.0
        %2252 = vmatpush2.xpose.msra.mxu0 0.0
        %2253 = vmatprep.subr.mxu0 0.0
        %2254 = vmatpush2.xpose.msra.mxu0 0.0
        %2255 = vmatprep.subr.mxu0 0.0
        %2256 = vmatpush2.xpose.msra.mxu0 0.0
        %2257 = vmatprep.subr.mxu0 0.0
        %2258 = vmatpush2.xpose.msra.mxu0 0.0
        %2259 = vmatprep.subr.mxu0 0.0
        %2260 = vmatpush2.xpose.msra.mxu0 0.0
        %2261 = vmatprep.subr.mxu0 0.0
        %2262 = vmatpush2.xpose.msra.mxu0 0.0
        %2263 = vmatprep.subr.mxu0 0.0
        %2264 = vmatpush2.xpose.msra.mxu0 0.0
        %2265 = vmatprep.mubr.f32.mxu0 0.0
        %2266 = vmatmul.mubr.f32.gmra.mxu0 %v2190
        %v2267 = vpop.f32.mrf.mxu0
        %v2268 = vadd.f32 0.0, %v2267
        %v2269 = vpop.f32.mrf.mxu0
        %2270 = vmatprep.mubr.f32.mxu0 0.0
        %2271 = vmatmul.mubr.f32.gmra.mxu0 %v2193
        %v2272 = vpop.f32.mrf.mxu0
        %v2273 = vadd.f32 0.0, %v2272
        %v2274 = vpop.f32.mrf.mxu0
        %2275 = vdwg.mxu0
        %v2276 = vmul.f32 %v2268, 0.25
        %v2277 = vmul.f32 %v2273, 0.25
        %v2278 = vsel %vm1133, %v2276, -inf
        %2279 = vmax.xlane.f32.xlu0 %v2278
        %v2280 = vpop.xlane.xlu0 %2279
        %v2281 = vsel %vm1133, %v2277, -inf
        %2282 = vmax.xlane.f32.xlu0 %v2281
        %v2283 = vpop.xlane.xlu0 %2282
        %v2284 = vsub.f32 %v2276, %v2280
        %v2285 = vsub.f32 %v2277, %v2283
        %v2286 = vmul.f32 %v2284, 1.442695
        %v2287 = vpow.pop %v2286
        %v2288 = vmul.f32 %v2285, 1.442695
        %v2289 = vpow.pop %v2288
        %v2290 = vsel %vm1133, %v2287, 0.0
        %2291 = vadd.xlane.f32.xlu0 %v2290
        %v2292 = vpop.xlane.xlu0 %2291
        %v2293 = vsel %vm1133, %v2289, 0.0
        %2294 = vadd.xlane.f32.xlu0 %v2293
        %v2295 = vpop.xlane.xlu0 %2294
        %v2296 = vrcp.pop %v2292
        %v2297 = vmul.f32 %v2287, %v2296
        %v2298 = vrcp.pop %v2295
        %v2299 = vmul.f32 %v2289, %v2298
        %v2301 = vsel %vm1133, %v2297, 0
        %v2304 = vsel %vm1133, %v2299, 0
        %2306 = vmatprep.subr.mxu0 0.0
        %2307 = vmatpush1.msra.mxu0 0.0
        %2308 = vmatprep.subr.mxu0 0.0
        %2309 = vmatpush1.msra.mxu0 0.0
        %2310 = vmatprep.subr.mxu0 0.0
        %2311 = vmatpush1.msra.mxu0 0.0
        %2312 = vmatprep.subr.mxu0 0.0
        %2313 = vmatpush1.msra.mxu0 0.0
        %2314 = vmatprep.subr.mxu0 0.0
        %2315 = vmatpush1.msra.mxu0 0.0
        %2316 = vmatprep.subr.mxu0 0.0
        %2317 = vmatpush1.msra.mxu0 0.0
        %2318 = vmatprep.subr.mxu0 0.0
        %2319 = vmatpush1.msra.mxu0 0.0
        %2320 = vmatprep.subr.mxu0 0.0
        %2321 = vmatpush1.msra.mxu0 0.0
        %2322 = vmatprep.subr.mxu0 0.0
        %2323 = vmatpush1.msra.mxu0 0.0
        %2324 = vmatprep.subr.mxu0 0.0
        %2325 = vmatpush1.msra.mxu0 0.0
        %2326 = vmatprep.subr.mxu0 0.0
        %2327 = vmatpush1.msra.mxu0 0.0
        %2328 = vmatprep.subr.mxu0 0.0
        %2329 = vmatpush1.msra.mxu0 0.0
        %2330 = vmatprep.subr.mxu0 0.0
        %2331 = vmatpush1.msra.mxu0 0.0
        %2332 = vmatprep.subr.mxu0 0.0
        %2333 = vmatpush1.msra.mxu0 0.0
        %2334 = vmatprep.subr.mxu0 0.0
        %2335 = vmatpush1.msra.mxu0 %v2186
        %2336 = vmatprep.subr.mxu0 0.0
        %2337 = vmatpush1.msra.mxu0 %v2181
        %2338 = vmatprep.subr.mxu0 0.0
        %2339 = vmatpush2.msra.mxu0 0.0
        %2340 = vmatprep.subr.mxu0 0.0
        %2341 = vmatpush2.msra.mxu0 0.0
        %2342 = vmatprep.subr.mxu0 0.0
        %2343 = vmatpush2.msra.mxu0 0.0
        %2344 = vmatprep.subr.mxu0 0.0
        %2345 = vmatpush2.msra.mxu0 0.0
        %2346 = vmatprep.subr.mxu0 0.0
        %2347 = vmatpush2.msra.mxu0 0.0
        %2348 = vmatprep.subr.mxu0 0.0
        %2349 = vmatpush2.msra.mxu0 0.0
        %2350 = vmatprep.subr.mxu0 0.0
        %2351 = vmatpush2.msra.mxu0 0.0
        %2352 = vmatprep.subr.mxu0 0.0
        %2353 = vmatpush2.msra.mxu0 0.0
        %2354 = vmatprep.subr.mxu0 0.0
        %2355 = vmatpush2.msra.mxu0 0.0
        %2356 = vmatprep.subr.mxu0 0.0
        %2357 = vmatpush2.msra.mxu0 0.0
        %2358 = vmatprep.subr.mxu0 0.0
        %2359 = vmatpush2.msra.mxu0 0.0
        %2360 = vmatprep.subr.mxu0 0.0
        %2361 = vmatpush2.msra.mxu0 0.0
        %2362 = vmatprep.subr.mxu0 0.0
        %2363 = vmatpush2.msra.mxu0 0.0
        %2364 = vmatprep.subr.mxu0 0.0
        %2365 = vmatpush2.msra.mxu0 0.0
        %2366 = vmatprep.subr.mxu0 0.0
        %2367 = vmatpush2.msra.mxu0 0.0
        %2368 = vmatprep.subr.mxu0 0.0
        %2369 = vmatpush2.msra.mxu0 0.0
        %2370 = vmatprep.mubr.f32.mxu0 0.0
        %2371 = vmatmul.mubr.f32.gmra.mxu0 %v2301
        %v2372 = vpop.f32.mrf.mxu0
        %v2373 = vadd.f32 0.0, %v2372
        %v2374 = vpop.f32.mrf.mxu0
        %2375 = vmatprep.mubr.f32.mxu0 0.0
        %2376 = vmatmul.mubr.f32.gmra.mxu0 %v2304
        %v2377 = vpop.f32.mrf.mxu0
        %v2378 = vadd.f32 0.0, %v2377
        %v2379 = vpop.f32.mrf.mxu0
        %2380 = vdwg.mxu0
        %s2381 = scalar_lea.vmem %s9, 32
        %v2382 = vld [vmem:[%s2381] sm:$0xff]
        %v2383 = vld [vmem:[%s2381 + $0x8] sm:$0xff]
        %v2385 = vsel %vm1133, %v2373, 0
        %v2388 = vsel %vm1133, %v2378, 0
        %2390 = vmatprep.subr.mxu0 0.0
        %2391 = vmatpush1.msra.mxu0 0.0
        %2392 = vmatprep.subr.mxu0 0.0
        %2393 = vmatpush1.msra.mxu0 0.0
        %2394 = vmatprep.subr.mxu0 0.0
        %2395 = vmatpush1.msra.mxu0 0.0
        %2396 = vmatprep.subr.mxu0 0.0
        %2397 = vmatpush1.msra.mxu0 0.0
        %2398 = vmatprep.subr.mxu0 0.0
        %2399 = vmatpush1.msra.mxu0 0.0
        %2400 = vmatprep.subr.mxu0 0.0
        %2401 = vmatpush1.msra.mxu0 0.0
        %2402 = vmatprep.subr.mxu0 0.0
        %2403 = vmatpush1.msra.mxu0 0.0
        %2404 = vmatprep.subr.mxu0 0.0
        %2405 = vmatpush1.msra.mxu0 0.0
        %2406 = vmatprep.subr.mxu0 0.0
        %2407 = vmatpush1.msra.mxu0 0.0
        %2408 = vmatprep.subr.mxu0 0.0
        %2409 = vmatpush1.msra.mxu0 0.0
        %2410 = vmatprep.subr.mxu0 0.0
        %2411 = vmatpush1.msra.mxu0 0.0
        %2412 = vmatprep.subr.mxu0 0.0
        %2413 = vmatpush1.msra.mxu0 0.0
        %2414 = vmatprep.subr.mxu0 0.0
        %2415 = vmatpush1.msra.mxu0 0.0
        %2416 = vmatprep.subr.mxu0 0.0
        %2417 = vmatpush1.msra.mxu0 0.0
        %2418 = vmatprep.subr.mxu0 0.0
        %2419 = vmatpush1.msra.mxu0 %v2383
        %2420 = vmatprep.subr.mxu0 0.0
        %2421 = vmatpush1.msra.mxu0 %v2382
        %2422 = vmatprep.subr.mxu0 0.0
        %2423 = vmatpush2.msra.mxu0 0.0
        %2424 = vmatprep.subr.mxu0 0.0
        %2425 = vmatpush2.msra.mxu0 0.0
        %2426 = vmatprep.subr.mxu0 0.0
        %2427 = vmatpush2.msra.mxu0 0.0
        %2428 = vmatprep.subr.mxu0 0.0
        %2429 = vmatpush2.msra.mxu0 0.0
        %2430 = vmatprep.subr.mxu0 0.0
        %2431 = vmatpush2.msra.mxu0 0.0
        %2432 = vmatprep.subr.mxu0 0.0
        %2433 = vmatpush2.msra.mxu0 0.0
        %2434 = vmatprep.subr.mxu0 0.0
        %2435 = vmatpush2.msra.mxu0 0.0
        %2436 = vmatprep.subr.mxu0 0.0
        %2437 = vmatpush2.msra.mxu0 0.0
        %2438 = vmatprep.subr.mxu0 0.0
        %2439 = vmatpush2.msra.mxu0 0.0
        %2440 = vmatprep.subr.mxu0 0.0
        %2441 = vmatpush2.msra.mxu0 0.0
        %2442 = vmatprep.subr.mxu0 0.0
        %2443 = vmatpush2.msra.mxu0 0.0
        %2444 = vmatprep.subr.mxu0 0.0
        %2445 = vmatpush2.msra.mxu0 0.0
        %2446 = vmatprep.subr.mxu0 0.0
        %2447 = vmatpush2.msra.mxu0 0.0
        %2448 = vmatprep.subr.mxu0 0.0
        %2449 = vmatpush2.msra.mxu0 0.0
        %2450 = vmatprep.subr.mxu0 0.0
        %2451 = vmatpush2.msra.mxu0 0.0
        %2452 = vmatprep.subr.mxu0 0.0
        %2453 = vmatpush2.msra.mxu0 0.0
        %2454 = vmatprep.mubr.f32.mxu0 0.0
        %2455 = vmatmul.mubr.f32.gmra.mxu0 %v2385
        %v2456 = vpop.f32.mrf.mxu0
        %v2457 = vadd.f32 0.0, %v2456
        %v2458 = vpop.f32.mrf.mxu0
        %2459 = vmatprep.mubr.f32.mxu0 0.0
        %2460 = vmatmul.mubr.f32.gmra.mxu0 %v2388
        %v2461 = vpop.f32.mrf.mxu0
        %v2462 = vadd.f32 0.0, %v2461
        %v2463 = vpop.f32.mrf.mxu0
        %2464 = vdwg.mxu0
        %v2465 = vadd.f32 %v1929, %v2457
        %v2466 = vadd.f32 %v1934, %v2462
        %s2467 = scalar_lea.vmem %s6, 192
        %v2468 = vld [vmem:[%s2467] sm:$0xff]
        %v2469 = vld [vmem:[%s2467 + $0x8] sm:$0xff]
        %v2470 = vld [vmem:[%s2467 + $0x10] sm:$0xff]
        %v2471 = vld [vmem:[%s2467 + $0x18] sm:$0xff]
        %v2472 = vld [vmem:[%s2467 + $0x20] sm:$0xff]
        %v2473 = vld [vmem:[%s2467 + $0x28] sm:$0xff]
        %v2474 = vld [vmem:[%s2467 + $0x30] sm:$0xff]
        %v2475 = vld [vmem:[%s2467 + $0x38] sm:$0xff]
        %2476 = vmatprep.subr.mxu0 0.0
        %2477 = vmatpush1.msra.mxu0 0.0
        %2478 = vmatprep.subr.mxu0 0.0
        %2479 = vmatpush1.msra.mxu0 0.0
        %2480 = vmatprep.subr.mxu0 0.0
        %2481 = vmatpush1.msra.mxu0 0.0
        %2482 = vmatprep.subr.mxu0 0.0
        %2483 = vmatpush1.msra.mxu0 0.0
        %2484 = vmatprep.subr.mxu0 0.0
        %2485 = vmatpush1.msra.mxu0 0.0
        %2486 = vmatprep.subr.mxu0 0.0
        %2487 = vmatpush1.msra.mxu0 0.0
        %2488 = vmatprep.subr.mxu0 0.0
        %2489 = vmatpush1.msra.mxu0 0.0
        %2490 = vmatprep.subr.mxu0 0.0
        %2491 = vmatpush1.msra.mxu0 0.0
        %2492 = vmatprep.subr.mxu0 0.0
        %2493 = vmatpush1.msra.mxu0 %v2475
        %2494 = vmatprep.subr.mxu0 0.0
        %2495 = vmatpush1.msra.mxu0 %v2474
        %2496 = vmatprep.subr.mxu0 0.0
        %2497 = vmatpush1.msra.mxu0 %v2473
        %2498 = vmatprep.subr.mxu0 0.0
        %2499 = vmatpush1.msra.mxu0 %v2472
        %2500 = vmatprep.subr.mxu0 0.0
        %2501 = vmatpush1.msra.mxu0 %v2471
        %2502 = vmatprep.subr.mxu0 0.0
        %2503 = vmatpush1.msra.mxu0 %v2470
        %2504 = vmatprep.subr.mxu0 0.0
        %2505 = vmatpush1.msra.mxu0 %v2469
        %2506 = vmatprep.subr.mxu0 0.0
        %2507 = vmatpush1.msra.mxu0 %v2468
        %2508 = vmatprep.subr.mxu0 0.0
        %2509 = vmatpush2.msra.mxu0 0.0
        %2510 = vmatprep.subr.mxu0 0.0
        %2511 = vmatpush2.msra.mxu0 0.0
        %2512 = vmatprep.subr.mxu0 0.0
        %2513 = vmatpush2.msra.mxu0 0.0
        %2514 = vmatprep.subr.mxu0 0.0
        %2515 = vmatpush2.msra.mxu0 0.0
        %2516 = vmatprep.subr.mxu0 0.0
        %2517 = vmatpush2.msra.mxu0 0.0
        %2518 = vmatprep.subr.mxu0 0.0
        %2519 = vmatpush2.msra.mxu0 0.0
        %2520 = vmatprep.subr.mxu0 0.0
        %2521 = vmatpush2.msra.mxu0 0.0
        %2522 = vmatprep.subr.mxu0 0.0
        %2523 = vmatpush2.msra.mxu0 0.0
        %2524 = vmatprep.subr.mxu0 0.0
        %2525 = vmatpush2.msra.mxu0 0.0
        %2526 = vmatprep.subr.mxu0 0.0
        %2527 = vmatpush2.msra.mxu0 0.0
        %2528 = vmatprep.subr.mxu0 0.0
        %2529 = vmatpush2.msra.mxu0 0.0
        %2530 = vmatprep.subr.mxu0 0.0
        %2531 = vmatpush2.msra.mxu0 0.0
        %2532 = vmatprep.subr.mxu0 0.0
        %2533 = vmatpush2.msra.mxu0 0.0
        %2534 = vmatprep.subr.mxu0 0.0
        %2535 = vmatpush2.msra.mxu0 0.0
        %2536 = vmatprep.subr.mxu0 0.0
        %2537 = vmatpush2.msra.mxu0 0.0
        %2538 = vmatprep.subr.mxu0 0.0
        %2539 = vmatpush2.msra.mxu0 0.0
        %2540 = vmatprep.mubr.f32.mxu0 0.0
        %2541 = vmatmul.mubr.f32.gmra.mxu0 %v887
        %v2542 = vpop.f32.mrf.mxu0
        %v2543 = vadd.f32 0.0, %v2542
        %v2544 = vpop.f32.mrf.mxu0
        %2545 = vmatprep.mubr.f32.mxu0 0.0
        %2546 = vmatmul.mubr.f32.gmra.mxu0 %v890
        %v2547 = vpop.f32.mrf.mxu0
        %v2548 = vadd.f32 0.0, %v2547
        %v2549 = vpop.f32.mrf.mxu0
        %2550 = vdwg.mxu0
        %s2551 = scalar_lea.vmem %s7, 192
        %v2552 = vld [vmem:[%s2551] sm:$0xff]
        %v2553 = vld [vmem:[%s2551 + $0x8] sm:$0xff]
        %v2554 = vld [vmem:[%s2551 + $0x10] sm:$0xff]
        %v2555 = vld [vmem:[%s2551 + $0x18] sm:$0xff]
        %v2556 = vld [vmem:[%s2551 + $0x20] sm:$0xff]
        %v2557 = vld [vmem:[%s2551 + $0x28] sm:$0xff]
        %v2558 = vld [vmem:[%s2551 + $0x30] sm:$0xff]
        %v2559 = vld [vmem:[%s2551 + $0x38] sm:$0xff]
        %2560 = vmatprep.subr.mxu0 0.0
        %2561 = vmatpush1.msra.mxu0 0.0
        %2562 = vmatprep.subr.mxu0 0.0
        %2563 = vmatpush1.msra.mxu0 0.0
        %2564 = vmatprep.subr.mxu0 0.0
        %2565 = vmatpush1.msra.mxu0 0.0
        %2566 = vmatprep.subr.mxu0 0.0
        %2567 = vmatpush1.msra.mxu0 0.0
        %2568 = vmatprep.subr.mxu0 0.0
        %2569 = vmatpush1.msra.mxu0 0.0
        %2570 = vmatprep.subr.mxu0 0.0
        %2571 = vmatpush1.msra.mxu0 0.0
        %2572 = vmatprep.subr.mxu0 0.0
        %2573 = vmatpush1.msra.mxu0 0.0
        %2574 = vmatprep.subr.mxu0 0.0
        %2575 = vmatpush1.msra.mxu0 0.0
        %2576 = vmatprep.subr.mxu0 0.0
        %2577 = vmatpush1.msra.mxu0 %v2559
        %2578 = vmatprep.subr.mxu0 0.0
        %2579 = vmatpush1.msra.mxu0 %v2558
        %2580 = vmatprep.subr.mxu0 0.0
        %2581 = vmatpush1.msra.mxu0 %v2557
        %2582 = vmatprep.subr.mxu0 0.0
        %2583 = vmatpush1.msra.mxu0 %v2556
        %2584 = vmatprep.subr.mxu0 0.0
        %2585 = vmatpush1.msra.mxu0 %v2555
        %2586 = vmatprep.subr.mxu0 0.0
        %2587 = vmatpush1.msra.mxu0 %v2554
        %2588 = vmatprep.subr.mxu0 0.0
        %2589 = vmatpush1.msra.mxu0 %v2553
        %2590 = vmatprep.subr.mxu0 0.0
        %2591 = vmatpush1.msra.mxu0 %v2552
        %2592 = vmatprep.subr.mxu0 0.0
        %2593 = vmatpush2.msra.mxu0 0.0
        %2594 = vmatprep.subr.mxu0 0.0
        %2595 = vmatpush2.msra.mxu0 0.0
        %2596 = vmatprep.subr.mxu0 0.0
        %2597 = vmatpush2.msra.mxu0 0.0
        %2598 = vmatprep.subr.mxu0 0.0
        %2599 = vmatpush2.msra.mxu0 0.0
        %2600 = vmatprep.subr.mxu0 0.0
        %2601 = vmatpush2.msra.mxu0 0.0
        %2602 = vmatprep.subr.mxu0 0.0
        %2603 = vmatpush2.msra.mxu0 0.0
        %2604 = vmatprep.subr.mxu0 0.0
        %2605 = vmatpush2.msra.mxu0 0.0
        %2606 = vmatprep.subr.mxu0 0.0
        %2607 = vmatpush2.msra.mxu0 0.0
        %2608 = vmatprep.subr.mxu0 0.0
        %2609 = vmatpush2.msra.mxu0 0.0
        %2610 = vmatprep.subr.mxu0 0.0
        %2611 = vmatpush2.msra.mxu0 0.0
        %2612 = vmatprep.subr.mxu0 0.0
        %2613 = vmatpush2.msra.mxu0 0.0
        %2614 = vmatprep.subr.mxu0 0.0
        %2615 = vmatpush2.msra.mxu0 0.0
        %2616 = vmatprep.subr.mxu0 0.0
        %2617 = vmatpush2.msra.mxu0 0.0
        %2618 = vmatprep.subr.mxu0 0.0
        %2619 = vmatpush2.msra.mxu0 0.0
        %2620 = vmatprep.subr.mxu0 0.0
        %2621 = vmatpush2.msra.mxu0 0.0
        %2622 = vmatprep.subr.mxu0 0.0
        %2623 = vmatpush2.msra.mxu0 0.0
        %2624 = vmatprep.mubr.f32.mxu0 0.0
        %2625 = vmatmul.mubr.f32.gmra.mxu0 %v887
        %v2626 = vpop.f32.mrf.mxu0
        %v2627 = vadd.f32 0.0, %v2626
        %v2628 = vpop.f32.mrf.mxu0
        %2629 = vmatprep.mubr.f32.mxu0 0.0
        %2630 = vmatmul.mubr.f32.gmra.mxu0 %v890
        %v2631 = vpop.f32.mrf.mxu0
        %v2632 = vadd.f32 0.0, %v2631
        %v2633 = vpop.f32.mrf.mxu0
        %2634 = vdwg.mxu0
        %s2635 = scalar_lea.vmem %s8, 192
        %v2636 = vld [vmem:[%s2635] sm:$0xff]
        %v2637 = vld [vmem:[%s2635 + $0x8] sm:$0xff]
        %v2638 = vld [vmem:[%s2635 + $0x10] sm:$0xff]
        %v2639 = vld [vmem:[%s2635 + $0x18] sm:$0xff]
        %v2640 = vld [vmem:[%s2635 + $0x20] sm:$0xff]
        %v2641 = vld [vmem:[%s2635 + $0x28] sm:$0xff]
        %v2642 = vld [vmem:[%s2635 + $0x30] sm:$0xff]
        %v2643 = vld [vmem:[%s2635 + $0x38] sm:$0xff]
        %2644 = vmatprep.subr.mxu0 0.0
        %2645 = vmatpush1.msra.mxu0 0.0
        %2646 = vmatprep.subr.mxu0 0.0
        %2647 = vmatpush1.msra.mxu0 0.0
        %2648 = vmatprep.subr.mxu0 0.0
        %2649 = vmatpush1.msra.mxu0 0.0
        %2650 = vmatprep.subr.mxu0 0.0
        %2651 = vmatpush1.msra.mxu0 0.0
        %2652 = vmatprep.subr.mxu0 0.0
        %2653 = vmatpush1.msra.mxu0 0.0
        %2654 = vmatprep.subr.mxu0 0.0
        %2655 = vmatpush1.msra.mxu0 0.0
        %2656 = vmatprep.subr.mxu0 0.0
        %2657 = vmatpush1.msra.mxu0 0.0
        %2658 = vmatprep.subr.mxu0 0.0
        %2659 = vmatpush1.msra.mxu0 0.0
        %2660 = vmatprep.subr.mxu0 0.0
        %2661 = vmatpush1.msra.mxu0 %v2643
        %2662 = vmatprep.subr.mxu0 0.0
        %2663 = vmatpush1.msra.mxu0 %v2642
        %2664 = vmatprep.subr.mxu0 0.0
        %2665 = vmatpush1.msra.mxu0 %v2641
        %2666 = vmatprep.subr.mxu0 0.0
        %2667 = vmatpush1.msra.mxu0 %v2640
        %2668 = vmatprep.subr.mxu0 0.0
        %2669 = vmatpush1.msra.mxu0 %v2639
        %2670 = vmatprep.subr.mxu0 0.0
        %2671 = vmatpush1.msra.mxu0 %v2638
        %2672 = vmatprep.subr.mxu0 0.0
        %2673 = vmatpush1.msra.mxu0 %v2637
        %2674 = vmatprep.subr.mxu0 0.0
        %2675 = vmatpush1.msra.mxu0 %v2636
        %2676 = vmatprep.subr.mxu0 0.0
        %2677 = vmatpush2.msra.mxu0 0.0
        %2678 = vmatprep.subr.mxu0 0.0
        %2679 = vmatpush2.msra.mxu0 0.0
        %2680 = vmatprep.subr.mxu0 0.0
        %2681 = vmatpush2.msra.mxu0 0.0
        %2682 = vmatprep.subr.mxu0 0.0
        %2683 = vmatpush2.msra.mxu0 0.0
        %2684 = vmatprep.subr.mxu0 0.0
        %2685 = vmatpush2.msra.mxu0 0.0
        %2686 = vmatprep.subr.mxu0 0.0
        %2687 = vmatpush2.msra.mxu0 0.0
        %2688 = vmatprep.subr.mxu0 0.0
        %2689 = vmatpush2.msra.mxu0 0.0
        %2690 = vmatprep.subr.mxu0 0.0
        %2691 = vmatpush2.msra.mxu0 0.0
        %2692 = vmatprep.subr.mxu0 0.0
        %2693 = vmatpush2.msra.mxu0 0.0
        %2694 = vmatprep.subr.mxu0 0.0
        %2695 = vmatpush2.msra.mxu0 0.0
        %2696 = vmatprep.subr.mxu0 0.0
        %2697 = vmatpush2.msra.mxu0 0.0
        %2698 = vmatprep.subr.mxu0 0.0
        %2699 = vmatpush2.msra.mxu0 0.0
        %2700 = vmatprep.subr.mxu0 0.0
        %2701 = vmatpush2.msra.mxu0 0.0
        %2702 = vmatprep.subr.mxu0 0.0
        %2703 = vmatpush2.msra.mxu0 0.0
        %2704 = vmatprep.subr.mxu0 0.0
        %2705 = vmatpush2.msra.mxu0 0.0
        %2706 = vmatprep.subr.mxu0 0.0
        %2707 = vmatpush2.msra.mxu0 0.0
        %2708 = vmatprep.mubr.f32.mxu0 0.0
        %2709 = vmatmul.mubr.f32.gmra.mxu0 %v887
        %v2710 = vpop.f32.mrf.mxu0
        %v2711 = vadd.f32 0.0, %v2710
        %v2712 = vpop.f32.mrf.mxu0
        %2713 = vmatprep.mubr.f32.mxu0 0.0
        %2714 = vmatmul.mubr.f32.gmra.mxu0 %v890
        %v2715 = vpop.f32.mrf.mxu0
        %v2716 = vadd.f32 0.0, %v2715
        %v2717 = vpop.f32.mrf.mxu0
        %2718 = vdwg.mxu0
        %v2720 = vsel %vm1133, %v2543, 0
        %v2723 = vsel %vm1133, %v2548, 0
        %v2726 = vsel %vm1133, %v2627, 0
        %v2729 = vsel %vm1133, %v2632, 0
        %2731 = vmatprep.subr.mxu0 0.0
        %2732 = vmatpush1.xpose.msra.mxu0 0.0
        %2733 = vmatprep.subr.mxu0 0.0
        %2734 = vmatpush1.xpose.msra.mxu0 0.0
        %2735 = vmatprep.subr.mxu0 0.0
        %2736 = vmatpush1.xpose.msra.mxu0 0.0
        %2737 = vmatprep.subr.mxu0 0.0
        %2738 = vmatpush1.xpose.msra.mxu0 0.0
        %2739 = vmatprep.subr.mxu0 0.0
        %2740 = vmatpush1.xpose.msra.mxu0 0.0
        %2741 = vmatprep.subr.mxu0 0.0
        %2742 = vmatpush1.xpose.msra.mxu0 0.0
        %2743 = vmatprep.subr.mxu0 0.0
        %2744 = vmatpush1.xpose.msra.mxu0 0.0
        %2745 = vmatprep.subr.mxu0 0.0
        %2746 = vmatpush1.xpose.msra.mxu0 0.0
        %2747 = vmatprep.subr.mxu0 0.0
        %2748 = vmatpush1.xpose.msra.mxu0 0.0
        %2749 = vmatprep.subr.mxu0 0.0
        %2750 = vmatpush1.xpose.msra.mxu0 0.0
        %2751 = vmatprep.subr.mxu0 0.0
        %2752 = vmatpush1.xpose.msra.mxu0 0.0
        %2753 = vmatprep.subr.mxu0 0.0
        %2754 = vmatpush1.xpose.msra.mxu0 0.0
        %2755 = vmatprep.subr.mxu0 0.0
        %2756 = vmatpush1.xpose.msra.mxu0 0.0
        %2757 = vmatprep.subr.mxu0 0.0
        %2758 = vmatpush1.xpose.msra.mxu0 0.0
        %2759 = vmatprep.subr.mxu0 0.0
        %2760 = vmatpush1.xpose.msra.mxu0 %v2729
        %2761 = vmatprep.subr.mxu0 0.0
        %2762 = vmatpush1.xpose.msra.mxu0 %v2726
        %2763 = vmatprep.subr.mxu0 0.0
        %2764 = vmatpush2.xpose.msra.mxu0 0.0
        %2765 = vmatprep.subr.mxu0 0.0
        %2766 = vmatpush2.xpose.msra.mxu0 0.0
        %2767 = vmatprep.subr.mxu0 0.0
        %2768 = vmatpush2.xpose.msra.mxu0 0.0
        %2769 = vmatprep.subr.mxu0 0.0
        %2770 = vmatpush2.xpose.msra.mxu0 0.0
        %2771 = vmatprep.subr.mxu0 0.0
        %2772 = vmatpush2.xpose.msra.mxu0 0.0
        %2773 = vmatprep.subr.mxu0 0.0
        %2774 = vmatpush2.xpose.msra.mxu0 0.0
        %2775 = vmatprep.subr.mxu0 0.0
        %2776 = vmatpush2.xpose.msra.mxu0 0.0
        %2777 = vmatprep.subr.mxu0 0.0
        %2778 = vmatpush2.xpose.msra.mxu0 0.0
        %2779 = vmatprep.subr.mxu0 0.0
        %2780 = vmatpush2.xpose.msra.mxu0 0.0
        %2781 = vmatprep.subr.mxu0 0.0
        %2782 = vmatpush2.xpose.msra.mxu0 0.0
        %2783 = vmatprep.subr.mxu0 0.0
        %2784 = vmatpush2.xpose.msra.mxu0 0.0
        %2785 = vmatprep.subr.mxu0 0.0
        %2786 = vmatpush2.xpose.msra.mxu0 0.0
        %2787 = vmatprep.subr.mxu0 0.0
        %2788 = vmatpush2.xpose.msra.mxu0 0.0
        %2789 = vmatprep.subr.mxu0 0.0
        %2790 = vmatpush2.xpose.msra.mxu0 0.0
        %2791 = vmatprep.subr.mxu0 0.0
        %2792 = vmatpush2.xpose.msra.mxu0 0.0
        %2793 = vmatprep.subr.mxu0 0.0
        %2794 = vmatpush2.xpose.msra.mxu0 0.0
        %2795 = vmatprep.mubr.f32.mxu0 0.0
        %2796 = vmatmul.mubr.f32.gmra.mxu0 %v2720
        %v2797 = vpop.f32.mrf.mxu0
        %v2798 = vadd.f32 0.0, %v2797
        %v2799 = vpop.f32.mrf.mxu0
        %2800 = vmatprep.mubr.f32.mxu0 0.0
        %2801 = vmatmul.mubr.f32.gmra.mxu0 %v2723
        %v2802 = vpop.f32.mrf.mxu0
        %v2803 = vadd.f32 0.0, %v2802
        %v2804 = vpop.f32.mrf.mxu0
        %2805 = vdwg.mxu0
        %v2806 = vmul.f32 %v2798, 0.25
        %v2807 = vmul.f32 %v2803, 0.25
        %v2808 = vsel %vm1133, %v2806, -inf
        %2809 = vmax.xlane.f32.xlu0 %v2808
        %v2810 = vpop.xlane.xlu0 %2809
        %v2811 = vsel %vm1133, %v2807, -inf
        %2812 = vmax.xlane.f32.xlu0 %v2811
        %v2813 = vpop.xlane.xlu0 %2812
        %v2814 = vsub.f32 %v2806, %v2810
        %v2815 = vsub.f32 %v2807, %v2813
        %v2816 = vmul.f32 %v2814, 1.442695
        %v2817 = vpow.pop %v2816
        %v2818 = vmul.f32 %v2815, 1.442695
        %v2819 = vpow.pop %v2818
        %v2820 = vsel %vm1133, %v2817, 0.0
        %2821 = vadd.xlane.f32.xlu0 %v2820
        %v2822 = vpop.xlane.xlu0 %2821
        %v2823 = vsel %vm1133, %v2819, 0.0
        %2824 = vadd.xlane.f32.xlu0 %v2823
        %v2825 = vpop.xlane.xlu0 %2824
        %v2826 = vrcp.pop %v2822
        %v2827 = vmul.f32 %v2817, %v2826
        %v2828 = vrcp.pop %v2825
        %v2829 = vmul.f32 %v2819, %v2828
        %v2831 = vsel %vm1133, %v2827, 0
        %v2834 = vsel %vm1133, %v2829, 0
        %2836 = vmatprep.subr.mxu0 0.0
        %2837 = vmatpush1.msra.mxu0 0.0
        %2838 = vmatprep.subr.mxu0 0.0
        %2839 = vmatpush1.msra.mxu0 0.0
        %2840 = vmatprep.subr.mxu0 0.0
        %2841 = vmatpush1.msra.mxu0 0.0
        %2842 = vmatprep.subr.mxu0 0.0
        %2843 = vmatpush1.msra.mxu0 0.0
        %2844 = vmatprep.subr.mxu0 0.0
        %2845 = vmatpush1.msra.mxu0 0.0
        %2846 = vmatprep.subr.mxu0 0.0
        %2847 = vmatpush1.msra.mxu0 0.0
        %2848 = vmatprep.subr.mxu0 0.0
        %2849 = vmatpush1.msra.mxu0 0.0
        %2850 = vmatprep.subr.mxu0 0.0
        %2851 = vmatpush1.msra.mxu0 0.0
        %2852 = vmatprep.subr.mxu0 0.0
        %2853 = vmatpush1.msra.mxu0 0.0
        %2854 = vmatprep.subr.mxu0 0.0
        %2855 = vmatpush1.msra.mxu0 0.0
        %2856 = vmatprep.subr.mxu0 0.0
        %2857 = vmatpush1.msra.mxu0 0.0
        %2858 = vmatprep.subr.mxu0 0.0
        %2859 = vmatpush1.msra.mxu0 0.0
        %2860 = vmatprep.subr.mxu0 0.0
        %2861 = vmatpush1.msra.mxu0 0.0
        %2862 = vmatprep.subr.mxu0 0.0
        %2863 = vmatpush1.msra.mxu0 0.0
        %2864 = vmatprep.subr.mxu0 0.0
        %2865 = vmatpush1.msra.mxu0 %v2716
        %2866 = vmatprep.subr.mxu0 0.0
        %2867 = vmatpush1.msra.mxu0 %v2711
        %2868 = vmatprep.subr.mxu0 0.0
        %2869 = vmatpush2.msra.mxu0 0.0
        %2870 = vmatprep.subr.mxu0 0.0
        %2871 = vmatpush2.msra.mxu0 0.0
        %2872 = vmatprep.subr.mxu0 0.0
        %2873 = vmatpush2.msra.mxu0 0.0
        %2874 = vmatprep.subr.mxu0 0.0
        %2875 = vmatpush2.msra.mxu0 0.0
        %2876 = vmatprep.subr.mxu0 0.0
        %2877 = vmatpush2.msra.mxu0 0.0
        %2878 = vmatprep.subr.mxu0 0.0
        %2879 = vmatpush2.msra.mxu0 0.0
        %2880 = vmatprep.subr.mxu0 0.0
        %2881 = vmatpush2.msra.mxu0 0.0
        %2882 = vmatprep.subr.mxu0 0.0
        %2883 = vmatpush2.msra.mxu0 0.0
        %2884 = vmatprep.subr.mxu0 0.0
        %2885 = vmatpush2.msra.mxu0 0.0
        %2886 = vmatprep.subr.mxu0 0.0
        %2887 = vmatpush2.msra.mxu0 0.0
        %2888 = vmatprep.subr.mxu0 0.0
        %2889 = vmatpush2.msra.mxu0 0.0
        %2890 = vmatprep.subr.mxu0 0.0
        %2891 = vmatpush2.msra.mxu0 0.0
        %2892 = vmatprep.subr.mxu0 0.0
        %2893 = vmatpush2.msra.mxu0 0.0
        %2894 = vmatprep.subr.mxu0 0.0
        %2895 = vmatpush2.msra.mxu0 0.0
        %2896 = vmatprep.subr.mxu0 0.0
        %2897 = vmatpush2.msra.mxu0 0.0
        %2898 = vmatprep.subr.mxu0 0.0
        %2899 = vmatpush2.msra.mxu0 0.0
        %2900 = vmatprep.mubr.f32.mxu0 0.0
        %2901 = vmatmul.mubr.f32.gmra.mxu0 %v2831
        %v2902 = vpop.f32.mrf.mxu0
        %v2903 = vadd.f32 0.0, %v2902
        %v2904 = vpop.f32.mrf.mxu0
        %2905 = vmatprep.mubr.f32.mxu0 0.0
        %2906 = vmatmul.mubr.f32.gmra.mxu0 %v2834
        %v2907 = vpop.f32.mrf.mxu0
        %v2908 = vadd.f32 0.0, %v2907
        %v2909 = vpop.f32.mrf.mxu0
        %2910 = vdwg.mxu0
        %s2911 = scalar_lea.vmem %s9, 48
        %v2912 = vld [vmem:[%s2911] sm:$0xff]
        %v2913 = vld [vmem:[%s2911 + $0x8] sm:$0xff]
        %v2915 = vsel %vm1133, %v2903, 0
        %v2918 = vsel %vm1133, %v2908, 0
        %2920 = vmatprep.subr.mxu0 0.0
        %2921 = vmatpush1.msra.mxu0 0.0
        %2922 = vmatprep.subr.mxu0 0.0
        %2923 = vmatpush1.msra.mxu0 0.0
        %2924 = vmatprep.subr.mxu0 0.0
        %2925 = vmatpush1.msra.mxu0 0.0
        %2926 = vmatprep.subr.mxu0 0.0
        %2927 = vmatpush1.msra.mxu0 0.0
        %2928 = vmatprep.subr.mxu0 0.0
        %2929 = vmatpush1.msra.mxu0 0.0
        %2930 = vmatprep.subr.mxu0 0.0
        %2931 = vmatpush1.msra.mxu0 0.0
        %2932 = vmatprep.subr.mxu0 0.0
        %2933 = vmatpush1.msra.mxu0 0.0
        %2934 = vmatprep.subr.mxu0 0.0
        %2935 = vmatpush1.msra.mxu0 0.0
        %2936 = vmatprep.subr.mxu0 0.0
        %2937 = vmatpush1.msra.mxu0 0.0
        %2938 = vmatprep.subr.mxu0 0.0
        %2939 = vmatpush1.msra.mxu0 0.0
        %2940 = vmatprep.subr.mxu0 0.0
        %2941 = vmatpush1.msra.mxu0 0.0
        %2942 = vmatprep.subr.mxu0 0.0
        %2943 = vmatpush1.msra.mxu0 0.0
        %2944 = vmatprep.subr.mxu0 0.0
        %2945 = vmatpush1.msra.mxu0 0.0
        %2946 = vmatprep.subr.mxu0 0.0
        %2947 = vmatpush1.msra.mxu0 0.0
        %2948 = vmatprep.subr.mxu0 0.0
        %2949 = vmatpush1.msra.mxu0 %v2913
        %2950 = vmatprep.subr.mxu0 0.0
        %2951 = vmatpush1.msra.mxu0 %v2912
        %2952 = vmatprep.subr.mxu0 0.0
        %2953 = vmatpush2.msra.mxu0 0.0
        %2954 = vmatprep.subr.mxu0 0.0
        %2955 = vmatpush2.msra.mxu0 0.0
        %2956 = vmatprep.subr.mxu0 0.0
        %2957 = vmatpush2.msra.mxu0 0.0
        %2958 = vmatprep.subr.mxu0 0.0
        %2959 = vmatpush2.msra.mxu0 0.0
        %2960 = vmatprep.subr.mxu0 0.0
        %2961 = vmatpush2.msra.mxu0 0.0
        %2962 = vmatprep.subr.mxu0 0.0
        %2963 = vmatpush2.msra.mxu0 0.0
        %2964 = vmatprep.subr.mxu0 0.0
        %2965 = vmatpush2.msra.mxu0 0.0
        %2966 = vmatprep.subr.mxu0 0.0
        %2967 = vmatpush2.msra.mxu0 0.0
        %2968 = vmatprep.subr.mxu0 0.0
        %2969 = vmatpush2.msra.mxu0 0.0
        %2970 = vmatprep.subr.mxu0 0.0
        %2971 = vmatpush2.msra.mxu0 0.0
        %2972 = vmatprep.subr.mxu0 0.0
        %2973 = vmatpush2.msra.mxu0 0.0
        %2974 = vmatprep.subr.mxu0 0.0
        %2975 = vmatpush2.msra.mxu0 0.0
        %2976 = vmatprep.subr.mxu0 0.0
        %2977 = vmatpush2.msra.mxu0 0.0
        %2978 = vmatprep.subr.mxu0 0.0
        %2979 = vmatpush2.msra.mxu0 0.0
        %2980 = vmatprep.subr.mxu0 0.0
        %2981 = vmatpush2.msra.mxu0 0.0
        %2982 = vmatprep.subr.mxu0 0.0
        %2983 = vmatpush2.msra.mxu0 0.0
        %2984 = vmatprep.mubr.f32.mxu0 0.0
        %2985 = vmatmul.mubr.f32.gmra.mxu0 %v2915
        %v2986 = vpop.f32.mrf.mxu0
        %v2987 = vadd.f32 0.0, %v2986
        %v2988 = vpop.f32.mrf.mxu0
        %2989 = vmatprep.mubr.f32.mxu0 0.0
        %2990 = vmatmul.mubr.f32.gmra.mxu0 %v2918
        %v2991 = vpop.f32.mrf.mxu0
        %v2992 = vadd.f32 0.0, %v2991
        %v2993 = vpop.f32.mrf.mxu0
        %2994 = vdwg.mxu0
        %v2995 = vadd.f32 %v2465, %v2987
        %v2996 = vadd.f32 %v2466, %v2992
        %v2997 = vadd.f32 %v830, %v2995
        %v2998 = vadd.f32 %v831, %v2996
        %v2999 = vld [vmem:[%s10] sm:$0x1]
        %v3000 = vld [vmem:[%s11] sm:$0x1]
        %v3001 = vsel %vm834, %v2997, 0.0
        %3002 = vadd.xlane.f32.xlu0 %v3001
        %v3003 = vpop.xlane.xlu0 %3002
        %v3004 = vsel %vm834, %v2998, 0.0
        %3005 = vadd.xlane.f32.xlu0 %v3004
        %v3006 = vpop.xlane.xlu0 %3005
        %v3007 = vmul.f32 %v3003, %v841
        %v3008 = vmul.f32 %v3006, %v841
        %v3009 = vsub.f32 %v2997, %v3007
        %v3010 = vsub.f32 %v2998, %v3008
        %v3011 = vmul.f32 %v3009, %v3009
        %v3012 = vmul.f32 %v3010, %v3010
        %v3013 = vsel %vm834, %v3011, 0.0
        %3014 = vadd.xlane.f32.xlu0 %v3013
        %v3015 = vpop.xlane.xlu0 %3014
        %v3016 = vsel %vm834, %v3012, 0.0
        %3017 = vadd.xlane.f32.xlu0 %v3016
        %v3018 = vpop.xlane.xlu0 %3017
        %v3019 = vmul.f32 %v3015, %v841
        %v3020 = vmul.f32 %v3018, %v841
        %v3021 = vadd.f32 %v3019, 1e-05
        %v3022 = vadd.f32 %v3020, 1e-05
        %v3023 = vrsqrt.pop %v3021
        %v3024 = vrsqrt.pop %v3022
        %v3025 = vmul.f32 %v3009, %v3023
        %v3026 = vmul.f32 %v3010, %v3024
        %v3028 = vlaneseq
        %v3029 = vshrl.u32 %v3028, 7
        %v3030 = vsub.s32 0, %v3029
        %v3031 = vrot.slane %v2999, %v3030
        %v3033 = vmul.f32 %v3025, %v3031
        %v3034 = vmul.f32 %v3026, %v3031
        %v3036 = vlaneseq
        %v3037 = vshrl.u32 %v3036, 7
        %v3038 = vsub.s32 0, %v3037
        %v3039 = vrot.slane %v3000, %v3038
        %v3041 = vadd.f32 %v3033, %v3039
        %v3042 = vadd.f32 %v3034, %v3039
        %v3043 = vld [vmem:[%s12] sm:$0xff]
        %v3044 = vld [vmem:[%s12 + $0x8] sm:$0xff]
        %v3045 = vld [vmem:[%s12 + $0x10] sm:$0xff]
        %v3046 = vld [vmem:[%s12 + $0x18] sm:$0xff]
        %v3047 = vld [vmem:[%s12 + $0x20] sm:$0xff]
        %v3048 = vld [vmem:[%s12 + $0x28] sm:$0xff]
        %v3049 = vld [vmem:[%s12 + $0x30] sm:$0xff]
        %v3050 = vld [vmem:[%s12 + $0x38] sm:$0xff]
        %v3051 = vld [vmem:[%s13] sm:$0x1]
        %v3053 = vlaneseq
        %v3054 = vshrl.u32 %v3053, 7
        %v3055 = vsub.s32 0, %v3054
        %v3056 = vrot.slane %v3051, %v3055
        %v3059 = vsel %vm834, %v3041, 0
        %v3062 = vsel %vm834, %v3042, 0
        %3064 = vmatprep.subr.mxu0 0.0
        %3065 = vmatpush1.msra.mxu0 0.0
        %3066 = vmatprep.subr.mxu0 0.0
        %3067 = vmatpush1.msra.mxu0 0.0
        %3068 = vmatprep.subr.mxu0 0.0
        %3069 = vmatpush1.msra.mxu0 0.0
        %3070 = vmatprep.subr.mxu0 0.0
        %3071 = vmatpush1.msra.mxu0 0.0
        %3072 = vmatprep.subr.mxu0 0.0
        %3073 = vmatpush1.msra.mxu0 0.0
        %3074 = vmatprep.subr.mxu0 0.0
        %3075 = vmatpush1.msra.mxu0 0.0
        %3076 = vmatprep.subr.mxu0 0.0
        %3077 = vmatpush1.msra.mxu0 0.0
        %3078 = vmatprep.subr.mxu0 0.0
        %3079 = vmatpush1.msra.mxu0 0.0
        %3080 = vmatprep.subr.mxu0 0.0
        %3081 = vmatpush1.msra.mxu0 %v3050
        %3082 = vmatprep.subr.mxu0 0.0
        %3083 = vmatpush1.msra.mxu0 %v3049
        %3084 = vmatprep.subr.mxu0 0.0
        %3085 = vmatpush1.msra.mxu0 %v3048
        %3086 = vmatprep.subr.mxu0 0.0
        %3087 = vmatpush1.msra.mxu0 %v3047
        %3088 = vmatprep.subr.mxu0 0.0
        %3089 = vmatpush1.msra.mxu0 %v3046
        %3090 = vmatprep.subr.mxu0 0.0
        %3091 = vmatpush1.msra.mxu0 %v3045
        %3092 = vmatprep.subr.mxu0 0.0
        %3093 = vmatpush1.msra.mxu0 %v3044
        %3094 = vmatprep.subr.mxu0 0.0
        %3095 = vmatpush1.msra.mxu0 %v3043
        %3096 = vmatprep.subr.mxu0 0.0
        %3097 = vmatpush2.msra.mxu0 0.0
        %3098 = vmatprep.subr.mxu0 0.0
        %3099 = vmatpush2.msra.mxu0 0.0
        %3100 = vmatprep.subr.mxu0 0.0
        %3101 = vmatpush2.msra.mxu0 0.0
        %3102 = vmatprep.subr.mxu0 0.0
        %3103 = vmatpush2.msra.mxu0 0.0
        %3104 = vmatprep.subr.mxu0 0.0
        %3105 = vmatpush2.msra.mxu0 0.0
        %3106 = vmatprep.subr.mxu0 0.0
        %3107 = vmatpush2.msra.mxu0 0.0
        %3108 = vmatprep.subr.mxu0 0.0
        %3109 = vmatpush2.msra.mxu0 0.0
        %3110 = vmatprep.subr.mxu0 0.0
        %3111 = vmatpush2.msra.mxu0 0.0
        %3112 = vmatprep.subr.mxu0 0.0
        %3113 = vmatpush2.msra.mxu0 0.0
        %3114 = vmatprep.subr.mxu0 0.0
        %3115 = vmatpush2.msra.mxu0 0.0
        %3116 = vmatprep.subr.mxu0 0.0
        %3117 = vmatpush2.msra.mxu0 0.0
        %3118 = vmatprep.subr.mxu0 0.0
        %3119 = vmatpush2.msra.mxu0 0.0
        %3120 = vmatprep.subr.mxu0 0.0
        %3121 = vmatpush2.msra.mxu0 0.0
        %3122 = vmatprep.subr.mxu0 0.0
        %3123 = vmatpush2.msra.mxu0 0.0
        %3124 = vmatprep.subr.mxu0 0.0
        %3125 = vmatpush2.msra.mxu0 0.0
        %3126 = vmatprep.subr.mxu0 0.0
        %3127 = vmatpush2.msra.mxu0 0.0
        %3128 = vmatprep.mubr.f32.mxu0 0.0
        %3129 = vmatmul.mubr.f32.gmra.mxu0 %v3059
        %v3130 = vpop.f32.mrf.mxu0
        %v3131 = vadd.f32 %v3056, %v3130
        %v3132 = vpop.f32.mrf.mxu0
        %3133 = vmatprep.mubr.f32.mxu0 0.0
        %3134 = vmatmul.mubr.f32.gmra.mxu0 %v3062
        %v3135 = vpop.f32.mrf.mxu0
        %v3136 = vadd.f32 %v3056, %v3135
        %v3137 = vpop.f32.mrf.mxu0
        %3138 = vdwg.mxu0
        %v3139 = vmul.f32 %v3131, 0.5
        %v3140 = vmul.f32 %v3136, 0.5
        %v3141 = vmul.f32 %v3131, 0.044715
        %v3142 = vmul.f32 %v3136, 0.044715
        %v3143 = vmul.f32 %v3141, %v3131
        %v3144 = vmul.f32 %v3142, %v3136
        %v3145 = vmul.f32 %v3143, %v3131
        %v3146 = vmul.f32 %v3144, %v3136
        %v3147 = vadd.f32 %v3131, %v3145
        %v3148 = vadd.f32 %v3136, %v3146
        %v3149 = vmul.f32 %v3147, 0.7978846
        %v3150 = vmul.f32 %v3148, 0.7978846
        %v3151 = vtanh.pop %v3149
        %v3152 = vtanh.pop %v3150
        %v3153 = vadd.f32 %v3151, 1.0
        %v3154 = vadd.f32 %v3152, 1.0
        %v3155 = vmul.f32 %v3139, %v3153
        %v3156 = vmul.f32 %v3140, %v3154
        %v3157 = vld [vmem:[%s14] sm:$0xff]
        %v3158 = vld [vmem:[%s14 + $0x8] sm:$0xff]
        %v3159 = vld [vmem:[%s14 + $0x10] sm:$0xff]
        %v3160 = vld [vmem:[%s14 + $0x18] sm:$0xff]
        %v3161 = vld [vmem:[%s14 + $0x20] sm:$0xff]
        %v3162 = vld [vmem:[%s14 + $0x28] sm:$0xff]
        %v3163 = vld [vmem:[%s14 + $0x30] sm:$0xff]
        %v3164 = vld [vmem:[%s14 + $0x38] sm:$0xff]
        %v3165 = vld [vmem:[%s14 + $0x40] sm:$0xff]
        %v3166 = vld [vmem:[%s14 + $0x48] sm:$0xff]
        %v3167 = vld [vmem:[%s14 + $0x50] sm:$0xff]
        %v3168 = vld [vmem:[%s14 + $0x58] sm:$0xff]
        %v3169 = vld [vmem:[%s14 + $0x60] sm:$0xff]
        %v3170 = vld [vmem:[%s14 + $0x68] sm:$0xff]
        %v3171 = vld [vmem:[%s14 + $0x70] sm:$0xff]
        %v3172 = vld [vmem:[%s14 + $0x78] sm:$0xff]
        %3173 = vmatprep.subr.mxu0 0.0
        %3174 = vmatpush1.msra.mxu0 %v3172
        %3175 = vmatprep.subr.mxu0 0.0
        %3176 = vmatpush1.msra.mxu0 %v3171
        %3177 = vmatprep.subr.mxu0 0.0
        %3178 = vmatpush1.msra.mxu0 %v3170
        %3179 = vmatprep.subr.mxu0 0.0
        %3180 = vmatpush1.msra.mxu0 %v3169
        %3181 = vmatprep.subr.mxu0 0.0
        %3182 = vmatpush1.msra.mxu0 %v3168
        %3183 = vmatprep.subr.mxu0 0.0
        %3184 = vmatpush1.msra.mxu0 %v3167
        %3185 = vmatprep.subr.mxu0 0.0
        %3186 = vmatpush1.msra.mxu0 %v3166
        %3187 = vmatprep.subr.mxu0 0.0
        %3188 = vmatpush1.msra.mxu0 %v3165
        %3189 = vmatprep.subr.mxu0 0.0
        %3190 = vmatpush1.msra.mxu0 %v3164
        %3191 = vmatprep.subr.mxu0 0.0
        %3192 = vmatpush1.msra.mxu0 %v3163
        %3193 = vmatprep.subr.mxu0 0.0
        %3194 = vmatpush1.msra.mxu0 %v3162
        %3195 = vmatprep.subr.mxu0 0.0
        %3196 = vmatpush1.msra.mxu0 %v3161
        %3197 = vmatprep.subr.mxu0 0.0
        %3198 = vmatpush1.msra.mxu0 %v3160
        %3199 = vmatprep.subr.mxu0 0.0
        %3200 = vmatpush1.msra.mxu0 %v3159
        %3201 = vmatprep.subr.mxu0 0.0
        %3202 = vmatpush1.msra.mxu0 %v3158
        %3203 = vmatprep.subr.mxu0 0.0
        %3204 = vmatpush1.msra.mxu0 %v3157
        %3205 = vmatprep.subr.mxu0 0.0
        %3206 = vmatpush2.msra.mxu0 0.0
        %3207 = vmatprep.subr.mxu0 0.0
        %3208 = vmatpush2.msra.mxu0 0.0
        %3209 = vmatprep.subr.mxu0 0.0
        %3210 = vmatpush2.msra.mxu0 0.0
        %3211 = vmatprep.subr.mxu0 0.0
        %3212 = vmatpush2.msra.mxu0 0.0
        %3213 = vmatprep.subr.mxu0 0.0
        %3214 = vmatpush2.msra.mxu0 0.0
        %3215 = vmatprep.subr.mxu0 0.0
        %3216 = vmatpush2.msra.mxu0 0.0
        %3217 = vmatprep.subr.mxu0 0.0
        %3218 = vmatpush2.msra.mxu0 0.0
        %3219 = vmatprep.subr.mxu0 0.0
        %3220 = vmatpush2.msra.mxu0 0.0
        %3221 = vmatprep.subr.mxu0 0.0
        %3222 = vmatpush2.msra.mxu0 0.0
        %3223 = vmatprep.subr.mxu0 0.0
        %3224 = vmatpush2.msra.mxu0 0.0
        %3225 = vmatprep.subr.mxu0 0.0
        %3226 = vmatpush2.msra.mxu0 0.0
        %3227 = vmatprep.subr.mxu0 0.0
        %3228 = vmatpush2.msra.mxu0 0.0
        %3229 = vmatprep.subr.mxu0 0.0
        %3230 = vmatpush2.msra.mxu0 0.0
        %3231 = vmatprep.subr.mxu0 0.0
        %3232 = vmatpush2.msra.mxu0 0.0
        %3233 = vmatprep.subr.mxu0 0.0
        %3234 = vmatpush2.msra.mxu0 0.0
        %3235 = vmatprep.subr.mxu0 0.0
        %3236 = vmatpush2.msra.mxu0 0.0
        %3237 = vmatprep.mubr.f32.mxu0 0.0
        %3238 = vmatmul.mubr.f32.gmra.mxu0 %v3155
        %v3239 = vpop.f32.mrf.mxu0
        %v3240 = vadd.f32 0.0, %v3239
        %v3241 = vpop.f32.mrf.mxu0
        %3242 = vmatprep.mubr.f32.mxu0 0.0
        %3243 = vmatmul.mubr.f32.gmra.mxu0 %v3156
        %v3244 = vpop.f32.mrf.mxu0
        %v3245 = vadd.f32 0.0, %v3244
        %v3246 = vpop.f32.mrf.mxu0
        %3247 = vdwg.mxu0
        %v3248 = vadd.f32 %v2997, %v3240
        %v3249 = vadd.f32 %v2998, %v3245
        %v3250 = vld [vmem:[%s15] sm:$0x1]
        %v3252 = vlaneseq
        %v3253 = vshrl.u32 %v3252, 7
        %v3254 = vsub.s32 0, %v3253
        %v3255 = vrot.slane %v3250, %v3254
        %v3257 = vadd.f32 %v3248, %v3255
        %v3258 = vadd.f32 %v3249, %v3255
        %s3259 = scalar_lea.vmem %s4, 1
        %v3260 = vld [vmem:[%s3259] sm:$0x1]
        %s3261 = scalar_lea.vmem %s5, 1
        %v3262 = vld [vmem:[%s3261] sm:$0x1]
        %v3263 = vsel %vm834, %v3257, 0.0
        %3264 = vadd.xlane.f32.xlu0 %v3263
        %v3265 = vpop.xlane.xlu0 %3264
        %v3266 = vsel %vm834, %v3258, 0.0
        %3267 = vadd.xlane.f32.xlu0 %v3266
        %v3268 = vpop.xlane.xlu0 %3267
        %v3269 = vmul.f32 %v3265, %v841
        %v3270 = vmul.f32 %v3268, %v841
        %v3271 = vsub.f32 %v3257, %v3269
        %v3272 = vsub.f32 %v3258, %v3270
        %v3273 = vmul.f32 %v3271, %v3271
        %v3274 = vmul.f32 %v3272, %v3272
        %v3275 = vsel %vm834, %v3273, 0.0
        %3276 = vadd.xlane.f32.xlu0 %v3275
        %v3277 = vpop.xlane.xlu0 %3276
        %v3278 = vsel %vm834, %v3274, 0.0
        %3279 = vadd.xlane.f32.xlu0 %v3278
        %v3280 = vpop.xlane.xlu0 %3279
        %v3281 = vmul.f32 %v3277, %v841
        %v3282 = vmul.f32 %v3280, %v841
        %v3283 = vadd.f32 %v3281, 1e-05
        %v3284 = vadd.f32 %v3282, 1e-05
        %v3285 = vrsqrt.pop %v3283
        %v3286 = vrsqrt.pop %v3284
        %v3287 = vmul.f32 %v3271, %v3285
        %v3288 = vmul.f32 %v3272, %v3286
        %v3290 = vlaneseq
        %v3291 = vshrl.u32 %v3290, 7
        %v3292 = vsub.s32 0, %v3291
        %v3293 = vrot.slane %v3260, %v3292
        %v3295 = vmul.f32 %v3287, %v3293
        %v3296 = vmul.f32 %v3288, %v3293
        %v3298 = vlaneseq
        %v3299 = vshrl.u32 %v3298, 7
        %v3300 = vsub.s32 0, %v3299
        %v3301 = vrot.slane %v3262, %v3300
        %v3303 = vadd.f32 %v3295, %v3301
        %v3304 = vadd.f32 %v3296, %v3301
        %s3305 = scalar_lea.vmem %s6, 256
        %v3306 = vld [vmem:[%s3305] sm:$0xff]
        %v3307 = vld [vmem:[%s3305 + $0x8] sm:$0xff]
        %v3308 = vld [vmem:[%s3305 + $0x10] sm:$0xff]
        %v3309 = vld [vmem:[%s3305 + $0x18] sm:$0xff]
        %v3310 = vld [vmem:[%s3305 + $0x20] sm:$0xff]
        %v3311 = vld [vmem:[%s3305 + $0x28] sm:$0xff]
        %v3312 = vld [vmem:[%s3305 + $0x30] sm:$0xff]
        %v3313 = vld [vmem:[%s3305 + $0x38] sm:$0xff]
        %v3315 = vsel %vm834, %v3303, 0
        %v3318 = vsel %vm834, %v3304, 0
        %3320 = vmatprep.subr.mxu0 0.0
        %3321 = vmatpush1.msra.mxu0 0.0
        %3322 = vmatprep.subr.mxu0 0.0
        %3323 = vmatpush1.msra.mxu0 0.0
        %3324 = vmatprep.subr.mxu0 0.0
        %3325 = vmatpush1.msra.mxu0 0.0
        %3326 = vmatprep.subr.mxu0 0.0
        %3327 = vmatpush1.msra.mxu0 0.0
        %3328 = vmatprep.subr.mxu0 0.0
        %3329 = vmatpush1.msra.mxu0 0.0
        %3330 = vmatprep.subr.mxu0 0.0
        %3331 = vmatpush1.msra.mxu0 0.0
        %3332 = vmatprep.subr.mxu0 0.0
        %3333 = vmatpush1.msra.mxu0 0.0
        %3334 = vmatprep.subr.mxu0 0.0
        %3335 = vmatpush1.msra.mxu0 0.0
        %3336 = vmatprep.subr.mxu0 0.0
        %3337 = vmatpush1.msra.mxu0 %v3313
        %3338 = vmatprep.subr.mxu0 0.0
        %3339 = vmatpush1.msra.mxu0 %v3312
        %3340 = vmatprep.subr.mxu0 0.0
        %3341 = vmatpush1.msra.mxu0 %v3311
        %3342 = vmatprep.subr.mxu0 0.0
        %3343 = vmatpush1.msra.mxu0 %v3310
        %3344 = vmatprep.subr.mxu0 0.0
        %3345 = vmatpush1.msra.mxu0 %v3309
        %3346 = vmatprep.subr.mxu0 0.0
        %3347 = vmatpush1.msra.mxu0 %v3308
        %3348 = vmatprep.subr.mxu0 0.0
        %3349 = vmatpush1.msra.mxu0 %v3307
        %3350 = vmatprep.subr.mxu0 0.0
        %3351 = vmatpush1.msra.mxu0 %v3306
        %3352 = vmatprep.subr.mxu0 0.0
        %3353 = vmatpush2.msra.mxu0 0.0
        %3354 = vmatprep.subr.mxu0 0.0
        %3355 = vmatpush2.msra.mxu0 0.0
        %3356 = vmatprep.subr.mxu0 0.0
        %3357 = vmatpush2.msra.mxu0 0.0
        %3358 = vmatprep.subr.mxu0 0.0
        %3359 = vmatpush2.msra.mxu0 0.0
        %3360 = vmatprep.subr.mxu0 0.0
        %3361 = vmatpush2.msra.mxu0 0.0
        %3362 = vmatprep.subr.mxu0 0.0
        %3363 = vmatpush2.msra.mxu0 0.0
        %3364 = vmatprep.subr.mxu0 0.0
        %3365 = vmatpush2.msra.mxu0 0.0
        %3366 = vmatprep.subr.mxu0 0.0
        %3367 = vmatpush2.msra.mxu0 0.0
        %3368 = vmatprep.subr.mxu0 0.0
        %3369 = vmatpush2.msra.mxu0 0.0
        %3370 = vmatprep.subr.mxu0 0.0
        %3371 = vmatpush2.msra.mxu0 0.0
        %3372 = vmatprep.subr.mxu0 0.0
        %3373 = vmatpush2.msra.mxu0 0.0
        %3374 = vmatprep.subr.mxu0 0.0
        %3375 = vmatpush2.msra.mxu0 0.0
        %3376 = vmatprep.subr.mxu0 0.0
        %3377 = vmatpush2.msra.mxu0 0.0
        %3378 = vmatprep.subr.mxu0 0.0
        %3379 = vmatpush2.msra.mxu0 0.0
        %3380 = vmatprep.subr.mxu0 0.0
        %3381 = vmatpush2.msra.mxu0 0.0
        %3382 = vmatprep.subr.mxu0 0.0
        %3383 = vmatpush2.msra.mxu0 0.0
        %3384 = vmatprep.mubr.f32.mxu0 0.0
        %3385 = vmatmul.mubr.f32.gmra.mxu0 %v3315
        %v3386 = vpop.f32.mrf.mxu0
        %v3387 = vadd.f32 0.0, %v3386
        %v3388 = vpop.f32.mrf.mxu0
        %3389 = vmatprep.mubr.f32.mxu0 0.0
        %3390 = vmatmul.mubr.f32.gmra.mxu0 %v3318
        %v3391 = vpop.f32.mrf.mxu0
        %v3392 = vadd.f32 0.0, %v3391
        %v3393 = vpop.f32.mrf.mxu0
        %3394 = vdwg.mxu0
        %s3395 = scalar_lea.vmem %s7, 256
        %v3396 = vld [vmem:[%s3395] sm:$0xff]
        %v3397 = vld [vmem:[%s3395 + $0x8] sm:$0xff]
        %v3398 = vld [vmem:[%s3395 + $0x10] sm:$0xff]
        %v3399 = vld [vmem:[%s3395 + $0x18] sm:$0xff]
        %v3400 = vld [vmem:[%s3395 + $0x20] sm:$0xff]
        %v3401 = vld [vmem:[%s3395 + $0x28] sm:$0xff]
        %v3402 = vld [vmem:[%s3395 + $0x30] sm:$0xff]
        %v3403 = vld [vmem:[%s3395 + $0x38] sm:$0xff]
        %3404 = vmatprep.subr.mxu0 0.0
        %3405 = vmatpush1.msra.mxu0 0.0
        %3406 = vmatprep.subr.mxu0 0.0
        %3407 = vmatpush1.msra.mxu0 0.0
        %3408 = vmatprep.subr.mxu0 0.0
        %3409 = vmatpush1.msra.mxu0 0.0
        %3410 = vmatprep.subr.mxu0 0.0
        %3411 = vmatpush1.msra.mxu0 0.0
        %3412 = vmatprep.subr.mxu0 0.0
        %3413 = vmatpush1.msra.mxu0 0.0
        %3414 = vmatprep.subr.mxu0 0.0
        %3415 = vmatpush1.msra.mxu0 0.0
        %3416 = vmatprep.subr.mxu0 0.0
        %3417 = vmatpush1.msra.mxu0 0.0
        %3418 = vmatprep.subr.mxu0 0.0
        %3419 = vmatpush1.msra.mxu0 0.0
        %3420 = vmatprep.subr.mxu0 0.0
        %3421 = vmatpush1.msra.mxu0 %v3403
        %3422 = vmatprep.subr.mxu0 0.0
        %3423 = vmatpush1.msra.mxu0 %v3402
        %3424 = vmatprep.subr.mxu0 0.0
        %3425 = vmatpush1.msra.mxu0 %v3401
        %3426 = vmatprep.subr.mxu0 0.0
        %3427 = vmatpush1.msra.mxu0 %v3400
        %3428 = vmatprep.subr.mxu0 0.0
        %3429 = vmatpush1.msra.mxu0 %v3399
        %3430 = vmatprep.subr.mxu0 0.0
        %3431 = vmatpush1.msra.mxu0 %v3398
        %3432 = vmatprep.subr.mxu0 0.0
        %3433 = vmatpush1.msra.mxu0 %v3397
        %3434 = vmatprep.subr.mxu0 0.0
        %3435 = vmatpush1.msra.mxu0 %v3396
        %3436 = vmatprep.subr.mxu0 0.0
        %3437 = vmatpush2.msra.mxu0 0.0
        %3438 = vmatprep.subr.mxu0 0.0
        %3439 = vmatpush2.msra.mxu0 0.0
        %3440 = vmatprep.subr.mxu0 0.0
        %3441 = vmatpush2.msra.mxu0 0.0
        %3442 = vmatprep.subr.mxu0 0.0
        %3443 = vmatpush2.msra.mxu0 0.0
        %3444 = vmatprep.subr.mxu0 0.0
        %3445 = vmatpush2.msra.mxu0 0.0
        %3446 = vmatprep.subr.mxu0 0.0
        %3447 = vmatpush2.msra.mxu0 0.0
        %3448 = vmatprep.subr.mxu0 0.0
        %3449 = vmatpush2.msra.mxu0 0.0
        %3450 = vmatprep.subr.mxu0 0.0
        %3451 = vmatpush2.msra.mxu0 0.0
        %3452 = vmatprep.subr.mxu0 0.0
        %3453 = vmatpush2.msra.mxu0 0.0
        %3454 = vmatprep.subr.mxu0 0.0
        %3455 = vmatpush2.msra.mxu0 0.0
        %3456 = vmatprep.subr.mxu0 0.0
        %3457 = vmatpush2.msra.mxu0 0.0
        %3458 = vmatprep.subr.mxu0 0.0
        %3459 = vmatpush2.msra.mxu0 0.0
        %3460 = vmatprep.subr.mxu0 0.0
        %3461 = vmatpush2.msra.mxu0 0.0
        %3462 = vmatprep.subr.mxu0 0.0
        %3463 = vmatpush2.msra.mxu0 0.0
        %3464 = vmatprep.subr.mxu0 0.0
        %3465 = vmatpush2.msra.mxu0 0.0
        %3466 = vmatprep.subr.mxu0 0.0
        %3467 = vmatpush2.msra.mxu0 0.0
        %3468 = vmatprep.mubr.f32.mxu0 0.0
        %3469 = vmatmul.mubr.f32.gmra.mxu0 %v3315
        %v3470 = vpop.f32.mrf.mxu0
        %v3471 = vadd.f32 0.0, %v3470
        %v3472 = vpop.f32.mrf.mxu0
        %3473 = vmatprep.mubr.f32.mxu0 0.0
        %3474 = vmatmul.mubr.f32.gmra.mxu0 %v3318
        %v3475 = vpop.f32.mrf.mxu0
        %v3476 = vadd.f32 0.0, %v3475
        %v3477 = vpop.f32.mrf.mxu0
        %3478 = vdwg.mxu0
        %s3479 = scalar_lea.vmem %s8, 256
        %v3480 = vld [vmem:[%s3479] sm:$0xff]
        %v3481 = vld [vmem:[%s3479 + $0x8] sm:$0xff]
        %v3482 = vld [vmem:[%s3479 + $0x10] sm:$0xff]
        %v3483 = vld [vmem:[%s3479 + $0x18] sm:$0xff]
        %v3484 = vld [vmem:[%s3479 + $0x20] sm:$0xff]
        %v3485 = vld [vmem:[%s3479 + $0x28] sm:$0xff]
        %v3486 = vld [vmem:[%s3479 + $0x30] sm:$0xff]
        %v3487 = vld [vmem:[%s3479 + $0x38] sm:$0xff]
        %3488 = vmatprep.subr.mxu0 0.0
        %3489 = vmatpush1.msra.mxu0 0.0
        %3490 = vmatprep.subr.mxu0 0.0
        %3491 = vmatpush1.msra.mxu0 0.0
        %3492 = vmatprep.subr.mxu0 0.0
        %3493 = vmatpush1.msra.mxu0 0.0
        %3494 = vmatprep.subr.mxu0 0.0
        %3495 = vmatpush1.msra.mxu0 0.0
        %3496 = vmatprep.subr.mxu0 0.0
        %3497 = vmatpush1.msra.mxu0 0.0
        %3498 = vmatprep.subr.mxu0 0.0
        %3499 = vmatpush1.msra.mxu0 0.0
        %3500 = vmatprep.subr.mxu0 0.0
        %3501 = vmatpush1.msra.mxu0 0.0
        %3502 = vmatprep.subr.mxu0 0.0
        %3503 = vmatpush1.msra.mxu0 0.0
        %3504 = vmatprep.subr.mxu0 0.0
        %3505 = vmatpush1.msra.mxu0 %v3487
        %3506 = vmatprep.subr.mxu0 0.0
        %3507 = vmatpush1.msra.mxu0 %v3486
        %3508 = vmatprep.subr.mxu0 0.0
        %3509 = vmatpush1.msra.mxu0 %v3485
        %3510 = vmatprep.subr.mxu0 0.0
        %3511 = vmatpush1.msra.mxu0 %v3484
        %3512 = vmatprep.subr.mxu0 0.0
        %3513 = vmatpush1.msra.mxu0 %v3483
        %3514 = vmatprep.subr.mxu0 0.0
        %3515 = vmatpush1.msra.mxu0 %v3482
        %3516 = vmatprep.subr.mxu0 0.0
        %3517 = vmatpush1.msra.mxu0 %v3481
        %3518 = vmatprep.subr.mxu0 0.0
        %3519 = vmatpush1.msra.mxu0 %v3480
        %3520 = vmatprep.subr.mxu0 0.0
        %3521 = vmatpush2.msra.mxu0 0.0
        %3522 = vmatprep.subr.mxu0 0.0
        %3523 = vmatpush2.msra.mxu0 0.0
        %3524 = vmatprep.subr.mxu0 0.0
        %3525 = vmatpush2.msra.mxu0 0.0
        %3526 = vmatprep.subr.mxu0 0.0
        %3527 = vmatpush2.msra.mxu0 0.0
        %3528 = vmatprep.subr.mxu0 0.0
        %3529 = vmatpush2.msra.mxu0 0.0
        %3530 = vmatprep.subr.mxu0 0.0
        %3531 = vmatpush2.msra.mxu0 0.0
        %3532 = vmatprep.subr.mxu0 0.0
        %3533 = vmatpush2.msra.mxu0 0.0
        %3534 = vmatprep.subr.mxu0 0.0
        %3535 = vmatpush2.msra.mxu0 0.0
        %3536 = vmatprep.subr.mxu0 0.0
        %3537 = vmatpush2.msra.mxu0 0.0
        %3538 = vmatprep.subr.mxu0 0.0
        %3539 = vmatpush2.msra.mxu0 0.0
        %3540 = vmatprep.subr.mxu0 0.0
        %3541 = vmatpush2.msra.mxu0 0.0
        %3542 = vmatprep.subr.mxu0 0.0
        %3543 = vmatpush2.msra.mxu0 0.0
        %3544 = vmatprep.subr.mxu0 0.0
        %3545 = vmatpush2.msra.mxu0 0.0
        %3546 = vmatprep.subr.mxu0 0.0
        %3547 = vmatpush2.msra.mxu0 0.0
        %3548 = vmatprep.subr.mxu0 0.0
        %3549 = vmatpush2.msra.mxu0 0.0
        %3550 = vmatprep.subr.mxu0 0.0
        %3551 = vmatpush2.msra.mxu0 0.0
        %3552 = vmatprep.mubr.f32.mxu0 0.0
        %3553 = vmatmul.mubr.f32.gmra.mxu0 %v3315
        %v3554 = vpop.f32.mrf.mxu0
        %v3555 = vadd.f32 0.0, %v3554
        %v3556 = vpop.f32.mrf.mxu0
        %3557 = vmatprep.mubr.f32.mxu0 0.0
        %3558 = vmatmul.mubr.f32.gmra.mxu0 %v3318
        %v3559 = vpop.f32.mrf.mxu0
        %v3560 = vadd.f32 0.0, %v3559
        %v3561 = vpop.f32.mrf.mxu0
        %3562 = vdwg.mxu0
        %v3564 = vsel %vm1133, %v3387, 0
        %v3567 = vsel %vm1133, %v3392, 0
        %v3570 = vsel %vm1133, %v3471, 0
        %v3573 = vsel %vm1133, %v3476, 0
        %3575 = vmatprep.subr.mxu0 0.0
        %3576 = vmatpush1.xpose.msra.mxu0 0.0
        %3577 = vmatprep.subr.mxu0 0.0
        %3578 = vmatpush1.xpose.msra.mxu0 0.0
        %3579 = vmatprep.subr.mxu0 0.0
        %3580 = vmatpush1.xpose.msra.mxu0 0.0
        %3581 = vmatprep.subr.mxu0 0.0
        %3582 = vmatpush1.xpose.msra.mxu0 0.0
        %3583 = vmatprep.subr.mxu0 0.0
        %3584 = vmatpush1.xpose.msra.mxu0 0.0
        %3585 = vmatprep.subr.mxu0 0.0
        %3586 = vmatpush1.xpose.msra.mxu0 0.0
        %3587 = vmatprep.subr.mxu0 0.0
        %3588 = vmatpush1.xpose.msra.mxu0 0.0
        %3589 = vmatprep.subr.mxu0 0.0
        %3590 = vmatpush1.xpose.msra.mxu0 0.0
        %3591 = vmatprep.subr.mxu0 0.0
        %3592 = vmatpush1.xpose.msra.mxu0 0.0
        %3593 = vmatprep.subr.mxu0 0.0
        %3594 = vmatpush1.xpose.msra.mxu0 0.0
        %3595 = vmatprep.subr.mxu0 0.0
        %3596 = vmatpush1.xpose.msra.mxu0 0.0
        %3597 = vmatprep.subr.mxu0 0.0
        %3598 = vmatpush1.xpose.msra.mxu0 0.0
        %3599 = vmatprep.subr.mxu0 0.0
        %3600 = vmatpush1.xpose.msra.mxu0 0.0
        %3601 = vmatprep.subr.mxu0 0.0
        %3602 = vmatpush1.xpose.msra.mxu0 0.0
        %3603 = vmatprep.subr.mxu0 0.0
        %3604 = vmatpush1.xpose.msra.mxu0 %v3573
        %3605 = vmatprep.subr.mxu0 0.0
        %3606 = vmatpush1.xpose.msra.mxu0 %v3570
        %3607 = vmatprep.subr.mxu0 0.0
        %3608 = vmatpush2.xpose.msra.mxu0 0.0
        %3609 = vmatprep.subr.mxu0 0.0
        %3610 = vmatpush2.xpose.msra.mxu0 0.0
        %3611 = vmatprep.subr.mxu0 0.0
        %3612 = vmatpush2.xpose.msra.mxu0 0.0
        %3613 = vmatprep.subr.mxu0 0.0
        %3614 = vmatpush2.xpose.msra.mxu0 0.0
        %3615 = vmatprep.subr.mxu0 0.0
        %3616 = vmatpush2.xpose.msra.mxu0 0.0
        %3617 = vmatprep.subr.mxu0 0.0
        %3618 = vmatpush2.xpose.msra.mxu0 0.0
        %3619 = vmatprep.subr.mxu0 0.0
        %3620 = vmatpush2.xpose.msra.mxu0 0.0
        %3621 = vmatprep.subr.mxu0 0.0
        %3622 = vmatpush2.xpose.msra.mxu0 0.0
        %3623 = vmatprep.subr.mxu0 0.0
        %3624 = vmatpush2.xpose.msra.mxu0 0.0
        %3625 = vmatprep.subr.mxu0 0.0
        %3626 = vmatpush2.xpose.msra.mxu0 0.0
        %3627 = vmatprep.subr.mxu0 0.0
        %3628 = vmatpush2.xpose.msra.mxu0 0.0
        %3629 = vmatprep.subr.mxu0 0.0
        %3630 = vmatpush2.xpose.msra.mxu0 0.0
        %3631 = vmatprep.subr.mxu0 0.0
        %3632 = vmatpush2.xpose.msra.mxu0 0.0
        %3633 = vmatprep.subr.mxu0 0.0
        %3634 = vmatpush2.xpose.msra.mxu0 0.0
        %3635 = vmatprep.subr.mxu0 0.0
        %3636 = vmatpush2.xpose.msra.mxu0 0.0
        %3637 = vmatprep.subr.mxu0 0.0
        %3638 = vmatpush2.xpose.msra.mxu0 0.0
        %3639 = vmatprep.mubr.f32.mxu0 0.0
        %3640 = vmatmul.mubr.f32.gmra.mxu0 %v3564
        %v3641 = vpop.f32.mrf.mxu0
        %v3642 = vadd.f32 0.0, %v3641
        %v3643 = vpop.f32.mrf.mxu0
        %3644 = vmatprep.mubr.f32.mxu0 0.0
        %3645 = vmatmul.mubr.f32.gmra.mxu0 %v3567
        %v3646 = vpop.f32.mrf.mxu0
        %v3647 = vadd.f32 0.0, %v3646
        %v3648 = vpop.f32.mrf.mxu0
        %3649 = vdwg.mxu0
        %v3650 = vmul.f32 %v3642, 0.25
        %v3651 = vmul.f32 %v3647, 0.25
        %v3652 = vsel %vm1133, %v3650, -inf
        %3653 = vmax.xlane.f32.xlu0 %v3652
        %v3654 = vpop.xlane.xlu0 %3653
        %v3655 = vsel %vm1133, %v3651, -inf
        %3656 = vmax.xlane.f32.xlu0 %v3655
        %v3657 = vpop.xlane.xlu0 %3656
        %v3658 = vsub.f32 %v3650, %v3654
        %v3659 = vsub.f32 %v3651, %v3657
        %v3660 = vmul.f32 %v3658, 1.442695
        %v3661 = vpow.pop %v3660
        %v3662 = vmul.f32 %v3659, 1.442695
        %v3663 = vpow.pop %v3662
        %v3664 = vsel %vm1133, %v3661, 0.0
        %3665 = vadd.xlane.f32.xlu0 %v3664
        %v3666 = vpop.xlane.xlu0 %3665
        %v3667 = vsel %vm1133, %v3663, 0.0
        %3668 = vadd.xlane.f32.xlu0 %v3667
        %v3669 = vpop.xlane.xlu0 %3668
        %v3670 = vrcp.pop %v3666
        %v3671 = vmul.f32 %v3661, %v3670
        %v3672 = vrcp.pop %v3669
        %v3673 = vmul.f32 %v3663, %v3672
        %v3675 = vsel %vm1133, %v3671, 0
        %v3678 = vsel %vm1133, %v3673, 0
        %3680 = vmatprep.subr.mxu0 0.0
        %3681 = vmatpush1.msra.mxu0 0.0
        %3682 = vmatprep.subr.mxu0 0.0
        %3683 = vmatpush1.msra.mxu0 0.0
        %3684 = vmatprep.subr.mxu0 0.0
        %3685 = vmatpush1.msra.mxu0 0.0
        %3686 = vmatprep.subr.mxu0 0.0
        %3687 = vmatpush1.msra.mxu0 0.0
        %3688 = vmatprep.subr.mxu0 0.0
        %3689 = vmatpush1.msra.mxu0 0.0
        %3690 = vmatprep.subr.mxu0 0.0
        %3691 = vmatpush1.msra.mxu0 0.0
        %3692 = vmatprep.subr.mxu0 0.0
        %3693 = vmatpush1.msra.mxu0 0.0
        %3694 = vmatprep.subr.mxu0 0.0
        %3695 = vmatpush1.msra.mxu0 0.0
        %3696 = vmatprep.subr.mxu0 0.0
        %3697 = vmatpush1.msra.mxu0 0.0
        %3698 = vmatprep.subr.mxu0 0.0
        %3699 = vmatpush1.msra.mxu0 0.0
        %3700 = vmatprep.subr.mxu0 0.0
        %3701 = vmatpush1.msra.mxu0 0.0
        %3702 = vmatprep.subr.mxu0 0.0
        %3703 = vmatpush1.msra.mxu0 0.0
        %3704 = vmatprep.subr.mxu0 0.0
        %3705 = vmatpush1.msra.mxu0 0.0
        %3706 = vmatprep.subr.mxu0 0.0
        %3707 = vmatpush1.msra.mxu0 0.0
        %3708 = vmatprep.subr.mxu0 0.0
        %3709 = vmatpush1.msra.mxu0 %v3560
        %3710 = vmatprep.subr.mxu0 0.0
        %3711 = vmatpush1.msra.mxu0 %v3555
        %3712 = vmatprep.subr.mxu0 0.0
        %3713 = vmatpush2.msra.mxu0 0.0
        %3714 = vmatprep.subr.mxu0 0.0
        %3715 = vmatpush2.msra.mxu0 0.0
        %3716 = vmatprep.subr.mxu0 0.0
        %3717 = vmatpush2.msra.mxu0 0.0
        %3718 = vmatprep.subr.mxu0 0.0
        %3719 = vmatpush2.msra.mxu0 0.0
        %3720 = vmatprep.subr.mxu0 0.0
        %3721 = vmatpush2.msra.mxu0 0.0
        %3722 = vmatprep.subr.mxu0 0.0
        %3723 = vmatpush2.msra.mxu0 0.0
        %3724 = vmatprep.subr.mxu0 0.0
        %3725 = vmatpush2.msra.mxu0 0.0
        %3726 = vmatprep.subr.mxu0 0.0
        %3727 = vmatpush2.msra.mxu0 0.0
        %3728 = vmatprep.subr.mxu0 0.0
        %3729 = vmatpush2.msra.mxu0 0.0
        %3730 = vmatprep.subr.mxu0 0.0
        %3731 = vmatpush2.msra.mxu0 0.0
        %3732 = vmatprep.subr.mxu0 0.0
        %3733 = vmatpush2.msra.mxu0 0.0
        %3734 = vmatprep.subr.mxu0 0.0
        %3735 = vmatpush2.msra.mxu0 0.0
        %3736 = vmatprep.subr.mxu0 0.0
        %3737 = vmatpush2.msra.mxu0 0.0
        %3738 = vmatprep.subr.mxu0 0.0
        %3739 = vmatpush2.msra.mxu0 0.0
        %3740 = vmatprep.subr.mxu0 0.0
        %3741 = vmatpush2.msra.mxu0 0.0
        %3742 = vmatprep.subr.mxu0 0.0
        %3743 = vmatpush2.msra.mxu0 0.0
        %3744 = vmatprep.mubr.f32.mxu0 0.0
        %3745 = vmatmul.mubr.f32.gmra.mxu0 %v3675
        %v3746 = vpop.f32.mrf.mxu0
        %v3747 = vadd.f32 0.0, %v3746
        %v3748 = vpop.f32.mrf.mxu0
        %3749 = vmatprep.mubr.f32.mxu0 0.0
        %3750 = vmatmul.mubr.f32.gmra.mxu0 %v3678
        %v3751 = vpop.f32.mrf.mxu0
        %v3752 = vadd.f32 0.0, %v3751
        %v3753 = vpop.f32.mrf.mxu0
        %3754 = vdwg.mxu0
        %s3755 = scalar_lea.vmem %s9, 64
        %v3756 = vld [vmem:[%s3755] sm:$0xff]
        %v3757 = vld [vmem:[%s3755 + $0x8] sm:$0xff]
        %s3758 = scalar_lea.vmem %s6, 320
        %v3759 = vld [vmem:[%s3758] sm:$0xff]
        %v3760 = vld [vmem:[%s3758 + $0x8] sm:$0xff]
        %v3761 = vld [vmem:[%s3758 + $0x10] sm:$0xff]
        %v3762 = vld [vmem:[%s3758 + $0x18] sm:$0xff]
        %v3763 = vld [vmem:[%s3758 + $0x20] sm:$0xff]
        %v3764 = vld [vmem:[%s3758 + $0x28] sm:$0xff]
        %v3765 = vld [vmem:[%s3758 + $0x30] sm:$0xff]
        %v3766 = vld [vmem:[%s3758 + $0x38] sm:$0xff]
        %3767 = vmatprep.subr.mxu0 0.0
        %3768 = vmatpush1.msra.mxu0 0.0
        %3769 = vmatprep.subr.mxu0 0.0
        %3770 = vmatpush1.msra.mxu0 0.0
        %3771 = vmatprep.subr.mxu0 0.0
        %3772 = vmatpush1.msra.mxu0 0.0
        %3773 = vmatprep.subr.mxu0 0.0
        %3774 = vmatpush1.msra.mxu0 0.0
        %3775 = vmatprep.subr.mxu0 0.0
        %3776 = vmatpush1.msra.mxu0 0.0
        %3777 = vmatprep.subr.mxu0 0.0
        %3778 = vmatpush1.msra.mxu0 0.0
        %3779 = vmatprep.subr.mxu0 0.0
        %3780 = vmatpush1.msra.mxu0 0.0
        %3781 = vmatprep.subr.mxu0 0.0
        %3782 = vmatpush1.msra.mxu0 0.0
        %3783 = vmatprep.subr.mxu0 0.0
        %3784 = vmatpush1.msra.mxu0 %v3766
        %3785 = vmatprep.subr.mxu0 0.0
        %3786 = vmatpush1.msra.mxu0 %v3765
        %3787 = vmatprep.subr.mxu0 0.0
        %3788 = vmatpush1.msra.mxu0 %v3764
        %3789 = vmatprep.subr.mxu0 0.0
        %3790 = vmatpush1.msra.mxu0 %v3763
        %3791 = vmatprep.subr.mxu0 0.0
        %3792 = vmatpush1.msra.mxu0 %v3762
        %3793 = vmatprep.subr.mxu0 0.0
        %3794 = vmatpush1.msra.mxu0 %v3761
        %3795 = vmatprep.subr.mxu0 0.0
        %3796 = vmatpush1.msra.mxu0 %v3760
        %3797 = vmatprep.subr.mxu0 0.0
        %3798 = vmatpush1.msra.mxu0 %v3759
        %3799 = vmatprep.subr.mxu0 0.0
        %3800 = vmatpush2.msra.mxu0 0.0
        %3801 = vmatprep.subr.mxu0 0.0
        %3802 = vmatpush2.msra.mxu0 0.0
        %3803 = vmatprep.subr.mxu0 0.0
        %3804 = vmatpush2.msra.mxu0 0.0
        %3805 = vmatprep.subr.mxu0 0.0
        %3806 = vmatpush2.msra.mxu0 0.0
        %3807 = vmatprep.subr.mxu0 0.0
        %3808 = vmatpush2.msra.mxu0 0.0
        %3809 = vmatprep.subr.mxu0 0.0
        %3810 = vmatpush2.msra.mxu0 0.0
        %3811 = vmatprep.subr.mxu0 0.0
        %3812 = vmatpush2.msra.mxu0 0.0
        %3813 = vmatprep.subr.mxu0 0.0
        %3814 = vmatpush2.msra.mxu0 0.0
        %3815 = vmatprep.subr.mxu0 0.0
        %3816 = vmatpush2.msra.mxu0 0.0
        %3817 = vmatprep.subr.mxu0 0.0
        %3818 = vmatpush2.msra.mxu0 0.0
        %3819 = vmatprep.subr.mxu0 0.0
        %3820 = vmatpush2.msra.mxu0 0.0
        %3821 = vmatprep.subr.mxu0 0.0
        %3822 = vmatpush2.msra.mxu0 0.0
        %3823 = vmatprep.subr.mxu0 0.0
        %3824 = vmatpush2.msra.mxu0 0.0
        %3825 = vmatprep.subr.mxu0 0.0
        %3826 = vmatpush2.msra.mxu0 0.0
        %3827 = vmatprep.subr.mxu0 0.0
        %3828 = vmatpush2.msra.mxu0 0.0
        %3829 = vmatprep.subr.mxu0 0.0
        %3830 = vmatpush2.msra.mxu0 0.0
        %3831 = vmatprep.mubr.f32.mxu0 0.0
        %3832 = vmatmul.mubr.f32.gmra.mxu0 %v3315
        %v3833 = vpop.f32.mrf.mxu0
        %v3834 = vadd.f32 0.0, %v3833
        %v3835 = vpop.f32.mrf.mxu0
        %3836 = vmatprep.mubr.f32.mxu0 0.0
        %3837 = vmatmul.mubr.f32.gmra.mxu0 %v3318
        %v3838 = vpop.f32.mrf.mxu0
        %v3839 = vadd.f32 0.0, %v3838
        %v3840 = vpop.f32.mrf.mxu0
        %3841 = vdwg.mxu0
        %s3842 = scalar_lea.vmem %s7, 320
        %v3843 = vld [vmem:[%s3842] sm:$0xff]
        %v3844 = vld [vmem:[%s3842 + $0x8] sm:$0xff]
        %v3845 = vld [vmem:[%s3842 + $0x10] sm:$0xff]
        %v3846 = vld [vmem:[%s3842 + $0x18] sm:$0xff]
        %v3847 = vld [vmem:[%s3842 + $0x20] sm:$0xff]
        %v3848 = vld [vmem:[%s3842 + $0x28] sm:$0xff]
        %v3849 = vld [vmem:[%s3842 + $0x30] sm:$0xff]
        %v3850 = vld [vmem:[%s3842 + $0x38] sm:$0xff]
        %3851 = vmatprep.subr.mxu0 0.0
        %3852 = vmatpush1.msra.mxu0 0.0
        %3853 = vmatprep.subr.mxu0 0.0
        %3854 = vmatpush1.msra.mxu0 0.0
        %3855 = vmatprep.subr.mxu0 0.0
        %3856 = vmatpush1.msra.mxu0 0.0
        %3857 = vmatprep.subr.mxu0 0.0
        %3858 = vmatpush1.msra.mxu0 0.0
        %3859 = vmatprep.subr.mxu0 0.0
        %3860 = vmatpush1.msra.mxu0 0.0
        %3861 = vmatprep.subr.mxu0 0.0
        %3862 = vmatpush1.msra.mxu0 0.0
        %3863 = vmatprep.subr.mxu0 0.0
        %3864 = vmatpush1.msra.mxu0 0.0
        %3865 = vmatprep.subr.mxu0 0.0
        %3866 = vmatpush1.msra.mxu0 0.0
        %3867 = vmatprep.subr.mxu0 0.0
        %3868 = vmatpush1.msra.mxu0 %v3850
        %3869 = vmatprep.subr.mxu0 0.0
        %3870 = vmatpush1.msra.mxu0 %v3849
        %3871 = vmatprep.subr.mxu0 0.0
        %3872 = vmatpush1.msra.mxu0 %v3848
        %3873 = vmatprep.subr.mxu0 0.0
        %3874 = vmatpush1.msra.mxu0 %v3847
        %3875 = vmatprep.subr.mxu0 0.0
        %3876 = vmatpush1.msra.mxu0 %v3846
        %3877 = vmatprep.subr.mxu0 0.0
        %3878 = vmatpush1.msra.mxu0 %v3845
        %3879 = vmatprep.subr.mxu0 0.0
        %3880 = vmatpush1.msra.mxu0 %v3844
        %3881 = vmatprep.subr.mxu0 0.0
        %3882 = vmatpush1.msra.mxu0 %v3843
        %3883 = vmatprep.subr.mxu0 0.0
        %3884 = vmatpush2.msra.mxu0 0.0
        %3885 = vmatprep.subr.mxu0 0.0
        %3886 = vmatpush2.msra.mxu0 0.0
        %3887 = vmatprep.subr.mxu0 0.0
        %3888 = vmatpush2.msra.mxu0 0.0
        %3889 = vmatprep.subr.mxu0 0.0
        %3890 = vmatpush2.msra.mxu0 0.0
        %3891 = vmatprep.subr.mxu0 0.0
        %3892 = vmatpush2.msra.mxu0 0.0
        %3893 = vmatprep.subr.mxu0 0.0
        %3894 = vmatpush2.msra.mxu0 0.0
        %3895 = vmatprep.subr.mxu0 0.0
        %3896 = vmatpush2.msra.mxu0 0.0
        %3897 = vmatprep.subr.mxu0 0.0
        %3898 = vmatpush2.msra.mxu0 0.0
        %3899 = vmatprep.subr.mxu0 0.0
        %3900 = vmatpush2.msra.mxu0 0.0
        %3901 = vmatprep.subr.mxu0 0.0
        %3902 = vmatpush2.msra.mxu0 0.0
        %3903 = vmatprep.subr.mxu0 0.0
        %3904 = vmatpush2.msra.mxu0 0.0
        %3905 = vmatprep.subr.mxu0 0.0
        %3906 = vmatpush2.msra.mxu0 0.0
        %3907 = vmatprep.subr.mxu0 0.0
        %3908 = vmatpush2.msra.mxu0 0.0
        %3909 = vmatprep.subr.mxu0 0.0
        %3910 = vmatpush2.msra.mxu0 0.0
        %3911 = vmatprep.subr.mxu0 0.0
        %3912 = vmatpush2.msra.mxu0 0.0
        %3913 = vmatprep.subr.mxu0 0.0
        %3914 = vmatpush2.msra.mxu0 0.0
        %3915 = vmatprep.mubr.f32.mxu0 0.0
        %3916 = vmatmul.mubr.f32.gmra.mxu0 %v3315
        %v3917 = vpop.f32.mrf.mxu0
        %v3918 = vadd.f32 0.0, %v3917
        %v3919 = vpop.f32.mrf.mxu0
        %3920 = vmatprep.mubr.f32.mxu0 0.0
        %3921 = vmatmul.mubr.f32.gmra.mxu0 %v3318
        %v3922 = vpop.f32.mrf.mxu0
        %v3923 = vadd.f32 0.0, %v3922
        %v3924 = vpop.f32.mrf.mxu0
        %3925 = vdwg.mxu0
        %s3926 = scalar_lea.vmem %s8, 320
        %v3927 = vld [vmem:[%s3926] sm:$0xff]
        %v3928 = vld [vmem:[%s3926 + $0x8] sm:$0xff]
        %v3929 = vld [vmem:[%s3926 + $0x10] sm:$0xff]
        %v3930 = vld [vmem:[%s3926 + $0x18] sm:$0xff]
        %v3931 = vld [vmem:[%s3926 + $0x20] sm:$0xff]
        %v3932 = vld [vmem:[%s3926 + $0x28] sm:$0xff]
        %v3933 = vld [vmem:[%s3926 + $0x30] sm:$0xff]
        %v3934 = vld [vmem:[%s3926 + $0x38] sm:$0xff]
        %3935 = vmatprep.subr.mxu0 0.0
        %3936 = vmatpush1.msra.mxu0 0.0
        %3937 = vmatprep.subr.mxu0 0.0
        %3938 = vmatpush1.msra.mxu0 0.0
        %3939 = vmatprep.subr.mxu0 0.0
        %3940 = vmatpush1.msra.mxu0 0.0
        %3941 = vmatprep.subr.mxu0 0.0
        %3942 = vmatpush1.msra.mxu0 0.0
        %3943 = vmatprep.subr.mxu0 0.0
        %3944 = vmatpush1.msra.mxu0 0.0
        %3945 = vmatprep.subr.mxu0 0.0
        %3946 = vmatpush1.msra.mxu0 0.0
        %3947 = vmatprep.subr.mxu0 0.0
        %3948 = vmatpush1.msra.mxu0 0.0
        %3949 = vmatprep.subr.mxu0 0.0
        %3950 = vmatpush1.msra.mxu0 0.0
        %3951 = vmatprep.subr.mxu0 0.0
        %3952 = vmatpush1.msra.mxu0 %v3934
        %3953 = vmatprep.subr.mxu0 0.0
        %3954 = vmatpush1.msra.mxu0 %v3933
        %3955 = vmatprep.subr.mxu0 0.0
        %3956 = vmatpush1.msra.mxu0 %v3932
        %3957 = vmatprep.subr.mxu0 0.0
        %3958 = vmatpush1.msra.mxu0 %v3931
        %3959 = vmatprep.subr.mxu0 0.0
        %3960 = vmatpush1.msra.mxu0 %v3930
        %3961 = vmatprep.subr.mxu0 0.0
        %3962 = vmatpush1.msra.mxu0 %v3929
        %3963 = vmatprep.subr.mxu0 0.0
        %3964 = vmatpush1.msra.mxu0 %v3928
        %3965 = vmatprep.subr.mxu0 0.0
        %3966 = vmatpush1.msra.mxu0 %v3927
        %3967 = vmatprep.subr.mxu0 0.0
        %3968 = vmatpush2.msra.mxu0 0.0
        %3969 = vmatprep.subr.mxu0 0.0
        %3970 = vmatpush2.msra.mxu0 0.0
        %3971 = vmatprep.subr.mxu0 0.0
        %3972 = vmatpush2.msra.mxu0 0.0
        %3973 = vmatprep.subr.mxu0 0.0
        %3974 = vmatpush2.msra.mxu0 0.0
        %3975 = vmatprep.subr.mxu0 0.0
        %3976 = vmatpush2.msra.mxu0 0.0
        %3977 = vmatprep.subr.mxu0 0.0
        %3978 = vmatpush2.msra.mxu0 0.0
        %3979 = vmatprep.subr.mxu0 0.0
        %3980 = vmatpush2.msra.mxu0 0.0
        %3981 = vmatprep.subr.mxu0 0.0
        %3982 = vmatpush2.msra.mxu0 0.0
        %3983 = vmatprep.subr.mxu0 0.0
        %3984 = vmatpush2.msra.mxu0 0.0
        %3985 = vmatprep.subr.mxu0 0.0
        %3986 = vmatpush2.msra.mxu0 0.0
        %3987 = vmatprep.subr.mxu0 0.0
        %3988 = vmatpush2.msra.mxu0 0.0
        %3989 = vmatprep.subr.mxu0 0.0
        %3990 = vmatpush2.msra.mxu0 0.0
        %3991 = vmatprep.subr.mxu0 0.0
        %3992 = vmatpush2.msra.mxu0 0.0
        %3993 = vmatprep.subr.mxu0 0.0
        %3994 = vmatpush2.msra.mxu0 0.0
        %3995 = vmatprep.subr.mxu0 0.0
        %3996 = vmatpush2.msra.mxu0 0.0
        %3997 = vmatprep.subr.mxu0 0.0
        %3998 = vmatpush2.msra.mxu0 0.0
        %3999 = vmatprep.mubr.f32.mxu0 0.0
        %4000 = vmatmul.mubr.f32.gmra.mxu0 %v3315
        %v4001 = vpop.f32.mrf.mxu0
        %v4002 = vadd.f32 0.0, %v4001
        %v4003 = vpop.f32.mrf.mxu0
        %4004 = vmatprep.mubr.f32.mxu0 0.0
        %4005 = vmatmul.mubr.f32.gmra.mxu0 %v3318
        %v4006 = vpop.f32.mrf.mxu0
        %v4007 = vadd.f32 0.0, %v4006
        %v4008 = vpop.f32.mrf.mxu0
        %4009 = vdwg.mxu0
        %v4011 = vsel %vm1133, %v3834, 0
        %v4014 = vsel %vm1133, %v3839, 0
        %v4017 = vsel %vm1133, %v3918, 0
        %v4020 = vsel %vm1133, %v3923, 0
        %4022 = vmatprep.subr.mxu0 0.0
        %4023 = vmatpush1.xpose.msra.mxu0 0.0
        %4024 = vmatprep.subr.mxu0 0.0
        %4025 = vmatpush1.xpose.msra.mxu0 0.0
        %4026 = vmatprep.subr.mxu0 0.0
        %4027 = vmatpush1.xpose.msra.mxu0 0.0
        %4028 = vmatprep.subr.mxu0 0.0
        %4029 = vmatpush1.xpose.msra.mxu0 0.0
        %4030 = vmatprep.subr.mxu0 0.0
        %4031 = vmatpush1.xpose.msra.mxu0 0.0
        %4032 = vmatprep.subr.mxu0 0.0
        %4033 = vmatpush1.xpose.msra.mxu0 0.0
        %4034 = vmatprep.subr.mxu0 0.0
        %4035 = vmatpush1.xpose.msra.mxu0 0.0
        %4036 = vmatprep.subr.mxu0 0.0
        %4037 = vmatpush1.xpose.msra.mxu0 0.0
        %4038 = vmatprep.subr.mxu0 0.0
        %4039 = vmatpush1.xpose.msra.mxu0 0.0
        %4040 = vmatprep.subr.mxu0 0.0
        %4041 = vmatpush1.xpose.msra.mxu0 0.0
        %4042 = vmatprep.subr.mxu0 0.0
        %4043 = vmatpush1.xpose.msra.mxu0 0.0
        %4044 = vmatprep.subr.mxu0 0.0
        %4045 = vmatpush1.xpose.msra.mxu0 0.0
        %4046 = vmatprep.subr.mxu0 0.0
        %4047 = vmatpush1.xpose.msra.mxu0 0.0
        %4048 = vmatprep.subr.mxu0 0.0
        %4049 = vmatpush1.xpose.msra.mxu0 0.0
        %4050 = vmatprep.subr.mxu0 0.0
        %4051 = vmatpush1.xpose.msra.mxu0 %v4020
        %4052 = vmatprep.subr.mxu0 0.0
        %4053 = vmatpush1.xpose.msra.mxu0 %v4017
        %4054 = vmatprep.subr.mxu0 0.0
        %4055 = vmatpush2.xpose.msra.mxu0 0.0
        %4056 = vmatprep.subr.mxu0 0.0
        %4057 = vmatpush2.xpose.msra.mxu0 0.0
        %4058 = vmatprep.subr.mxu0 0.0
        %4059 = vmatpush2.xpose.msra.mxu0 0.0
        %4060 = vmatprep.subr.mxu0 0.0
        %4061 = vmatpush2.xpose.msra.mxu0 0.0
        %4062 = vmatprep.subr.mxu0 0.0
        %4063 = vmatpush2.xpose.msra.mxu0 0.0
        %4064 = vmatprep.subr.mxu0 0.0
        %4065 = vmatpush2.xpose.msra.mxu0 0.0
        %4066 = vmatprep.subr.mxu0 0.0
        %4067 = vmatpush2.xpose.msra.mxu0 0.0
        %4068 = vmatprep.subr.mxu0 0.0
        %4069 = vmatpush2.xpose.msra.mxu0 0.0
        %4070 = vmatprep.subr.mxu0 0.0
        %4071 = vmatpush2.xpose.msra.mxu0 0.0
        %4072 = vmatprep.subr.mxu0 0.0
        %4073 = vmatpush2.xpose.msra.mxu0 0.0
        %4074 = vmatprep.subr.mxu0 0.0
        %4075 = vmatpush2.xpose.msra.mxu0 0.0
        %4076 = vmatprep.subr.mxu0 0.0
        %4077 = vmatpush2.xpose.msra.mxu0 0.0
        %4078 = vmatprep.subr.mxu0 0.0
        %4079 = vmatpush2.xpose.msra.mxu0 0.0
        %4080 = vmatprep.subr.mxu0 0.0
        %4081 = vmatpush2.xpose.msra.mxu0 0.0
        %4082 = vmatprep.subr.mxu0 0.0
        %4083 = vmatpush2.xpose.msra.mxu0 0.0
        %4084 = vmatprep.subr.mxu0 0.0
        %4085 = vmatpush2.xpose.msra.mxu0 0.0
        %4086 = vmatprep.mubr.f32.mxu0 0.0
        %4087 = vmatmul.mubr.f32.gmra.mxu0 %v4011
        %v4088 = vpop.f32.mrf.mxu0
        %v4089 = vadd.f32 0.0, %v4088
        %v4090 = vpop.f32.mrf.mxu0
        %4091 = vmatprep.mubr.f32.mxu0 0.0
        %4092 = vmatmul.mubr.f32.gmra.mxu0 %v4014
        %v4093 = vpop.f32.mrf.mxu0
        %v4094 = vadd.f32 0.0, %v4093
        %v4095 = vpop.f32.mrf.mxu0
        %4096 = vdwg.mxu0
        %v4097 = vmul.f32 %v4089, 0.25
        %v4098 = vmul.f32 %v4094, 0.25
        %v4099 = vsel %vm1133, %v4097, -inf
        %4100 = vmax.xlane.f32.xlu0 %v4099
        %v4101 = vpop.xlane.xlu0 %4100
        %v4102 = vsel %vm1133, %v4098, -inf
        %4103 = vmax.xlane.f32.xlu0 %v4102
        %v4104 = vpop.xlane.xlu0 %4103
        %v4105 = vsub.f32 %v4097, %v4101
        %v4106 = vsub.f32 %v4098, %v4104
        %v4107 = vmul.f32 %v4105, 1.442695
        %v4108 = vpow.pop %v4107
        %v4109 = vmul.f32 %v4106, 1.442695
        %v4110 = vpow.pop %v4109
        %v4111 = vsel %vm1133, %v4108, 0.0
        %4112 = vadd.xlane.f32.xlu0 %v4111
        %v4113 = vpop.xlane.xlu0 %4112
        %v4114 = vsel %vm1133, %v4110, 0.0
        %4115 = vadd.xlane.f32.xlu0 %v4114
        %v4116 = vpop.xlane.xlu0 %4115
        %v4117 = vrcp.pop %v4113
        %v4118 = vmul.f32 %v4108, %v4117
        %v4119 = vrcp.pop %v4116
        %v4120 = vmul.f32 %v4110, %v4119
        %v4122 = vsel %vm1133, %v4118, 0
        %v4125 = vsel %vm1133, %v4120, 0
        %4127 = vmatprep.subr.mxu0 0.0
        %4128 = vmatpush1.msra.mxu0 0.0
        %4129 = vmatprep.subr.mxu0 0.0
        %4130 = vmatpush1.msra.mxu0 0.0
        %4131 = vmatprep.subr.mxu0 0.0
        %4132 = vmatpush1.msra.mxu0 0.0
        %4133 = vmatprep.subr.mxu0 0.0
        %4134 = vmatpush1.msra.mxu0 0.0
        %4135 = vmatprep.subr.mxu0 0.0
        %4136 = vmatpush1.msra.mxu0 0.0
        %4137 = vmatprep.subr.mxu0 0.0
        %4138 = vmatpush1.msra.mxu0 0.0
        %4139 = vmatprep.subr.mxu0 0.0
        %4140 = vmatpush1.msra.mxu0 0.0
        %4141 = vmatprep.subr.mxu0 0.0
        %4142 = vmatpush1.msra.mxu0 0.0
        %4143 = vmatprep.subr.mxu0 0.0
        %4144 = vmatpush1.msra.mxu0 0.0
        %4145 = vmatprep.subr.mxu0 0.0
        %4146 = vmatpush1.msra.mxu0 0.0
        %4147 = vmatprep.subr.mxu0 0.0
        %4148 = vmatpush1.msra.mxu0 0.0
        %4149 = vmatprep.subr.mxu0 0.0
        %4150 = vmatpush1.msra.mxu0 0.0
        %4151 = vmatprep.subr.mxu0 0.0
        %4152 = vmatpush1.msra.mxu0 0.0
        %4153 = vmatprep.subr.mxu0 0.0
        %4154 = vmatpush1.msra.mxu0 0.0
        %4155 = vmatprep.subr.mxu0 0.0
        %4156 = vmatpush1.msra.mxu0 %v4007
        %4157 = vmatprep.subr.mxu0 0.0
        %4158 = vmatpush1.msra.mxu0 %v4002
        %4159 = vmatprep.subr.mxu0 0.0
        %4160 = vmatpush2.msra.mxu0 0.0
        %4161 = vmatprep.subr.mxu0 0.0
        %4162 = vmatpush2.msra.mxu0 0.0
        %4163 = vmatprep.subr.mxu0 0.0
        %4164 = vmatpush2.msra.mxu0 0.0
        %4165 = vmatprep.subr.mxu0 0.0
        %4166 = vmatpush2.msra.mxu0 0.0
        %4167 = vmatprep.subr.mxu0 0.0
        %4168 = vmatpush2.msra.mxu0 0.0
        %4169 = vmatprep.subr.mxu0 0.0
        %4170 = vmatpush2.msra.mxu0 0.0
        %4171 = vmatprep.subr.mxu0 0.0
        %4172 = vmatpush2.msra.mxu0 0.0
        %4173 = vmatprep.subr.mxu0 0.0
        %4174 = vmatpush2.msra.mxu0 0.0
        %4175 = vmatprep.subr.mxu0 0.0
        %4176 = vmatpush2.msra.mxu0 0.0
        %4177 = vmatprep.subr.mxu0 0.0
        %4178 = vmatpush2.msra.mxu0 0.0
        %4179 = vmatprep.subr.mxu0 0.0
        %4180 = vmatpush2.msra.mxu0 0.0
        %4181 = vmatprep.subr.mxu0 0.0
        %4182 = vmatpush2.msra.mxu0 0.0
        %4183 = vmatprep.subr.mxu0 0.0
        %4184 = vmatpush2.msra.mxu0 0.0
        %4185 = vmatprep.subr.mxu0 0.0
        %4186 = vmatpush2.msra.mxu0 0.0
        %4187 = vmatprep.subr.mxu0 0.0
        %4188 = vmatpush2.msra.mxu0 0.0
        %4189 = vmatprep.subr.mxu0 0.0
        %4190 = vmatpush2.msra.mxu0 0.0
        %4191 = vmatprep.mubr.f32.mxu0 0.0
        %4192 = vmatmul.mubr.f32.gmra.mxu0 %v4122
        %v4193 = vpop.f32.mrf.mxu0
        %v4194 = vadd.f32 0.0, %v4193
        %v4195 = vpop.f32.mrf.mxu0
        %4196 = vmatprep.mubr.f32.mxu0 0.0
        %4197 = vmatmul.mubr.f32.gmra.mxu0 %v4125
        %v4198 = vpop.f32.mrf.mxu0
        %v4199 = vadd.f32 0.0, %v4198
        %v4200 = vpop.f32.mrf.mxu0
        %4201 = vdwg.mxu0
        %s4202 = scalar_lea.vmem %s9, 80
        %v4203 = vld [vmem:[%s4202] sm:$0xff]
        %v4204 = vld [vmem:[%s4202 + $0x8] sm:$0xff]
        %v4206 = vsel %vm1133, %v4194, 0
        %v4209 = vsel %vm1133, %v4199, 0
        %4211 = vmatprep.subr.mxu0 0.0
        %4212 = vmatpush1.msra.mxu0 0.0
        %4213 = vmatprep.subr.mxu0 0.0
        %4214 = vmatpush1.msra.mxu0 0.0
        %4215 = vmatprep.subr.mxu0 0.0
        %4216 = vmatpush1.msra.mxu0 0.0
        %4217 = vmatprep.subr.mxu0 0.0
        %4218 = vmatpush1.msra.mxu0 0.0
        %4219 = vmatprep.subr.mxu0 0.0
        %4220 = vmatpush1.msra.mxu0 0.0
        %4221 = vmatprep.subr.mxu0 0.0
        %4222 = vmatpush1.msra.mxu0 0.0
        %4223 = vmatprep.subr.mxu0 0.0
        %4224 = vmatpush1.msra.mxu0 0.0
        %4225 = vmatprep.subr.mxu0 0.0
        %4226 = vmatpush1.msra.mxu0 0.0
        %4227 = vmatprep.subr.mxu0 0.0
        %4228 = vmatpush1.msra.mxu0 0.0
        %4229 = vmatprep.subr.mxu0 0.0
        %4230 = vmatpush1.msra.mxu0 0.0
        %4231 = vmatprep.subr.mxu0 0.0
        %4232 = vmatpush1.msra.mxu0 0.0
        %4233 = vmatprep.subr.mxu0 0.0
        %4234 = vmatpush1.msra.mxu0 0.0
        %4235 = vmatprep.subr.mxu0 0.0
        %4236 = vmatpush1.msra.mxu0 0.0
        %4237 = vmatprep.subr.mxu0 0.0
        %4238 = vmatpush1.msra.mxu0 0.0
        %4239 = vmatprep.subr.mxu0 0.0
        %4240 = vmatpush1.msra.mxu0 %v4204
        %4241 = vmatprep.subr.mxu0 0.0
        %4242 = vmatpush1.msra.mxu0 %v4203
        %4243 = vmatprep.subr.mxu0 0.0
        %4244 = vmatpush2.msra.mxu0 0.0
        %4245 = vmatprep.subr.mxu0 0.0
        %4246 = vmatpush2.msra.mxu0 0.0
        %4247 = vmatprep.subr.mxu0 0.0
        %4248 = vmatpush2.msra.mxu0 0.0
        %4249 = vmatprep.subr.mxu0 0.0
        %4250 = vmatpush2.msra.mxu0 0.0
        %4251 = vmatprep.subr.mxu0 0.0
        %4252 = vmatpush2.msra.mxu0 0.0
        %4253 = vmatprep.subr.mxu0 0.0
        %4254 = vmatpush2.msra.mxu0 0.0
        %4255 = vmatprep.subr.mxu0 0.0
        %4256 = vmatpush2.msra.mxu0 0.0
        %4257 = vmatprep.subr.mxu0 0.0
        %4258 = vmatpush2.msra.mxu0 0.0
        %4259 = vmatprep.subr.mxu0 0.0
        %4260 = vmatpush2.msra.mxu0 0.0
        %4261 = vmatprep.subr.mxu0 0.0
        %4262 = vmatpush2.msra.mxu0 0.0
        %4263 = vmatprep.subr.mxu0 0.0
        %4264 = vmatpush2.msra.mxu0 0.0
        %4265 = vmatprep.subr.mxu0 0.0
        %4266 = vmatpush2.msra.mxu0 0.0
        %4267 = vmatprep.subr.mxu0 0.0
        %4268 = vmatpush2.msra.mxu0 0.0
        %4269 = vmatprep.subr.mxu0 0.0
        %4270 = vmatpush2.msra.mxu0 0.0
        %4271 = vmatprep.subr.mxu0 0.0
        %4272 = vmatpush2.msra.mxu0 0.0
        %4273 = vmatprep.subr.mxu0 0.0
        %4274 = vmatpush2.msra.mxu0 0.0
        %4275 = vmatprep.mubr.f32.mxu0 0.0
        %4276 = vmatmul.mubr.f32.gmra.mxu0 %v4206
        %v4277 = vpop.f32.mrf.mxu0
        %v4278 = vadd.f32 0.0, %v4277
        %v4279 = vpop.f32.mrf.mxu0
        %4280 = vmatprep.mubr.f32.mxu0 0.0
        %4281 = vmatmul.mubr.f32.gmra.mxu0 %v4209
        %v4282 = vpop.f32.mrf.mxu0
        %v4283 = vadd.f32 0.0, %v4282
        %v4284 = vpop.f32.mrf.mxu0
        %4285 = vdwg.mxu0
        %v4287 = vsel %vm1133, %v3747, 0
        %v4290 = vsel %vm1133, %v3752, 0
        %4292 = vmatprep.subr.mxu0 0.0
        %4293 = vmatpush1.msra.mxu0 0.0
        %4294 = vmatprep.subr.mxu0 0.0
        %4295 = vmatpush1.msra.mxu0 0.0
        %4296 = vmatprep.subr.mxu0 0.0
        %4297 = vmatpush1.msra.mxu0 0.0
        %4298 = vmatprep.subr.mxu0 0.0
        %4299 = vmatpush1.msra.mxu0 0.0
        %4300 = vmatprep.subr.mxu0 0.0
        %4301 = vmatpush1.msra.mxu0 0.0
        %4302 = vmatprep.subr.mxu0 0.0
        %4303 = vmatpush1.msra.mxu0 0.0
        %4304 = vmatprep.subr.mxu0 0.0
        %4305 = vmatpush1.msra.mxu0 0.0
        %4306 = vmatprep.subr.mxu0 0.0
        %4307 = vmatpush1.msra.mxu0 0.0
        %4308 = vmatprep.subr.mxu0 0.0
        %4309 = vmatpush1.msra.mxu0 0.0
        %4310 = vmatprep.subr.mxu0 0.0
        %4311 = vmatpush1.msra.mxu0 0.0
        %4312 = vmatprep.subr.mxu0 0.0
        %4313 = vmatpush1.msra.mxu0 0.0
        %4314 = vmatprep.subr.mxu0 0.0
        %4315 = vmatpush1.msra.mxu0 0.0
        %4316 = vmatprep.subr.mxu0 0.0
        %4317 = vmatpush1.msra.mxu0 0.0
        %4318 = vmatprep.subr.mxu0 0.0
        %4319 = vmatpush1.msra.mxu0 0.0
        %4320 = vmatprep.subr.mxu0 0.0
        %4321 = vmatpush1.msra.mxu0 %v3757
        %4322 = vmatprep.subr.mxu0 0.0
        %4323 = vmatpush1.msra.mxu0 %v3756
        %4324 = vmatprep.subr.mxu0 0.0
        %4325 = vmatpush2.msra.mxu0 0.0
        %4326 = vmatprep.subr.mxu0 0.0
        %4327 = vmatpush2.msra.mxu0 0.0
        %4328 = vmatprep.subr.mxu0 0.0
        %4329 = vmatpush2.msra.mxu0 0.0
        %4330 = vmatprep.subr.mxu0 0.0
        %4331 = vmatpush2.msra.mxu0 0.0
        %4332 = vmatprep.subr.mxu0 0.0
        %4333 = vmatpush2.msra.mxu0 0.0
        %4334 = vmatprep.subr.mxu0 0.0
        %4335 = vmatpush2.msra.mxu0 0.0
        %4336 = vmatprep.subr.mxu0 0.0
        %4337 = vmatpush2.msra.mxu0 0.0
        %4338 = vmatprep.subr.mxu0 0.0
        %4339 = vmatpush2.msra.mxu0 0.0
        %4340 = vmatprep.subr.mxu0 0.0
        %4341 = vmatpush2.msra.mxu0 0.0
        %4342 = vmatprep.subr.mxu0 0.0
        %4343 = vmatpush2.msra.mxu0 0.0
        %4344 = vmatprep.subr.mxu0 0.0
        %4345 = vmatpush2.msra.mxu0 0.0
        %4346 = vmatprep.subr.mxu0 0.0
        %4347 = vmatpush2.msra.mxu0 0.0
        %4348 = vmatprep.subr.mxu0 0.0
        %4349 = vmatpush2.msra.mxu0 0.0
        %4350 = vmatprep.subr.mxu0 0.0
        %4351 = vmatpush2.msra.mxu0 0.0
        %4352 = vmatprep.subr.mxu0 0.0
        %4353 = vmatpush2.msra.mxu0 0.0
        %4354 = vmatprep.subr.mxu0 0.0
        %4355 = vmatpush2.msra.mxu0 0.0
        %4356 = vmatprep.mubr.f32.mxu0 0.0
        %4357 = vmatmul.mubr.f32.gmra.mxu0 %v4287
        %v4358 = vpop.f32.mrf.mxu0
        %v4359 = vadd.f32 %v4278, %v4358
        %v4360 = vpop.f32.mrf.mxu0
        %4361 = vmatprep.mubr.f32.mxu0 0.0
        %4362 = vmatmul.mubr.f32.gmra.mxu0 %v4290
        %v4363 = vpop.f32.mrf.mxu0
        %v4364 = vadd.f32 %v4283, %v4363
        %v4365 = vpop.f32.mrf.mxu0
        %4366 = vdwg.mxu0
        %s4367 = scalar_lea.vmem %s6, 384
        %v4368 = vld [vmem:[%s4367] sm:$0xff]
        %v4369 = vld [vmem:[%s4367 + $0x8] sm:$0xff]
        %v4370 = vld [vmem:[%s4367 + $0x10] sm:$0xff]
        %v4371 = vld [vmem:[%s4367 + $0x18] sm:$0xff]
        %v4372 = vld [vmem:[%s4367 + $0x20] sm:$0xff]
        %v4373 = vld [vmem:[%s4367 + $0x28] sm:$0xff]
        %v4374 = vld [vmem:[%s4367 + $0x30] sm:$0xff]
        %v4375 = vld [vmem:[%s4367 + $0x38] sm:$0xff]
        %4376 = vmatprep.subr.mxu0 0.0
        %4377 = vmatpush1.msra.mxu0 0.0
        %4378 = vmatprep.subr.mxu0 0.0
        %4379 = vmatpush1.msra.mxu0 0.0
        %4380 = vmatprep.subr.mxu0 0.0
        %4381 = vmatpush1.msra.mxu0 0.0
        %4382 = vmatprep.subr.mxu0 0.0
        %4383 = vmatpush1.msra.mxu0 0.0
        %4384 = vmatprep.subr.mxu0 0.0
        %4385 = vmatpush1.msra.mxu0 0.0
        %4386 = vmatprep.subr.mxu0 0.0
        %4387 = vmatpush1.msra.mxu0 0.0
        %4388 = vmatprep.subr.mxu0 0.0
        %4389 = vmatpush1.msra.mxu0 0.0
        %4390 = vmatprep.subr.mxu0 0.0
        %4391 = vmatpush1.msra.mxu0 0.0
        %4392 = vmatprep.subr.mxu0 0.0
        %4393 = vmatpush1.msra.mxu0 %v4375
        %4394 = vmatprep.subr.mxu0 0.0
        %4395 = vmatpush1.msra.mxu0 %v4374
        %4396 = vmatprep.subr.mxu0 0.0
        %4397 = vmatpush1.msra.mxu0 %v4373
        %4398 = vmatprep.subr.mxu0 0.0
        %4399 = vmatpush1.msra.mxu0 %v4372
        %4400 = vmatprep.subr.mxu0 0.0
        %4401 = vmatpush1.msra.mxu0 %v4371
        %4402 = vmatprep.subr.mxu0 0.0
        %4403 = vmatpush1.msra.mxu0 %v4370
        %4404 = vmatprep.subr.mxu0 0.0
        %4405 = vmatpush1.msra.mxu0 %v4369
        %4406 = vmatprep.subr.mxu0 0.0
        %4407 = vmatpush1.msra.mxu0 %v4368
        %4408 = vmatprep.subr.mxu0 0.0
        %4409 = vmatpush2.msra.mxu0 0.0
        %4410 = vmatprep.subr.mxu0 0.0
        %4411 = vmatpush2.msra.mxu0 0.0
        %4412 = vmatprep.subr.mxu0 0.0
        %4413 = vmatpush2.msra.mxu0 0.0
        %4414 = vmatprep.subr.mxu0 0.0
        %4415 = vmatpush2.msra.mxu0 0.0
        %4416 = vmatprep.subr.mxu0 0.0
        %4417 = vmatpush2.msra.mxu0 0.0
        %4418 = vmatprep.subr.mxu0 0.0
        %4419 = vmatpush2.msra.mxu0 0.0
        %4420 = vmatprep.subr.mxu0 0.0
        %4421 = vmatpush2.msra.mxu0 0.0
        %4422 = vmatprep.subr.mxu0 0.0
        %4423 = vmatpush2.msra.mxu0 0.0
        %4424 = vmatprep.subr.mxu0 0.0
        %4425 = vmatpush2.msra.mxu0 0.0
        %4426 = vmatprep.subr.mxu0 0.0
        %4427 = vmatpush2.msra.mxu0 0.0
        %4428 = vmatprep.subr.mxu0 0.0
        %4429 = vmatpush2.msra.mxu0 0.0
        %4430 = vmatprep.subr.mxu0 0.0
        %4431 = vmatpush2.msra.mxu0 0.0
        %4432 = vmatprep.subr.mxu0 0.0
        %4433 = vmatpush2.msra.mxu0 0.0
        %4434 = vmatprep.subr.mxu0 0.0
        %4435 = vmatpush2.msra.mxu0 0.0
        %4436 = vmatprep.subr.mxu0 0.0
        %4437 = vmatpush2.msra.mxu0 0.0
        %4438 = vmatprep.subr.mxu0 0.0
        %4439 = vmatpush2.msra.mxu0 0.0
        %4440 = vmatprep.mubr.f32.mxu0 0.0
        %4441 = vmatmul.mubr.f32.gmra.mxu0 %v3315
        %v4442 = vpop.f32.mrf.mxu0
        %v4443 = vadd.f32 0.0, %v4442
        %v4444 = vpop.f32.mrf.mxu0
        %4445 = vmatprep.mubr.f32.mxu0 0.0
        %4446 = vmatmul.mubr.f32.gmra.mxu0 %v3318
        %v4447 = vpop.f32.mrf.mxu0
        %v4448 = vadd.f32 0.0, %v4447
        %v4449 = vpop.f32.mrf.mxu0
        %4450 = vdwg.mxu0
        %s4451 = scalar_lea.vmem %s7, 384
        %v4452 = vld [vmem:[%s4451] sm:$0xff]
        %v4453 = vld [vmem:[%s4451 + $0x8] sm:$0xff]
        %v4454 = vld [vmem:[%s4451 + $0x10] sm:$0xff]
        %v4455 = vld [vmem:[%s4451 + $0x18] sm:$0xff]
        %v4456 = vld [vmem:[%s4451 + $0x20] sm:$0xff]
        %v4457 = vld [vmem:[%s4451 + $0x28] sm:$0xff]
        %v4458 = vld [vmem:[%s4451 + $0x30] sm:$0xff]
        %v4459 = vld [vmem:[%s4451 + $0x38] sm:$0xff]
        %4460 = vmatprep.subr.mxu0 0.0
        %4461 = vmatpush1.msra.mxu0 0.0
        %4462 = vmatprep.subr.mxu0 0.0
        %4463 = vmatpush1.msra.mxu0 0.0
        %4464 = vmatprep.subr.mxu0 0.0
        %4465 = vmatpush1.msra.mxu0 0.0
        %4466 = vmatprep.subr.mxu0 0.0
        %4467 = vmatpush1.msra.mxu0 0.0
        %4468 = vmatprep.subr.mxu0 0.0
        %4469 = vmatpush1.msra.mxu0 0.0
        %4470 = vmatprep.subr.mxu0 0.0
        %4471 = vmatpush1.msra.mxu0 0.0
        %4472 = vmatprep.subr.mxu0 0.0
        %4473 = vmatpush1.msra.mxu0 0.0
        %4474 = vmatprep.subr.mxu0 0.0
        %4475 = vmatpush1.msra.mxu0 0.0
        %4476 = vmatprep.subr.mxu0 0.0
        %4477 = vmatpush1.msra.mxu0 %v4459
        %4478 = vmatprep.subr.mxu0 0.0
        %4479 = vmatpush1.msra.mxu0 %v4458
        %4480 = vmatprep.subr.mxu0 0.0
        %4481 = vmatpush1.msra.mxu0 %v4457
        %4482 = vmatprep.subr.mxu0 0.0
        %4483 = vmatpush1.msra.mxu0 %v4456
        %4484 = vmatprep.subr.mxu0 0.0
        %4485 = vmatpush1.msra.mxu0 %v4455
        %4486 = vmatprep.subr.mxu0 0.0
        %4487 = vmatpush1.msra.mxu0 %v4454
        %4488 = vmatprep.subr.mxu0 0.0
        %4489 = vmatpush1.msra.mxu0 %v4453
        %4490 = vmatprep.subr.mxu0 0.0
        %4491 = vmatpush1.msra.mxu0 %v4452
        %4492 = vmatprep.subr.mxu0 0.0
        %4493 = vmatpush2.msra.mxu0 0.0
        %4494 = vmatprep.subr.mxu0 0.0
        %4495 = vmatpush2.msra.mxu0 0.0
        %4496 = vmatprep.subr.mxu0 0.0
        %4497 = vmatpush2.msra.mxu0 0.0
        %4498 = vmatprep.subr.mxu0 0.0
        %4499 = vmatpush2.msra.mxu0 0.0
        %4500 = vmatprep.subr.mxu0 0.0
        %4501 = vmatpush2.msra.mxu0 0.0
        %4502 = vmatprep.subr.mxu0 0.0
        %4503 = vmatpush2.msra.mxu0 0.0
        %4504 = vmatprep.subr.mxu0 0.0
        %4505 = vmatpush2.msra.mxu0 0.0
        %4506 = vmatprep.subr.mxu0 0.0
        %4507 = vmatpush2.msra.mxu0 0.0
        %4508 = vmatprep.subr.mxu0 0.0
        %4509 = vmatpush2.msra.mxu0 0.0
        %4510 = vmatprep.subr.mxu0 0.0
        %4511 = vmatpush2.msra.mxu0 0.0
        %4512 = vmatprep.subr.mxu0 0.0
        %4513 = vmatpush2.msra.mxu0 0.0
        %4514 = vmatprep.subr.mxu0 0.0
        %4515 = vmatpush2.msra.mxu0 0.0
        %4516 = vmatprep.subr.mxu0 0.0
        %4517 = vmatpush2.msra.mxu0 0.0
        %4518 = vmatprep.subr.mxu0 0.0
        %4519 = vmatpush2.msra.mxu0 0.0
        %4520 = vmatprep.subr.mxu0 0.0
        %4521 = vmatpush2.msra.mxu0 0.0
        %4522 = vmatprep.subr.mxu0 0.0
        %4523 = vmatpush2.msra.mxu0 0.0
        %4524 = vmatprep.mubr.f32.mxu0 0.0
        %4525 = vmatmul.mubr.f32.gmra.mxu0 %v3315
        %v4526 = vpop.f32.mrf.mxu0
        %v4527 = vadd.f32 0.0, %v4526
        %v4528 = vpop.f32.mrf.mxu0
        %4529 = vmatprep.mubr.f32.mxu0 0.0
        %4530 = vmatmul.mubr.f32.gmra.mxu0 %v3318
        %v4531 = vpop.f32.mrf.mxu0
        %v4532 = vadd.f32 0.0, %v4531
        %v4533 = vpop.f32.mrf.mxu0
        %4534 = vdwg.mxu0
        %s4535 = scalar_lea.vmem %s8, 384
        %v4536 = vld [vmem:[%s4535] sm:$0xff]
        %v4537 = vld [vmem:[%s4535 + $0x8] sm:$0xff]
        %v4538 = vld [vmem:[%s4535 + $0x10] sm:$0xff]
        %v4539 = vld [vmem:[%s4535 + $0x18] sm:$0xff]
        %v4540 = vld [vmem:[%s4535 + $0x20] sm:$0xff]
        %v4541 = vld [vmem:[%s4535 + $0x28] sm:$0xff]
        %v4542 = vld [vmem:[%s4535 + $0x30] sm:$0xff]
        %v4543 = vld [vmem:[%s4535 + $0x38] sm:$0xff]
        %4544 = vmatprep.subr.mxu0 0.0
        %4545 = vmatpush1.msra.mxu0 0.0
        %4546 = vmatprep.subr.mxu0 0.0
        %4547 = vmatpush1.msra.mxu0 0.0
        %4548 = vmatprep.subr.mxu0 0.0
        %4549 = vmatpush1.msra.mxu0 0.0
        %4550 = vmatprep.subr.mxu0 0.0
        %4551 = vmatpush1.msra.mxu0 0.0
        %4552 = vmatprep.subr.mxu0 0.0
        %4553 = vmatpush1.msra.mxu0 0.0
        %4554 = vmatprep.subr.mxu0 0.0
        %4555 = vmatpush1.msra.mxu0 0.0
        %4556 = vmatprep.subr.mxu0 0.0
        %4557 = vmatpush1.msra.mxu0 0.0
        %4558 = vmatprep.subr.mxu0 0.0
        %4559 = vmatpush1.msra.mxu0 0.0
        %4560 = vmatprep.subr.mxu0 0.0
        %4561 = vmatpush1.msra.mxu0 %v4543
        %4562 = vmatprep.subr.mxu0 0.0
        %4563 = vmatpush1.msra.mxu0 %v4542
        %4564 = vmatprep.subr.mxu0 0.0
        %4565 = vmatpush1.msra.mxu0 %v4541
        %4566 = vmatprep.subr.mxu0 0.0
        %4567 = vmatpush1.msra.mxu0 %v4540
        %4568 = vmatprep.subr.mxu0 0.0
        %4569 = vmatpush1.msra.mxu0 %v4539
        %4570 = vmatprep.subr.mxu0 0.0
        %4571 = vmatpush1.msra.mxu0 %v4538
        %4572 = vmatprep.subr.mxu0 0.0
        %4573 = vmatpush1.msra.mxu0 %v4537
        %4574 = vmatprep.subr.mxu0 0.0
        %4575 = vmatpush1.msra.mxu0 %v4536
        %4576 = vmatprep.subr.mxu0 0.0
        %4577 = vmatpush2.msra.mxu0 0.0
        %4578 = vmatprep.subr.mxu0 0.0
        %4579 = vmatpush2.msra.mxu0 0.0
        %4580 = vmatprep.subr.mxu0 0.0
        %4581 = vmatpush2.msra.mxu0 0.0
        %4582 = vmatprep.subr.mxu0 0.0
        %4583 = vmatpush2.msra.mxu0 0.0
        %4584 = vmatprep.subr.mxu0 0.0
        %4585 = vmatpush2.msra.mxu0 0.0
        %4586 = vmatprep.subr.mxu0 0.0
        %4587 = vmatpush2.msra.mxu0 0.0
        %4588 = vmatprep.subr.mxu0 0.0
        %4589 = vmatpush2.msra.mxu0 0.0
        %4590 = vmatprep.subr.mxu0 0.0
        %4591 = vmatpush2.msra.mxu0 0.0
        %4592 = vmatprep.subr.mxu0 0.0
        %4593 = vmatpush2.msra.mxu0 0.0
        %4594 = vmatprep.subr.mxu0 0.0
        %4595 = vmatpush2.msra.mxu0 0.0
        %4596 = vmatprep.subr.mxu0 0.0
        %4597 = vmatpush2.msra.mxu0 0.0
        %4598 = vmatprep.subr.mxu0 0.0
        %4599 = vmatpush2.msra.mxu0 0.0
        %4600 = vmatprep.subr.mxu0 0.0
        %4601 = vmatpush2.msra.mxu0 0.0
        %4602 = vmatprep.subr.mxu0 0.0
        %4603 = vmatpush2.msra.mxu0 0.0
        %4604 = vmatprep.subr.mxu0 0.0
        %4605 = vmatpush2.msra.mxu0 0.0
        %4606 = vmatprep.subr.mxu0 0.0
        %4607 = vmatpush2.msra.mxu0 0.0
        %4608 = vmatprep.mubr.f32.mxu0 0.0
        %4609 = vmatmul.mubr.f32.gmra.mxu0 %v3315
        %v4610 = vpop.f32.mrf.mxu0
        %v4611 = vadd.f32 0.0, %v4610
        %v4612 = vpop.f32.mrf.mxu0
        %4613 = vmatprep.mubr.f32.mxu0 0.0
        %4614 = vmatmul.mubr.f32.gmra.mxu0 %v3318
        %v4615 = vpop.f32.mrf.mxu0
        %v4616 = vadd.f32 0.0, %v4615
        %v4617 = vpop.f32.mrf.mxu0
        %4618 = vdwg.mxu0
        %v4620 = vsel %vm1133, %v4443, 0
        %v4623 = vsel %vm1133, %v4448, 0
        %v4626 = vsel %vm1133, %v4527, 0
        %v4629 = vsel %vm1133, %v4532, 0
        %4631 = vmatprep.subr.mxu0 0.0
        %4632 = vmatpush1.xpose.msra.mxu0 0.0
        %4633 = vmatprep.subr.mxu0 0.0
        %4634 = vmatpush1.xpose.msra.mxu0 0.0
        %4635 = vmatprep.subr.mxu0 0.0
        %4636 = vmatpush1.xpose.msra.mxu0 0.0
        %4637 = vmatprep.subr.mxu0 0.0
        %4638 = vmatpush1.xpose.msra.mxu0 0.0
        %4639 = vmatprep.subr.mxu0 0.0
        %4640 = vmatpush1.xpose.msra.mxu0 0.0
        %4641 = vmatprep.subr.mxu0 0.0
        %4642 = vmatpush1.xpose.msra.mxu0 0.0
        %4643 = vmatprep.subr.mxu0 0.0
        %4644 = vmatpush1.xpose.msra.mxu0 0.0
        %4645 = vmatprep.subr.mxu0 0.0
        %4646 = vmatpush1.xpose.msra.mxu0 0.0
        %4647 = vmatprep.subr.mxu0 0.0
        %4648 = vmatpush1.xpose.msra.mxu0 0.0
        %4649 = vmatprep.subr.mxu0 0.0
        %4650 = vmatpush1.xpose.msra.mxu0 0.0
        %4651 = vmatprep.subr.mxu0 0.0
        %4652 = vmatpush1.xpose.msra.mxu0 0.0
        %4653 = vmatprep.subr.mxu0 0.0
        %4654 = vmatpush1.xpose.msra.mxu0 0.0
        %4655 = vmatprep.subr.mxu0 0.0
        %4656 = vmatpush1.xpose.msra.mxu0 0.0
        %4657 = vmatprep.subr.mxu0 0.0
        %4658 = vmatpush1.xpose.msra.mxu0 0.0
        %4659 = vmatprep.subr.mxu0 0.0
        %4660 = vmatpush1.xpose.msra.mxu0 %v4629
        %4661 = vmatprep.subr.mxu0 0.0
        %4662 = vmatpush1.xpose.msra.mxu0 %v4626
        %4663 = vmatprep.subr.mxu0 0.0
        %4664 = vmatpush2.xpose.msra.mxu0 0.0
        %4665 = vmatprep.subr.mxu0 0.0
        %4666 = vmatpush2.xpose.msra.mxu0 0.0
        %4667 = vmatprep.subr.mxu0 0.0
        %4668 = vmatpush2.xpose.msra.mxu0 0.0
        %4669 = vmatprep.subr.mxu0 0.0
        %4670 = vmatpush2.xpose.msra.mxu0 0.0
        %4671 = vmatprep.subr.mxu0 0.0
        %4672 = vmatpush2.xpose.msra.mxu0 0.0
        %4673 = vmatprep.subr.mxu0 0.0
        %4674 = vmatpush2.xpose.msra.mxu0 0.0
        %4675 = vmatprep.subr.mxu0 0.0
        %4676 = vmatpush2.xpose.msra.mxu0 0.0
        %4677 = vmatprep.subr.mxu0 0.0
        %4678 = vmatpush2.xpose.msra.mxu0 0.0
        %4679 = vmatprep.subr.mxu0 0.0
        %4680 = vmatpush2.xpose.msra.mxu0 0.0
        %4681 = vmatprep.subr.mxu0 0.0
        %4682 = vmatpush2.xpose.msra.mxu0 0.0
        %4683 = vmatprep.subr.mxu0 0.0
        %4684 = vmatpush2.xpose.msra.mxu0 0.0
        %4685 = vmatprep.subr.mxu0 0.0
        %4686 = vmatpush2.xpose.msra.mxu0 0.0
        %4687 = vmatprep.subr.mxu0 0.0
        %4688 = vmatpush2.xpose.msra.mxu0 0.0
        %4689 = vmatprep.subr.mxu0 0.0
        %4690 = vmatpush2.xpose.msra.mxu0 0.0
        %4691 = vmatprep.subr.mxu0 0.0
        %4692 = vmatpush2.xpose.msra.mxu0 0.0
        %4693 = vmatprep.subr.mxu0 0.0
        %4694 = vmatpush2.xpose.msra.mxu0 0.0
        %4695 = vmatprep.mubr.f32.mxu0 0.0
        %4696 = vmatmul.mubr.f32.gmra.mxu0 %v4620
        %v4697 = vpop.f32.mrf.mxu0
        %v4698 = vadd.f32 0.0, %v4697
        %v4699 = vpop.f32.mrf.mxu0
        %4700 = vmatprep.mubr.f32.mxu0 0.0
        %4701 = vmatmul.mubr.f32.gmra.mxu0 %v4623
        %v4702 = vpop.f32.mrf.mxu0
        %v4703 = vadd.f32 0.0, %v4702
        %v4704 = vpop.f32.mrf.mxu0
        %4705 = vdwg.mxu0
        %v4706 = vmul.f32 %v4698, 0.25
        %v4707 = vmul.f32 %v4703, 0.25
        %v4708 = vsel %vm1133, %v4706, -inf
        %4709 = vmax.xlane.f32.xlu0 %v4708
        %v4710 = vpop.xlane.xlu0 %4709
        %v4711 = vsel %vm1133, %v4707, -inf
        %4712 = vmax.xlane.f32.xlu0 %v4711
        %v4713 = vpop.xlane.xlu0 %4712
        %v4714 = vsub.f32 %v4706, %v4710
        %v4715 = vsub.f32 %v4707, %v4713
        %v4716 = vmul.f32 %v4714, 1.442695
        %v4717 = vpow.pop %v4716
        %v4718 = vmul.f32 %v4715, 1.442695
        %v4719 = vpow.pop %v4718
        %v4720 = vsel %vm1133, %v4717, 0.0
        %4721 = vadd.xlane.f32.xlu0 %v4720
        %v4722 = vpop.xlane.xlu0 %4721
        %v4723 = vsel %vm1133, %v4719, 0.0
        %4724 = vadd.xlane.f32.xlu0 %v4723
        %v4725 = vpop.xlane.xlu0 %4724
        %v4726 = vrcp.pop %v4722
        %v4727 = vmul.f32 %v4717, %v4726
        %v4728 = vrcp.pop %v4725
        %v4729 = vmul.f32 %v4719, %v4728
        %v4731 = vsel %vm1133, %v4727, 0
        %v4734 = vsel %vm1133, %v4729, 0
        %4736 = vmatprep.subr.mxu0 0.0
        %4737 = vmatpush1.msra.mxu0 0.0
        %4738 = vmatprep.subr.mxu0 0.0
        %4739 = vmatpush1.msra.mxu0 0.0
        %4740 = vmatprep.subr.mxu0 0.0
        %4741 = vmatpush1.msra.mxu0 0.0
        %4742 = vmatprep.subr.mxu0 0.0
        %4743 = vmatpush1.msra.mxu0 0.0
        %4744 = vmatprep.subr.mxu0 0.0
        %4745 = vmatpush1.msra.mxu0 0.0
        %4746 = vmatprep.subr.mxu0 0.0
        %4747 = vmatpush1.msra.mxu0 0.0
        %4748 = vmatprep.subr.mxu0 0.0
        %4749 = vmatpush1.msra.mxu0 0.0
        %4750 = vmatprep.subr.mxu0 0.0
        %4751 = vmatpush1.msra.mxu0 0.0
        %4752 = vmatprep.subr.mxu0 0.0
        %4753 = vmatpush1.msra.mxu0 0.0
        %4754 = vmatprep.subr.mxu0 0.0
        %4755 = vmatpush1.msra.mxu0 0.0
        %4756 = vmatprep.subr.mxu0 0.0
        %4757 = vmatpush1.msra.mxu0 0.0
        %4758 = vmatprep.subr.mxu0 0.0
        %4759 = vmatpush1.msra.mxu0 0.0
        %4760 = vmatprep.subr.mxu0 0.0
        %4761 = vmatpush1.msra.mxu0 0.0
        %4762 = vmatprep.subr.mxu0 0.0
        %4763 = vmatpush1.msra.mxu0 0.0
        %4764 = vmatprep.subr.mxu0 0.0
        %4765 = vmatpush1.msra.mxu0 %v4616
        %4766 = vmatprep.subr.mxu0 0.0
        %4767 = vmatpush1.msra.mxu0 %v4611
        %4768 = vmatprep.subr.mxu0 0.0
        %4769 = vmatpush2.msra.mxu0 0.0
        %4770 = vmatprep.subr.mxu0 0.0
        %4771 = vmatpush2.msra.mxu0 0.0
        %4772 = vmatprep.subr.mxu0 0.0
        %4773 = vmatpush2.msra.mxu0 0.0
        %4774 = vmatprep.subr.mxu0 0.0
        %4775 = vmatpush2.msra.mxu0 0.0
        %4776 = vmatprep.subr.mxu0 0.0
        %4777 = vmatpush2.msra.mxu0 0.0
        %4778 = vmatprep.subr.mxu0 0.0
        %4779 = vmatpush2.msra.mxu0 0.0
        %4780 = vmatprep.subr.mxu0 0.0
        %4781 = vmatpush2.msra.mxu0 0.0
        %4782 = vmatprep.subr.mxu0 0.0
        %4783 = vmatpush2.msra.mxu0 0.0
        %4784 = vmatprep.subr.mxu0 0.0
        %4785 = vmatpush2.msra.mxu0 0.0
        %4786 = vmatprep.subr.mxu0 0.0
        %4787 = vmatpush2.msra.mxu0 0.0
        %4788 = vmatprep.subr.mxu0 0.0
        %4789 = vmatpush2.msra.mxu0 0.0
        %4790 = vmatprep.subr.mxu0 0.0
        %4791 = vmatpush2.msra.mxu0 0.0
        %4792 = vmatprep.subr.mxu0 0.0
        %4793 = vmatpush2.msra.mxu0 0.0
        %4794 = vmatprep.subr.mxu0 0.0
        %4795 = vmatpush2.msra.mxu0 0.0
        %4796 = vmatprep.subr.mxu0 0.0
        %4797 = vmatpush2.msra.mxu0 0.0
        %4798 = vmatprep.subr.mxu0 0.0
        %4799 = vmatpush2.msra.mxu0 0.0
        %4800 = vmatprep.mubr.f32.mxu0 0.0
        %4801 = vmatmul.mubr.f32.gmra.mxu0 %v4731
        %v4802 = vpop.f32.mrf.mxu0
        %v4803 = vadd.f32 0.0, %v4802
        %v4804 = vpop.f32.mrf.mxu0
        %4805 = vmatprep.mubr.f32.mxu0 0.0
        %4806 = vmatmul.mubr.f32.gmra.mxu0 %v4734
        %v4807 = vpop.f32.mrf.mxu0
        %v4808 = vadd.f32 0.0, %v4807
        %v4809 = vpop.f32.mrf.mxu0
        %4810 = vdwg.mxu0
        %s4811 = scalar_lea.vmem %s9, 96
        %v4812 = vld [vmem:[%s4811] sm:$0xff]
        %v4813 = vld [vmem:[%s4811 + $0x8] sm:$0xff]
        %v4815 = vsel %vm1133, %v4803, 0
        %v4818 = vsel %vm1133, %v4808, 0
        %4820 = vmatprep.subr.mxu0 0.0
        %4821 = vmatpush1.msra.mxu0 0.0
        %4822 = vmatprep.subr.mxu0 0.0
        %4823 = vmatpush1.msra.mxu0 0.0
        %4824 = vmatprep.subr.mxu0 0.0
        %4825 = vmatpush1.msra.mxu0 0.0
        %4826 = vmatprep.subr.mxu0 0.0
        %4827 = vmatpush1.msra.mxu0 0.0
        %4828 = vmatprep.subr.mxu0 0.0
        %4829 = vmatpush1.msra.mxu0 0.0
        %4830 = vmatprep.subr.mxu0 0.0
        %4831 = vmatpush1.msra.mxu0 0.0
        %4832 = vmatprep.subr.mxu0 0.0
        %4833 = vmatpush1.msra.mxu0 0.0
        %4834 = vmatprep.subr.mxu0 0.0
        %4835 = vmatpush1.msra.mxu0 0.0
        %4836 = vmatprep.subr.mxu0 0.0
        %4837 = vmatpush1.msra.mxu0 0.0
        %4838 = vmatprep.subr.mxu0 0.0
        %4839 = vmatpush1.msra.mxu0 0.0
        %4840 = vmatprep.subr.mxu0 0.0
        %4841 = vmatpush1.msra.mxu0 0.0
        %4842 = vmatprep.subr.mxu0 0.0
        %4843 = vmatpush1.msra.mxu0 0.0
        %4844 = vmatprep.subr.mxu0 0.0
        %4845 = vmatpush1.msra.mxu0 0.0
        %4846 = vmatprep.subr.mxu0 0.0
        %4847 = vmatpush1.msra.mxu0 0.0
        %4848 = vmatprep.subr.mxu0 0.0
        %4849 = vmatpush1.msra.mxu0 %v4813
        %4850 = vmatprep.subr.mxu0 0.0
        %4851 = vmatpush1.msra.mxu0 %v4812
        %4852 = vmatprep.subr.mxu0 0.0
        %4853 = vmatpush2.msra.mxu0 0.0
        %4854 = vmatprep.subr.mxu0 0.0
        %4855 = vmatpush2.msra.mxu0 0.0
        %4856 = vmatprep.subr.mxu0 0.0
        %4857 = vmatpush2.msra.mxu0 0.0
        %4858 = vmatprep.subr.mxu0 0.0
        %4859 = vmatpush2.msra.mxu0 0.0
        %4860 = vmatprep.subr.mxu0 0.0
        %4861 = vmatpush2.msra.mxu0 0.0
        %4862 = vmatprep.subr.mxu0 0.0
        %4863 = vmatpush2.msra.mxu0 0.0
        %4864 = vmatprep.subr.mxu0 0.0
        %4865 = vmatpush2.msra.mxu0 0.0
        %4866 = vmatprep.subr.mxu0 0.0
        %4867 = vmatpush2.msra.mxu0 0.0
        %4868 = vmatprep.subr.mxu0 0.0
        %4869 = vmatpush2.msra.mxu0 0.0
        %4870 = vmatprep.subr.mxu0 0.0
        %4871 = vmatpush2.msra.mxu0 0.0
        %4872 = vmatprep.subr.mxu0 0.0
        %4873 = vmatpush2.msra.mxu0 0.0
        %4874 = vmatprep.subr.mxu0 0.0
        %4875 = vmatpush2.msra.mxu0 0.0
        %4876 = vmatprep.subr.mxu0 0.0
        %4877 = vmatpush2.msra.mxu0 0.0
        %4878 = vmatprep.subr.mxu0 0.0
        %4879 = vmatpush2.msra.mxu0 0.0
        %4880 = vmatprep.subr.mxu0 0.0
        %4881 = vmatpush2.msra.mxu0 0.0
        %4882 = vmatprep.subr.mxu0 0.0
        %4883 = vmatpush2.msra.mxu0 0.0
        %4884 = vmatprep.mubr.f32.mxu0 0.0
        %4885 = vmatmul.mubr.f32.gmra.mxu0 %v4815
        %v4886 = vpop.f32.mrf.mxu0
        %v4887 = vadd.f32 0.0, %v4886
        %v4888 = vpop.f32.mrf.mxu0
        %4889 = vmatprep.mubr.f32.mxu0 0.0
        %4890 = vmatmul.mubr.f32.gmra.mxu0 %v4818
        %v4891 = vpop.f32.mrf.mxu0
        %v4892 = vadd.f32 0.0, %v4891
        %v4893 = vpop.f32.mrf.mxu0
        %4894 = vdwg.mxu0
        %v4895 = vadd.f32 %v4359, %v4887
        %v4896 = vadd.f32 %v4364, %v4892
        %s4897 = scalar_lea.vmem %s6, 448
        %v4898 = vld [vmem:[%s4897] sm:$0xff]
        %v4899 = vld [vmem:[%s4897 + $0x8] sm:$0xff]
        %v4900 = vld [vmem:[%s4897 + $0x10] sm:$0xff]
        %v4901 = vld [vmem:[%s4897 + $0x18] sm:$0xff]
        %v4902 = vld [vmem:[%s4897 + $0x20] sm:$0xff]
        %v4903 = vld [vmem:[%s4897 + $0x28] sm:$0xff]
        %v4904 = vld [vmem:[%s4897 + $0x30] sm:$0xff]
        %v4905 = vld [vmem:[%s4897 + $0x38] sm:$0xff]
        %4906 = vmatprep.subr.mxu0 0.0
        %4907 = vmatpush1.msra.mxu0 0.0
        %4908 = vmatprep.subr.mxu0 0.0
        %4909 = vmatpush1.msra.mxu0 0.0
        %4910 = vmatprep.subr.mxu0 0.0
        %4911 = vmatpush1.msra.mxu0 0.0
        %4912 = vmatprep.subr.mxu0 0.0
        %4913 = vmatpush1.msra.mxu0 0.0
        %4914 = vmatprep.subr.mxu0 0.0
        %4915 = vmatpush1.msra.mxu0 0.0
        %4916 = vmatprep.subr.mxu0 0.0
        %4917 = vmatpush1.msra.mxu0 0.0
        %4918 = vmatprep.subr.mxu0 0.0
        %4919 = vmatpush1.msra.mxu0 0.0
        %4920 = vmatprep.subr.mxu0 0.0
        %4921 = vmatpush1.msra.mxu0 0.0
        %4922 = vmatprep.subr.mxu0 0.0
        %4923 = vmatpush1.msra.mxu0 %v4905
        %4924 = vmatprep.subr.mxu0 0.0
        %4925 = vmatpush1.msra.mxu0 %v4904
        %4926 = vmatprep.subr.mxu0 0.0
        %4927 = vmatpush1.msra.mxu0 %v4903
        %4928 = vmatprep.subr.mxu0 0.0
        %4929 = vmatpush1.msra.mxu0 %v4902
        %4930 = vmatprep.subr.mxu0 0.0
        %4931 = vmatpush1.msra.mxu0 %v4901
        %4932 = vmatprep.subr.mxu0 0.0
        %4933 = vmatpush1.msra.mxu0 %v4900
        %4934 = vmatprep.subr.mxu0 0.0
        %4935 = vmatpush1.msra.mxu0 %v4899
        %4936 = vmatprep.subr.mxu0 0.0
        %4937 = vmatpush1.msra.mxu0 %v4898
        %4938 = vmatprep.subr.mxu0 0.0
        %4939 = vmatpush2.msra.mxu0 0.0
        %4940 = vmatprep.subr.mxu0 0.0
        %4941 = vmatpush2.msra.mxu0 0.0
        %4942 = vmatprep.subr.mxu0 0.0
        %4943 = vmatpush2.msra.mxu0 0.0
        %4944 = vmatprep.subr.mxu0 0.0
        %4945 = vmatpush2.msra.mxu0 0.0
        %4946 = vmatprep.subr.mxu0 0.0
        %4947 = vmatpush2.msra.mxu0 0.0
        %4948 = vmatprep.subr.mxu0 0.0
        %4949 = vmatpush2.msra.mxu0 0.0
        %4950 = vmatprep.subr.mxu0 0.0
        %4951 = vmatpush2.msra.mxu0 0.0
        %4952 = vmatprep.subr.mxu0 0.0
        %4953 = vmatpush2.msra.mxu0 0.0
        %4954 = vmatprep.subr.mxu0 0.0
        %4955 = vmatpush2.msra.mxu0 0.0
        %4956 = vmatprep.subr.mxu0 0.0
        %4957 = vmatpush2.msra.mxu0 0.0
        %4958 = vmatprep.subr.mxu0 0.0
        %4959 = vmatpush2.msra.mxu0 0.0
        %4960 = vmatprep.subr.mxu0 0.0
        %4961 = vmatpush2.msra.mxu0 0.0
        %4962 = vmatprep.subr.mxu0 0.0
        %4963 = vmatpush2.msra.mxu0 0.0
        %4964 = vmatprep.subr.mxu0 0.0
        %4965 = vmatpush2.msra.mxu0 0.0
        %4966 = vmatprep.subr.mxu0 0.0
        %4967 = vmatpush2.msra.mxu0 0.0
        %4968 = vmatprep.subr.mxu0 0.0
        %4969 = vmatpush2.msra.mxu0 0.0
        %4970 = vmatprep.mubr.f32.mxu0 0.0
        %4971 = vmatmul.mubr.f32.gmra.mxu0 %v3315
        %v4972 = vpop.f32.mrf.mxu0
        %v4973 = vadd.f32 0.0, %v4972
        %v4974 = vpop.f32.mrf.mxu0
        %4975 = vmatprep.mubr.f32.mxu0 0.0
        %4976 = vmatmul.mubr.f32.gmra.mxu0 %v3318
        %v4977 = vpop.f32.mrf.mxu0
        %v4978 = vadd.f32 0.0, %v4977
        %v4979 = vpop.f32.mrf.mxu0
        %4980 = vdwg.mxu0
        %s4981 = scalar_lea.vmem %s7, 448
        %v4982 = vld [vmem:[%s4981] sm:$0xff]
        %v4983 = vld [vmem:[%s4981 + $0x8] sm:$0xff]
        %v4984 = vld [vmem:[%s4981 + $0x10] sm:$0xff]
        %v4985 = vld [vmem:[%s4981 + $0x18] sm:$0xff]
        %v4986 = vld [vmem:[%s4981 + $0x20] sm:$0xff]
        %v4987 = vld [vmem:[%s4981 + $0x28] sm:$0xff]
        %v4988 = vld [vmem:[%s4981 + $0x30] sm:$0xff]
        %v4989 = vld [vmem:[%s4981 + $0x38] sm:$0xff]
        %4990 = vmatprep.subr.mxu0 0.0
        %4991 = vmatpush1.msra.mxu0 0.0
        %4992 = vmatprep.subr.mxu0 0.0
        %4993 = vmatpush1.msra.mxu0 0.0
        %4994 = vmatprep.subr.mxu0 0.0
        %4995 = vmatpush1.msra.mxu0 0.0
        %4996 = vmatprep.subr.mxu0 0.0
        %4997 = vmatpush1.msra.mxu0 0.0
        %4998 = vmatprep.subr.mxu0 0.0
        %4999 = vmatpush1.msra.mxu0 0.0
        %5000 = vmatprep.subr.mxu0 0.0
        %5001 = vmatpush1.msra.mxu0 0.0
        %5002 = vmatprep.subr.mxu0 0.0
        %5003 = vmatpush1.msra.mxu0 0.0
        %5004 = vmatprep.subr.mxu0 0.0
        %5005 = vmatpush1.msra.mxu0 0.0
        %5006 = vmatprep.subr.mxu0 0.0
        %5007 = vmatpush1.msra.mxu0 %v4989
        %5008 = vmatprep.subr.mxu0 0.0
        %5009 = vmatpush1.msra.mxu0 %v4988
        %5010 = vmatprep.subr.mxu0 0.0
        %5011 = vmatpush1.msra.mxu0 %v4987
        %5012 = vmatprep.subr.mxu0 0.0
        %5013 = vmatpush1.msra.mxu0 %v4986
        %5014 = vmatprep.subr.mxu0 0.0
        %5015 = vmatpush1.msra.mxu0 %v4985
        %5016 = vmatprep.subr.mxu0 0.0
        %5017 = vmatpush1.msra.mxu0 %v4984
        %5018 = vmatprep.subr.mxu0 0.0
        %5019 = vmatpush1.msra.mxu0 %v4983
        %5020 = vmatprep.subr.mxu0 0.0
        %5021 = vmatpush1.msra.mxu0 %v4982
        %5022 = vmatprep.subr.mxu0 0.0
        %5023 = vmatpush2.msra.mxu0 0.0
        %5024 = vmatprep.subr.mxu0 0.0
        %5025 = vmatpush2.msra.mxu0 0.0
        %5026 = vmatprep.subr.mxu0 0.0
        %5027 = vmatpush2.msra.mxu0 0.0
        %5028 = vmatprep.subr.mxu0 0.0
        %5029 = vmatpush2.msra.mxu0 0.0
        %5030 = vmatprep.subr.mxu0 0.0
        %5031 = vmatpush2.msra.mxu0 0.0
        %5032 = vmatprep.subr.mxu0 0.0
        %5033 = vmatpush2.msra.mxu0 0.0
        %5034 = vmatprep.subr.mxu0 0.0
        %5035 = vmatpush2.msra.mxu0 0.0
        %5036 = vmatprep.subr.mxu0 0.0
        %5037 = vmatpush2.msra.mxu0 0.0
        %5038 = vmatprep.subr.mxu0 0.0
        %5039 = vmatpush2.msra.mxu0 0.0
        %5040 = vmatprep.subr.mxu0 0.0
        %5041 = vmatpush2.msra.mxu0 0.0
        %5042 = vmatprep.subr.mxu0 0.0
        %5043 = vmatpush2.msra.mxu0 0.0
        %5044 = vmatprep.subr.mxu0 0.0
        %5045 = vmatpush2.msra.mxu0 0.0
        %5046 = vmatprep.subr.mxu0 0.0
        %5047 = vmatpush2.msra.mxu0 0.0
        %5048 = vmatprep.subr.mxu0 0.0
        %5049 = vmatpush2.msra.mxu0 0.0
        %5050 = vmatprep.subr.mxu0 0.0
        %5051 = vmatpush2.msra.mxu0 0.0
        %5052 = vmatprep.subr.mxu0 0.0
        %5053 = vmatpush2.msra.mxu0 0.0
        %5054 = vmatprep.mubr.f32.mxu0 0.0
        %5055 = vmatmul.mubr.f32.gmra.mxu0 %v3315
        %v5056 = vpop.f32.mrf.mxu0
        %v5057 = vadd.f32 0.0, %v5056
        %v5058 = vpop.f32.mrf.mxu0
        %5059 = vmatprep.mubr.f32.mxu0 0.0
        %5060 = vmatmul.mubr.f32.gmra.mxu0 %v3318
        %v5061 = vpop.f32.mrf.mxu0
        %v5062 = vadd.f32 0.0, %v5061
        %v5063 = vpop.f32.mrf.mxu0
        %5064 = vdwg.mxu0
        %s5065 = scalar_lea.vmem %s8, 448
        %v5066 = vld [vmem:[%s5065] sm:$0xff]
        %v5067 = vld [vmem:[%s5065 + $0x8] sm:$0xff]
        %v5068 = vld [vmem:[%s5065 + $0x10] sm:$0xff]
        %v5069 = vld [vmem:[%s5065 + $0x18] sm:$0xff]
        %v5070 = vld [vmem:[%s5065 + $0x20] sm:$0xff]
        %v5071 = vld [vmem:[%s5065 + $0x28] sm:$0xff]
        %v5072 = vld [vmem:[%s5065 + $0x30] sm:$0xff]
        %v5073 = vld [vmem:[%s5065 + $0x38] sm:$0xff]
        %5074 = vmatprep.subr.mxu0 0.0
        %5075 = vmatpush1.msra.mxu0 0.0
        %5076 = vmatprep.subr.mxu0 0.0
        %5077 = vmatpush1.msra.mxu0 0.0
        %5078 = vmatprep.subr.mxu0 0.0
        %5079 = vmatpush1.msra.mxu0 0.0
        %5080 = vmatprep.subr.mxu0 0.0
        %5081 = vmatpush1.msra.mxu0 0.0
        %5082 = vmatprep.subr.mxu0 0.0
        %5083 = vmatpush1.msra.mxu0 0.0
        %5084 = vmatprep.subr.mxu0 0.0
        %5085 = vmatpush1.msra.mxu0 0.0
        %5086 = vmatprep.subr.mxu0 0.0
        %5087 = vmatpush1.msra.mxu0 0.0
        %5088 = vmatprep.subr.mxu0 0.0
        %5089 = vmatpush1.msra.mxu0 0.0
        %5090 = vmatprep.subr.mxu0 0.0
        %5091 = vmatpush1.msra.mxu0 %v5073
        %5092 = vmatprep.subr.mxu0 0.0
        %5093 = vmatpush1.msra.mxu0 %v5072
        %5094 = vmatprep.subr.mxu0 0.0
        %5095 = vmatpush1.msra.mxu0 %v5071
        %5096 = vmatprep.subr.mxu0 0.0
        %5097 = vmatpush1.msra.mxu0 %v5070
        %5098 = vmatprep.subr.mxu0 0.0
        %5099 = vmatpush1.msra.mxu0 %v5069
        %5100 = vmatprep.subr.mxu0 0.0
        %5101 = vmatpush1.msra.mxu0 %v5068
        %5102 = vmatprep.subr.mxu0 0.0
        %5103 = vmatpush1.msra.mxu0 %v5067
        %5104 = vmatprep.subr.mxu0 0.0
        %5105 = vmatpush1.msra.mxu0 %v5066
        %5106 = vmatprep.subr.mxu0 0.0
        %5107 = vmatpush2.msra.mxu0 0.0
        %5108 = vmatprep.subr.mxu0 0.0
        %5109 = vmatpush2.msra.mxu0 0.0
        %5110 = vmatprep.subr.mxu0 0.0
        %5111 = vmatpush2.msra.mxu0 0.0
        %5112 = vmatprep.subr.mxu0 0.0
        %5113 = vmatpush2.msra.mxu0 0.0
        %5114 = vmatprep.subr.mxu0 0.0
        %5115 = vmatpush2.msra.mxu0 0.0
        %5116 = vmatprep.subr.mxu0 0.0
        %5117 = vmatpush2.msra.mxu0 0.0
        %5118 = vmatprep.subr.mxu0 0.0
        %5119 = vmatpush2.msra.mxu0 0.0
        %5120 = vmatprep.subr.mxu0 0.0
        %5121 = vmatpush2.msra.mxu0 0.0
        %5122 = vmatprep.subr.mxu0 0.0
        %5123 = vmatpush2.msra.mxu0 0.0
        %5124 = vmatprep.subr.mxu0 0.0
        %5125 = vmatpush2.msra.mxu0 0.0
        %5126 = vmatprep.subr.mxu0 0.0
        %5127 = vmatpush2.msra.mxu0 0.0
        %5128 = vmatprep.subr.mxu0 0.0
        %5129 = vmatpush2.msra.mxu0 0.0
        %5130 = vmatprep.subr.mxu0 0.0
        %5131 = vmatpush2.msra.mxu0 0.0
        %5132 = vmatprep.subr.mxu0 0.0
        %5133 = vmatpush2.msra.mxu0 0.0
        %5134 = vmatprep.subr.mxu0 0.0
        %5135 = vmatpush2.msra.mxu0 0.0
        %5136 = vmatprep.subr.mxu0 0.0
        %5137 = vmatpush2.msra.mxu0 0.0
        %5138 = vmatprep.mubr.f32.mxu0 0.0
        %5139 = vmatmul.mubr.f32.gmra.mxu0 %v3315
        %v5140 = vpop.f32.mrf.mxu0
        %v5141 = vadd.f32 0.0, %v5140
        %v5142 = vpop.f32.mrf.mxu0
        %5143 = vmatprep.mubr.f32.mxu0 0.0
        %5144 = vmatmul.mubr.f32.gmra.mxu0 %v3318
        %v5145 = vpop.f32.mrf.mxu0
        %v5146 = vadd.f32 0.0, %v5145
        %v5147 = vpop.f32.mrf.mxu0
        %5148 = vdwg.mxu0
        %v5150 = vsel %vm1133, %v4973, 0
        %v5153 = vsel %vm1133, %v4978, 0
        %v5156 = vsel %vm1133, %v5057, 0
        %v5159 = vsel %vm1133, %v5062, 0
        %5161 = vmatprep.subr.mxu0 0.0
        %5162 = vmatpush1.xpose.msra.mxu0 0.0
        %5163 = vmatprep.subr.mxu0 0.0
        %5164 = vmatpush1.xpose.msra.mxu0 0.0
        %5165 = vmatprep.subr.mxu0 0.0
        %5166 = vmatpush1.xpose.msra.mxu0 0.0
        %5167 = vmatprep.subr.mxu0 0.0
        %5168 = vmatpush1.xpose.msra.mxu0 0.0
        %5169 = vmatprep.subr.mxu0 0.0
        %5170 = vmatpush1.xpose.msra.mxu0 0.0
        %5171 = vmatprep.subr.mxu0 0.0
        %5172 = vmatpush1.xpose.msra.mxu0 0.0
        %5173 = vmatprep.subr.mxu0 0.0
        %5174 = vmatpush1.xpose.msra.mxu0 0.0
        %5175 = vmatprep.subr.mxu0 0.0
        %5176 = vmatpush1.xpose.msra.mxu0 0.0
        %5177 = vmatprep.subr.mxu0 0.0
        %5178 = vmatpush1.xpose.msra.mxu0 0.0
        %5179 = vmatprep.subr.mxu0 0.0
        %5180 = vmatpush1.xpose.msra.mxu0 0.0
        %5181 = vmatprep.subr.mxu0 0.0
        %5182 = vmatpush1.xpose.msra.mxu0 0.0
        %5183 = vmatprep.subr.mxu0 0.0
        %5184 = vmatpush1.xpose.msra.mxu0 0.0
        %5185 = vmatprep.subr.mxu0 0.0
        %5186 = vmatpush1.xpose.msra.mxu0 0.0
        %5187 = vmatprep.subr.mxu0 0.0
        %5188 = vmatpush1.xpose.msra.mxu0 0.0
        %5189 = vmatprep.subr.mxu0 0.0
        %5190 = vmatpush1.xpose.msra.mxu0 %v5159
        %5191 = vmatprep.subr.mxu0 0.0
        %5192 = vmatpush1.xpose.msra.mxu0 %v5156
        %5193 = vmatprep.subr.mxu0 0.0
        %5194 = vmatpush2.xpose.msra.mxu0 0.0
        %5195 = vmatprep.subr.mxu0 0.0
        %5196 = vmatpush2.xpose.msra.mxu0 0.0
        %5197 = vmatprep.subr.mxu0 0.0
        %5198 = vmatpush2.xpose.msra.mxu0 0.0
        %5199 = vmatprep.subr.mxu0 0.0
        %5200 = vmatpush2.xpose.msra.mxu0 0.0
        %5201 = vmatprep.subr.mxu0 0.0
        %5202 = vmatpush2.xpose.msra.mxu0 0.0
        %5203 = vmatprep.subr.mxu0 0.0
        %5204 = vmatpush2.xpose.msra.mxu0 0.0
        %5205 = vmatprep.subr.mxu0 0.0
        %5206 = vmatpush2.xpose.msra.mxu0 0.0
        %5207 = vmatprep.subr.mxu0 0.0
        %5208 = vmatpush2.xpose.msra.mxu0 0.0
        %5209 = vmatprep.subr.mxu0 0.0
        %5210 = vmatpush2.xpose.msra.mxu0 0.0
        %5211 = vmatprep.subr.mxu0 0.0
        %5212 = vmatpush2.xpose.msra.mxu0 0.0
        %5213 = vmatprep.subr.mxu0 0.0
        %5214 = vmatpush2.xpose.msra.mxu0 0.0
        %5215 = vmatprep.subr.mxu0 0.0
        %5216 = vmatpush2.xpose.msra.mxu0 0.0
        %5217 = vmatprep.subr.mxu0 0.0
        %5218 = vmatpush2.xpose.msra.mxu0 0.0
        %5219 = vmatprep.subr.mxu0 0.0
        %5220 = vmatpush2.xpose.msra.mxu0 0.0
        %5221 = vmatprep.subr.mxu0 0.0
        %5222 = vmatpush2.xpose.msra.mxu0 0.0
        %5223 = vmatprep.subr.mxu0 0.0
        %5224 = vmatpush2.xpose.msra.mxu0 0.0
        %5225 = vmatprep.mubr.f32.mxu0 0.0
        %5226 = vmatmul.mubr.f32.gmra.mxu0 %v5150
        %v5227 = vpop.f32.mrf.mxu0
        %v5228 = vadd.f32 0.0, %v5227
        %v5229 = vpop.f32.mrf.mxu0
        %5230 = vmatprep.mubr.f32.mxu0 0.0
        %5231 = vmatmul.mubr.f32.gmra.mxu0 %v5153
        %v5232 = vpop.f32.mrf.mxu0
        %v5233 = vadd.f32 0.0, %v5232
        %v5234 = vpop.f32.mrf.mxu0
        %5235 = vdwg.mxu0
        %v5236 = vmul.f32 %v5228, 0.25
        %v5237 = vmul.f32 %v5233, 0.25
        %v5238 = vsel %vm1133, %v5236, -inf
        %5239 = vmax.xlane.f32.xlu0 %v5238
        %v5240 = vpop.xlane.xlu0 %5239
        %v5241 = vsel %vm1133, %v5237, -inf
        %5242 = vmax.xlane.f32.xlu0 %v5241
        %v5243 = vpop.xlane.xlu0 %5242
        %v5244 = vsub.f32 %v5236, %v5240
        %v5245 = vsub.f32 %v5237, %v5243
        %v5246 = vmul.f32 %v5244, 1.442695
        %v5247 = vpow.pop %v5246
        %v5248 = vmul.f32 %v5245, 1.442695
        %v5249 = vpow.pop %v5248
        %v5250 = vsel %vm1133, %v5247, 0.0
        %5251 = vadd.xlane.f32.xlu0 %v5250
        %v5252 = vpop.xlane.xlu0 %5251
        %v5253 = vsel %vm1133, %v5249, 0.0
        %5254 = vadd.xlane.f32.xlu0 %v5253
        %v5255 = vpop.xlane.xlu0 %5254
        %v5256 = vrcp.pop %v5252
        %v5257 = vmul.f32 %v5247, %v5256
        %v5258 = vrcp.pop %v5255
        %v5259 = vmul.f32 %v5249, %v5258
        %v5261 = vsel %vm1133, %v5257, 0
        %v5264 = vsel %vm1133, %v5259, 0
        %5266 = vmatprep.subr.mxu0 0.0
        %5267 = vmatpush1.msra.mxu0 0.0
        %5268 = vmatprep.subr.mxu0 0.0
        %5269 = vmatpush1.msra.mxu0 0.0
        %5270 = vmatprep.subr.mxu0 0.0
        %5271 = vmatpush1.msra.mxu0 0.0
        %5272 = vmatprep.subr.mxu0 0.0
        %5273 = vmatpush1.msra.mxu0 0.0
        %5274 = vmatprep.subr.mxu0 0.0
        %5275 = vmatpush1.msra.mxu0 0.0
        %5276 = vmatprep.subr.mxu0 0.0
        %5277 = vmatpush1.msra.mxu0 0.0
        %5278 = vmatprep.subr.mxu0 0.0
        %5279 = vmatpush1.msra.mxu0 0.0
        %5280 = vmatprep.subr.mxu0 0.0
        %5281 = vmatpush1.msra.mxu0 0.0
        %5282 = vmatprep.subr.mxu0 0.0
        %5283 = vmatpush1.msra.mxu0 0.0
        %5284 = vmatprep.subr.mxu0 0.0
        %5285 = vmatpush1.msra.mxu0 0.0
        %5286 = vmatprep.subr.mxu0 0.0
        %5287 = vmatpush1.msra.mxu0 0.0
        %5288 = vmatprep.subr.mxu0 0.0
        %5289 = vmatpush1.msra.mxu0 0.0
        %5290 = vmatprep.subr.mxu0 0.0
        %5291 = vmatpush1.msra.mxu0 0.0
        %5292 = vmatprep.subr.mxu0 0.0
        %5293 = vmatpush1.msra.mxu0 0.0
        %5294 = vmatprep.subr.mxu0 0.0
        %5295 = vmatpush1.msra.mxu0 %v5146
        %5296 = vmatprep.subr.mxu0 0.0
        %5297 = vmatpush1.msra.mxu0 %v5141
        %5298 = vmatprep.subr.mxu0 0.0
        %5299 = vmatpush2.msra.mxu0 0.0
        %5300 = vmatprep.subr.mxu0 0.0
        %5301 = vmatpush2.msra.mxu0 0.0
        %5302 = vmatprep.subr.mxu0 0.0
        %5303 = vmatpush2.msra.mxu0 0.0
        %5304 = vmatprep.subr.mxu0 0.0
        %5305 = vmatpush2.msra.mxu0 0.0
        %5306 = vmatprep.subr.mxu0 0.0
        %5307 = vmatpush2.msra.mxu0 0.0
        %5308 = vmatprep.subr.mxu0 0.0
        %5309 = vmatpush2.msra.mxu0 0.0
        %5310 = vmatprep.subr.mxu0 0.0
        %5311 = vmatpush2.msra.mxu0 0.0
        %5312 = vmatprep.subr.mxu0 0.0
        %5313 = vmatpush2.msra.mxu0 0.0
        %5314 = vmatprep.subr.mxu0 0.0
        %5315 = vmatpush2.msra.mxu0 0.0
        %5316 = vmatprep.subr.mxu0 0.0
        %5317 = vmatpush2.msra.mxu0 0.0
        %5318 = vmatprep.subr.mxu0 0.0
        %5319 = vmatpush2.msra.mxu0 0.0
        %5320 = vmatprep.subr.mxu0 0.0
        %5321 = vmatpush2.msra.mxu0 0.0
        %5322 = vmatprep.subr.mxu0 0.0
        %5323 = vmatpush2.msra.mxu0 0.0
        %5324 = vmatprep.subr.mxu0 0.0
        %5325 = vmatpush2.msra.mxu0 0.0
        %5326 = vmatprep.subr.mxu0 0.0
        %5327 = vmatpush2.msra.mxu0 0.0
        %5328 = vmatprep.subr.mxu0 0.0
        %5329 = vmatpush2.msra.mxu0 0.0
        %5330 = vmatprep.mubr.f32.mxu0 0.0
        %5331 = vmatmul.mubr.f32.gmra.mxu0 %v5261
        %v5332 = vpop.f32.mrf.mxu0
        %v5333 = vadd.f32 0.0, %v5332
        %v5334 = vpop.f32.mrf.mxu0
        %5335 = vmatprep.mubr.f32.mxu0 0.0
        %5336 = vmatmul.mubr.f32.gmra.mxu0 %v5264
        %v5337 = vpop.f32.mrf.mxu0
        %v5338 = vadd.f32 0.0, %v5337
        %v5339 = vpop.f32.mrf.mxu0
        %5340 = vdwg.mxu0
        %s5341 = scalar_lea.vmem %s9, 112
        %v5342 = vld [vmem:[%s5341] sm:$0xff]
        %v5343 = vld [vmem:[%s5341 + $0x8] sm:$0xff]
        %v5345 = vsel %vm1133, %v5333, 0
        %v5348 = vsel %vm1133, %v5338, 0
        %5350 = vmatprep.subr.mxu0 0.0
        %5351 = vmatpush1.msra.mxu0 0.0
        %5352 = vmatprep.subr.mxu0 0.0
        %5353 = vmatpush1.msra.mxu0 0.0
        %5354 = vmatprep.subr.mxu0 0.0
        %5355 = vmatpush1.msra.mxu0 0.0
        %5356 = vmatprep.subr.mxu0 0.0
        %5357 = vmatpush1.msra.mxu0 0.0
        %5358 = vmatprep.subr.mxu0 0.0
        %5359 = vmatpush1.msra.mxu0 0.0
        %5360 = vmatprep.subr.mxu0 0.0
        %5361 = vmatpush1.msra.mxu0 0.0
        %5362 = vmatprep.subr.mxu0 0.0
        %5363 = vmatpush1.msra.mxu0 0.0
        %5364 = vmatprep.subr.mxu0 0.0
        %5365 = vmatpush1.msra.mxu0 0.0
        %5366 = vmatprep.subr.mxu0 0.0
        %5367 = vmatpush1.msra.mxu0 0.0
        %5368 = vmatprep.subr.mxu0 0.0
        %5369 = vmatpush1.msra.mxu0 0.0
        %5370 = vmatprep.subr.mxu0 0.0
        %5371 = vmatpush1.msra.mxu0 0.0
        %5372 = vmatprep.subr.mxu0 0.0
        %5373 = vmatpush1.msra.mxu0 0.0
        %5374 = vmatprep.subr.mxu0 0.0
        %5375 = vmatpush1.msra.mxu0 0.0
        %5376 = vmatprep.subr.mxu0 0.0
        %5377 = vmatpush1.msra.mxu0 0.0
        %5378 = vmatprep.subr.mxu0 0.0
        %5379 = vmatpush1.msra.mxu0 %v5343
        %5380 = vmatprep.subr.mxu0 0.0
        %5381 = vmatpush1.msra.mxu0 %v5342
        %5382 = vmatprep.subr.mxu0 0.0
        %5383 = vmatpush2.msra.mxu0 0.0
        %5384 = vmatprep.subr.mxu0 0.0
        %5385 = vmatpush2.msra.mxu0 0.0
        %5386 = vmatprep.subr.mxu0 0.0
        %5387 = vmatpush2.msra.mxu0 0.0
        %5388 = vmatprep.subr.mxu0 0.0
        %5389 = vmatpush2.msra.mxu0 0.0
        %5390 = vmatprep.subr.mxu0 0.0
        %5391 = vmatpush2.msra.mxu0 0.0
        %5392 = vmatprep.subr.mxu0 0.0
        %5393 = vmatpush2.msra.mxu0 0.0
        %5394 = vmatprep.subr.mxu0 0.0
        %5395 = vmatpush2.msra.mxu0 0.0
        %5396 = vmatprep.subr.mxu0 0.0
        %5397 = vmatpush2.msra.mxu0 0.0
        %5398 = vmatprep.subr.mxu0 0.0
        %5399 = vmatpush2.msra.mxu0 0.0
        %5400 = vmatprep.subr.mxu0 0.0
        %5401 = vmatpush2.msra.mxu0 0.0
        %5402 = vmatprep.subr.mxu0 0.0
        %5403 = vmatpush2.msra.mxu0 0.0
        %5404 = vmatprep.subr.mxu0 0.0
        %5405 = vmatpush2.msra.mxu0 0.0
        %5406 = vmatprep.subr.mxu0 0.0
        %5407 = vmatpush2.msra.mxu0 0.0
        %5408 = vmatprep.subr.mxu0 0.0
        %5409 = vmatpush2.msra.mxu0 0.0
        %5410 = vmatprep.subr.mxu0 0.0
        %5411 = vmatpush2.msra.mxu0 0.0
        %5412 = vmatprep.subr.mxu0 0.0
        %5413 = vmatpush2.msra.mxu0 0.0
        %5414 = vmatprep.mubr.f32.mxu0 0.0
        %5415 = vmatmul.mubr.f32.gmra.mxu0 %v5345
        %v5416 = vpop.f32.mrf.mxu0
        %v5417 = vadd.f32 0.0, %v5416
        %v5418 = vpop.f32.mrf.mxu0
        %5419 = vmatprep.mubr.f32.mxu0 0.0
        %5420 = vmatmul.mubr.f32.gmra.mxu0 %v5348
        %v5421 = vpop.f32.mrf.mxu0
        %v5422 = vadd.f32 0.0, %v5421
        %v5423 = vpop.f32.mrf.mxu0
        %5424 = vdwg.mxu0
        %v5425 = vadd.f32 %v4895, %v5417
        %v5426 = vadd.f32 %v4896, %v5422
        %v5427 = vadd.f32 %v3257, %v5425
        %v5428 = vadd.f32 %v3258, %v5426
        %s5429 = scalar_lea.vmem %s10, 1
        %v5430 = vld [vmem:[%s5429] sm:$0x1]
        %s5431 = scalar_lea.vmem %s11, 1
        %v5432 = vld [vmem:[%s5431] sm:$0x1]
        %v5433 = vsel %vm834, %v5427, 0.0
        %5434 = vadd.xlane.f32.xlu0 %v5433
        %v5435 = vpop.xlane.xlu0 %5434
        %v5436 = vsel %vm834, %v5428, 0.0
        %5437 = vadd.xlane.f32.xlu0 %v5436
        %v5438 = vpop.xlane.xlu0 %5437
        %v5439 = vmul.f32 %v5435, %v841
        %v5440 = vmul.f32 %v5438, %v841
        %v5441 = vsub.f32 %v5427, %v5439
        %v5442 = vsub.f32 %v5428, %v5440
        %v5443 = vmul.f32 %v5441, %v5441
        %v5444 = vmul.f32 %v5442, %v5442
        %v5445 = vsel %vm834, %v5443, 0.0
        %5446 = vadd.xlane.f32.xlu0 %v5445
        %v5447 = vpop.xlane.xlu0 %5446
        %v5448 = vsel %vm834, %v5444, 0.0
        %5449 = vadd.xlane.f32.xlu0 %v5448
        %v5450 = vpop.xlane.xlu0 %5449
        %v5451 = vmul.f32 %v5447, %v841
        %v5452 = vmul.f32 %v5450, %v841
        %v5453 = vadd.f32 %v5451, 1e-05
        %v5454 = vadd.f32 %v5452, 1e-05
        %v5455 = vrsqrt.pop %v5453
        %v5456 = vrsqrt.pop %v5454
        %v5457 = vmul.f32 %v5441, %v5455
        %v5458 = vmul.f32 %v5442, %v5456
        %v5460 = vlaneseq
        %v5461 = vshrl.u32 %v5460, 7
        %v5462 = vsub.s32 0, %v5461
        %v5463 = vrot.slane %v5430, %v5462
        %v5465 = vmul.f32 %v5457, %v5463
        %v5466 = vmul.f32 %v5458, %v5463
        %v5468 = vlaneseq
        %v5469 = vshrl.u32 %v5468, 7
        %v5470 = vsub.s32 0, %v5469
        %v5471 = vrot.slane %v5432, %v5470
        %v5473 = vadd.f32 %v5465, %v5471
        %v5474 = vadd.f32 %v5466, %v5471
        %s5475 = scalar_lea.vmem %s12, 64
        %v5476 = vld [vmem:[%s5475] sm:$0xff]
        %v5477 = vld [vmem:[%s5475 + $0x8] sm:$0xff]
        %v5478 = vld [vmem:[%s5475 + $0x10] sm:$0xff]
        %v5479 = vld [vmem:[%s5475 + $0x18] sm:$0xff]
        %v5480 = vld [vmem:[%s5475 + $0x20] sm:$0xff]
        %v5481 = vld [vmem:[%s5475 + $0x28] sm:$0xff]
        %v5482 = vld [vmem:[%s5475 + $0x30] sm:$0xff]
        %v5483 = vld [vmem:[%s5475 + $0x38] sm:$0xff]
        %s5484 = scalar_lea.vmem %s13, 1
        %v5485 = vld [vmem:[%s5484] sm:$0x1]
        %v5487 = vlaneseq
        %v5488 = vshrl.u32 %v5487, 7
        %v5489 = vsub.s32 0, %v5488
        %v5490 = vrot.slane %v5485, %v5489
        %v5493 = vsel %vm834, %v5473, 0
        %v5496 = vsel %vm834, %v5474, 0
        %5498 = vmatprep.subr.mxu0 0.0
        %5499 = vmatpush1.msra.mxu0 0.0
        %5500 = vmatprep.subr.mxu0 0.0
        %5501 = vmatpush1.msra.mxu0 0.0
        %5502 = vmatprep.subr.mxu0 0.0
        %5503 = vmatpush1.msra.mxu0 0.0
        %5504 = vmatprep.subr.mxu0 0.0
        %5505 = vmatpush1.msra.mxu0 0.0
        %5506 = vmatprep.subr.mxu0 0.0
        %5507 = vmatpush1.msra.mxu0 0.0
        %5508 = vmatprep.subr.mxu0 0.0
        %5509 = vmatpush1.msra.mxu0 0.0
        %5510 = vmatprep.subr.mxu0 0.0
        %5511 = vmatpush1.msra.mxu0 0.0
        %5512 = vmatprep.subr.mxu0 0.0
        %5513 = vmatpush1.msra.mxu0 0.0
        %5514 = vmatprep.subr.mxu0 0.0
        %5515 = vmatpush1.msra.mxu0 %v5483
        %5516 = vmatprep.subr.mxu0 0.0
        %5517 = vmatpush1.msra.mxu0 %v5482
        %5518 = vmatprep.subr.mxu0 0.0
        %5519 = vmatpush1.msra.mxu0 %v5481
        %5520 = vmatprep.subr.mxu0 0.0
        %5521 = vmatpush1.msra.mxu0 %v5480
        %5522 = vmatprep.subr.mxu0 0.0
        %5523 = vmatpush1.msra.mxu0 %v5479
        %5524 = vmatprep.subr.mxu0 0.0
        %5525 = vmatpush1.msra.mxu0 %v5478
        %5526 = vmatprep.subr.mxu0 0.0
        %5527 = vmatpush1.msra.mxu0 %v5477
        %5528 = vmatprep.subr.mxu0 0.0
        %5529 = vmatpush1.msra.mxu0 %v5476
        %5530 = vmatprep.subr.mxu0 0.0
        %5531 = vmatpush2.msra.mxu0 0.0
        %5532 = vmatprep.subr.mxu0 0.0
        %5533 = vmatpush2.msra.mxu0 0.0
        %5534 = vmatprep.subr.mxu0 0.0
        %5535 = vmatpush2.msra.mxu0 0.0
        %5536 = vmatprep.subr.mxu0 0.0
        %5537 = vmatpush2.msra.mxu0 0.0
        %5538 = vmatprep.subr.mxu0 0.0
        %5539 = vmatpush2.msra.mxu0 0.0
        %5540 = vmatprep.subr.mxu0 0.0
        %5541 = vmatpush2.msra.mxu0 0.0
        %5542 = vmatprep.subr.mxu0 0.0
        %5543 = vmatpush2.msra.mxu0 0.0
        %5544 = vmatprep.subr.mxu0 0.0
        %5545 = vmatpush2.msra.mxu0 0.0
        %5546 = vmatprep.subr.mxu0 0.0
        %5547 = vmatpush2.msra.mxu0 0.0
        %5548 = vmatprep.subr.mxu0 0.0
        %5549 = vmatpush2.msra.mxu0 0.0
        %5550 = vmatprep.subr.mxu0 0.0
        %5551 = vmatpush2.msra.mxu0 0.0
        %5552 = vmatprep.subr.mxu0 0.0
        %5553 = vmatpush2.msra.mxu0 0.0
        %5554 = vmatprep.subr.mxu0 0.0
        %5555 = vmatpush2.msra.mxu0 0.0
        %5556 = vmatprep.subr.mxu0 0.0
        %5557 = vmatpush2.msra.mxu0 0.0
        %5558 = vmatprep.subr.mxu0 0.0
        %5559 = vmatpush2.msra.mxu0 0.0
        %5560 = vmatprep.subr.mxu0 0.0
        %5561 = vmatpush2.msra.mxu0 0.0
        %5562 = vmatprep.mubr.f32.mxu0 0.0
        %5563 = vmatmul.mubr.f32.gmra.mxu0 %v5493
        %v5564 = vpop.f32.mrf.mxu0
        %v5565 = vadd.f32 %v5490, %v5564
        %v5566 = vpop.f32.mrf.mxu0
        %5567 = vmatprep.mubr.f32.mxu0 0.0
        %5568 = vmatmul.mubr.f32.gmra.mxu0 %v5496
        %v5569 = vpop.f32.mrf.mxu0
        %v5570 = vadd.f32 %v5490, %v5569
        %v5571 = vpop.f32.mrf.mxu0
        %5572 = vdwg.mxu0
        %v5573 = vmul.f32 %v5565, 0.5
        %v5574 = vmul.f32 %v5570, 0.5
        %v5575 = vmul.f32 %v5565, 0.044715
        %v5576 = vmul.f32 %v5570, 0.044715
        %v5577 = vmul.f32 %v5575, %v5565
        %v5578 = vmul.f32 %v5576, %v5570
        %v5579 = vmul.f32 %v5577, %v5565
        %v5580 = vmul.f32 %v5578, %v5570
        %v5581 = vadd.f32 %v5565, %v5579
        %v5582 = vadd.f32 %v5570, %v5580
        %v5583 = vmul.f32 %v5581, 0.7978846
        %v5584 = vmul.f32 %v5582, 0.7978846
        %v5585 = vtanh.pop %v5583
        %v5586 = vtanh.pop %v5584
        %v5587 = vadd.f32 %v5585, 1.0
        %v5588 = vadd.f32 %v5586, 1.0
        %v5589 = vmul.f32 %v5573, %v5587
        %v5590 = vmul.f32 %v5574, %v5588
        %s5591 = scalar_lea.vmem %s14, 128
        %v5592 = vld [vmem:[%s5591] sm:$0xff]
        %v5593 = vld [vmem:[%s5591 + $0x8] sm:$0xff]
        %v5594 = vld [vmem:[%s5591 + $0x10] sm:$0xff]
        %v5595 = vld [vmem:[%s5591 + $0x18] sm:$0xff]
        %v5596 = vld [vmem:[%s5591 + $0x20] sm:$0xff]
        %v5597 = vld [vmem:[%s5591 + $0x28] sm:$0xff]
        %v5598 = vld [vmem:[%s5591 + $0x30] sm:$0xff]
        %v5599 = vld [vmem:[%s5591 + $0x38] sm:$0xff]
        %v5600 = vld [vmem:[%s5591 + $0x40] sm:$0xff]
        %v5601 = vld [vmem:[%s5591 + $0x48] sm:$0xff]
        %v5602 = vld [vmem:[%s5591 + $0x50] sm:$0xff]
        %v5603 = vld [vmem:[%s5591 + $0x58] sm:$0xff]
        %v5604 = vld [vmem:[%s5591 + $0x60] sm:$0xff]
        %v5605 = vld [vmem:[%s5591 + $0x68] sm:$0xff]
        %v5606 = vld [vmem:[%s5591 + $0x70] sm:$0xff]
        %v5607 = vld [vmem:[%s5591 + $0x78] sm:$0xff]
        %5608 = vmatprep.subr.mxu0 0.0
        %5609 = vmatpush1.msra.mxu0 %v5607
        %5610 = vmatprep.subr.mxu0 0.0
        %5611 = vmatpush1.msra.mxu0 %v5606
        %5612 = vmatprep.subr.mxu0 0.0
        %5613 = vmatpush1.msra.mxu0 %v5605
        %5614 = vmatprep.subr.mxu0 0.0
        %5615 = vmatpush1.msra.mxu0 %v5604
        %5616 = vmatprep.subr.mxu0 0.0
        %5617 = vmatpush1.msra.mxu0 %v5603
        %5618 = vmatprep.subr.mxu0 0.0
        %5619 = vmatpush1.msra.mxu0 %v5602
        %5620 = vmatprep.subr.mxu0 0.0
        %5621 = vmatpush1.msra.mxu0 %v5601
        %5622 = vmatprep.subr.mxu0 0.0
        %5623 = vmatpush1.msra.mxu0 %v5600
        %5624 = vmatprep.subr.mxu0 0.0
        %5625 = vmatpush1.msra.mxu0 %v5599
        %5626 = vmatprep.subr.mxu0 0.0
        %5627 = vmatpush1.msra.mxu0 %v5598
        %5628 = vmatprep.subr.mxu0 0.0
        %5629 = vmatpush1.msra.mxu0 %v5597
        %5630 = vmatprep.subr.mxu0 0.0
        %5631 = vmatpush1.msra.mxu0 %v5596
        %5632 = vmatprep.subr.mxu0 0.0
        %5633 = vmatpush1.msra.mxu0 %v5595
        %5634 = vmatprep.subr.mxu0 0.0
        %5635 = vmatpush1.msra.mxu0 %v5594
        %5636 = vmatprep.subr.mxu0 0.0
        %5637 = vmatpush1.msra.mxu0 %v5593
        %5638 = vmatprep.subr.mxu0 0.0
        %5639 = vmatpush1.msra.mxu0 %v5592
        %5640 = vmatprep.subr.mxu0 0.0
        %5641 = vmatpush2.msra.mxu0 0.0
        %5642 = vmatprep.subr.mxu0 0.0
        %5643 = vmatpush2.msra.mxu0 0.0
        %5644 = vmatprep.subr.mxu0 0.0
        %5645 = vmatpush2.msra.mxu0 0.0
        %5646 = vmatprep.subr.mxu0 0.0
        %5647 = vmatpush2.msra.mxu0 0.0
        %5648 = vmatprep.subr.mxu0 0.0
        %5649 = vmatpush2.msra.mxu0 0.0
        %5650 = vmatprep.subr.mxu0 0.0
        %5651 = vmatpush2.msra.mxu0 0.0
        %5652 = vmatprep.subr.mxu0 0.0
        %5653 = vmatpush2.msra.mxu0 0.0
        %5654 = vmatprep.subr.mxu0 0.0
        %5655 = vmatpush2.msra.mxu0 0.0
        %5656 = vmatprep.subr.mxu0 0.0
        %5657 = vmatpush2.msra.mxu0 0.0
        %5658 = vmatprep.subr.mxu0 0.0
        %5659 = vmatpush2.msra.mxu0 0.0
        %5660 = vmatprep.subr.mxu0 0.0
        %5661 = vmatpush2.msra.mxu0 0.0
        %5662 = vmatprep.subr.mxu0 0.0
        %5663 = vmatpush2.msra.mxu0 0.0
        %5664 = vmatprep.subr.mxu0 0.0
        %5665 = vmatpush2.msra.mxu0 0.0
        %5666 = vmatprep.subr.mxu0 0.0
        %5667 = vmatpush2.msra.mxu0 0.0
        %5668 = vmatprep.subr.mxu0 0.0
        %5669 = vmatpush2.msra.mxu0 0.0
        %5670 = vmatprep.subr.mxu0 0.0
        %5671 = vmatpush2.msra.mxu0 0.0
        %5672 = vmatprep.mubr.f32.mxu0 0.0
        %5673 = vmatmul.mubr.f32.gmra.mxu0 %v5589
        %v5674 = vpop.f32.mrf.mxu0
        %v5675 = vadd.f32 0.0, %v5674
        %v5676 = vpop.f32.mrf.mxu0
        %5677 = vmatprep.mubr.f32.mxu0 0.0
        %5678 = vmatmul.mubr.f32.gmra.mxu0 %v5590
        %v5679 = vpop.f32.mrf.mxu0
        %v5680 = vadd.f32 0.0, %v5679
        %v5681 = vpop.f32.mrf.mxu0
        %5682 = vdwg.mxu0
        %v5683 = vadd.f32 %v5427, %v5675
        %v5684 = vadd.f32 %v5428, %v5680
        %s5685 = scalar_lea.vmem %s15, 1
        %v5686 = vld [vmem:[%s5685] sm:$0x1]
        %v5688 = vlaneseq
        %v5689 = vshrl.u32 %v5688, 7
        %v5690 = vsub.s32 0, %v5689
        %v5691 = vrot.slane %v5686, %v5690
        %v5693 = vadd.f32 %v5683, %v5691
        %v5694 = vadd.f32 %v5684, %v5691
        %v5695 = vld [vmem:[%s16] sm:$0x1]
        %v5696 = vld [vmem:[%s17] sm:$0x1]
        %v5697 = vsel %vm834, %v5693, 0.0
        %5698 = vadd.xlane.f32.xlu0 %v5697
        %v5699 = vpop.xlane.xlu0 %5698
        %v5700 = vsel %vm834, %v5694, 0.0
        %5701 = vadd.xlane.f32.xlu0 %v5700
        %v5702 = vpop.xlane.xlu0 %5701
        %v5703 = vmul.f32 %v5699, %v841
        %v5704 = vmul.f32 %v5702, %v841
        %v5705 = vsub.f32 %v5693, %v5703
        %v5706 = vsub.f32 %v5694, %v5704
        %v5707 = vmul.f32 %v5705, %v5705
        %v5708 = vmul.f32 %v5706, %v5706
        %v5709 = vsel %vm834, %v5707, 0.0
        %5710 = vadd.xlane.f32.xlu0 %v5709
        %v5711 = vpop.xlane.xlu0 %5710
        %v5712 = vsel %vm834, %v5708, 0.0
        %5713 = vadd.xlane.f32.xlu0 %v5712
        %v5714 = vpop.xlane.xlu0 %5713
        %v5715 = vmul.f32 %v5711, %v841
        %v5716 = vmul.f32 %v5714, %v841
        %v5717 = vadd.f32 %v5715, 1e-05
        %v5718 = vadd.f32 %v5716, 1e-05
        %v5719 = vrsqrt.pop %v5717
        %v5720 = vrsqrt.pop %v5718
        %v5721 = vmul.f32 %v5705, %v5719
        %v5722 = vmul.f32 %v5706, %v5720
        %v5724 = vlaneseq
        %v5725 = vshrl.u32 %v5724, 7
        %v5726 = vsub.s32 0, %v5725
        %v5727 = vrot.slane %v5695, %v5726
        %v5729 = vmul.f32 %v5721, %v5727
        %v5730 = vmul.f32 %v5722, %v5727
        %v5732 = vlaneseq
        %v5733 = vshrl.u32 %v5732, 7
        %v5734 = vsub.s32 0, %v5733
        %v5735 = vrot.slane %v5696, %v5734
        %v5737 = vadd.f32 %v5729, %v5735
        %v5738 = vadd.f32 %v5730, %v5735
        %v5739 = vld [vmem:[%s18] sm:$0x1]
        %v5740 = vld [vmem:[%s19] sm:$0x1]
        %v5741 = vsel %vm834, %v5737, 0.0
        %5742 = vadd.xlane.f32.xlu0 %v5741
        %v5743 = vpop.xlane.xlu0 %5742
        %v5744 = vsel %vm834, %v5738, 0.0
        %5745 = vadd.xlane.f32.xlu0 %v5744
        %v5746 = vpop.xlane.xlu0 %5745
        %v5747 = vmul.f32 %v5743, %v841
        %v5748 = vmul.f32 %v5746, %v841
        %v5749 = vsub.f32 %v5737, %v5747
        %v5750 = vsub.f32 %v5738, %v5748
        %v5751 = vmul.f32 %v5749, %v5749
        %v5752 = vmul.f32 %v5750, %v5750
        %v5753 = vsel %vm834, %v5751, 0.0
        %5754 = vadd.xlane.f32.xlu0 %v5753
        %v5755 = vpop.xlane.xlu0 %5754
        %v5756 = vsel %vm834, %v5752, 0.0
        %5757 = vadd.xlane.f32.xlu0 %v5756
        %v5758 = vpop.xlane.xlu0 %5757
        %v5759 = vmul.f32 %v5755, %v841
        %v5760 = vmul.f32 %v5758, %v841
        %v5761 = vadd.f32 %v5759, 1e-05
        %v5762 = vadd.f32 %v5760, 1e-05
        %v5763 = vrsqrt.pop %v5761
        %v5764 = vrsqrt.pop %v5762
        %v5765 = vmul.f32 %v5749, %v5763
        %v5766 = vmul.f32 %v5750, %v5764
        %v5768 = vlaneseq
        %v5769 = vshrl.u32 %v5768, 7
        %v5770 = vsub.s32 0, %v5769
        %v5771 = vrot.slane %v5739, %v5770
        %v5773 = vmul.f32 %v5765, %v5771
        %v5774 = vmul.f32 %v5766, %v5771
        %v5776 = vlaneseq
        %v5777 = vshrl.u32 %v5776, 7
        %v5778 = vsub.s32 0, %v5777
        %v5779 = vrot.slane %v5740, %v5778
        %v5781 = vadd.f32 %v5773, %v5779
        %v5782 = vadd.f32 %v5774, %v5779
        %5783 = vst.msk [vmem:[%s711] sm:$0xff] %vm834, %v5781
        %5784 = vst.msk [vmem:[%s711 + $0x8] sm:$0xff] %vm834, %v5782
        %v5785 = vld [vmem:[%s20] sm:$0xff]
        %v5786 = vld [vmem:[%s20 + $0x8] sm:$0xff]
        %v5787 = vld [vmem:[%s20 + $0x10] sm:$0xff]
        %v5788 = vld [vmem:[%s20 + $0x18] sm:$0xff]
        %v5789 = vld [vmem:[%s20 + $0x20] sm:$0xff]
        %v5790 = vld [vmem:[%s20 + $0x28] sm:$0xff]
        %v5791 = vld [vmem:[%s20 + $0x30] sm:$0xff]
        %v5792 = vld [vmem:[%s20 + $0x38] sm:$0xff]
        %v5793 = vld [vmem:[%s21] sm:$0x1]
        %v5795 = vlaneseq
        %v5796 = vshrl.u32 %v5795, 7
        %v5797 = vsub.s32 0, %v5796
        %v5798 = vrot.slane %v5793, %v5797
        %v5801 = vsel %vm834, %v5781, 0
        %v5804 = vsel %vm834, %v5782, 0
        %5806 = vmatprep.subr.mxu0 0.0
        %5807 = vmatpush1.msra.mxu0 0.0
        %5808 = vmatprep.subr.mxu0 0.0
        %5809 = vmatpush1.msra.mxu0 0.0
        %5810 = vmatprep.subr.mxu0 0.0
        %5811 = vmatpush1.msra.mxu0 0.0
        %5812 = vmatprep.subr.mxu0 0.0
        %5813 = vmatpush1.msra.mxu0 0.0
        %5814 = vmatprep.subr.mxu0 0.0
        %5815 = vmatpush1.msra.mxu0 0.0
        %5816 = vmatprep.subr.mxu0 0.0
        %5817 = vmatpush1.msra.mxu0 0.0
        %5818 = vmatprep.subr.mxu0 0.0
        %5819 = vmatpush1.msra.mxu0 0.0
        %5820 = vmatprep.subr.mxu0 0.0
        %5821 = vmatpush1.msra.mxu0 0.0
        %5822 = vmatprep.subr.mxu0 0.0
        %5823 = vmatpush1.msra.mxu0 %v5792
        %5824 = vmatprep.subr.mxu0 0.0
        %5825 = vmatpush1.msra.mxu0 %v5791
        %5826 = vmatprep.subr.mxu0 0.0
        %5827 = vmatpush1.msra.mxu0 %v5790
        %5828 = vmatprep.subr.mxu0 0.0
        %5829 = vmatpush1.msra.mxu0 %v5789
        %5830 = vmatprep.subr.mxu0 0.0
        %5831 = vmatpush1.msra.mxu0 %v5788
        %5832 = vmatprep.subr.mxu0 0.0
        %5833 = vmatpush1.msra.mxu0 %v5787
        %5834 = vmatprep.subr.mxu0 0.0
        %5835 = vmatpush1.msra.mxu0 %v5786
        %5836 = vmatprep.subr.mxu0 0.0
        %5837 = vmatpush1.msra.mxu0 %v5785
        %5838 = vmatprep.subr.mxu0 0.0
        %5839 = vmatpush2.msra.mxu0 0.0
        %5840 = vmatprep.subr.mxu0 0.0
        %5841 = vmatpush2.msra.mxu0 0.0
        %5842 = vmatprep.subr.mxu0 0.0
        %5843 = vmatpush2.msra.mxu0 0.0
        %5844 = vmatprep.subr.mxu0 0.0
        %5845 = vmatpush2.msra.mxu0 0.0
        %5846 = vmatprep.subr.mxu0 0.0
        %5847 = vmatpush2.msra.mxu0 0.0
        %5848 = vmatprep.subr.mxu0 0.0
        %5849 = vmatpush2.msra.mxu0 0.0
        %5850 = vmatprep.subr.mxu0 0.0
        %5851 = vmatpush2.msra.mxu0 0.0
        %5852 = vmatprep.subr.mxu0 0.0
        %5853 = vmatpush2.msra.mxu0 0.0
        %5854 = vmatprep.subr.mxu0 0.0
        %5855 = vmatpush2.msra.mxu0 0.0
        %5856 = vmatprep.subr.mxu0 0.0
        %5857 = vmatpush2.msra.mxu0 0.0
        %5858 = vmatprep.subr.mxu0 0.0
        %5859 = vmatpush2.msra.mxu0 0.0
        %5860 = vmatprep.subr.mxu0 0.0
        %5861 = vmatpush2.msra.mxu0 0.0
        %5862 = vmatprep.subr.mxu0 0.0
        %5863 = vmatpush2.msra.mxu0 0.0
        %5864 = vmatprep.subr.mxu0 0.0
        %5865 = vmatpush2.msra.mxu0 0.0
        %5866 = vmatprep.subr.mxu0 0.0
        %5867 = vmatpush2.msra.mxu0 0.0
        %5868 = vmatprep.subr.mxu0 0.0
        %5869 = vmatpush2.msra.mxu0 0.0
        %5870 = vmatprep.mubr.f32.mxu0 0.0
        %5871 = vmatmul.mubr.f32.gmra.mxu0 %v5801
        %v5872 = vpop.f32.mrf.mxu0
        %v5873 = vadd.f32 %v5798, %v5872
        %v5874 = vpop.f32.mrf.mxu0
        %5875 = vmatprep.mubr.f32.mxu0 0.0
        %5876 = vmatmul.mubr.f32.gmra.mxu0 %v5804
        %v5877 = vpop.f32.mrf.mxu0
        %v5878 = vadd.f32 %v5798, %v5877
        %v5879 = vpop.f32.mrf.mxu0
        %5880 = vdwg.mxu0
        %vm5881 = vcmask 89088
        %5882 = vst.msk [vmem:[%s721] sm:$0xff] %vm5881, %v5873
        %5883 = vst.msk [vmem:[%s721 + $0x8] sm:$0xff] %vm5881, %v5878
        %p5884 = scmp.lt.s32.totalorder %s38, 1
        %s5885 = scalar_select %p5884, %s38, 1
        %s5886 = smul.addr %s5885, 2
        %s5887 = smul.addr %s5886, 8
        %s5888 = scalar_lea.vmem %s22, %s5887
        %s5889 = sand.u32 %s539, 1
        %s5890 = scalar_lea.sflag [#allocation3], %s5889
        %s5891 = sand.u32 %s539, 1
        %s5892 = smul.addr %s5891, 16
        %s5893 = scalar_lea.vmem [#allocation2], %s5892
        // Predicated region
        $region109: #{tpu_custom_call.1} parent=107 // pred_check
          %p5894 = pneg %p523
        $region110: #{tpu_custom_call.1} parent=107 // pred_check_branch
          %5896 = sbr.rel (%p5894) target = $region112
        $region111: #{tpu_custom_call.1} parent=107 // pred_region
          _
        $region112: #{tpu_custom_call.1} parent=107 // pred_fallthru
          _
        // Predicated region
        $region113: #{tpu_custom_call.1} parent=107 // pred_check
          %p5897 = pneg %p549
        $region114: #{tpu_custom_call.1} parent=107 // pred_check_branch
          %5899 = sbr.rel (%p5897) target = $region116
        $region115: #{tpu_custom_call.1} parent=107 // pred_region
          %s5901 = ssub.s32 256, 256
          %5902 = vsyncadd %s5890, %s5901
          %s5903 = smul.addr %s38, 2
          %s5904 = smul.addr %s5903, 128
          %s5905 = scalar_lea.hbm %s23, %s5904
          %s5906 = sshll.u32 %s5893, 4
          %s5907 = int_to_ptr.vmem [resolvable:$true] %s5906
          %5912 = dma.vmem_to_hbm [thread:$0]  %s5907, 256, %s5905, %s5890, 128, 128, 8
        $region116: #{tpu_custom_call.1} parent=107 // pred_fallthru
          _
      $region108: #{tpu_custom_call.1} parent=5 // pred_fallthru
        _
      %p5913 = scmp.le.s32.totalorder 2, %s33
      // Predicated region
      $region117: #{tpu_custom_call.1} parent=5 // pred_check
        %p5914 = pneg %p5913
      $region118: #{tpu_custom_call.1} parent=5 // pred_check_branch
        %5916 = sbr.rel (%p5914) target = $region120
      $region119: #{tpu_custom_call.1} parent=5 // pred_region
        %s5917 = ssub.s32 %s33, 2
        // Predicated region
        $region121: #{tpu_custom_call.1} parent=119 // pred_check
          %p5918 = pneg %p529
        $region122: #{tpu_custom_call.1} parent=119 // pred_check_branch
          %5920 = sbr.rel (%p5918) target = $region124
        $region123: #{tpu_custom_call.1} parent=119 // pred_region
          %p5921 = scmp.lt.s32.totalorder %s39, 1
          %s5922 = scalar_select %p5921, %s39, 1
          %s5923 = smul.addr %s5922, 2
          %s5924 = smul.addr %s5923, 8
          %s5925 = scalar_lea.vmem %s22, %s5924
        $region124: #{tpu_custom_call.1} parent=119 // pred_fallthru
          _
        // Predicated region
        $region125: #{tpu_custom_call.1} parent=119 // pred_check
          %p5926 = pneg %p555
        $region126: #{tpu_custom_call.1} parent=119 // pred_check_branch
          %5928 = sbr.rel (%p5926) target = $region128
        $region127: #{tpu_custom_call.1} parent=119 // pred_region
          %s5929 = sand.u32 %s540, 1
          %s5930 = scalar_lea.sflag [#allocation3], %s5929
          %s5931 = sand.u32 %s540, 1
          %s5932 = smul.addr %s5931, 16
          %s5933 = scalar_lea.vmem [#allocation2], %s5932
          %5934 = dma.done %s5930, 256
        $region128: #{tpu_custom_call.1} parent=119 // pred_fallthru
          _
      $region120: #{tpu_custom_call.1} parent=5 // pred_fallthru
        _
    $region6: #{tpu_custom_call.1} parent=1 // loop_footer
      %s37 = sadd.s32 1, %s33
    $region7: #{tpu_custom_call.1} parent=1 // loop_footer_branch
      %32 = sbr.rel target = $region3
    $region8: #{tpu_custom_call.1} parent=1 // loop_exit
      _
    %5935 = vsyncpa [#allocation3], 1
    %s5936 = scalar_lea.sflag [#allocation3], 1
    %5937 = vsyncpa %s5936, 1

</llo_original>
